<compile_context>
chip_gen: v5e
topology: v5e:2x2
jax: 0.10.0
libtpu: 0.0.40
codegen_flags: <defaults>
</compile_context>

<pallas_src>
import functools

import jax
import jax.numpy as jnp
import numpy as np
from jax import lax
from jax.experimental import pallas as pl
from jax.experimental.pallas import tpu as pltpu

CFG = dict(img_size=16, patch_size=8, in_channels=3, num_classes=5,
           emb_size=32, num_heads=4, depth=2, mlp_dim=64)


# ----------------------------- in-kernel helpers -----------------------------
def _erf(x):
    # Abramowitz & Stegun 7.1.26 polynomial, max abs err ~1.5e-7 (fp32-accurate).
    # TODO(synk): exact lax.erf GELU replaced by fp32-accurate polynomial erf.
    a1, a2, a3, a4, a5 = 0.254829592, -0.284496736, 1.421413741, -1.453152027, 1.061405429
    p = 0.3275911
    sgn = jnp.where(x >= 0.0, 1.0, -1.0)
    ax = jnp.abs(x)
    t = 1.0 / (1.0 + p * ax)
    poly = ((((a5 * t + a4) * t + a3) * t + a2) * t + a1) * t
    return sgn * (1.0 - poly * jnp.exp(-ax * ax))


def _gelu(x):  # nn.GELU() default (erf form)
    return 0.5 * x * (1.0 + _erf(x * 0.7071067811865476))


def _layernorm(x, g, b):  # nn.LayerNorm over last dim, eps=1e-5
    mu = jnp.mean(x, axis=-1, keepdims=True)
    xc = x - mu
    var = jnp.mean(xc * xc, axis=-1, keepdims=True)
    return xc * lax.rsqrt(var + 1e-5) * g + b


# ------------------------------ fused forward kernel -------------------------
def fused_forward_kernel(nh, n_blocks, bs_pad, batch,
                         pslab_ref, pw_ref, misc_ref, rowmeta_ref, selmeta_ref,
                         wbig_ref, w1_ref, w2_ref, vecs_ref, head_ref,
                         out_ref, attn_sc):
    E = misc_ref.shape[1]
    dh = E // nh
    scale = 1.0 / float(dh) ** 0.5

    # ---- per-token metadata, hoisted out of the block loop (O(B*S), not O((B*S)^2)) ----
    seg_row = rowmeta_ref[:, 0:1]                      # (BS, 1) segment id per token
    mask_prev = rowmeta_ref[:, 1:2]                    # 0 at segment start / pad rows
    mask_next = rowmeta_ref[:, 2:3]                    # 0 at segment end / pad rows
    seg_col = selmeta_ref[batch:batch + 1, :]          # (1, BS) segment id, lane-major
    attn_bias = jnp.where(seg_row == seg_col, 0.0, -1e30)   # block-diagonal batch mask

    # ---- patch embedding: cls/pad rows of the pixel slab are zero, the additive
    #      slab supplies cls token resp. pos_emb + conv bias for patch rows ----
    x = (jnp.dot(pslab_ref[...], pw_ref[...], preferred_element_type=jnp.float32)
         + misc_ref[0:bs_pad, :])
    state = jnp.broadcast_to(misc_ref[bs_pad:bs_pad + 1, :], (bs_pad, E))

    for blk in range(n_blocks):        # encoder blocks, bottleneck, decoder blocks
        vec = vecs_ref[blk]            # (14, E)
        bsu, g1, b1 = vec[0:1], vec[1:2], vec[2:3]
        bo, bconv = vec[3:4], vec[4:5]
        g2, b2, b2m = vec[5:6], vec[6:7], vec[7:8]
        bq, bk, bv = vec[8:9], vec[9:10], vec[10:11]
        wc_prev, wc_mid, wc_next = vec[11:12], vec[12:13], vec[13:14]

        wqkv_l = wbig_ref[blk, :, 0:3 * E]            # (E, 3E)
        wsu_l = wbig_ref[blk, :, 3 * E:4 * E]         # (E, E)
        wo_l = wbig_ref[blk, :, 4 * E:5 * E]          # (E, E)

        # state = state_update(state) + x   (uses the pre-attention x)
        state = jnp.dot(state, wsu_l, preferred_element_type=jnp.float32) + bsu + x

        # --- multi-head self-attention on norm1(x) ---
        xn = _layernorm(x, g1, b1)
        qkv = jnp.dot(xn, wqkv_l, preferred_element_type=jnp.float32)   # (BS, 3E)
        q = (qkv[:, 0:E] + bq) * scale
        k = qkv[:, E:2 * E] + bk
        v = qkv[:, 2 * E:3 * E] + bv
        for h in range(nh):
            cs = slice(h * dh, (h + 1) * dh)
            s = lax.dot_general(q[:, cs], k[:, cs], (((1,), (1,)), ((), ())),
                                preferred_element_type=jnp.float32) + attn_bias
            p = jnp.exp(s - jnp.max(s, axis=-1, keepdims=True))
            ctx = jnp.dot(p, v[:, cs], preferred_element_type=jnp.float32)
            ctx = ctx * pl.reciprocal(jnp.sum(p, axis=-1, keepdims=True), approx=True)
            attn_sc[:, cs] = ctx                       # per-head lane-offset scratch store
        # single fused output projection for all heads (1 MXU push instead of 4)
        attn = jnp.dot(attn_sc[...], wo_l, preferred_element_type=jnp.float32)
        x = x + attn + bo
        res = x

        # --- depthwise Conv1d(k=3, pad=1, groups=E) over the sequence axis:
        #     sublane rolls (XLU) + batch-boundary masks, no MXU pushes ---
        x_prev = pltpu.roll(x, 1, axis=0) * mask_prev
        x_next = pltpu.roll(x, bs_pad - 1, axis=0) * mask_next
        conv = x_prev * wc_prev + x * wc_mid + x_next * wc_next + bconv
        conv = conv * jax.nn.sigmoid(conv)             # SiLU
        x = res + conv + state

        # --- MLP on norm2(x) ---
        xn2 = _layernorm(x, g2, b2)
        h1 = (jnp.dot(xn2, w1_ref[blk, 0:E, :], preferred_element_type=jnp.float32)
              + w1_ref[blk, E:E + 1, :])
        h1 = _gelu(h1)
        x = x + jnp.dot(h1, w2_ref[blk], preferred_element_type=jnp.float32) + b2m

    # --- head: exact weighted patch-token mean (== bilinear upsample + spatial
    #     mean) then the 1x1-conv head as a linear layer ---
    feat = jnp.dot(selmeta_ref[0:batch, :], x, preferred_element_type=jnp.float32)  # (B, E)
    out_ref[...] = (jnp.dot(feat, head_ref[0:E, :], preferred_element_type=jnp.float32)
                    + head_ref[E:E + 1, :])


# ------------------------------- wrapper --------------------------------------
def mamba_unet_forward(packed, x_img, cfg):
    B, C, H, W = x_img.shape
    P, E = cfg['patch_size'], cfg['emb_size']
    NC, nh = cfg['num_classes'], cfg['num_heads']
    L = 2 * cfg['depth'] + 1
    hh, ww = H // P, W // P
    N = hh * ww
    S = N + 1
    BS = B * S
    BS_pad = packed['misc'].shape[0] - 1
    Cpp = C * P * P

    # patch extraction (pure layout; fused by XLA inside the surrounding jit)
    xp = x_img.reshape(B, C, hh, P, ww, P).transpose(0, 2, 4, 1, 3, 5)
    patches = xp.reshape(B, N, Cpp)
    p_slab = jnp.concatenate(
        [jnp.zeros((B, 1, Cpp), jnp.float32), patches], axis=1).reshape(BS, Cpp)
    p_slab = jnp.concatenate(
        [p_slab, jnp.zeros((BS_pad - BS, Cpp), jnp.float32)], axis=0)

    inputs = (p_slab, packed['pw'], packed['misc'], packed['rowmeta'],
              packed['selmeta'], packed['wbig'], packed['w1slab'],
              packed['w2slab'], packed['vecs'], packed['headw'])

    vmem = pl.BlockSpec(memory_space=pltpu.MemorySpace.VMEM)
    return pl.pallas_call(
        functools.partial(fused_forward_kernel, nh, L, BS_pad, B),
        in_specs=[vmem] * len(inputs),
        out_specs=vmem,
        out_shape=jax.ShapeDtypeStruct((B, NC), jnp.float32),
        scratch_shapes=[pltpu.VMEM((BS_pad, E), jnp.float32)],
    )(*inputs)


# ------------------------------- params & packing -----------------------------
def init_params(key, cfg):
    E, P, C = cfg['emb_size'], cfg['patch_size'], cfg['in_channels']
    NC, M = cfg['num_classes'], cfg['mlp_dim']
    H = cfg['img_size']
    N = (H // P) ** 2
    L = 2 * cfg['depth'] + 1
    s = 0.02
    keys = jax.random.split(key, 16)

    def rnd(k, shape):
        return (jax.random.normal(k, shape) * s).astype(jnp.float32)

    return dict(
        patch_w=rnd(keys[0], (E, C * P * P)),      # Conv2d kernel, flattened (c,ph,pw)
        patch_b=rnd(keys[1], (E,)),
        pos_emb=jnp.zeros((N, E), jnp.float32),    # nn.Parameter(torch.zeros(...))
        cls_token=jnp.zeros((E,), jnp.float32),
        initial_state=jnp.zeros((1, E), jnp.float32),
        head_w=rnd(keys[2], (NC, E)), head_b=rnd(keys[3], (NC,)),
        Wsu=rnd(keys[4], (L, E, E)), bsu=rnd(keys[5], (L, E)),
        ipw=rnd(keys[6], (L, 3 * E, E)), ipb=rnd(keys[7], (L, 3 * E)),
        Wo=rnd(keys[8], (L, E, E)), bo=rnd(keys[9], (L, E)),
        Wc=rnd(keys[10], (L, E, 1, 3)), bc=rnd(keys[11], (L, E)),
        W1=rnd(keys[12], (L, M, E)), b1=rnd(keys[13], (L, M)),
        W2=rnd(keys[14], (L, E, M)), b2=rnd(keys[15], (L, E)),
    )


def _bilinear_mean_weights(n_in, n_out):
    # Column sums of the align_corners=False bilinear resize matrix, / n_out:
    # the per-source-cell weight of a uniform mean over the upsampled axis.
    w = np.zeros((n_in,), np.float64)
    for i in range(n_out):
        src = (i + 0.5) * n_in / n_out - 0.5
        x0 = int(np.floor(src))
        frac = src - x0
        i0 = min(max(x0, 0), n_in - 1)
        i1 = min(max(x0 + 1, 0), n_in - 1)
        w[i0] += 1.0 - frac
        w[i1] += frac
    return w / n_out


def build_packed(params, cfg, batch):
    E, P = cfg['emb_size'], cfg['patch_size']
    H = cfg['img_size']
    M = cfg['mlp_dim']
    hh = ww = H // P
    N = hh * ww
    S = N + 1
    L = 2 * cfg['depth'] + 1
    BS = batch * S
    BS_pad = ((BS + 7) // 8) * 8          # 8-aligned token slab (no dead sublanes)
    f32 = jnp.float32

    # misc slab: additive rows (cls token / pos_emb + patch-embed bias) + init-state row.
    base = jnp.concatenate(
        [params['cls_token'][None, :],
         params['pos_emb'] + params['patch_b'][None, :]], axis=0)       # (S, E)
    add_slab = jnp.tile(base, (batch, 1))
    add_slab = jnp.concatenate([add_slab, jnp.zeros((BS_pad - BS, E), f32)], axis=0)
    misc = jnp.concatenate([add_slab, params['initial_state']], axis=0).astype(f32)

    # per-token metadata (O(B*S) only): segment id, prev/next validity masks
    idx = np.arange(BS_pad)
    pos = idx % S
    seg = np.where(idx < BS, idx // S, batch).astype(np.float32)
    m_prev = ((idx < BS) & (pos != 0)).astype(np.float32)
    m_next = ((idx < BS) & (pos != S - 1)).astype(np.float32)
    rowmeta = np.stack([seg, m_prev, m_next, np.zeros(BS_pad, np.float32)], axis=1)

    # head rows: exact weights of (bilinear upsample to HxW -> uniform spatial mean);
    # last row: segment ids laid out along lanes (for the in-kernel bias build).
    w_h = _bilinear_mean_weights(hh, H)
    w_w = _bilinear_mean_weights(ww, H)
    w2d = np.outer(w_h, w_w).reshape(-1).astype(np.float32)   # (N,), row-major (h, w)
    selmeta = np.zeros((batch + 1, BS_pad), np.float32)
    for b in range(batch):
        selmeta[b, b * S + 1: b * S + 1 + N] = w2d
    selmeta[batch, :] = seg

    # per-block matmul weights, lane-concatenated: [Wqkv^T | Wsu^T | Wo^T]  (L, E, 5E)
    wbig = jnp.concatenate([jnp.transpose(params['ipw'], (0, 2, 1)),
                            jnp.transpose(params['Wsu'], (0, 2, 1)),
                            jnp.transpose(params['Wo'], (0, 2, 1))], axis=2)

    # MLP: first linear weight^T with its bias appended as an extra row; second linear^T
    w1slab = jnp.concatenate([jnp.transpose(params['W1'], (0, 2, 1)),
                              params['b1'][:, None, :]], axis=1)         # (L, E+1, M)
    w2slab = jnp.transpose(params['W2'], (0, 2, 1))                      # (L, M, E)

    # per-block vectors (L, 14, E): biases, norm affine params, conv taps, qkv bias
    wc = params['Wc'][:, :, 0, :]                                        # (L, E, 3)
    ones = jnp.ones((L, E), f32)
    zeros = jnp.zeros((L, E), f32)
    vecs = jnp.stack([params['bsu'],
                      ones, zeros,                 # norm1 weight / bias (default init)
                      params['bo'], params['bc'],
                      ones, zeros,                 # norm2 weight / bias (default init)
                      params['b2'],
                      params['ipb'][:, 0:E], params['ipb'][:, E:2 * E],
                      params['ipb'][:, 2 * E:3 * E],
                      wc[:, :, 0], wc[:, :, 1], wc[:, :, 2]], axis=1)

    headw = jnp.concatenate([params['head_w'].T, params['head_b'][None, :]], axis=0)

    return dict(pw=params['patch_w'].T.astype(f32),
                misc=misc,
                rowmeta=jnp.asarray(rowmeta),
                selmeta=jnp.asarray(selmeta),
                wbig=wbig.astype(f32),
                w1slab=w1slab.astype(f32),
                w2slab=w2slab.astype(f32),
                vecs=vecs.astype(f32),
                headw=headw.astype(f32))


# --------------------------------- main ---------------------------------------
if __name__ == "__main__":
    key = jax.random.PRNGKey(0)
    pkey, xkey = jax.random.split(key)
    params = init_params(pkey, CFG)
    B = 2
    packed = build_packed(params, CFG, B)
    x = jax.random.normal(
        xkey, (B, CFG['in_channels'], CFG['img_size'], CFG['img_size']), jnp.float32)

    fwd = jax.jit(functools.partial(mamba_unet_forward, cfg=CFG))
    out = fwd(packed, x)
    out = jax.block_until_ready(out)

    assert out.shape == (B, CFG['num_classes'])
    assert bool(jnp.all(jnp.isfinite(out)))
    print("KERNEL_OK")
</pallas_src>

<mosaic_0001>
module attributes {stable_mosaic.version = 11 : i64} {
  func.func @fused_forward_kernel(%arg0: memref<16x192xf32, #tpu.memory_space<vmem>>, %arg1: memref<192x32xf32, #tpu.memory_space<vmem>>, %arg2: memref<17x32xf32, #tpu.memory_space<vmem>>, %arg3: memref<16x4xf32, #tpu.memory_space<vmem>>, %arg4: memref<3x16xf32, #tpu.memory_space<vmem>>, %arg5: memref<5x32x160xf32, #tpu.memory_space<vmem>>, %arg6: memref<5x33x64xf32, #tpu.memory_space<vmem>>, %arg7: memref<5x64x32xf32, #tpu.memory_space<vmem>>, %arg8: memref<5x14x32xf32, #tpu.memory_space<vmem>>, %arg9: memref<33x5xf32, #tpu.memory_space<vmem>>, %arg10: memref<2x5xf32, #tpu.memory_space<vmem>>, %arg11: memref<16x32xf32, #tpu.memory_space<vmem>>) attributes {dimension_semantics = [], scalar_prefetch = 0 : i64, scratch_operands = 1 : i64, tpu.core_type = #tpu.core_type<tc>} {
    %c0 = arith.constant 0 : index
    %c0_0 = arith.constant 0 : index
    %0 = vector.load %arg3[%c0, %c0_0] : memref<16x4xf32, #tpu.memory_space<vmem>>, vector<16x1xf32>
    %c0_1 = arith.constant 0 : index
    %c1 = arith.constant 1 : index
    %1 = vector.load %arg3[%c0_1, %c1] : memref<16x4xf32, #tpu.memory_space<vmem>>, vector<16x1xf32>
    %c0_2 = arith.constant 0 : index
    %c2 = arith.constant 2 : index
    %2 = vector.load %arg3[%c0_2, %c2] : memref<16x4xf32, #tpu.memory_space<vmem>>, vector<16x1xf32>
    %c2_3 = arith.constant 2 : index
    %c0_4 = arith.constant 0 : index
    %3 = vector.load %arg4[%c2_3, %c0_4] : memref<3x16xf32, #tpu.memory_space<vmem>>, vector<1x16xf32>
    %4 = vector.broadcast %0 : vector<16x1xf32> to vector<16x16xf32>
    %5 = vector.broadcast %3 : vector<1x16xf32> to vector<16x16xf32>
    %6 = arith.cmpf oeq, %4, %5 : vector<16x16xf32>
    %cst = arith.constant 0.000000e+00 : f32
    %cst_5 = arith.constant -1.000000e+30 : f32
    %7 = vector.broadcast %cst : f32 to vector<16x16xf32>
    %8 = vector.broadcast %cst_5 : f32 to vector<16x16xf32>
    %9 = arith.select %6, %7, %8 : vector<16x16xi1>, vector<16x16xf32>
    %c0_6 = arith.constant 0 : index
    %c0_7 = arith.constant 0 : index
    %10 = vector.load %arg0[%c0_6, %c0_7] : memref<16x192xf32, #tpu.memory_space<vmem>>, vector<16x192xf32>
    %c0_8 = arith.constant 0 : index
    %c0_9 = arith.constant 0 : index
    %11 = vector.load %arg1[%c0_8, %c0_9] : memref<192x32xf32, #tpu.memory_space<vmem>>, vector<192x32xf32>
    %cst_10 = arith.constant dense<0.000000e+00> : vector<16x32xf32>
    %12 = tpu.matmul %10, %11, %cst_10 {dimension_numbers = #tpu.dot_dimension_numbers<[1], [0], [0], [1], [0, 0, 1, 1], [], []>} : vector<16x192xf32>, vector<192x32xf32>, vector<16x32xf32> -> vector<16x32xf32>
    %c0_11 = arith.constant 0 : index
    %c0_12 = arith.constant 0 : index
    %13 = vector.load %arg2[%c0_11, %c0_12] : memref<17x32xf32, #tpu.memory_space<vmem>>, vector<16x32xf32>
    %14 = arith.addf %12, %13 : vector<16x32xf32>
    %c16 = arith.constant 16 : index
    %c0_13 = arith.constant 0 : index
    %15 = vector.load %arg2[%c16, %c0_13] : memref<17x32xf32, #tpu.memory_space<vmem>>, vector<1x32xf32>
    %16 = vector.shape_cast %15 : vector<1x32xf32> to vector<1x32xf32>
    %17 = vector.broadcast %16 : vector<1x32xf32> to vector<16x32xf32>
    %c0_14 = arith.constant 0 : index
    %c0_15 = arith.constant 0 : index
    %c0_16 = arith.constant 0 : index
    %18 = vector.load %arg8[%c0_14, %c0_15, %c0_16] : memref<5x14x32xf32, #tpu.memory_space<vmem>>, vector<1x14x32xf32>
    %19 = vector.shape_cast %18 : vector<1x14x32xf32> to vector<14x32xf32>
    %20 = vector.extract_strided_slice %19 {offsets = [0, 0], sizes = [1, 32], strides = [1, 1]} : vector<14x32xf32> to vector<1x32xf32>
    %21 = vector.extract_strided_slice %19 {offsets = [1, 0], sizes = [1, 32], strides = [1, 1]} : vector<14x32xf32> to vector<1x32xf32>
    %22 = vector.extract_strided_slice %19 {offsets = [2, 0], sizes = [1, 32], strides = [1, 1]} : vector<14x32xf32> to vector<1x32xf32>
    %23 = vector.extract_strided_slice %19 {offsets = [3, 0], sizes = [1, 32], strides = [1, 1]} : vector<14x32xf32> to vector<1x32xf32>
    %24 = vector.extract_strided_slice %19 {offsets = [4, 0], sizes = [1, 32], strides = [1, 1]} : vector<14x32xf32> to vector<1x32xf32>
    %25 = vector.extract_strided_slice %19 {offsets = [5, 0], sizes = [1, 32], strides = [1, 1]} : vector<14x32xf32> to vector<1x32xf32>
    %26 = vector.extract_strided_slice %19 {offsets = [6, 0], sizes = [1, 32], strides = [1, 1]} : vector<14x32xf32> to vector<1x32xf32>
    %27 = vector.extract_strided_slice %19 {offsets = [7, 0], sizes = [1, 32], strides = [1, 1]} : vector<14x32xf32> to vector<1x32xf32>
    %28 = vector.extract_strided_slice %19 {offsets = [8, 0], sizes = [1, 32], strides = [1, 1]} : vector<14x32xf32> to vector<1x32xf32>
    %29 = vector.extract_strided_slice %19 {offsets = [9, 0], sizes = [1, 32], strides = [1, 1]} : vector<14x32xf32> to vector<1x32xf32>
    %30 = vector.extract_strided_slice %19 {offsets = [10, 0], sizes = [1, 32], strides = [1, 1]} : vector<14x32xf32> to vector<1x32xf32>
    %31 = vector.extract_strided_slice %19 {offsets = [11, 0], sizes = [1, 32], strides = [1, 1]} : vector<14x32xf32> to vector<1x32xf32>
    %32 = vector.extract_strided_slice %19 {offsets = [12, 0], sizes = [1, 32], strides = [1, 1]} : vector<14x32xf32> to vector<1x32xf32>
    %33 = vector.extract_strided_slice %19 {offsets = [13, 0], sizes = [1, 32], strides = [1, 1]} : vector<14x32xf32> to vector<1x32xf32>
    %c0_17 = arith.constant 0 : index
    %c0_18 = arith.constant 0 : index
    %c0_19 = arith.constant 0 : index
    %34 = vector.load %arg5[%c0_17, %c0_18, %c0_19] : memref<5x32x160xf32, #tpu.memory_space<vmem>>, vector<1x32x96xf32>
    %35 = vector.shape_cast %34 : vector<1x32x96xf32> to vector<32x96xf32>
    %c0_20 = arith.constant 0 : index
    %c0_21 = arith.constant 0 : index
    %c96 = arith.constant 96 : index
    %36 = vector.load %arg5[%c0_20, %c0_21, %c96] : memref<5x32x160xf32, #tpu.memory_space<vmem>>, vector<1x32x32xf32>
    %37 = vector.shape_cast %36 : vector<1x32x32xf32> to vector<32x32xf32>
    %c0_22 = arith.constant 0 : index
    %c0_23 = arith.constant 0 : index
    %c128 = arith.constant 128 : index
    %38 = vector.load %arg5[%c0_22, %c0_23, %c128] : memref<5x32x160xf32, #tpu.memory_space<vmem>>, vector<1x32x32xf32>
    %39 = vector.shape_cast %38 : vector<1x32x32xf32> to vector<32x32xf32>
    %cst_24 = arith.constant dense<0.000000e+00> : vector<16x32xf32>
    %40 = tpu.matmul %17, %37, %cst_24 {dimension_numbers = #tpu.dot_dimension_numbers<[1], [0], [0], [1], [0, 0, 1, 1], [], []>} : vector<16x32xf32>, vector<32x32xf32>, vector<16x32xf32> -> vector<16x32xf32>
    %41 = vector.broadcast %20 : vector<1x32xf32> to vector<16x32xf32>
    %42 = arith.addf %40, %41 : vector<16x32xf32>
    %43 = arith.addf %42, %14 : vector<16x32xf32>
    %cst_25 = arith.constant dense<0.000000e+00> : vector<16xf32>
    %44 = vector.multi_reduction <add>, %14, %cst_25 [1] : vector<16x32xf32> to vector<16xf32>
    %45 = vector.shape_cast %44 : vector<16xf32> to vector<16x1xf32>
    %cst_26 = arith.constant 3.200000e+01 : f32
    %46 = vector.broadcast %cst_26 : f32 to vector<16x1xf32>
    %47 = arith.divf %45, %46 : vector<16x1xf32>
    %48 = vector.broadcast %47 : vector<16x1xf32> to vector<16x32xf32>
    %49 = arith.subf %14, %48 : vector<16x32xf32>
    %50 = arith.mulf %49, %49 : vector<16x32xf32>
    %cst_27 = arith.constant dense<0.000000e+00> : vector<16xf32>
    %51 = vector.multi_reduction <add>, %50, %cst_27 [1] : vector<16x32xf32> to vector<16xf32>
    %52 = vector.shape_cast %51 : vector<16xf32> to vector<16x1xf32>
    %cst_28 = arith.constant 3.200000e+01 : f32
    %53 = vector.broadcast %cst_28 : f32 to vector<16x1xf32>
    %54 = arith.divf %52, %53 : vector<16x1xf32>
    %cst_29 = arith.constant 9.99999974E-6 : f32
    %55 = vector.broadcast %cst_29 : f32 to vector<16x1xf32>
    %56 = arith.addf %54, %55 : vector<16x1xf32>
    %57 = math.rsqrt %56 : vector<16x1xf32>
    %58 = vector.broadcast %57 : vector<16x1xf32> to vector<16x32xf32>
    %59 = arith.mulf %49, %58 : vector<16x32xf32>
    %60 = vector.broadcast %21 : vector<1x32xf32> to vector<16x32xf32>
    %61 = arith.mulf %59, %60 : vector<16x32xf32>
    %62 = vector.broadcast %22 : vector<1x32xf32> to vector<16x32xf32>
    %63 = arith.addf %61, %62 : vector<16x32xf32>
    %cst_30 = arith.constant dense<0.000000e+00> : vector<16x96xf32>
    %64 = tpu.matmul %63, %35, %cst_30 {dimension_numbers = #tpu.dot_dimension_numbers<[1], [0], [0], [1], [0, 0, 1, 1], [], []>} : vector<16x32xf32>, vector<32x96xf32>, vector<16x96xf32> -> vector<16x96xf32>
    %65 = vector.extract_strided_slice %64 {offsets = [0, 0], sizes = [16, 32], strides = [1, 1]} : vector<16x96xf32> to vector<16x32xf32>
    %66 = vector.broadcast %28 : vector<1x32xf32> to vector<16x32xf32>
    %67 = arith.addf %65, %66 : vector<16x32xf32>
    %cst_31 = arith.constant 0.353553385 : f32
    %68 = vector.broadcast %cst_31 : f32 to vector<16x32xf32>
    %69 = arith.mulf %67, %68 : vector<16x32xf32>
    %70 = vector.extract_strided_slice %64 {offsets = [0, 32], sizes = [16, 32], strides = [1, 1]} : vector<16x96xf32> to vector<16x32xf32>
    %71 = vector.broadcast %29 : vector<1x32xf32> to vector<16x32xf32>
    %72 = arith.addf %70, %71 : vector<16x32xf32>
    %73 = vector.extract_strided_slice %64 {offsets = [0, 64], sizes = [16, 32], strides = [1, 1]} : vector<16x96xf32> to vector<16x32xf32>
    %74 = vector.broadcast %30 : vector<1x32xf32> to vector<16x32xf32>
    %75 = arith.addf %73, %74 : vector<16x32xf32>
    %76 = vector.extract_strided_slice %69 {offsets = [0, 0], sizes = [16, 8], strides = [1, 1]} : vector<16x32xf32> to vector<16x8xf32>
    %77 = vector.extract_strided_slice %72 {offsets = [0, 0], sizes = [16, 8], strides = [1, 1]} : vector<16x32xf32> to vector<16x8xf32>
    %cst_32 = arith.constant dense<0.000000e+00> : vector<16x16xf32>
    %78 = tpu.matmul %76, %77, %cst_32 {dimension_numbers = #tpu.dot_dimension_numbers<[1], [1], [0], [0], [0, 0, 1, 0], [], []>} : vector<16x8xf32>, vector<16x8xf32>, vector<16x16xf32> -> vector<16x16xf32>
    %79 = arith.addf %78, %9 : vector<16x16xf32>
    %cst_33 = arith.constant dense<0xFF800000> : vector<16xf32>
    %80 = vector.multi_reduction <maximumf>, %79, %cst_33 [1] : vector<16x16xf32> to vector<16xf32>
    %81 = vector.shape_cast %80 : vector<16xf32> to vector<16x1xf32>
    %82 = vector.broadcast %81 : vector<16x1xf32> to vector<16x16xf32>
    %83 = arith.subf %79, %82 : vector<16x16xf32>
    %84 = math.exp %83 : vector<16x16xf32>
    %85 = vector.extract_strided_slice %75 {offsets = [0, 0], sizes = [16, 8], strides = [1, 1]} : vector<16x32xf32> to vector<16x8xf32>
    %cst_34 = arith.constant dense<0.000000e+00> : vector<16x8xf32>
    %86 = tpu.matmul %84, %85, %cst_34 {dimension_numbers = #tpu.dot_dimension_numbers<[1], [0], [0], [1], [0, 0, 1, 1], [], []>} : vector<16x16xf32>, vector<16x8xf32>, vector<16x8xf32> -> vector<16x8xf32>
    %cst_35 = arith.constant dense<0.000000e+00> : vector<16xf32>
    %87 = vector.multi_reduction <add>, %84, %cst_35 [1] : vector<16x16xf32> to vector<16xf32>
    %88 = vector.shape_cast %87 : vector<16xf32> to vector<16x1xf32>
    %89 = tpu.reciprocal %88 {approx = true} : vector<16x1xf32> -> vector<16x1xf32>
    %90 = vector.broadcast %89 : vector<16x1xf32> to vector<16x8xf32>
    %91 = arith.mulf %86, %90 : vector<16x8xf32>
    %c0_36 = arith.constant 0 : index
    %c0_37 = arith.constant 0 : index
    %92 = vector.load %arg11[%c0_36, %c0_37] : memref<16x32xf32, #tpu.memory_space<vmem>>, vector<16x8xf32>
    tpu.vector_store %arg11[%c0_36, %c0_37], %91 {strides = array<i32>} : memref<16x32xf32, #tpu.memory_space<vmem>>, vector<16x8xf32>,
    %93 = vector.extract_strided_slice %69 {offsets = [0, 8], sizes = [16, 8], strides = [1, 1]} : vector<16x32xf32> to vector<16x8xf32>
    %94 = vector.extract_strided_slice %72 {offsets = [0, 8], sizes = [16, 8], strides = [1, 1]} : vector<16x32xf32> to vector<16x8xf32>
    %cst_38 = arith.constant dense<0.000000e+00> : vector<16x16xf32>
    %95 = tpu.matmul %93, %94, %cst_38 {dimension_numbers = #tpu.dot_dimension_numbers<[1], [1], [0], [0], [0, 0, 1, 0], [], []>} : vector<16x8xf32>, vector<16x8xf32>, vector<16x16xf32> -> vector<16x16xf32>
    %96 = arith.addf %95, %9 : vector<16x16xf32>
    %cst_39 = arith.constant dense<0xFF800000> : vector<16xf32>
    %97 = vector.multi_reduction <maximumf>, %96, %cst_39 [1] : vector<16x16xf32> to vector<16xf32>
    %98 = vector.shape_cast %97 : vector<16xf32> to vector<16x1xf32>
    %99 = vector.broadcast %98 : vector<16x1xf32> to vector<16x16xf32>
    %100 = arith.subf %96, %99 : vector<16x16xf32>
    %101 = math.exp %100 : vector<16x16xf32>
    %102 = vector.extract_strided_slice %75 {offsets = [0, 8], sizes = [16, 8], strides = [1, 1]} : vector<16x32xf32> to vector<16x8xf32>
    %cst_40 = arith.constant dense<0.000000e+00> : vector<16x8xf32>
    %103 = tpu.matmul %101, %102, %cst_40 {dimension_numbers = #tpu.dot_dimension_numbers<[1], [0], [0], [1], [0, 0, 1, 1], [], []>} : vector<16x16xf32>, vector<16x8xf32>, vector<16x8xf32> -> vector<16x8xf32>
    %cst_41 = arith.constant dense<0.000000e+00> : vector<16xf32>
    %104 = vector.multi_reduction <add>, %101, %cst_41 [1] : vector<16x16xf32> to vector<16xf32>
    %105 = vector.shape_cast %104 : vector<16xf32> to vector<16x1xf32>
    %106 = tpu.reciprocal %105 {approx = true} : vector<16x1xf32> -> vector<16x1xf32>
    %107 = vector.broadcast %106 : vector<16x1xf32> to vector<16x8xf32>
    %108 = arith.mulf %103, %107 : vector<16x8xf32>
    %c0_42 = arith.constant 0 : index
    %c8 = arith.constant 8 : index
    %109 = vector.load %arg11[%c0_42, %c8] : memref<16x32xf32, #tpu.memory_space<vmem>>, vector<16x8xf32>
    tpu.vector_store %arg11[%c0_42, %c8], %108 {strides = array<i32>} : memref<16x32xf32, #tpu.memory_space<vmem>>, vector<16x8xf32>,
    %110 = vector.extract_strided_slice %69 {offsets = [0, 16], sizes = [16, 8], strides = [1, 1]} : vector<16x32xf32> to vector<16x8xf32>
    %111 = vector.extract_strided_slice %72 {offsets = [0, 16], sizes = [16, 8], strides = [1, 1]} : vector<16x32xf32> to vector<16x8xf32>
    %cst_43 = arith.constant dense<0.000000e+00> : vector<16x16xf32>
    %112 = tpu.matmul %110, %111, %cst_43 {dimension_numbers = #tpu.dot_dimension_numbers<[1], [1], [0], [0], [0, 0, 1, 0], [], []>} : vector<16x8xf32>, vector<16x8xf32>, vector<16x16xf32> -> vector<16x16xf32>
    %113 = arith.addf %112, %9 : vector<16x16xf32>
    %cst_44 = arith.constant dense<0xFF800000> : vector<16xf32>
    %114 = vector.multi_reduction <maximumf>, %113, %cst_44 [1] : vector<16x16xf32> to vector<16xf32>
    %115 = vector.shape_cast %114 : vector<16xf32> to vector<16x1xf32>
    %116 = vector.broadcast %115 : vector<16x1xf32> to vector<16x16xf32>
    %117 = arith.subf %113, %116 : vector<16x16xf32>
    %118 = math.exp %117 : vector<16x16xf32>
    %119 = vector.extract_strided_slice %75 {offsets = [0, 16], sizes = [16, 8], strides = [1, 1]} : vector<16x32xf32> to vector<16x8xf32>
    %cst_45 = arith.constant dense<0.000000e+00> : vector<16x8xf32>
    %120 = tpu.matmul %118, %119, %cst_45 {dimension_numbers = #tpu.dot_dimension_numbers<[1], [0], [0], [1], [0, 0, 1, 1], [], []>} : vector<16x16xf32>, vector<16x8xf32>, vector<16x8xf32> -> vector<16x8xf32>
    %cst_46 = arith.constant dense<0.000000e+00> : vector<16xf32>
    %121 = vector.multi_reduction <add>, %118, %cst_46 [1] : vector<16x16xf32> to vector<16xf32>
    %122 = vector.shape_cast %121 : vector<16xf32> to vector<16x1xf32>
    %123 = tpu.reciprocal %122 {approx = true} : vector<16x1xf32> -> vector<16x1xf32>
    %124 = vector.broadcast %123 : vector<16x1xf32> to vector<16x8xf32>
    %125 = arith.mulf %120, %124 : vector<16x8xf32>
    %c0_47 = arith.constant 0 : index
    %c16_48 = arith.constant 16 : index
    %126 = vector.load %arg11[%c0_47, %c16_48] : memref<16x32xf32, #tpu.memory_space<vmem>>, vector<16x8xf32>
    tpu.vector_store %arg11[%c0_47, %c16_48], %125 {strides = array<i32>} : memref<16x32xf32, #tpu.memory_space<vmem>>, vector<16x8xf32>,
    %127 = vector.extract_strided_slice %69 {offsets = [0, 24], sizes = [16, 8], strides = [1, 1]} : vector<16x32xf32> to vector<16x8xf32>
    %128 = vector.extract_strided_slice %72 {offsets = [0, 24], sizes = [16, 8], strides = [1, 1]} : vector<16x32xf32> to vector<16x8xf32>
    %cst_49 = arith.constant dense<0.000000e+00> : vector<16x16xf32>
    %129 = tpu.matmul %127, %128, %cst_49 {dimension_numbers = #tpu.dot_dimension_numbers<[1], [1], [0], [0], [0, 0, 1, 0], [], []>} : vector<16x8xf32>, vector<16x8xf32>, vector<16x16xf32> -> vector<16x16xf32>
    %130 = arith.addf %129, %9 : vector<16x16xf32>
    %cst_50 = arith.constant dense<0xFF800000> : vector<16xf32>
    %131 = vector.multi_reduction <maximumf>, %130, %cst_50 [1] : vector<16x16xf32> to vector<16xf32>
    %132 = vector.shape_cast %131 : vector<16xf32> to vector<16x1xf32>
    %133 = vector.broadcast %132 : vector<16x1xf32> to vector<16x16xf32>
    %134 = arith.subf %130, %133 : vector<16x16xf32>
    %135 = math.exp %134 : vector<16x16xf32>
    %136 = vector.extract_strided_slice %75 {offsets = [0, 24], sizes = [16, 8], strides = [1, 1]} : vector<16x32xf32> to vector<16x8xf32>
    %cst_51 = arith.constant dense<0.000000e+00> : vector<16x8xf32>
    %137 = tpu.matmul %135, %136, %cst_51 {dimension_numbers = #tpu.dot_dimension_numbers<[1], [0], [0], [1], [0, 0, 1, 1], [], []>} : vector<16x16xf32>, vector<16x8xf32>, vector<16x8xf32> -> vector<16x8xf32>
    %cst_52 = arith.constant dense<0.000000e+00> : vector<16xf32>
    %138 = vector.multi_reduction <add>, %135, %cst_52 [1] : vector<16x16xf32> to vector<16xf32>
    %139 = vector.shape_cast %138 : vector<16xf32> to vector<16x1xf32>
    %140 = tpu.reciprocal %139 {approx = true} : vector<16x1xf32> -> vector<16x1xf32>
    %141 = vector.broadcast %140 : vector<16x1xf32> to vector<16x8xf32>
    %142 = arith.mulf %137, %141 : vector<16x8xf32>
    %c0_53 = arith.constant 0 : index
    %c24 = arith.constant 24 : index
    %143 = vector.load %arg11[%c0_53, %c24] : memref<16x32xf32, #tpu.memory_space<vmem>>, vector<16x8xf32>
    tpu.vector_store %arg11[%c0_53, %c24], %142 {strides = array<i32>} : memref<16x32xf32, #tpu.memory_space<vmem>>, vector<16x8xf32>,
    %c0_54 = arith.constant 0 : index
    %c0_55 = arith.constant 0 : index
    %144 = vector.load %arg11[%c0_54, %c0_55] : memref<16x32xf32, #tpu.memory_space<vmem>>, vector<16x32xf32>
    %cst_56 = arith.constant dense<0.000000e+00> : vector<16x32xf32>
    %145 = tpu.matmul %144, %39, %cst_56 {dimension_numbers = #tpu.dot_dimension_numbers<[1], [0], [0], [1], [0, 0, 1, 1], [], []>} : vector<16x32xf32>, vector<32x32xf32>, vector<16x32xf32> -> vector<16x32xf32>
    %146 = arith.addf %14, %145 : vector<16x32xf32>
    %147 = vector.broadcast %23 : vector<1x32xf32> to vector<16x32xf32>
    %148 = arith.addf %146, %147 : vector<16x32xf32>
    %c1_i32 = arith.constant 1 : i32
    %149 = tpu.dynamic_rotate %148 by %c1_i32 dim 0 : vector<16x32xf32>, i32 -> vector<16x32xf32>
    %150 = vector.broadcast %1 : vector<16x1xf32> to vector<16x32xf32>
    %151 = arith.mulf %149, %150 : vector<16x32xf32>
    %c15_i32 = arith.constant 15 : i32
    %152 = tpu.dynamic_rotate %148 by %c15_i32 dim 0 : vector<16x32xf32>, i32 -> vector<16x32xf32>
    %153 = vector.broadcast %2 : vector<16x1xf32> to vector<16x32xf32>
    %154 = arith.mulf %152, %153 : vector<16x32xf32>
    %155 = vector.broadcast %31 : vector<1x32xf32> to vector<16x32xf32>
    %156 = arith.mulf %151, %155 : vector<16x32xf32>
    %157 = vector.broadcast %32 : vector<1x32xf32> to vector<16x32xf32>
    %158 = arith.mulf %148, %157 : vector<16x32xf32>
    %159 = arith.addf %156, %158 : vector<16x32xf32>
    %160 = vector.broadcast %33 : vector<1x32xf32> to vector<16x32xf32>
    %161 = arith.mulf %154, %160 : vector<16x32xf32>
    %162 = arith.addf %159, %161 : vector<16x32xf32>
    %163 = vector.broadcast %24 : vector<1x32xf32> to vector<16x32xf32>
    %164 = arith.addf %162, %163 : vector<16x32xf32>
    %165 = arith.negf %164 : vector<16x32xf32>
    %166 = math.exp %165 : vector<16x32xf32>
    %cst_57 = arith.constant 1.000000e+00 : f32
    %167 = vector.broadcast %cst_57 : f32 to vector<16x32xf32>
    %168 = arith.addf %167, %166 : vector<16x32xf32>
    %169 = arith.divf %167, %168 : vector<16x32xf32>
    %170 = arith.mulf %164, %169 : vector<16x32xf32>
    %171 = arith.addf %148, %170 : vector<16x32xf32>
    %172 = arith.addf %171, %43 : vector<16x32xf32>
    %cst_58 = arith.constant dense<0.000000e+00> : vector<16xf32>
    %173 = vector.multi_reduction <add>, %172, %cst_58 [1] : vector<16x32xf32> to vector<16xf32>
    %174 = vector.shape_cast %173 : vector<16xf32> to vector<16x1xf32>
    %cst_59 = arith.constant 3.200000e+01 : f32
    %175 = vector.broadcast %cst_59 : f32 to vector<16x1xf32>
    %176 = arith.divf %174, %175 : vector<16x1xf32>
    %177 = vector.broadcast %176 : vector<16x1xf32> to vector<16x32xf32>
    %178 = arith.subf %172, %177 : vector<16x32xf32>
    %179 = arith.mulf %178, %178 : vector<16x32xf32>
    %cst_60 = arith.constant dense<0.000000e+00> : vector<16xf32>
    %180 = vector.multi_reduction <add>, %179, %cst_60 [1] : vector<16x32xf32> to vector<16xf32>
    %181 = vector.shape_cast %180 : vector<16xf32> to vector<16x1xf32>
    %cst_61 = arith.constant 3.200000e+01 : f32
    %182 = vector.broadcast %cst_61 : f32 to vector<16x1xf32>
    %183 = arith.divf %181, %182 : vector<16x1xf32>
    %cst_62 = arith.constant 9.99999974E-6 : f32
    %184 = vector.broadcast %cst_62 : f32 to vector<16x1xf32>
    %185 = arith.addf %183, %184 : vector<16x1xf32>
    %186 = math.rsqrt %185 : vector<16x1xf32>
    %187 = vector.broadcast %186 : vector<16x1xf32> to vector<16x32xf32>
    %188 = arith.mulf %178, %187 : vector<16x32xf32>
    %189 = vector.broadcast %25 : vector<1x32xf32> to vector<16x32xf32>
    %190 = arith.mulf %188, %189 : vector<16x32xf32>
    %191 = vector.broadcast %26 : vector<1x32xf32> to vector<16x32xf32>
    %192 = arith.addf %190, %191 : vector<16x32xf32>
    %c0_63 = arith.constant 0 : index
    %c0_64 = arith.constant 0 : index
    %c0_65 = arith.constant 0 : index
    %193 = vector.load %arg6[%c0_63, %c0_64, %c0_65] : memref<5x33x64xf32, #tpu.memory_space<vmem>>, vector<1x32x64xf32>
    %194 = vector.shape_cast %193 : vector<1x32x64xf32> to vector<32x64xf32>
    %cst_66 = arith.constant dense<0.000000e+00> : vector<16x64xf32>
    %195 = tpu.matmul %192, %194, %cst_66 {dimension_numbers = #tpu.dot_dimension_numbers<[1], [0], [0], [1], [0, 0, 1, 1], [], []>} : vector<16x32xf32>, vector<32x64xf32>, vector<16x64xf32> -> vector<16x64xf32>
    %c0_67 = arith.constant 0 : index
    %c32 = arith.constant 32 : index
    %c0_68 = arith.constant 0 : index
    %196 = vector.load %arg6[%c0_67, %c32, %c0_68] : memref<5x33x64xf32, #tpu.memory_space<vmem>>, vector<1x1x64xf32>
    %197 = vector.shape_cast %196 : vector<1x1x64xf32> to vector<1x64xf32>
    %198 = vector.broadcast %197 : vector<1x64xf32> to vector<16x64xf32>
    %199 = arith.addf %195, %198 : vector<16x64xf32>
    %cst_69 = arith.constant 5.000000e-01 : f32
    %200 = vector.broadcast %cst_69 : f32 to vector<16x64xf32>
    %201 = arith.mulf %200, %199 : vector<16x64xf32>
    %cst_70 = arith.constant 0.707106769 : f32
    %202 = vector.broadcast %cst_70 : f32 to vector<16x64xf32>
    %203 = arith.mulf %199, %202 : vector<16x64xf32>
    %cst_71 = arith.constant 0.000000e+00 : f32
    %204 = vector.broadcast %cst_71 : f32 to vector<16x64xf32>
    %205 = arith.cmpf oge, %203, %204 : vector<16x64xf32>
    %cst_72 = arith.constant 1.000000e+00 : f32
    %cst_73 = arith.constant -1.000000e+00 : f32
    %206 = vector.broadcast %cst_72 : f32 to vector<16x64xf32>
    %207 = vector.broadcast %cst_73 : f32 to vector<16x64xf32>
    %208 = arith.select %205, %206, %207 : vector<16x64xi1>, vector<16x64xf32>
    %209 = math.absf %203 : vector<16x64xf32>
    %cst_74 = arith.constant 0.327591091 : f32
    %210 = vector.broadcast %cst_74 : f32 to vector<16x64xf32>
    %211 = arith.mulf %210, %209 : vector<16x64xf32>
    %cst_75 = arith.constant 1.000000e+00 : f32
    %212 = vector.broadcast %cst_75 : f32 to vector<16x64xf32>
    %213 = arith.addf %212, %211 : vector<16x64xf32>
    %cst_76 = arith.constant 1.000000e+00 : f32
    %214 = vector.broadcast %cst_76 : f32 to vector<16x64xf32>
    %215 = arith.divf %214, %213 : vector<16x64xf32>
    %cst_77 = arith.constant 1.06140542 : f32
    %216 = vector.broadcast %cst_77 : f32 to vector<16x64xf32>
    %217 = arith.mulf %216, %215 : vector<16x64xf32>
    %cst_78 = arith.constant -1.45315206 : f32
    %218 = vector.broadcast %cst_78 : f32 to vector<16x64xf32>
    %219 = arith.addf %217, %218 : vector<16x64xf32>
    %220 = arith.mulf %219, %215 : vector<16x64xf32>
    %cst_79 = arith.constant 1.42141378 : f32
    %221 = vector.broadcast %cst_79 : f32 to vector<16x64xf32>
    %222 = arith.addf %220, %221 : vector<16x64xf32>
    %223 = arith.mulf %222, %215 : vector<16x64xf32>
    %cst_80 = arith.constant -0.284496725 : f32
    %224 = vector.broadcast %cst_80 : f32 to vector<16x64xf32>
    %225 = arith.addf %223, %224 : vector<16x64xf32>
    %226 = arith.mulf %225, %215 : vector<16x64xf32>
    %cst_81 = arith.constant 0.254829586 : f32
    %227 = vector.broadcast %cst_81 : f32 to vector<16x64xf32>
    %228 = arith.addf %226, %227 : vector<16x64xf32>
    %229 = arith.mulf %228, %215 : vector<16x64xf32>
    %cst_82 = arith.constant 0.000000e+00 : f32
    %230 = vector.broadcast %cst_82 : f32 to vector<16x64xf32>
    %231 = arith.subf %230, %209 : vector<16x64xf32>
    %232 = arith.mulf %231, %209 : vector<16x64xf32>
    %233 = math.exp %232 : vector<16x64xf32>
    %234 = arith.mulf %229, %233 : vector<16x64xf32>
    %cst_83 = arith.constant 1.000000e+00 : f32
    %235 = vector.broadcast %cst_83 : f32 to vector<16x64xf32>
    %236 = arith.subf %235, %234 : vector<16x64xf32>
    %237 = arith.mulf %208, %236 : vector<16x64xf32>
    %cst_84 = arith.constant 1.000000e+00 : f32
    %238 = vector.broadcast %cst_84 : f32 to vector<16x64xf32>
    %239 = arith.addf %238, %237 : vector<16x64xf32>
    %240 = arith.mulf %201, %239 : vector<16x64xf32>
    %c0_85 = arith.constant 0 : index
    %c0_86 = arith.constant 0 : index
    %c0_87 = arith.constant 0 : index
    %241 = vector.load %arg7[%c0_85, %c0_86, %c0_87] : memref<5x64x32xf32, #tpu.memory_space<vmem>>, vector<1x64x32xf32>
    %242 = vector.shape_cast %241 : vector<1x64x32xf32> to vector<64x32xf32>
    %cst_88 = arith.constant dense<0.000000e+00> : vector<16x32xf32>
    %243 = tpu.matmul %240, %242, %cst_88 {dimension_numbers = #tpu.dot_dimension_numbers<[1], [0], [0], [1], [0, 0, 1, 1], [], []>} : vector<16x64xf32>, vector<64x32xf32>, vector<16x32xf32> -> vector<16x32xf32>
    %244 = arith.addf %172, %243 : vector<16x32xf32>
    %245 = vector.broadcast %27 : vector<1x32xf32> to vector<16x32xf32>
    %246 = arith.addf %244, %245 : vector<16x32xf32>
    %c1_89 = arith.constant 1 : index
    %c0_90 = arith.constant 0 : index
    %c0_91 = arith.constant 0 : index
    %247 = vector.load %arg8[%c1_89, %c0_90, %c0_91] : memref<5x14x32xf32, #tpu.memory_space<vmem>>, vector<1x14x32xf32>
    %248 = vector.shape_cast %247 : vector<1x14x32xf32> to vector<14x32xf32>
    %249 = vector.extract_strided_slice %248 {offsets = [0, 0], sizes = [1, 32], strides = [1, 1]} : vector<14x32xf32> to vector<1x32xf32>
    %250 = vector.extract_strided_slice %248 {offsets = [1, 0], sizes = [1, 32], strides = [1, 1]} : vector<14x32xf32> to vector<1x32xf32>
    %251 = vector.extract_strided_slice %248 {offsets = [2, 0], sizes = [1, 32], strides = [1, 1]} : vector<14x32xf32> to vector<1x32xf32>
    %252 = vector.extract_strided_slice %248 {offsets = [3, 0], sizes = [1, 32], strides = [1, 1]} : vector<14x32xf32> to vector<1x32xf32>
    %253 = vector.extract_strided_slice %248 {offsets = [4, 0], sizes = [1, 32], strides = [1, 1]} : vector<14x32xf32> to vector<1x32xf32>
    %254 = vector.extract_strided_slice %248 {offsets = [5, 0], sizes = [1, 32], strides = [1, 1]} : vector<14x32xf32> to vector<1x32xf32>
    %255 = vector.extract_strided_slice %248 {offsets = [6, 0], sizes = [1, 32], strides = [1, 1]} : vector<14x32xf32> to vector<1x32xf32>
    %256 = vector.extract_strided_slice %248 {offsets = [7, 0], sizes = [1, 32], strides = [1, 1]} : vector<14x32xf32> to vector<1x32xf32>
    %257 = vector.extract_strided_slice %248 {offsets = [8, 0], sizes = [1, 32], strides = [1, 1]} : vector<14x32xf32> to vector<1x32xf32>
    %258 = vector.extract_strided_slice %248 {offsets = [9, 0], sizes = [1, 32], strides = [1, 1]} : vector<14x32xf32> to vector<1x32xf32>
    %259 = vector.extract_strided_slice %248 {offsets = [10, 0], sizes = [1, 32], strides = [1, 1]} : vector<14x32xf32> to vector<1x32xf32>
    %260 = vector.extract_strided_slice %248 {offsets = [11, 0], sizes = [1, 32], strides = [1, 1]} : vector<14x32xf32> to vector<1x32xf32>
    %261 = vector.extract_strided_slice %248 {offsets = [12, 0], sizes = [1, 32], strides = [1, 1]} : vector<14x32xf32> to vector<1x32xf32>
    %262 = vector.extract_strided_slice %248 {offsets = [13, 0], sizes = [1, 32], strides = [1, 1]} : vector<14x32xf32> to vector<1x32xf32>
    %c1_92 = arith.constant 1 : index
    %c0_93 = arith.constant 0 : index
    %c0_94 = arith.constant 0 : index
    %263 = vector.load %arg5[%c1_92, %c0_93, %c0_94] : memref<5x32x160xf32, #tpu.memory_space<vmem>>, vector<1x32x96xf32>
    %264 = vector.shape_cast %263 : vector<1x32x96xf32> to vector<32x96xf32>
    %c1_95 = arith.constant 1 : index
    %c0_96 = arith.constant 0 : index
    %c96_97 = arith.constant 96 : index
    %265 = vector.load %arg5[%c1_95, %c0_96, %c96_97] : memref<5x32x160xf32, #tpu.memory_space<vmem>>, vector<1x32x32xf32>
    %266 = vector.shape_cast %265 : vector<1x32x32xf32> to vector<32x32xf32>
    %c1_98 = arith.constant 1 : index
    %c0_99 = arith.constant 0 : index
    %c128_100 = arith.constant 128 : index
    %267 = vector.load %arg5[%c1_98, %c0_99, %c128_100] : memref<5x32x160xf32, #tpu.memory_space<vmem>>, vector<1x32x32xf32>
    %268 = vector.shape_cast %267 : vector<1x32x32xf32> to vector<32x32xf32>
    %cst_101 = arith.constant dense<0.000000e+00> : vector<16x32xf32>
    %269 = tpu.matmul %43, %266, %cst_101 {dimension_numbers = #tpu.dot_dimension_numbers<[1], [0], [0], [1], [0, 0, 1, 1], [], []>} : vector<16x32xf32>, vector<32x32xf32>, vector<16x32xf32> -> vector<16x32xf32>
    %270 = vector.broadcast %249 : vector<1x32xf32> to vector<16x32xf32>
    %271 = arith.addf %269, %270 : vector<16x32xf32>
    %272 = arith.addf %271, %246 : vector<16x32xf32>
    %cst_102 = arith.constant dense<0.000000e+00> : vector<16xf32>
    %273 = vector.multi_reduction <add>, %246, %cst_102 [1] : vector<16x32xf32> to vector<16xf32>
    %274 = vector.shape_cast %273 : vector<16xf32> to vector<16x1xf32>
    %cst_103 = arith.constant 3.200000e+01 : f32
    %275 = vector.broadcast %cst_103 : f32 to vector<16x1xf32>
    %276 = arith.divf %274, %275 : vector<16x1xf32>
    %277 = vector.broadcast %276 : vector<16x1xf32> to vector<16x32xf32>
    %278 = arith.subf %246, %277 : vector<16x32xf32>
    %279 = arith.mulf %278, %278 : vector<16x32xf32>
    %cst_104 = arith.constant dense<0.000000e+00> : vector<16xf32>
    %280 = vector.multi_reduction <add>, %279, %cst_104 [1] : vector<16x32xf32> to vector<16xf32>
    %281 = vector.shape_cast %280 : vector<16xf32> to vector<16x1xf32>
    %cst_105 = arith.constant 3.200000e+01 : f32
    %282 = vector.broadcast %cst_105 : f32 to vector<16x1xf32>
    %283 = arith.divf %281, %282 : vector<16x1xf32>
    %cst_106 = arith.constant 9.99999974E-6 : f32
    %284 = vector.broadcast %cst_106 : f32 to vector<16x1xf32>
    %285 = arith.addf %283, %284 : vector<16x1xf32>
    %286 = math.rsqrt %285 : vector<16x1xf32>
    %287 = vector.broadcast %286 : vector<16x1xf32> to vector<16x32xf32>
    %288 = arith.mulf %278, %287 : vector<16x32xf32>
    %289 = vector.broadcast %250 : vector<1x32xf32> to vector<16x32xf32>
    %290 = arith.mulf %288, %289 : vector<16x32xf32>
    %291 = vector.broadcast %251 : vector<1x32xf32> to vector<16x32xf32>
    %292 = arith.addf %290, %291 : vector<16x32xf32>
    %cst_107 = arith.constant dense<0.000000e+00> : vector<16x96xf32>
    %293 = tpu.matmul %292, %264, %cst_107 {dimension_numbers = #tpu.dot_dimension_numbers<[1], [0], [0], [1], [0, 0, 1, 1], [], []>} : vector<16x32xf32>, vector<32x96xf32>, vector<16x96xf32> -> vector<16x96xf32>
    %294 = vector.extract_strided_slice %293 {offsets = [0, 0], sizes = [16, 32], strides = [1, 1]} : vector<16x96xf32> to vector<16x32xf32>
    %295 = vector.broadcast %257 : vector<1x32xf32> to vector<16x32xf32>
    %296 = arith.addf %294, %295 : vector<16x32xf32>
    %cst_108 = arith.constant 0.353553385 : f32
    %297 = vector.broadcast %cst_108 : f32 to vector<16x32xf32>
    %298 = arith.mulf %296, %297 : vector<16x32xf32>
    %299 = vector.extract_strided_slice %293 {offsets = [0, 32], sizes = [16, 32], strides = [1, 1]} : vector<16x96xf32> to vector<16x32xf32>
    %300 = vector.broadcast %258 : vector<1x32xf32> to vector<16x32xf32>
    %301 = arith.addf %299, %300 : vector<16x32xf32>
    %302 = vector.extract_strided_slice %293 {offsets = [0, 64], sizes = [16, 32], strides = [1, 1]} : vector<16x96xf32> to vector<16x32xf32>
    %303 = vector.broadcast %259 : vector<1x32xf32> to vector<16x32xf32>
    %304 = arith.addf %302, %303 : vector<16x32xf32>
    %305 = vector.extract_strided_slice %298 {offsets = [0, 0], sizes = [16, 8], strides = [1, 1]} : vector<16x32xf32> to vector<16x8xf32>
    %306 = vector.extract_strided_slice %301 {offsets = [0, 0], sizes = [16, 8], strides = [1, 1]} : vector<16x32xf32> to vector<16x8xf32>
    %cst_109 = arith.constant dense<0.000000e+00> : vector<16x16xf32>
    %307 = tpu.matmul %305, %306, %cst_109 {dimension_numbers = #tpu.dot_dimension_numbers<[1], [1], [0], [0], [0, 0, 1, 0], [], []>} : vector<16x8xf32>, vector<16x8xf32>, vector<16x16xf32> -> vector<16x16xf32>
    %308 = arith.addf %307, %9 : vector<16x16xf32>
    %cst_110 = arith.constant dense<0xFF800000> : vector<16xf32>
    %309 = vector.multi_reduction <maximumf>, %308, %cst_110 [1] : vector<16x16xf32> to vector<16xf32>
    %310 = vector.shape_cast %309 : vector<16xf32> to vector<16x1xf32>
    %311 = vector.broadcast %310 : vector<16x1xf32> to vector<16x16xf32>
    %312 = arith.subf %308, %311 : vector<16x16xf32>
    %313 = math.exp %312 : vector<16x16xf32>
    %314 = vector.extract_strided_slice %304 {offsets = [0, 0], sizes = [16, 8], strides = [1, 1]} : vector<16x32xf32> to vector<16x8xf32>
    %cst_111 = arith.constant dense<0.000000e+00> : vector<16x8xf32>
    %315 = tpu.matmul %313, %314, %cst_111 {dimension_numbers = #tpu.dot_dimension_numbers<[1], [0], [0], [1], [0, 0, 1, 1], [], []>} : vector<16x16xf32>, vector<16x8xf32>, vector<16x8xf32> -> vector<16x8xf32>
    %cst_112 = arith.constant dense<0.000000e+00> : vector<16xf32>
    %316 = vector.multi_reduction <add>, %313, %cst_112 [1] : vector<16x16xf32> to vector<16xf32>
    %317 = vector.shape_cast %316 : vector<16xf32> to vector<16x1xf32>
    %318 = tpu.reciprocal %317 {approx = true} : vector<16x1xf32> -> vector<16x1xf32>
    %319 = vector.broadcast %318 : vector<16x1xf32> to vector<16x8xf32>
    %320 = arith.mulf %315, %319 : vector<16x8xf32>
    %c0_113 = arith.constant 0 : index
    %c0_114 = arith.constant 0 : index
    %321 = vector.load %arg11[%c0_113, %c0_114] : memref<16x32xf32, #tpu.memory_space<vmem>>, vector<16x8xf32>
    tpu.vector_store %arg11[%c0_113, %c0_114], %320 {strides = array<i32>} : memref<16x32xf32, #tpu.memory_space<vmem>>, vector<16x8xf32>,
    %322 = vector.extract_strided_slice %298 {offsets = [0, 8], sizes = [16, 8], strides = [1, 1]} : vector<16x32xf32> to vector<16x8xf32>
    %323 = vector.extract_strided_slice %301 {offsets = [0, 8], sizes = [16, 8], strides = [1, 1]} : vector<16x32xf32> to vector<16x8xf32>
    %cst_115 = arith.constant dense<0.000000e+00> : vector<16x16xf32>
    %324 = tpu.matmul %322, %323, %cst_115 {dimension_numbers = #tpu.dot_dimension_numbers<[1], [1], [0], [0], [0, 0, 1, 0], [], []>} : vector<16x8xf32>, vector<16x8xf32>, vector<16x16xf32> -> vector<16x16xf32>
    %325 = arith.addf %324, %9 : vector<16x16xf32>
    %cst_116 = arith.constant dense<0xFF800000> : vector<16xf32>
    %326 = vector.multi_reduction <maximumf>, %325, %cst_116 [1] : vector<16x16xf32> to vector<16xf32>
    %327 = vector.shape_cast %326 : vector<16xf32> to vector<16x1xf32>
    %328 = vector.broadcast %327 : vector<16x1xf32> to vector<16x16xf32>
    %329 = arith.subf %325, %328 : vector<16x16xf32>
    %330 = math.exp %329 : vector<16x16xf32>
    %331 = vector.extract_strided_slice %304 {offsets = [0, 8], sizes = [16, 8], strides = [1, 1]} : vector<16x32xf32> to vector<16x8xf32>
    %cst_117 = arith.constant dense<0.000000e+00> : vector<16x8xf32>
    %332 = tpu.matmul %330, %331, %cst_117 {dimension_numbers = #tpu.dot_dimension_numbers<[1], [0], [0], [1], [0, 0, 1, 1], [], []>} : vector<16x16xf32>, vector<16x8xf32>, vector<16x8xf32> -> vector<16x8xf32>
    %cst_118 = arith.constant dense<0.000000e+00> : vector<16xf32>
    %333 = vector.multi_reduction <add>, %330, %cst_118 [1] : vector<16x16xf32> to vector<16xf32>
    %334 = vector.shape_cast %333 : vector<16xf32> to vector<16x1xf32>
    %335 = tpu.reciprocal %334 {approx = true} : vector<16x1xf32> -> vector<16x1xf32>
    %336 = vector.broadcast %335 : vector<16x1xf32> to vector<16x8xf32>
    %337 = arith.mulf %332, %336 : vector<16x8xf32>
    %c0_119 = arith.constant 0 : index
    %c8_120 = arith.constant 8 : index
    %338 = vector.load %arg11[%c0_119, %c8_120] : memref<16x32xf32, #tpu.memory_space<vmem>>, vector<16x8xf32>
    tpu.vector_store %arg11[%c0_119, %c8_120], %337 {strides = array<i32>} : memref<16x32xf32, #tpu.memory_space<vmem>>, vector<16x8xf32>,
    %339 = vector.extract_strided_slice %298 {offsets = [0, 16], sizes = [16, 8], strides = [1, 1]} : vector<16x32xf32> to vector<16x8xf32>
    %340 = vector.extract_strided_slice %301 {offsets = [0, 16], sizes = [16, 8], strides = [1, 1]} : vector<16x32xf32> to vector<16x8xf32>
    %cst_121 = arith.constant dense<0.000000e+00> : vector<16x16xf32>
    %341 = tpu.matmul %339, %340, %cst_121 {dimension_numbers = #tpu.dot_dimension_numbers<[1], [1], [0], [0], [0, 0, 1, 0], [], []>} : vector<16x8xf32>, vector<16x8xf32>, vector<16x16xf32> -> vector<16x16xf32>
    %342 = arith.addf %341, %9 : vector<16x16xf32>
    %cst_122 = arith.constant dense<0xFF800000> : vector<16xf32>
    %343 = vector.multi_reduction <maximumf>, %342, %cst_122 [1] : vector<16x16xf32> to vector<16xf32>
    %344 = vector.shape_cast %343 : vector<16xf32> to vector<16x1xf32>
    %345 = vector.broadcast %344 : vector<16x1xf32> to vector<16x16xf32>
    %346 = arith.subf %342, %345 : vector<16x16xf32>
    %347 = math.exp %346 : vector<16x16xf32>
    %348 = vector.extract_strided_slice %304 {offsets = [0, 16], sizes = [16, 8], strides = [1, 1]} : vector<16x32xf32> to vector<16x8xf32>
    %cst_123 = arith.constant dense<0.000000e+00> : vector<16x8xf32>
    %349 = tpu.matmul %347, %348, %cst_123 {dimension_numbers = #tpu.dot_dimension_numbers<[1], [0], [0], [1], [0, 0, 1, 1], [], []>} : vector<16x16xf32>, vector<16x8xf32>, vector<16x8xf32> -> vector<16x8xf32>
    %cst_124 = arith.constant dense<0.000000e+00> : vector<16xf32>
    %350 = vector.multi_reduction <add>, %347, %cst_124 [1] : vector<16x16xf32> to vector<16xf32>
    %351 = vector.shape_cast %350 : vector<16xf32> to vector<16x1xf32>
    %352 = tpu.reciprocal %351 {approx = true} : vector<16x1xf32> -> vector<16x1xf32>
    %353 = vector.broadcast %352 : vector<16x1xf32> to vector<16x8xf32>
    %354 = arith.mulf %349, %353 : vector<16x8xf32>
    %c0_125 = arith.constant 0 : index
    %c16_126 = arith.constant 16 : index
    %355 = vector.load %arg11[%c0_125, %c16_126] : memref<16x32xf32, #tpu.memory_space<vmem>>, vector<16x8xf32>
    tpu.vector_store %arg11[%c0_125, %c16_126], %354 {strides = array<i32>} : memref<16x32xf32, #tpu.memory_space<vmem>>, vector<16x8xf32>,
    %356 = vector.extract_strided_slice %298 {offsets = [0, 24], sizes = [16, 8], strides = [1, 1]} : vector<16x32xf32> to vector<16x8xf32>
    %357 = vector.extract_strided_slice %301 {offsets = [0, 24], sizes = [16, 8], strides = [1, 1]} : vector<16x32xf32> to vector<16x8xf32>
    %cst_127 = arith.constant dense<0.000000e+00> : vector<16x16xf32>
    %358 = tpu.matmul %356, %357, %cst_127 {dimension_numbers = #tpu.dot_dimension_numbers<[1], [1], [0], [0], [0, 0, 1, 0], [], []>} : vector<16x8xf32>, vector<16x8xf32>, vector<16x16xf32> -> vector<16x16xf32>
    %359 = arith.addf %358, %9 : vector<16x16xf32>
    %cst_128 = arith.constant dense<0xFF800000> : vector<16xf32>
    %360 = vector.multi_reduction <maximumf>, %359, %cst_128 [1] : vector<16x16xf32> to vector<16xf32>
    %361 = vector.shape_cast %360 : vector<16xf32> to vector<16x1xf32>
    %362 = vector.broadcast %361 : vector<16x1xf32> to vector<16x16xf32>
    %363 = arith.subf %359, %362 : vector<16x16xf32>
    %364 = math.exp %363 : vector<16x16xf32>
    %365 = vector.extract_strided_slice %304 {offsets = [0, 24], sizes = [16, 8], strides = [1, 1]} : vector<16x32xf32> to vector<16x8xf32>
    %cst_129 = arith.constant dense<0.000000e+00> : vector<16x8xf32>
    %366 = tpu.matmul %364, %365, %cst_129 {dimension_numbers = #tpu.dot_dimension_numbers<[1], [0], [0], [1], [0, 0, 1, 1], [], []>} : vector<16x16xf32>, vector<16x8xf32>, vector<16x8xf32> -> vector<16x8xf32>
    %cst_130 = arith.constant dense<0.000000e+00> : vector<16xf32>
    %367 = vector.multi_reduction <add>, %364, %cst_130 [1] : vector<16x16xf32> to vector<16xf32>
    %368 = vector.shape_cast %367 : vector<16xf32> to vector<16x1xf32>
    %369 = tpu.reciprocal %368 {approx = true} : vector<16x1xf32> -> vector<16x1xf32>
    %370 = vector.broadcast %369 : vector<16x1xf32> to vector<16x8xf32>
    %371 = arith.mulf %366, %370 : vector<16x8xf32>
    %c0_131 = arith.constant 0 : index
    %c24_132 = arith.constant 24 : index
    %372 = vector.load %arg11[%c0_131, %c24_132] : memref<16x32xf32, #tpu.memory_space<vmem>>, vector<16x8xf32>
    tpu.vector_store %arg11[%c0_131, %c24_132], %371 {strides = array<i32>} : memref<16x32xf32, #tpu.memory_space<vmem>>, vector<16x8xf32>,
    %c0_133 = arith.constant 0 : index
    %c0_134 = arith.constant 0 : index
    %373 = vector.load %arg11[%c0_133, %c0_134] : memref<16x32xf32, #tpu.memory_space<vmem>>, vector<16x32xf32>
    %cst_135 = arith.constant dense<0.000000e+00> : vector<16x32xf32>
    %374 = tpu.matmul %373, %268, %cst_135 {dimension_numbers = #tpu.dot_dimension_numbers<[1], [0], [0], [1], [0, 0, 1, 1], [], []>} : vector<16x32xf32>, vector<32x32xf32>, vector<16x32xf32> -> vector<16x32xf32>
    %375 = arith.addf %246, %374 : vector<16x32xf32>
    %376 = vector.broadcast %252 : vector<1x32xf32> to vector<16x32xf32>
    %377 = arith.addf %375, %376 : vector<16x32xf32>
    %c1_i32_136 = arith.constant 1 : i32
    %378 = tpu.dynamic_rotate %377 by %c1_i32_136 dim 0 : vector<16x32xf32>, i32 -> vector<16x32xf32>
    %379 = vector.broadcast %1 : vector<16x1xf32> to vector<16x32xf32>
    %380 = arith.mulf %378, %379 : vector<16x32xf32>
    %c15_i32_137 = arith.constant 15 : i32
    %381 = tpu.dynamic_rotate %377 by %c15_i32_137 dim 0 : vector<16x32xf32>, i32 -> vector<16x32xf32>
    %382 = vector.broadcast %2 : vector<16x1xf32> to vector<16x32xf32>
    %383 = arith.mulf %381, %382 : vector<16x32xf32>
    %384 = vector.broadcast %260 : vector<1x32xf32> to vector<16x32xf32>
    %385 = arith.mulf %380, %384 : vector<16x32xf32>
    %386 = vector.broadcast %261 : vector<1x32xf32> to vector<16x32xf32>
    %387 = arith.mulf %377, %386 : vector<16x32xf32>
    %388 = arith.addf %385, %387 : vector<16x32xf32>
    %389 = vector.broadcast %262 : vector<1x32xf32> to vector<16x32xf32>
    %390 = arith.mulf %383, %389 : vector<16x32xf32>
    %391 = arith.addf %388, %390 : vector<16x32xf32>
    %392 = vector.broadcast %253 : vector<1x32xf32> to vector<16x32xf32>
    %393 = arith.addf %391, %392 : vector<16x32xf32>
    %394 = arith.negf %393 : vector<16x32xf32>
    %395 = math.exp %394 : vector<16x32xf32>
    %cst_138 = arith.constant 1.000000e+00 : f32
    %396 = vector.broadcast %cst_138 : f32 to vector<16x32xf32>
    %397 = arith.addf %396, %395 : vector<16x32xf32>
    %398 = arith.divf %396, %397 : vector<16x32xf32>
    %399 = arith.mulf %393, %398 : vector<16x32xf32>
    %400 = arith.addf %377, %399 : vector<16x32xf32>
    %401 = arith.addf %400, %272 : vector<16x32xf32>
    %cst_139 = arith.constant dense<0.000000e+00> : vector<16xf32>
    %402 = vector.multi_reduction <add>, %401, %cst_139 [1] : vector<16x32xf32> to vector<16xf32>
    %403 = vector.shape_cast %402 : vector<16xf32> to vector<16x1xf32>
    %cst_140 = arith.constant 3.200000e+01 : f32
    %404 = vector.broadcast %cst_140 : f32 to vector<16x1xf32>
    %405 = arith.divf %403, %404 : vector<16x1xf32>
    %406 = vector.broadcast %405 : vector<16x1xf32> to vector<16x32xf32>
    %407 = arith.subf %401, %406 : vector<16x32xf32>
    %408 = arith.mulf %407, %407 : vector<16x32xf32>
    %cst_141 = arith.constant dense<0.000000e+00> : vector<16xf32>
    %409 = vector.multi_reduction <add>, %408, %cst_141 [1] : vector<16x32xf32> to vector<16xf32>
    %410 = vector.shape_cast %409 : vector<16xf32> to vector<16x1xf32>
    %cst_142 = arith.constant 3.200000e+01 : f32
    %411 = vector.broadcast %cst_142 : f32 to vector<16x1xf32>
    %412 = arith.divf %410, %411 : vector<16x1xf32>
    %cst_143 = arith.constant 9.99999974E-6 : f32
    %413 = vector.broadcast %cst_143 : f32 to vector<16x1xf32>
    %414 = arith.addf %412, %413 : vector<16x1xf32>
    %415 = math.rsqrt %414 : vector<16x1xf32>
    %416 = vector.broadcast %415 : vector<16x1xf32> to vector<16x32xf32>
    %417 = arith.mulf %407, %416 : vector<16x32xf32>
    %418 = vector.broadcast %254 : vector<1x32xf32> to vector<16x32xf32>
    %419 = arith.mulf %417, %418 : vector<16x32xf32>
    %420 = vector.broadcast %255 : vector<1x32xf32> to vector<16x32xf32>
    %421 = arith.addf %419, %420 : vector<16x32xf32>
    %c1_144 = arith.constant 1 : index
    %c0_145 = arith.constant 0 : index
    %c0_146 = arith.constant 0 : index
    %422 = vector.load %arg6[%c1_144, %c0_145, %c0_146] : memref<5x33x64xf32, #tpu.memory_space<vmem>>, vector<1x32x64xf32>
    %423 = vector.shape_cast %422 : vector<1x32x64xf32> to vector<32x64xf32>
    %cst_147 = arith.constant dense<0.000000e+00> : vector<16x64xf32>
    %424 = tpu.matmul %421, %423, %cst_147 {dimension_numbers = #tpu.dot_dimension_numbers<[1], [0], [0], [1], [0, 0, 1, 1], [], []>} : vector<16x32xf32>, vector<32x64xf32>, vector<16x64xf32> -> vector<16x64xf32>
    %c1_148 = arith.constant 1 : index
    %c32_149 = arith.constant 32 : index
    %c0_150 = arith.constant 0 : index
    %425 = vector.load %arg6[%c1_148, %c32_149, %c0_150] : memref<5x33x64xf32, #tpu.memory_space<vmem>>, vector<1x1x64xf32>
    %426 = vector.shape_cast %425 : vector<1x1x64xf32> to vector<1x64xf32>
    %427 = vector.broadcast %426 : vector<1x64xf32> to vector<16x64xf32>
    %428 = arith.addf %424, %427 : vector<16x64xf32>
    %cst_151 = arith.constant 5.000000e-01 : f32
    %429 = vector.broadcast %cst_151 : f32 to vector<16x64xf32>
    %430 = arith.mulf %429, %428 : vector<16x64xf32>
    %cst_152 = arith.constant 0.707106769 : f32
    %431 = vector.broadcast %cst_152 : f32 to vector<16x64xf32>
    %432 = arith.mulf %428, %431 : vector<16x64xf32>
    %cst_153 = arith.constant 0.000000e+00 : f32
    %433 = vector.broadcast %cst_153 : f32 to vector<16x64xf32>
    %434 = arith.cmpf oge, %432, %433 : vector<16x64xf32>
    %cst_154 = arith.constant 1.000000e+00 : f32
    %cst_155 = arith.constant -1.000000e+00 : f32
    %435 = vector.broadcast %cst_154 : f32 to vector<16x64xf32>
    %436 = vector.broadcast %cst_155 : f32 to vector<16x64xf32>
    %437 = arith.select %434, %435, %436 : vector<16x64xi1>, vector<16x64xf32>
    %438 = math.absf %432 : vector<16x64xf32>
    %cst_156 = arith.constant 0.327591091 : f32
    %439 = vector.broadcast %cst_156 : f32 to vector<16x64xf32>
    %440 = arith.mulf %439, %438 : vector<16x64xf32>
    %cst_157 = arith.constant 1.000000e+00 : f32
    %441 = vector.broadcast %cst_157 : f32 to vector<16x64xf32>
    %442 = arith.addf %441, %440 : vector<16x64xf32>
    %cst_158 = arith.constant 1.000000e+00 : f32
    %443 = vector.broadcast %cst_158 : f32 to vector<16x64xf32>
    %444 = arith.divf %443, %442 : vector<16x64xf32>
    %cst_159 = arith.constant 1.06140542 : f32
    %445 = vector.broadcast %cst_159 : f32 to vector<16x64xf32>
    %446 = arith.mulf %445, %444 : vector<16x64xf32>
    %cst_160 = arith.constant -1.45315206 : f32
    %447 = vector.broadcast %cst_160 : f32 to vector<16x64xf32>
    %448 = arith.addf %446, %447 : vector<16x64xf32>
    %449 = arith.mulf %448, %444 : vector<16x64xf32>
    %cst_161 = arith.constant 1.42141378 : f32
    %450 = vector.broadcast %cst_161 : f32 to vector<16x64xf32>
    %451 = arith.addf %449, %450 : vector<16x64xf32>
    %452 = arith.mulf %451, %444 : vector<16x64xf32>
    %cst_162 = arith.constant -0.284496725 : f32
    %453 = vector.broadcast %cst_162 : f32 to vector<16x64xf32>
    %454 = arith.addf %452, %453 : vector<16x64xf32>
    %455 = arith.mulf %454, %444 : vector<16x64xf32>
    %cst_163 = arith.constant 0.254829586 : f32
    %456 = vector.broadcast %cst_163 : f32 to vector<16x64xf32>
    %457 = arith.addf %455, %456 : vector<16x64xf32>
    %458 = arith.mulf %457, %444 : vector<16x64xf32>
    %cst_164 = arith.constant 0.000000e+00 : f32
    %459 = vector.broadcast %cst_164 : f32 to vector<16x64xf32>
    %460 = arith.subf %459, %438 : vector<16x64xf32>
    %461 = arith.mulf %460, %438 : vector<16x64xf32>
    %462 = math.exp %461 : vector<16x64xf32>
    %463 = arith.mulf %458, %462 : vector<16x64xf32>
    %cst_165 = arith.constant 1.000000e+00 : f32
    %464 = vector.broadcast %cst_165 : f32 to vector<16x64xf32>
    %465 = arith.subf %464, %463 : vector<16x64xf32>
    %466 = arith.mulf %437, %465 : vector<16x64xf32>
    %cst_166 = arith.constant 1.000000e+00 : f32
    %467 = vector.broadcast %cst_166 : f32 to vector<16x64xf32>
    %468 = arith.addf %467, %466 : vector<16x64xf32>
    %469 = arith.mulf %430, %468 : vector<16x64xf32>
    %c1_167 = arith.constant 1 : index
    %c0_168 = arith.constant 0 : index
    %c0_169 = arith.constant 0 : index
    %470 = vector.load %arg7[%c1_167, %c0_168, %c0_169] : memref<5x64x32xf32, #tpu.memory_space<vmem>>, vector<1x64x32xf32>
    %471 = vector.shape_cast %470 : vector<1x64x32xf32> to vector<64x32xf32>
    %cst_170 = arith.constant dense<0.000000e+00> : vector<16x32xf32>
    %472 = tpu.matmul %469, %471, %cst_170 {dimension_numbers = #tpu.dot_dimension_numbers<[1], [0], [0], [1], [0, 0, 1, 1], [], []>} : vector<16x64xf32>, vector<64x32xf32>, vector<16x32xf32> -> vector<16x32xf32>
    %473 = arith.addf %401, %472 : vector<16x32xf32>
    %474 = vector.broadcast %256 : vector<1x32xf32> to vector<16x32xf32>
    %475 = arith.addf %473, %474 : vector<16x32xf32>
    %c2_171 = arith.constant 2 : index
    %c0_172 = arith.constant 0 : index
    %c0_173 = arith.constant 0 : index
    %476 = vector.load %arg8[%c2_171, %c0_172, %c0_173] : memref<5x14x32xf32, #tpu.memory_space<vmem>>, vector<1x14x32xf32>
    %477 = vector.shape_cast %476 : vector<1x14x32xf32> to vector<14x32xf32>
    %478 = vector.extract_strided_slice %477 {offsets = [0, 0], sizes = [1, 32], strides = [1, 1]} : vector<14x32xf32> to vector<1x32xf32>
    %479 = vector.extract_strided_slice %477 {offsets = [1, 0], sizes = [1, 32], strides = [1, 1]} : vector<14x32xf32> to vector<1x32xf32>
    %480 = vector.extract_strided_slice %477 {offsets = [2, 0], sizes = [1, 32], strides = [1, 1]} : vector<14x32xf32> to vector<1x32xf32>
    %481 = vector.extract_strided_slice %477 {offsets = [3, 0], sizes = [1, 32], strides = [1, 1]} : vector<14x32xf32> to vector<1x32xf32>
    %482 = vector.extract_strided_slice %477 {offsets = [4, 0], sizes = [1, 32], strides = [1, 1]} : vector<14x32xf32> to vector<1x32xf32>
    %483 = vector.extract_strided_slice %477 {offsets = [5, 0], sizes = [1, 32], strides = [1, 1]} : vector<14x32xf32> to vector<1x32xf32>
    %484 = vector.extract_strided_slice %477 {offsets = [6, 0], sizes = [1, 32], strides = [1, 1]} : vector<14x32xf32> to vector<1x32xf32>
    %485 = vector.extract_strided_slice %477 {offsets = [7, 0], sizes = [1, 32], strides = [1, 1]} : vector<14x32xf32> to vector<1x32xf32>
    %486 = vector.extract_strided_slice %477 {offsets = [8, 0], sizes = [1, 32], strides = [1, 1]} : vector<14x32xf32> to vector<1x32xf32>
    %487 = vector.extract_strided_slice %477 {offsets = [9, 0], sizes = [1, 32], strides = [1, 1]} : vector<14x32xf32> to vector<1x32xf32>
    %488 = vector.extract_strided_slice %477 {offsets = [10, 0], sizes = [1, 32], strides = [1, 1]} : vector<14x32xf32> to vector<1x32xf32>
    %489 = vector.extract_strided_slice %477 {offsets = [11, 0], sizes = [1, 32], strides = [1, 1]} : vector<14x32xf32> to vector<1x32xf32>
    %490 = vector.extract_strided_slice %477 {offsets = [12, 0], sizes = [1, 32], strides = [1, 1]} : vector<14x32xf32> to vector<1x32xf32>
    %491 = vector.extract_strided_slice %477 {offsets = [13, 0], sizes = [1, 32], strides = [1, 1]} : vector<14x32xf32> to vector<1x32xf32>
    %c2_174 = arith.constant 2 : index
    %c0_175 = arith.constant 0 : index
    %c0_176 = arith.constant 0 : index
    %492 = vector.load %arg5[%c2_174, %c0_175, %c0_176] : memref<5x32x160xf32, #tpu.memory_space<vmem>>, vector<1x32x96xf32>
    %493 = vector.shape_cast %492 : vector<1x32x96xf32> to vector<32x96xf32>
    %c2_177 = arith.constant 2 : index
    %c0_178 = arith.constant 0 : index
    %c96_179 = arith.constant 96 : index
    %494 = vector.load %arg5[%c2_177, %c0_178, %c96_179] : memref<5x32x160xf32, #tpu.memory_space<vmem>>, vector<1x32x32xf32>
    %495 = vector.shape_cast %494 : vector<1x32x32xf32> to vector<32x32xf32>
    %c2_180 = arith.constant 2 : index
    %c0_181 = arith.constant 0 : index
    %c128_182 = arith.constant 128 : index
    %496 = vector.load %arg5[%c2_180, %c0_181, %c128_182] : memref<5x32x160xf32, #tpu.memory_space<vmem>>, vector<1x32x32xf32>
    %497 = vector.shape_cast %496 : vector<1x32x32xf32> to vector<32x32xf32>
    %cst_183 = arith.constant dense<0.000000e+00> : vector<16x32xf32>
    %498 = tpu.matmul %272, %495, %cst_183 {dimension_numbers = #tpu.dot_dimension_numbers<[1], [0], [0], [1], [0, 0, 1, 1], [], []>} : vector<16x32xf32>, vector<32x32xf32>, vector<16x32xf32> -> vector<16x32xf32>
    %499 = vector.broadcast %478 : vector<1x32xf32> to vector<16x32xf32>
    %500 = arith.addf %498, %499 : vector<16x32xf32>
    %501 = arith.addf %500, %475 : vector<16x32xf32>
    %cst_184 = arith.constant dense<0.000000e+00> : vector<16xf32>
    %502 = vector.multi_reduction <add>, %475, %cst_184 [1] : vector<16x32xf32> to vector<16xf32>
    %503 = vector.shape_cast %502 : vector<16xf32> to vector<16x1xf32>
    %cst_185 = arith.constant 3.200000e+01 : f32
    %504 = vector.broadcast %cst_185 : f32 to vector<16x1xf32>
    %505 = arith.divf %503, %504 : vector<16x1xf32>
    %506 = vector.broadcast %505 : vector<16x1xf32> to vector<16x32xf32>
    %507 = arith.subf %475, %506 : vector<16x32xf32>
    %508 = arith.mulf %507, %507 : vector<16x32xf32>
    %cst_186 = arith.constant dense<0.000000e+00> : vector<16xf32>
    %509 = vector.multi_reduction <add>, %508, %cst_186 [1] : vector<16x32xf32> to vector<16xf32>
    %510 = vector.shape_cast %509 : vector<16xf32> to vector<16x1xf32>
    %cst_187 = arith.constant 3.200000e+01 : f32
    %511 = vector.broadcast %cst_187 : f32 to vector<16x1xf32>
    %512 = arith.divf %510, %511 : vector<16x1xf32>
    %cst_188 = arith.constant 9.99999974E-6 : f32
    %513 = vector.broadcast %cst_188 : f32 to vector<16x1xf32>
    %514 = arith.addf %512, %513 : vector<16x1xf32>
    %515 = math.rsqrt %514 : vector<16x1xf32>
    %516 = vector.broadcast %515 : vector<16x1xf32> to vector<16x32xf32>
    %517 = arith.mulf %507, %516 : vector<16x32xf32>
    %518 = vector.broadcast %479 : vector<1x32xf32> to vector<16x32xf32>
    %519 = arith.mulf %517, %518 : vector<16x32xf32>
    %520 = vector.broadcast %480 : vector<1x32xf32> to vector<16x32xf32>
    %521 = arith.addf %519, %520 : vector<16x32xf32>
    %cst_189 = arith.constant dense<0.000000e+00> : vector<16x96xf32>
    %522 = tpu.matmul %521, %493, %cst_189 {dimension_numbers = #tpu.dot_dimension_numbers<[1], [0], [0], [1], [0, 0, 1, 1], [], []>} : vector<16x32xf32>, vector<32x96xf32>, vector<16x96xf32> -> vector<16x96xf32>
    %523 = vector.extract_strided_slice %522 {offsets = [0, 0], sizes = [16, 32], strides = [1, 1]} : vector<16x96xf32> to vector<16x32xf32>
    %524 = vector.broadcast %486 : vector<1x32xf32> to vector<16x32xf32>
    %525 = arith.addf %523, %524 : vector<16x32xf32>
    %cst_190 = arith.constant 0.353553385 : f32
    %526 = vector.broadcast %cst_190 : f32 to vector<16x32xf32>
    %527 = arith.mulf %525, %526 : vector<16x32xf32>
    %528 = vector.extract_strided_slice %522 {offsets = [0, 32], sizes = [16, 32], strides = [1, 1]} : vector<16x96xf32> to vector<16x32xf32>
    %529 = vector.broadcast %487 : vector<1x32xf32> to vector<16x32xf32>
    %530 = arith.addf %528, %529 : vector<16x32xf32>
    %531 = vector.extract_strided_slice %522 {offsets = [0, 64], sizes = [16, 32], strides = [1, 1]} : vector<16x96xf32> to vector<16x32xf32>
    %532 = vector.broadcast %488 : vector<1x32xf32> to vector<16x32xf32>
    %533 = arith.addf %531, %532 : vector<16x32xf32>
    %534 = vector.extract_strided_slice %527 {offsets = [0, 0], sizes = [16, 8], strides = [1, 1]} : vector<16x32xf32> to vector<16x8xf32>
    %535 = vector.extract_strided_slice %530 {offsets = [0, 0], sizes = [16, 8], strides = [1, 1]} : vector<16x32xf32> to vector<16x8xf32>
    %cst_191 = arith.constant dense<0.000000e+00> : vector<16x16xf32>
    %536 = tpu.matmul %534, %535, %cst_191 {dimension_numbers = #tpu.dot_dimension_numbers<[1], [1], [0], [0], [0, 0, 1, 0], [], []>} : vector<16x8xf32>, vector<16x8xf32>, vector<16x16xf32> -> vector<16x16xf32>
    %537 = arith.addf %536, %9 : vector<16x16xf32>
    %cst_192 = arith.constant dense<0xFF800000> : vector<16xf32>
    %538 = vector.multi_reduction <maximumf>, %537, %cst_192 [1] : vector<16x16xf32> to vector<16xf32>
    %539 = vector.shape_cast %538 : vector<16xf32> to vector<16x1xf32>
    %540 = vector.broadcast %539 : vector<16x1xf32> to vector<16x16xf32>
    %541 = arith.subf %537, %540 : vector<16x16xf32>
    %542 = math.exp %541 : vector<16x16xf32>
    %543 = vector.extract_strided_slice %533 {offsets = [0, 0], sizes = [16, 8], strides = [1, 1]} : vector<16x32xf32> to vector<16x8xf32>
    %cst_193 = arith.constant dense<0.000000e+00> : vector<16x8xf32>
    %544 = tpu.matmul %542, %543, %cst_193 {dimension_numbers = #tpu.dot_dimension_numbers<[1], [0], [0], [1], [0, 0, 1, 1], [], []>} : vector<16x16xf32>, vector<16x8xf32>, vector<16x8xf32> -> vector<16x8xf32>
    %cst_194 = arith.constant dense<0.000000e+00> : vector<16xf32>
    %545 = vector.multi_reduction <add>, %542, %cst_194 [1] : vector<16x16xf32> to vector<16xf32>
    %546 = vector.shape_cast %545 : vector<16xf32> to vector<16x1xf32>
    %547 = tpu.reciprocal %546 {approx = true} : vector<16x1xf32> -> vector<16x1xf32>
    %548 = vector.broadcast %547 : vector<16x1xf32> to vector<16x8xf32>
    %549 = arith.mulf %544, %548 : vector<16x8xf32>
    %c0_195 = arith.constant 0 : index
    %c0_196 = arith.constant 0 : index
    %550 = vector.load %arg11[%c0_195, %c0_196] : memref<16x32xf32, #tpu.memory_space<vmem>>, vector<16x8xf32>
    tpu.vector_store %arg11[%c0_195, %c0_196], %549 {strides = array<i32>} : memref<16x32xf32, #tpu.memory_space<vmem>>, vector<16x8xf32>,
    %551 = vector.extract_strided_slice %527 {offsets = [0, 8], sizes = [16, 8], strides = [1, 1]} : vector<16x32xf32> to vector<16x8xf32>
    %552 = vector.extract_strided_slice %530 {offsets = [0, 8], sizes = [16, 8], strides = [1, 1]} : vector<16x32xf32> to vector<16x8xf32>
    %cst_197 = arith.constant dense<0.000000e+00> : vector<16x16xf32>
    %553 = tpu.matmul %551, %552, %cst_197 {dimension_numbers = #tpu.dot_dimension_numbers<[1], [1], [0], [0], [0, 0, 1, 0], [], []>} : vector<16x8xf32>, vector<16x8xf32>, vector<16x16xf32> -> vector<16x16xf32>
    %554 = arith.addf %553, %9 : vector<16x16xf32>
    %cst_198 = arith.constant dense<0xFF800000> : vector<16xf32>
    %555 = vector.multi_reduction <maximumf>, %554, %cst_198 [1] : vector<16x16xf32> to vector<16xf32>
    %556 = vector.shape_cast %555 : vector<16xf32> to vector<16x1xf32>
    %557 = vector.broadcast %556 : vector<16x1xf32> to vector<16x16xf32>
    %558 = arith.subf %554, %557 : vector<16x16xf32>
    %559 = math.exp %558 : vector<16x16xf32>
    %560 = vector.extract_strided_slice %533 {offsets = [0, 8], sizes = [16, 8], strides = [1, 1]} : vector<16x32xf32> to vector<16x8xf32>
    %cst_199 = arith.constant dense<0.000000e+00> : vector<16x8xf32>
    %561 = tpu.matmul %559, %560, %cst_199 {dimension_numbers = #tpu.dot_dimension_numbers<[1], [0], [0], [1], [0, 0, 1, 1], [], []>} : vector<16x16xf32>, vector<16x8xf32>, vector<16x8xf32> -> vector<16x8xf32>
    %cst_200 = arith.constant dense<0.000000e+00> : vector<16xf32>
    %562 = vector.multi_reduction <add>, %559, %cst_200 [1] : vector<16x16xf32> to vector<16xf32>
    %563 = vector.shape_cast %562 : vector<16xf32> to vector<16x1xf32>
    %564 = tpu.reciprocal %563 {approx = true} : vector<16x1xf32> -> vector<16x1xf32>
    %565 = vector.broadcast %564 : vector<16x1xf32> to vector<16x8xf32>
    %566 = arith.mulf %561, %565 : vector<16x8xf32>
    %c0_201 = arith.constant 0 : index
    %c8_202 = arith.constant 8 : index
    %567 = vector.load %arg11[%c0_201, %c8_202] : memref<16x32xf32, #tpu.memory_space<vmem>>, vector<16x8xf32>
    tpu.vector_store %arg11[%c0_201, %c8_202], %566 {strides = array<i32>} : memref<16x32xf32, #tpu.memory_space<vmem>>, vector<16x8xf32>,
    %568 = vector.extract_strided_slice %527 {offsets = [0, 16], sizes = [16, 8], strides = [1, 1]} : vector<16x32xf32> to vector<16x8xf32>
    %569 = vector.extract_strided_slice %530 {offsets = [0, 16], sizes = [16, 8], strides = [1, 1]} : vector<16x32xf32> to vector<16x8xf32>
    %cst_203 = arith.constant dense<0.000000e+00> : vector<16x16xf32>
    %570 = tpu.matmul %568, %569, %cst_203 {dimension_numbers = #tpu.dot_dimension_numbers<[1], [1], [0], [0], [0, 0, 1, 0], [], []>} : vector<16x8xf32>, vector<16x8xf32>, vector<16x16xf32> -> vector<16x16xf32>
    %571 = arith.addf %570, %9 : vector<16x16xf32>
    %cst_204 = arith.constant dense<0xFF800000> : vector<16xf32>
    %572 = vector.multi_reduction <maximumf>, %571, %cst_204 [1] : vector<16x16xf32> to vector<16xf32>
    %573 = vector.shape_cast %572 : vector<16xf32> to vector<16x1xf32>
    %574 = vector.broadcast %573 : vector<16x1xf32> to vector<16x16xf32>
    %575 = arith.subf %571, %574 : vector<16x16xf32>
    %576 = math.exp %575 : vector<16x16xf32>
    %577 = vector.extract_strided_slice %533 {offsets = [0, 16], sizes = [16, 8], strides = [1, 1]} : vector<16x32xf32> to vector<16x8xf32>
    %cst_205 = arith.constant dense<0.000000e+00> : vector<16x8xf32>
    %578 = tpu.matmul %576, %577, %cst_205 {dimension_numbers = #tpu.dot_dimension_numbers<[1], [0], [0], [1], [0, 0, 1, 1], [], []>} : vector<16x16xf32>, vector<16x8xf32>, vector<16x8xf32> -> vector<16x8xf32>
    %cst_206 = arith.constant dense<0.000000e+00> : vector<16xf32>
    %579 = vector.multi_reduction <add>, %576, %cst_206 [1] : vector<16x16xf32> to vector<16xf32>
    %580 = vector.shape_cast %579 : vector<16xf32> to vector<16x1xf32>
    %581 = tpu.reciprocal %580 {approx = true} : vector<16x1xf32> -> vector<16x1xf32>
    %582 = vector.broadcast %581 : vector<16x1xf32> to vector<16x8xf32>
    %583 = arith.mulf %578, %582 : vector<16x8xf32>
    %c0_207 = arith.constant 0 : index
    %c16_208 = arith.constant 16 : index
    %584 = vector.load %arg11[%c0_207, %c16_208] : memref<16x32xf32, #tpu.memory_space<vmem>>, vector<16x8xf32>
    tpu.vector_store %arg11[%c0_207, %c16_208], %583 {strides = array<i32>} : memref<16x32xf32, #tpu.memory_space<vmem>>, vector<16x8xf32>,
    %585 = vector.extract_strided_slice %527 {offsets = [0, 24], sizes = [16, 8], strides = [1, 1]} : vector<16x32xf32> to vector<16x8xf32>
    %586 = vector.extract_strided_slice %530 {offsets = [0, 24], sizes = [16, 8], strides = [1, 1]} : vector<16x32xf32> to vector<16x8xf32>
    %cst_209 = arith.constant dense<0.000000e+00> : vector<16x16xf32>
    %587 = tpu.matmul %585, %586, %cst_209 {dimension_numbers = #tpu.dot_dimension_numbers<[1], [1], [0], [0], [0, 0, 1, 0], [], []>} : vector<16x8xf32>, vector<16x8xf32>, vector<16x16xf32> -> vector<16x16xf32>
    %588 = arith.addf %587, %9 : vector<16x16xf32>
    %cst_210 = arith.constant dense<0xFF800000> : vector<16xf32>
    %589 = vector.multi_reduction <maximumf>, %588, %cst_210 [1] : vector<16x16xf32> to vector<16xf32>
    %590 = vector.shape_cast %589 : vector<16xf32> to vector<16x1xf32>
    %591 = vector.broadcast %590 : vector<16x1xf32> to vector<16x16xf32>
    %592 = arith.subf %588, %591 : vector<16x16xf32>
    %593 = math.exp %592 : vector<16x16xf32>
    %594 = vector.extract_strided_slice %533 {offsets = [0, 24], sizes = [16, 8], strides = [1, 1]} : vector<16x32xf32> to vector<16x8xf32>
    %cst_211 = arith.constant dense<0.000000e+00> : vector<16x8xf32>
    %595 = tpu.matmul %593, %594, %cst_211 {dimension_numbers = #tpu.dot_dimension_numbers<[1], [0], [0], [1], [0, 0, 1, 1], [], []>} : vector<16x16xf32>, vector<16x8xf32>, vector<16x8xf32> -> vector<16x8xf32>
    %cst_212 = arith.constant dense<0.000000e+00> : vector<16xf32>
    %596 = vector.multi_reduction <add>, %593, %cst_212 [1] : vector<16x16xf32> to vector<16xf32>
    %597 = vector.shape_cast %596 : vector<16xf32> to vector<16x1xf32>
    %598 = tpu.reciprocal %597 {approx = true} : vector<16x1xf32> -> vector<16x1xf32>
    %599 = vector.broadcast %598 : vector<16x1xf32> to vector<16x8xf32>
    %600 = arith.mulf %595, %599 : vector<16x8xf32>
    %c0_213 = arith.constant 0 : index
    %c24_214 = arith.constant 24 : index
    %601 = vector.load %arg11[%c0_213, %c24_214] : memref<16x32xf32, #tpu.memory_space<vmem>>, vector<16x8xf32>
    tpu.vector_store %arg11[%c0_213, %c24_214], %600 {strides = array<i32>} : memref<16x32xf32, #tpu.memory_space<vmem>>, vector<16x8xf32>,
    %c0_215 = arith.constant 0 : index
    %c0_216 = arith.constant 0 : index
    %602 = vector.load %arg11[%c0_215, %c0_216] : memref<16x32xf32, #tpu.memory_space<vmem>>, vector<16x32xf32>
    %cst_217 = arith.constant dense<0.000000e+00> : vector<16x32xf32>
    %603 = tpu.matmul %602, %497, %cst_217 {dimension_numbers = #tpu.dot_dimension_numbers<[1], [0], [0], [1], [0, 0, 1, 1], [], []>} : vector<16x32xf32>, vector<32x32xf32>, vector<16x32xf32> -> vector<16x32xf32>
    %604 = arith.addf %475, %603 : vector<16x32xf32>
    %605 = vector.broadcast %481 : vector<1x32xf32> to vector<16x32xf32>
    %606 = arith.addf %604, %605 : vector<16x32xf32>
    %c1_i32_218 = arith.constant 1 : i32
    %607 = tpu.dynamic_rotate %606 by %c1_i32_218 dim 0 : vector<16x32xf32>, i32 -> vector<16x32xf32>
    %608 = vector.broadcast %1 : vector<16x1xf32> to vector<16x32xf32>
    %609 = arith.mulf %607, %608 : vector<16x32xf32>
    %c15_i32_219 = arith.constant 15 : i32
    %610 = tpu.dynamic_rotate %606 by %c15_i32_219 dim 0 : vector<16x32xf32>, i32 -> vector<16x32xf32>
    %611 = vector.broadcast %2 : vector<16x1xf32> to vector<16x32xf32>
    %612 = arith.mulf %610, %611 : vector<16x32xf32>
    %613 = vector.broadcast %489 : vector<1x32xf32> to vector<16x32xf32>
    %614 = arith.mulf %609, %613 : vector<16x32xf32>
    %615 = vector.broadcast %490 : vector<1x32xf32> to vector<16x32xf32>
    %616 = arith.mulf %606, %615 : vector<16x32xf32>
    %617 = arith.addf %614, %616 : vector<16x32xf32>
    %618 = vector.broadcast %491 : vector<1x32xf32> to vector<16x32xf32>
    %619 = arith.mulf %612, %618 : vector<16x32xf32>
    %620 = arith.addf %617, %619 : vector<16x32xf32>
    %621 = vector.broadcast %482 : vector<1x32xf32> to vector<16x32xf32>
    %622 = arith.addf %620, %621 : vector<16x32xf32>
    %623 = arith.negf %622 : vector<16x32xf32>
    %624 = math.exp %623 : vector<16x32xf32>
    %cst_220 = arith.constant 1.000000e+00 : f32
    %625 = vector.broadcast %cst_220 : f32 to vector<16x32xf32>
    %626 = arith.addf %625, %624 : vector<16x32xf32>
    %627 = arith.divf %625, %626 : vector<16x32xf32>
    %628 = arith.mulf %622, %627 : vector<16x32xf32>
    %629 = arith.addf %606, %628 : vector<16x32xf32>
    %630 = arith.addf %629, %501 : vector<16x32xf32>
    %cst_221 = arith.constant dense<0.000000e+00> : vector<16xf32>
    %631 = vector.multi_reduction <add>, %630, %cst_221 [1] : vector<16x32xf32> to vector<16xf32>
    %632 = vector.shape_cast %631 : vector<16xf32> to vector<16x1xf32>
    %cst_222 = arith.constant 3.200000e+01 : f32
    %633 = vector.broadcast %cst_222 : f32 to vector<16x1xf32>
    %634 = arith.divf %632, %633 : vector<16x1xf32>
    %635 = vector.broadcast %634 : vector<16x1xf32> to vector<16x32xf32>
    %636 = arith.subf %630, %635 : vector<16x32xf32>
    %637 = arith.mulf %636, %636 : vector<16x32xf32>
    %cst_223 = arith.constant dense<0.000000e+00> : vector<16xf32>
    %638 = vector.multi_reduction <add>, %637, %cst_223 [1] : vector<16x32xf32> to vector<16xf32>
    %639 = vector.shape_cast %638 : vector<16xf32> to vector<16x1xf32>
    %cst_224 = arith.constant 3.200000e+01 : f32
    %640 = vector.broadcast %cst_224 : f32 to vector<16x1xf32>
    %641 = arith.divf %639, %640 : vector<16x1xf32>
    %cst_225 = arith.constant 9.99999974E-6 : f32
    %642 = vector.broadcast %cst_225 : f32 to vector<16x1xf32>
    %643 = arith.addf %641, %642 : vector<16x1xf32>
    %644 = math.rsqrt %643 : vector<16x1xf32>
    %645 = vector.broadcast %644 : vector<16x1xf32> to vector<16x32xf32>
    %646 = arith.mulf %636, %645 : vector<16x32xf32>
    %647 = vector.broadcast %483 : vector<1x32xf32> to vector<16x32xf32>
    %648 = arith.mulf %646, %647 : vector<16x32xf32>
    %649 = vector.broadcast %484 : vector<1x32xf32> to vector<16x32xf32>
    %650 = arith.addf %648, %649 : vector<16x32xf32>
    %c2_226 = arith.constant 2 : index
    %c0_227 = arith.constant 0 : index
    %c0_228 = arith.constant 0 : index
    %651 = vector.load %arg6[%c2_226, %c0_227, %c0_228] : memref<5x33x64xf32, #tpu.memory_space<vmem>>, vector<1x32x64xf32>
    %652 = vector.shape_cast %651 : vector<1x32x64xf32> to vector<32x64xf32>
    %cst_229 = arith.constant dense<0.000000e+00> : vector<16x64xf32>
    %653 = tpu.matmul %650, %652, %cst_229 {dimension_numbers = #tpu.dot_dimension_numbers<[1], [0], [0], [1], [0, 0, 1, 1], [], []>} : vector<16x32xf32>, vector<32x64xf32>, vector<16x64xf32> -> vector<16x64xf32>
    %c2_230 = arith.constant 2 : index
    %c32_231 = arith.constant 32 : index
    %c0_232 = arith.constant 0 : index
    %654 = vector.load %arg6[%c2_230, %c32_231, %c0_232] : memref<5x33x64xf32, #tpu.memory_space<vmem>>, vector<1x1x64xf32>
    %655 = vector.shape_cast %654 : vector<1x1x64xf32> to vector<1x64xf32>
    %656 = vector.broadcast %655 : vector<1x64xf32> to vector<16x64xf32>
    %657 = arith.addf %653, %656 : vector<16x64xf32>
    %cst_233 = arith.constant 5.000000e-01 : f32
    %658 = vector.broadcast %cst_233 : f32 to vector<16x64xf32>
    %659 = arith.mulf %658, %657 : vector<16x64xf32>
    %cst_234 = arith.constant 0.707106769 : f32
    %660 = vector.broadcast %cst_234 : f32 to vector<16x64xf32>
    %661 = arith.mulf %657, %660 : vector<16x64xf32>
    %cst_235 = arith.constant 0.000000e+00 : f32
    %662 = vector.broadcast %cst_235 : f32 to vector<16x64xf32>
    %663 = arith.cmpf oge, %661, %662 : vector<16x64xf32>
    %cst_236 = arith.constant 1.000000e+00 : f32
    %cst_237 = arith.constant -1.000000e+00 : f32
    %664 = vector.broadcast %cst_236 : f32 to vector<16x64xf32>
    %665 = vector.broadcast %cst_237 : f32 to vector<16x64xf32>
    %666 = arith.select %663, %664, %665 : vector<16x64xi1>, vector<16x64xf32>
    %667 = math.absf %661 : vector<16x64xf32>
    %cst_238 = arith.constant 0.327591091 : f32
    %668 = vector.broadcast %cst_238 : f32 to vector<16x64xf32>
    %669 = arith.mulf %668, %667 : vector<16x64xf32>
    %cst_239 = arith.constant 1.000000e+00 : f32
    %670 = vector.broadcast %cst_239 : f32 to vector<16x64xf32>
    %671 = arith.addf %670, %669 : vector<16x64xf32>
    %cst_240 = arith.constant 1.000000e+00 : f32
    %672 = vector.broadcast %cst_240 : f32 to vector<16x64xf32>
    %673 = arith.divf %672, %671 : vector<16x64xf32>
    %cst_241 = arith.constant 1.06140542 : f32
    %674 = vector.broadcast %cst_241 : f32 to vector<16x64xf32>
    %675 = arith.mulf %674, %673 : vector<16x64xf32>
    %cst_242 = arith.constant -1.45315206 : f32
    %676 = vector.broadcast %cst_242 : f32 to vector<16x64xf32>
    %677 = arith.addf %675, %676 : vector<16x64xf32>
    %678 = arith.mulf %677, %673 : vector<16x64xf32>
    %cst_243 = arith.constant 1.42141378 : f32
    %679 = vector.broadcast %cst_243 : f32 to vector<16x64xf32>
    %680 = arith.addf %678, %679 : vector<16x64xf32>
    %681 = arith.mulf %680, %673 : vector<16x64xf32>
    %cst_244 = arith.constant -0.284496725 : f32
    %682 = vector.broadcast %cst_244 : f32 to vector<16x64xf32>
    %683 = arith.addf %681, %682 : vector<16x64xf32>
    %684 = arith.mulf %683, %673 : vector<16x64xf32>
    %cst_245 = arith.constant 0.254829586 : f32
    %685 = vector.broadcast %cst_245 : f32 to vector<16x64xf32>
    %686 = arith.addf %684, %685 : vector<16x64xf32>
    %687 = arith.mulf %686, %673 : vector<16x64xf32>
    %cst_246 = arith.constant 0.000000e+00 : f32
    %688 = vector.broadcast %cst_246 : f32 to vector<16x64xf32>
    %689 = arith.subf %688, %667 : vector<16x64xf32>
    %690 = arith.mulf %689, %667 : vector<16x64xf32>
    %691 = math.exp %690 : vector<16x64xf32>
    %692 = arith.mulf %687, %691 : vector<16x64xf32>
    %cst_247 = arith.constant 1.000000e+00 : f32
    %693 = vector.broadcast %cst_247 : f32 to vector<16x64xf32>
    %694 = arith.subf %693, %692 : vector<16x64xf32>
    %695 = arith.mulf %666, %694 : vector<16x64xf32>
    %cst_248 = arith.constant 1.000000e+00 : f32
    %696 = vector.broadcast %cst_248 : f32 to vector<16x64xf32>
    %697 = arith.addf %696, %695 : vector<16x64xf32>
    %698 = arith.mulf %659, %697 : vector<16x64xf32>
    %c2_249 = arith.constant 2 : index
    %c0_250 = arith.constant 0 : index
    %c0_251 = arith.constant 0 : index
    %699 = vector.load %arg7[%c2_249, %c0_250, %c0_251] : memref<5x64x32xf32, #tpu.memory_space<vmem>>, vector<1x64x32xf32>
    %700 = vector.shape_cast %699 : vector<1x64x32xf32> to vector<64x32xf32>
    %cst_252 = arith.constant dense<0.000000e+00> : vector<16x32xf32>
    %701 = tpu.matmul %698, %700, %cst_252 {dimension_numbers = #tpu.dot_dimension_numbers<[1], [0], [0], [1], [0, 0, 1, 1], [], []>} : vector<16x64xf32>, vector<64x32xf32>, vector<16x32xf32> -> vector<16x32xf32>
    %702 = arith.addf %630, %701 : vector<16x32xf32>
    %703 = vector.broadcast %485 : vector<1x32xf32> to vector<16x32xf32>
    %704 = arith.addf %702, %703 : vector<16x32xf32>
    %c3 = arith.constant 3 : index
    %c0_253 = arith.constant 0 : index
    %c0_254 = arith.constant 0 : index
    %705 = vector.load %arg8[%c3, %c0_253, %c0_254] : memref<5x14x32xf32, #tpu.memory_space<vmem>>, vector<1x14x32xf32>
    %706 = vector.shape_cast %705 : vector<1x14x32xf32> to vector<14x32xf32>
    %707 = vector.extract_strided_slice %706 {offsets = [0, 0], sizes = [1, 32], strides = [1, 1]} : vector<14x32xf32> to vector<1x32xf32>
    %708 = vector.extract_strided_slice %706 {offsets = [1, 0], sizes = [1, 32], strides = [1, 1]} : vector<14x32xf32> to vector<1x32xf32>
    %709 = vector.extract_strided_slice %706 {offsets = [2, 0], sizes = [1, 32], strides = [1, 1]} : vector<14x32xf32> to vector<1x32xf32>
    %710 = vector.extract_strided_slice %706 {offsets = [3, 0], sizes = [1, 32], strides = [1, 1]} : vector<14x32xf32> to vector<1x32xf32>
    %711 = vector.extract_strided_slice %706 {offsets = [4, 0], sizes = [1, 32], strides = [1, 1]} : vector<14x32xf32> to vector<1x32xf32>
    %712 = vector.extract_strided_slice %706 {offsets = [5, 0], sizes = [1, 32], strides = [1, 1]} : vector<14x32xf32> to vector<1x32xf32>
    %713 = vector.extract_strided_slice %706 {offsets = [6, 0], sizes = [1, 32], strides = [1, 1]} : vector<14x32xf32> to vector<1x32xf32>
    %714 = vector.extract_strided_slice %706 {offsets = [7, 0], sizes = [1, 32], strides = [1, 1]} : vector<14x32xf32> to vector<1x32xf32>
    %715 = vector.extract_strided_slice %706 {offsets = [8, 0], sizes = [1, 32], strides = [1, 1]} : vector<14x32xf32> to vector<1x32xf32>
    %716 = vector.extract_strided_slice %706 {offsets = [9, 0], sizes = [1, 32], strides = [1, 1]} : vector<14x32xf32> to vector<1x32xf32>
    %717 = vector.extract_strided_slice %706 {offsets = [10, 0], sizes = [1, 32], strides = [1, 1]} : vector<14x32xf32> to vector<1x32xf32>
    %718 = vector.extract_strided_slice %706 {offsets = [11, 0], sizes = [1, 32], strides = [1, 1]} : vector<14x32xf32> to vector<1x32xf32>
    %719 = vector.extract_strided_slice %706 {offsets = [12, 0], sizes = [1, 32], strides = [1, 1]} : vector<14x32xf32> to vector<1x32xf32>
    %720 = vector.extract_strided_slice %706 {offsets = [13, 0], sizes = [1, 32], strides = [1, 1]} : vector<14x32xf32> to vector<1x32xf32>
    %c3_255 = arith.constant 3 : index
    %c0_256 = arith.constant 0 : index
    %c0_257 = arith.constant 0 : index
    %721 = vector.load %arg5[%c3_255, %c0_256, %c0_257] : memref<5x32x160xf32, #tpu.memory_space<vmem>>, vector<1x32x96xf32>
    %722 = vector.shape_cast %721 : vector<1x32x96xf32> to vector<32x96xf32>
    %c3_258 = arith.constant 3 : index
    %c0_259 = arith.constant 0 : index
    %c96_260 = arith.constant 96 : index
    %723 = vector.load %arg5[%c3_258, %c0_259, %c96_260] : memref<5x32x160xf32, #tpu.memory_space<vmem>>, vector<1x32x32xf32>
    %724 = vector.shape_cast %723 : vector<1x32x32xf32> to vector<32x32xf32>
    %c3_261 = arith.constant 3 : index
    %c0_262 = arith.constant 0 : index
    %c128_263 = arith.constant 128 : index
    %725 = vector.load %arg5[%c3_261, %c0_262, %c128_263] : memref<5x32x160xf32, #tpu.memory_space<vmem>>, vector<1x32x32xf32>
    %726 = vector.shape_cast %725 : vector<1x32x32xf32> to vector<32x32xf32>
    %cst_264 = arith.constant dense<0.000000e+00> : vector<16x32xf32>
    %727 = tpu.matmul %501, %724, %cst_264 {dimension_numbers = #tpu.dot_dimension_numbers<[1], [0], [0], [1], [0, 0, 1, 1], [], []>} : vector<16x32xf32>, vector<32x32xf32>, vector<16x32xf32> -> vector<16x32xf32>
    %728 = vector.broadcast %707 : vector<1x32xf32> to vector<16x32xf32>
    %729 = arith.addf %727, %728 : vector<16x32xf32>
    %730 = arith.addf %729, %704 : vector<16x32xf32>
    %cst_265 = arith.constant dense<0.000000e+00> : vector<16xf32>
    %731 = vector.multi_reduction <add>, %704, %cst_265 [1] : vector<16x32xf32> to vector<16xf32>
    %732 = vector.shape_cast %731 : vector<16xf32> to vector<16x1xf32>
    %cst_266 = arith.constant 3.200000e+01 : f32
    %733 = vector.broadcast %cst_266 : f32 to vector<16x1xf32>
    %734 = arith.divf %732, %733 : vector<16x1xf32>
    %735 = vector.broadcast %734 : vector<16x1xf32> to vector<16x32xf32>
    %736 = arith.subf %704, %735 : vector<16x32xf32>
    %737 = arith.mulf %736, %736 : vector<16x32xf32>
    %cst_267 = arith.constant dense<0.000000e+00> : vector<16xf32>
    %738 = vector.multi_reduction <add>, %737, %cst_267 [1] : vector<16x32xf32> to vector<16xf32>
    %739 = vector.shape_cast %738 : vector<16xf32> to vector<16x1xf32>
    %cst_268 = arith.constant 3.200000e+01 : f32
    %740 = vector.broadcast %cst_268 : f32 to vector<16x1xf32>
    %741 = arith.divf %739, %740 : vector<16x1xf32>
    %cst_269 = arith.constant 9.99999974E-6 : f32
    %742 = vector.broadcast %cst_269 : f32 to vector<16x1xf32>
    %743 = arith.addf %741, %742 : vector<16x1xf32>
    %744 = math.rsqrt %743 : vector<16x1xf32>
    %745 = vector.broadcast %744 : vector<16x1xf32> to vector<16x32xf32>
    %746 = arith.mulf %736, %745 : vector<16x32xf32>
    %747 = vector.broadcast %708 : vector<1x32xf32> to vector<16x32xf32>
    %748 = arith.mulf %746, %747 : vector<16x32xf32>
    %749 = vector.broadcast %709 : vector<1x32xf32> to vector<16x32xf32>
    %750 = arith.addf %748, %749 : vector<16x32xf32>
    %cst_270 = arith.constant dense<0.000000e+00> : vector<16x96xf32>
    %751 = tpu.matmul %750, %722, %cst_270 {dimension_numbers = #tpu.dot_dimension_numbers<[1], [0], [0], [1], [0, 0, 1, 1], [], []>} : vector<16x32xf32>, vector<32x96xf32>, vector<16x96xf32> -> vector<16x96xf32>
    %752 = vector.extract_strided_slice %751 {offsets = [0, 0], sizes = [16, 32], strides = [1, 1]} : vector<16x96xf32> to vector<16x32xf32>
    %753 = vector.broadcast %715 : vector<1x32xf32> to vector<16x32xf32>
    %754 = arith.addf %752, %753 : vector<16x32xf32>
    %cst_271 = arith.constant 0.353553385 : f32
    %755 = vector.broadcast %cst_271 : f32 to vector<16x32xf32>
    %756 = arith.mulf %754, %755 : vector<16x32xf32>
    %757 = vector.extract_strided_slice %751 {offsets = [0, 32], sizes = [16, 32], strides = [1, 1]} : vector<16x96xf32> to vector<16x32xf32>
    %758 = vector.broadcast %716 : vector<1x32xf32> to vector<16x32xf32>
    %759 = arith.addf %757, %758 : vector<16x32xf32>
    %760 = vector.extract_strided_slice %751 {offsets = [0, 64], sizes = [16, 32], strides = [1, 1]} : vector<16x96xf32> to vector<16x32xf32>
    %761 = vector.broadcast %717 : vector<1x32xf32> to vector<16x32xf32>
    %762 = arith.addf %760, %761 : vector<16x32xf32>
    %763 = vector.extract_strided_slice %756 {offsets = [0, 0], sizes = [16, 8], strides = [1, 1]} : vector<16x32xf32> to vector<16x8xf32>
    %764 = vector.extract_strided_slice %759 {offsets = [0, 0], sizes = [16, 8], strides = [1, 1]} : vector<16x32xf32> to vector<16x8xf32>
    %cst_272 = arith.constant dense<0.000000e+00> : vector<16x16xf32>
    %765 = tpu.matmul %763, %764, %cst_272 {dimension_numbers = #tpu.dot_dimension_numbers<[1], [1], [0], [0], [0, 0, 1, 0], [], []>} : vector<16x8xf32>, vector<16x8xf32>, vector<16x16xf32> -> vector<16x16xf32>
    %766 = arith.addf %765, %9 : vector<16x16xf32>
    %cst_273 = arith.constant dense<0xFF800000> : vector<16xf32>
    %767 = vector.multi_reduction <maximumf>, %766, %cst_273 [1] : vector<16x16xf32> to vector<16xf32>
    %768 = vector.shape_cast %767 : vector<16xf32> to vector<16x1xf32>
    %769 = vector.broadcast %768 : vector<16x1xf32> to vector<16x16xf32>
    %770 = arith.subf %766, %769 : vector<16x16xf32>
    %771 = math.exp %770 : vector<16x16xf32>
    %772 = vector.extract_strided_slice %762 {offsets = [0, 0], sizes = [16, 8], strides = [1, 1]} : vector<16x32xf32> to vector<16x8xf32>
    %cst_274 = arith.constant dense<0.000000e+00> : vector<16x8xf32>
    %773 = tpu.matmul %771, %772, %cst_274 {dimension_numbers = #tpu.dot_dimension_numbers<[1], [0], [0], [1], [0, 0, 1, 1], [], []>} : vector<16x16xf32>, vector<16x8xf32>, vector<16x8xf32> -> vector<16x8xf32>
    %cst_275 = arith.constant dense<0.000000e+00> : vector<16xf32>
    %774 = vector.multi_reduction <add>, %771, %cst_275 [1] : vector<16x16xf32> to vector<16xf32>
    %775 = vector.shape_cast %774 : vector<16xf32> to vector<16x1xf32>
    %776 = tpu.reciprocal %775 {approx = true} : vector<16x1xf32> -> vector<16x1xf32>
    %777 = vector.broadcast %776 : vector<16x1xf32> to vector<16x8xf32>
    %778 = arith.mulf %773, %777 : vector<16x8xf32>
    %c0_276 = arith.constant 0 : index
    %c0_277 = arith.constant 0 : index
    %779 = vector.load %arg11[%c0_276, %c0_277] : memref<16x32xf32, #tpu.memory_space<vmem>>, vector<16x8xf32>
    tpu.vector_store %arg11[%c0_276, %c0_277], %778 {strides = array<i32>} : memref<16x32xf32, #tpu.memory_space<vmem>>, vector<16x8xf32>,
    %780 = vector.extract_strided_slice %756 {offsets = [0, 8], sizes = [16, 8], strides = [1, 1]} : vector<16x32xf32> to vector<16x8xf32>
    %781 = vector.extract_strided_slice %759 {offsets = [0, 8], sizes = [16, 8], strides = [1, 1]} : vector<16x32xf32> to vector<16x8xf32>
    %cst_278 = arith.constant dense<0.000000e+00> : vector<16x16xf32>
    %782 = tpu.matmul %780, %781, %cst_278 {dimension_numbers = #tpu.dot_dimension_numbers<[1], [1], [0], [0], [0, 0, 1, 0], [], []>} : vector<16x8xf32>, vector<16x8xf32>, vector<16x16xf32> -> vector<16x16xf32>
    %783 = arith.addf %782, %9 : vector<16x16xf32>
    %cst_279 = arith.constant dense<0xFF800000> : vector<16xf32>
    %784 = vector.multi_reduction <maximumf>, %783, %cst_279 [1] : vector<16x16xf32> to vector<16xf32>
    %785 = vector.shape_cast %784 : vector<16xf32> to vector<16x1xf32>
    %786 = vector.broadcast %785 : vector<16x1xf32> to vector<16x16xf32>
    %787 = arith.subf %783, %786 : vector<16x16xf32>
    %788 = math.exp %787 : vector<16x16xf32>
    %789 = vector.extract_strided_slice %762 {offsets = [0, 8], sizes = [16, 8], strides = [1, 1]} : vector<16x32xf32> to vector<16x8xf32>
    %cst_280 = arith.constant dense<0.000000e+00> : vector<16x8xf32>
    %790 = tpu.matmul %788, %789, %cst_280 {dimension_numbers = #tpu.dot_dimension_numbers<[1], [0], [0], [1], [0, 0, 1, 1], [], []>} : vector<16x16xf32>, vector<16x8xf32>, vector<16x8xf32> -> vector<16x8xf32>
    %cst_281 = arith.constant dense<0.000000e+00> : vector<16xf32>
    %791 = vector.multi_reduction <add>, %788, %cst_281 [1] : vector<16x16xf32> to vector<16xf32>
    %792 = vector.shape_cast %791 : vector<16xf32> to vector<16x1xf32>
    %793 = tpu.reciprocal %792 {approx = true} : vector<16x1xf32> -> vector<16x1xf32>
    %794 = vector.broadcast %793 : vector<16x1xf32> to vector<16x8xf32>
    %795 = arith.mulf %790, %794 : vector<16x8xf32>
    %c0_282 = arith.constant 0 : index
    %c8_283 = arith.constant 8 : index
    %796 = vector.load %arg11[%c0_282, %c8_283] : memref<16x32xf32, #tpu.memory_space<vmem>>, vector<16x8xf32>
    tpu.vector_store %arg11[%c0_282, %c8_283], %795 {strides = array<i32>} : memref<16x32xf32, #tpu.memory_space<vmem>>, vector<16x8xf32>,
    %797 = vector.extract_strided_slice %756 {offsets = [0, 16], sizes = [16, 8], strides = [1, 1]} : vector<16x32xf32> to vector<16x8xf32>
    %798 = vector.extract_strided_slice %759 {offsets = [0, 16], sizes = [16, 8], strides = [1, 1]} : vector<16x32xf32> to vector<16x8xf32>
    %cst_284 = arith.constant dense<0.000000e+00> : vector<16x16xf32>
    %799 = tpu.matmul %797, %798, %cst_284 {dimension_numbers = #tpu.dot_dimension_numbers<[1], [1], [0], [0], [0, 0, 1, 0], [], []>} : vector<16x8xf32>, vector<16x8xf32>, vector<16x16xf32> -> vector<16x16xf32>
    %800 = arith.addf %799, %9 : vector<16x16xf32>
    %cst_285 = arith.constant dense<0xFF800000> : vector<16xf32>
    %801 = vector.multi_reduction <maximumf>, %800, %cst_285 [1] : vector<16x16xf32> to vector<16xf32>
    %802 = vector.shape_cast %801 : vector<16xf32> to vector<16x1xf32>
    %803 = vector.broadcast %802 : vector<16x1xf32> to vector<16x16xf32>
    %804 = arith.subf %800, %803 : vector<16x16xf32>
    %805 = math.exp %804 : vector<16x16xf32>
    %806 = vector.extract_strided_slice %762 {offsets = [0, 16], sizes = [16, 8], strides = [1, 1]} : vector<16x32xf32> to vector<16x8xf32>
    %cst_286 = arith.constant dense<0.000000e+00> : vector<16x8xf32>
    %807 = tpu.matmul %805, %806, %cst_286 {dimension_numbers = #tpu.dot_dimension_numbers<[1], [0], [0], [1], [0, 0, 1, 1], [], []>} : vector<16x16xf32>, vector<16x8xf32>, vector<16x8xf32> -> vector<16x8xf32>
    %cst_287 = arith.constant dense<0.000000e+00> : vector<16xf32>
    %808 = vector.multi_reduction <add>, %805, %cst_287 [1] : vector<16x16xf32> to vector<16xf32>
    %809 = vector.shape_cast %808 : vector<16xf32> to vector<16x1xf32>
    %810 = tpu.reciprocal %809 {approx = true} : vector<16x1xf32> -> vector<16x1xf32>
    %811 = vector.broadcast %810 : vector<16x1xf32> to vector<16x8xf32>
    %812 = arith.mulf %807, %811 : vector<16x8xf32>
    %c0_288 = arith.constant 0 : index
    %c16_289 = arith.constant 16 : index
    %813 = vector.load %arg11[%c0_288, %c16_289] : memref<16x32xf32, #tpu.memory_space<vmem>>, vector<16x8xf32>
    tpu.vector_store %arg11[%c0_288, %c16_289], %812 {strides = array<i32>} : memref<16x32xf32, #tpu.memory_space<vmem>>, vector<16x8xf32>,
    %814 = vector.extract_strided_slice %756 {offsets = [0, 24], sizes = [16, 8], strides = [1, 1]} : vector<16x32xf32> to vector<16x8xf32>
    %815 = vector.extract_strided_slice %759 {offsets = [0, 24], sizes = [16, 8], strides = [1, 1]} : vector<16x32xf32> to vector<16x8xf32>
    %cst_290 = arith.constant dense<0.000000e+00> : vector<16x16xf32>
    %816 = tpu.matmul %814, %815, %cst_290 {dimension_numbers = #tpu.dot_dimension_numbers<[1], [1], [0], [0], [0, 0, 1, 0], [], []>} : vector<16x8xf32>, vector<16x8xf32>, vector<16x16xf32> -> vector<16x16xf32>
    %817 = arith.addf %816, %9 : vector<16x16xf32>
    %cst_291 = arith.constant dense<0xFF800000> : vector<16xf32>
    %818 = vector.multi_reduction <maximumf>, %817, %cst_291 [1] : vector<16x16xf32> to vector<16xf32>
    %819 = vector.shape_cast %818 : vector<16xf32> to vector<16x1xf32>
    %820 = vector.broadcast %819 : vector<16x1xf32> to vector<16x16xf32>
    %821 = arith.subf %817, %820 : vector<16x16xf32>
    %822 = math.exp %821 : vector<16x16xf32>
    %823 = vector.extract_strided_slice %762 {offsets = [0, 24], sizes = [16, 8], strides = [1, 1]} : vector<16x32xf32> to vector<16x8xf32>
    %cst_292 = arith.constant dense<0.000000e+00> : vector<16x8xf32>
    %824 = tpu.matmul %822, %823, %cst_292 {dimension_numbers = #tpu.dot_dimension_numbers<[1], [0], [0], [1], [0, 0, 1, 1], [], []>} : vector<16x16xf32>, vector<16x8xf32>, vector<16x8xf32> -> vector<16x8xf32>
    %cst_293 = arith.constant dense<0.000000e+00> : vector<16xf32>
    %825 = vector.multi_reduction <add>, %822, %cst_293 [1] : vector<16x16xf32> to vector<16xf32>
    %826 = vector.shape_cast %825 : vector<16xf32> to vector<16x1xf32>
    %827 = tpu.reciprocal %826 {approx = true} : vector<16x1xf32> -> vector<16x1xf32>
    %828 = vector.broadcast %827 : vector<16x1xf32> to vector<16x8xf32>
    %829 = arith.mulf %824, %828 : vector<16x8xf32>
    %c0_294 = arith.constant 0 : index
    %c24_295 = arith.constant 24 : index
    %830 = vector.load %arg11[%c0_294, %c24_295] : memref<16x32xf32, #tpu.memory_space<vmem>>, vector<16x8xf32>
    tpu.vector_store %arg11[%c0_294, %c24_295], %829 {strides = array<i32>} : memref<16x32xf32, #tpu.memory_space<vmem>>, vector<16x8xf32>,
    %c0_296 = arith.constant 0 : index
    %c0_297 = arith.constant 0 : index
    %831 = vector.load %arg11[%c0_296, %c0_297] : memref<16x32xf32, #tpu.memory_space<vmem>>, vector<16x32xf32>
    %cst_298 = arith.constant dense<0.000000e+00> : vector<16x32xf32>
    %832 = tpu.matmul %831, %726, %cst_298 {dimension_numbers = #tpu.dot_dimension_numbers<[1], [0], [0], [1], [0, 0, 1, 1], [], []>} : vector<16x32xf32>, vector<32x32xf32>, vector<16x32xf32> -> vector<16x32xf32>
    %833 = arith.addf %704, %832 : vector<16x32xf32>
    %834 = vector.broadcast %710 : vector<1x32xf32> to vector<16x32xf32>
    %835 = arith.addf %833, %834 : vector<16x32xf32>
    %c1_i32_299 = arith.constant 1 : i32
    %836 = tpu.dynamic_rotate %835 by %c1_i32_299 dim 0 : vector<16x32xf32>, i32 -> vector<16x32xf32>
    %837 = vector.broadcast %1 : vector<16x1xf32> to vector<16x32xf32>
    %838 = arith.mulf %836, %837 : vector<16x32xf32>
    %c15_i32_300 = arith.constant 15 : i32
    %839 = tpu.dynamic_rotate %835 by %c15_i32_300 dim 0 : vector<16x32xf32>, i32 -> vector<16x32xf32>
    %840 = vector.broadcast %2 : vector<16x1xf32> to vector<16x32xf32>
    %841 = arith.mulf %839, %840 : vector<16x32xf32>
    %842 = vector.broadcast %718 : vector<1x32xf32> to vector<16x32xf32>
    %843 = arith.mulf %838, %842 : vector<16x32xf32>
    %844 = vector.broadcast %719 : vector<1x32xf32> to vector<16x32xf32>
    %845 = arith.mulf %835, %844 : vector<16x32xf32>
    %846 = arith.addf %843, %845 : vector<16x32xf32>
    %847 = vector.broadcast %720 : vector<1x32xf32> to vector<16x32xf32>
    %848 = arith.mulf %841, %847 : vector<16x32xf32>
    %849 = arith.addf %846, %848 : vector<16x32xf32>
    %850 = vector.broadcast %711 : vector<1x32xf32> to vector<16x32xf32>
    %851 = arith.addf %849, %850 : vector<16x32xf32>
    %852 = arith.negf %851 : vector<16x32xf32>
    %853 = math.exp %852 : vector<16x32xf32>
    %cst_301 = arith.constant 1.000000e+00 : f32
    %854 = vector.broadcast %cst_301 : f32 to vector<16x32xf32>
    %855 = arith.addf %854, %853 : vector<16x32xf32>
    %856 = arith.divf %854, %855 : vector<16x32xf32>
    %857 = arith.mulf %851, %856 : vector<16x32xf32>
    %858 = arith.addf %835, %857 : vector<16x32xf32>
    %859 = arith.addf %858, %730 : vector<16x32xf32>
    %cst_302 = arith.constant dense<0.000000e+00> : vector<16xf32>
    %860 = vector.multi_reduction <add>, %859, %cst_302 [1] : vector<16x32xf32> to vector<16xf32>
    %861 = vector.shape_cast %860 : vector<16xf32> to vector<16x1xf32>
    %cst_303 = arith.constant 3.200000e+01 : f32
    %862 = vector.broadcast %cst_303 : f32 to vector<16x1xf32>
    %863 = arith.divf %861, %862 : vector<16x1xf32>
    %864 = vector.broadcast %863 : vector<16x1xf32> to vector<16x32xf32>
    %865 = arith.subf %859, %864 : vector<16x32xf32>
    %866 = arith.mulf %865, %865 : vector<16x32xf32>
    %cst_304 = arith.constant dense<0.000000e+00> : vector<16xf32>
    %867 = vector.multi_reduction <add>, %866, %cst_304 [1] : vector<16x32xf32> to vector<16xf32>
    %868 = vector.shape_cast %867 : vector<16xf32> to vector<16x1xf32>
    %cst_305 = arith.constant 3.200000e+01 : f32
    %869 = vector.broadcast %cst_305 : f32 to vector<16x1xf32>
    %870 = arith.divf %868, %869 : vector<16x1xf32>
    %cst_306 = arith.constant 9.99999974E-6 : f32
    %871 = vector.broadcast %cst_306 : f32 to vector<16x1xf32>
    %872 = arith.addf %870, %871 : vector<16x1xf32>
    %873 = math.rsqrt %872 : vector<16x1xf32>
    %874 = vector.broadcast %873 : vector<16x1xf32> to vector<16x32xf32>
    %875 = arith.mulf %865, %874 : vector<16x32xf32>
    %876 = vector.broadcast %712 : vector<1x32xf32> to vector<16x32xf32>
    %877 = arith.mulf %875, %876 : vector<16x32xf32>
    %878 = vector.broadcast %713 : vector<1x32xf32> to vector<16x32xf32>
    %879 = arith.addf %877, %878 : vector<16x32xf32>
    %c3_307 = arith.constant 3 : index
    %c0_308 = arith.constant 0 : index
    %c0_309 = arith.constant 0 : index
    %880 = vector.load %arg6[%c3_307, %c0_308, %c0_309] : memref<5x33x64xf32, #tpu.memory_space<vmem>>, vector<1x32x64xf32>
    %881 = vector.shape_cast %880 : vector<1x32x64xf32> to vector<32x64xf32>
    %cst_310 = arith.constant dense<0.000000e+00> : vector<16x64xf32>
    %882 = tpu.matmul %879, %881, %cst_310 {dimension_numbers = #tpu.dot_dimension_numbers<[1], [0], [0], [1], [0, 0, 1, 1], [], []>} : vector<16x32xf32>, vector<32x64xf32>, vector<16x64xf32> -> vector<16x64xf32>
    %c3_311 = arith.constant 3 : index
    %c32_312 = arith.constant 32 : index
    %c0_313 = arith.constant 0 : index
    %883 = vector.load %arg6[%c3_311, %c32_312, %c0_313] : memref<5x33x64xf32, #tpu.memory_space<vmem>>, vector<1x1x64xf32>
    %884 = vector.shape_cast %883 : vector<1x1x64xf32> to vector<1x64xf32>
    %885 = vector.broadcast %884 : vector<1x64xf32> to vector<16x64xf32>
    %886 = arith.addf %882, %885 : vector<16x64xf32>
    %cst_314 = arith.constant 5.000000e-01 : f32
    %887 = vector.broadcast %cst_314 : f32 to vector<16x64xf32>
    %888 = arith.mulf %887, %886 : vector<16x64xf32>
    %cst_315 = arith.constant 0.707106769 : f32
    %889 = vector.broadcast %cst_315 : f32 to vector<16x64xf32>
    %890 = arith.mulf %886, %889 : vector<16x64xf32>
    %cst_316 = arith.constant 0.000000e+00 : f32
    %891 = vector.broadcast %cst_316 : f32 to vector<16x64xf32>
    %892 = arith.cmpf oge, %890, %891 : vector<16x64xf32>
    %cst_317 = arith.constant 1.000000e+00 : f32
    %cst_318 = arith.constant -1.000000e+00 : f32
    %893 = vector.broadcast %cst_317 : f32 to vector<16x64xf32>
    %894 = vector.broadcast %cst_318 : f32 to vector<16x64xf32>
    %895 = arith.select %892, %893, %894 : vector<16x64xi1>, vector<16x64xf32>
    %896 = math.absf %890 : vector<16x64xf32>
    %cst_319 = arith.constant 0.327591091 : f32
    %897 = vector.broadcast %cst_319 : f32 to vector<16x64xf32>
    %898 = arith.mulf %897, %896 : vector<16x64xf32>
    %cst_320 = arith.constant 1.000000e+00 : f32
    %899 = vector.broadcast %cst_320 : f32 to vector<16x64xf32>
    %900 = arith.addf %899, %898 : vector<16x64xf32>
    %cst_321 = arith.constant 1.000000e+00 : f32
    %901 = vector.broadcast %cst_321 : f32 to vector<16x64xf32>
    %902 = arith.divf %901, %900 : vector<16x64xf32>
    %cst_322 = arith.constant 1.06140542 : f32
    %903 = vector.broadcast %cst_322 : f32 to vector<16x64xf32>
    %904 = arith.mulf %903, %902 : vector<16x64xf32>
    %cst_323 = arith.constant -1.45315206 : f32
    %905 = vector.broadcast %cst_323 : f32 to vector<16x64xf32>
    %906 = arith.addf %904, %905 : vector<16x64xf32>
    %907 = arith.mulf %906, %902 : vector<16x64xf32>
    %cst_324 = arith.constant 1.42141378 : f32
    %908 = vector.broadcast %cst_324 : f32 to vector<16x64xf32>
    %909 = arith.addf %907, %908 : vector<16x64xf32>
    %910 = arith.mulf %909, %902 : vector<16x64xf32>
    %cst_325 = arith.constant -0.284496725 : f32
    %911 = vector.broadcast %cst_325 : f32 to vector<16x64xf32>
    %912 = arith.addf %910, %911 : vector<16x64xf32>
    %913 = arith.mulf %912, %902 : vector<16x64xf32>
    %cst_326 = arith.constant 0.254829586 : f32
    %914 = vector.broadcast %cst_326 : f32 to vector<16x64xf32>
    %915 = arith.addf %913, %914 : vector<16x64xf32>
    %916 = arith.mulf %915, %902 : vector<16x64xf32>
    %cst_327 = arith.constant 0.000000e+00 : f32
    %917 = vector.broadcast %cst_327 : f32 to vector<16x64xf32>
    %918 = arith.subf %917, %896 : vector<16x64xf32>
    %919 = arith.mulf %918, %896 : vector<16x64xf32>
    %920 = math.exp %919 : vector<16x64xf32>
    %921 = arith.mulf %916, %920 : vector<16x64xf32>
    %cst_328 = arith.constant 1.000000e+00 : f32
    %922 = vector.broadcast %cst_328 : f32 to vector<16x64xf32>
    %923 = arith.subf %922, %921 : vector<16x64xf32>
    %924 = arith.mulf %895, %923 : vector<16x64xf32>
    %cst_329 = arith.constant 1.000000e+00 : f32
    %925 = vector.broadcast %cst_329 : f32 to vector<16x64xf32>
    %926 = arith.addf %925, %924 : vector<16x64xf32>
    %927 = arith.mulf %888, %926 : vector<16x64xf32>
    %c3_330 = arith.constant 3 : index
    %c0_331 = arith.constant 0 : index
    %c0_332 = arith.constant 0 : index
    %928 = vector.load %arg7[%c3_330, %c0_331, %c0_332] : memref<5x64x32xf32, #tpu.memory_space<vmem>>, vector<1x64x32xf32>
    %929 = vector.shape_cast %928 : vector<1x64x32xf32> to vector<64x32xf32>
    %cst_333 = arith.constant dense<0.000000e+00> : vector<16x32xf32>
    %930 = tpu.matmul %927, %929, %cst_333 {dimension_numbers = #tpu.dot_dimension_numbers<[1], [0], [0], [1], [0, 0, 1, 1], [], []>} : vector<16x64xf32>, vector<64x32xf32>, vector<16x32xf32> -> vector<16x32xf32>
    %931 = arith.addf %859, %930 : vector<16x32xf32>
    %932 = vector.broadcast %714 : vector<1x32xf32> to vector<16x32xf32>
    %933 = arith.addf %931, %932 : vector<16x32xf32>
    %c4 = arith.constant 4 : index
    %c0_334 = arith.constant 0 : index
    %c0_335 = arith.constant 0 : index
    %934 = vector.load %arg8[%c4, %c0_334, %c0_335] : memref<5x14x32xf32, #tpu.memory_space<vmem>>, vector<1x14x32xf32>
    %935 = vector.shape_cast %934 : vector<1x14x32xf32> to vector<14x32xf32>
    %936 = vector.extract_strided_slice %935 {offsets = [0, 0], sizes = [1, 32], strides = [1, 1]} : vector<14x32xf32> to vector<1x32xf32>
    %937 = vector.extract_strided_slice %935 {offsets = [1, 0], sizes = [1, 32], strides = [1, 1]} : vector<14x32xf32> to vector<1x32xf32>
    %938 = vector.extract_strided_slice %935 {offsets = [2, 0], sizes = [1, 32], strides = [1, 1]} : vector<14x32xf32> to vector<1x32xf32>
    %939 = vector.extract_strided_slice %935 {offsets = [3, 0], sizes = [1, 32], strides = [1, 1]} : vector<14x32xf32> to vector<1x32xf32>
    %940 = vector.extract_strided_slice %935 {offsets = [4, 0], sizes = [1, 32], strides = [1, 1]} : vector<14x32xf32> to vector<1x32xf32>
    %941 = vector.extract_strided_slice %935 {offsets = [5, 0], sizes = [1, 32], strides = [1, 1]} : vector<14x32xf32> to vector<1x32xf32>
    %942 = vector.extract_strided_slice %935 {offsets = [6, 0], sizes = [1, 32], strides = [1, 1]} : vector<14x32xf32> to vector<1x32xf32>
    %943 = vector.extract_strided_slice %935 {offsets = [7, 0], sizes = [1, 32], strides = [1, 1]} : vector<14x32xf32> to vector<1x32xf32>
    %944 = vector.extract_strided_slice %935 {offsets = [8, 0], sizes = [1, 32], strides = [1, 1]} : vector<14x32xf32> to vector<1x32xf32>
    %945 = vector.extract_strided_slice %935 {offsets = [9, 0], sizes = [1, 32], strides = [1, 1]} : vector<14x32xf32> to vector<1x32xf32>
    %946 = vector.extract_strided_slice %935 {offsets = [10, 0], sizes = [1, 32], strides = [1, 1]} : vector<14x32xf32> to vector<1x32xf32>
    %947 = vector.extract_strided_slice %935 {offsets = [11, 0], sizes = [1, 32], strides = [1, 1]} : vector<14x32xf32> to vector<1x32xf32>
    %948 = vector.extract_strided_slice %935 {offsets = [12, 0], sizes = [1, 32], strides = [1, 1]} : vector<14x32xf32> to vector<1x32xf32>
    %949 = vector.extract_strided_slice %935 {offsets = [13, 0], sizes = [1, 32], strides = [1, 1]} : vector<14x32xf32> to vector<1x32xf32>
    %c4_336 = arith.constant 4 : index
    %c0_337 = arith.constant 0 : index
    %c0_338 = arith.constant 0 : index
    %950 = vector.load %arg5[%c4_336, %c0_337, %c0_338] : memref<5x32x160xf32, #tpu.memory_space<vmem>>, vector<1x32x96xf32>
    %951 = vector.shape_cast %950 : vector<1x32x96xf32> to vector<32x96xf32>
    %c4_339 = arith.constant 4 : index
    %c0_340 = arith.constant 0 : index
    %c96_341 = arith.constant 96 : index
    %952 = vector.load %arg5[%c4_339, %c0_340, %c96_341] : memref<5x32x160xf32, #tpu.memory_space<vmem>>, vector<1x32x32xf32>
    %953 = vector.shape_cast %952 : vector<1x32x32xf32> to vector<32x32xf32>
    %c4_342 = arith.constant 4 : index
    %c0_343 = arith.constant 0 : index
    %c128_344 = arith.constant 128 : index
    %954 = vector.load %arg5[%c4_342, %c0_343, %c128_344] : memref<5x32x160xf32, #tpu.memory_space<vmem>>, vector<1x32x32xf32>
    %955 = vector.shape_cast %954 : vector<1x32x32xf32> to vector<32x32xf32>
    %cst_345 = arith.constant dense<0.000000e+00> : vector<16x32xf32>
    %956 = tpu.matmul %730, %953, %cst_345 {dimension_numbers = #tpu.dot_dimension_numbers<[1], [0], [0], [1], [0, 0, 1, 1], [], []>} : vector<16x32xf32>, vector<32x32xf32>, vector<16x32xf32> -> vector<16x32xf32>
    %957 = vector.broadcast %936 : vector<1x32xf32> to vector<16x32xf32>
    %958 = arith.addf %956, %957 : vector<16x32xf32>
    %959 = arith.addf %958, %933 : vector<16x32xf32>
    %cst_346 = arith.constant dense<0.000000e+00> : vector<16xf32>
    %960 = vector.multi_reduction <add>, %933, %cst_346 [1] : vector<16x32xf32> to vector<16xf32>
    %961 = vector.shape_cast %960 : vector<16xf32> to vector<16x1xf32>
    %cst_347 = arith.constant 3.200000e+01 : f32
    %962 = vector.broadcast %cst_347 : f32 to vector<16x1xf32>
    %963 = arith.divf %961, %962 : vector<16x1xf32>
    %964 = vector.broadcast %963 : vector<16x1xf32> to vector<16x32xf32>
    %965 = arith.subf %933, %964 : vector<16x32xf32>
    %966 = arith.mulf %965, %965 : vector<16x32xf32>
    %cst_348 = arith.constant dense<0.000000e+00> : vector<16xf32>
    %967 = vector.multi_reduction <add>, %966, %cst_348 [1] : vector<16x32xf32> to vector<16xf32>
    %968 = vector.shape_cast %967 : vector<16xf32> to vector<16x1xf32>
    %cst_349 = arith.constant 3.200000e+01 : f32
    %969 = vector.broadcast %cst_349 : f32 to vector<16x1xf32>
    %970 = arith.divf %968, %969 : vector<16x1xf32>
    %cst_350 = arith.constant 9.99999974E-6 : f32
    %971 = vector.broadcast %cst_350 : f32 to vector<16x1xf32>
    %972 = arith.addf %970, %971 : vector<16x1xf32>
    %973 = math.rsqrt %972 : vector<16x1xf32>
    %974 = vector.broadcast %973 : vector<16x1xf32> to vector<16x32xf32>
    %975 = arith.mulf %965, %974 : vector<16x32xf32>
    %976 = vector.broadcast %937 : vector<1x32xf32> to vector<16x32xf32>
    %977 = arith.mulf %975, %976 : vector<16x32xf32>
    %978 = vector.broadcast %938 : vector<1x32xf32> to vector<16x32xf32>
    %979 = arith.addf %977, %978 : vector<16x32xf32>
    %cst_351 = arith.constant dense<0.000000e+00> : vector<16x96xf32>
    %980 = tpu.matmul %979, %951, %cst_351 {dimension_numbers = #tpu.dot_dimension_numbers<[1], [0], [0], [1], [0, 0, 1, 1], [], []>} : vector<16x32xf32>, vector<32x96xf32>, vector<16x96xf32> -> vector<16x96xf32>
    %981 = vector.extract_strided_slice %980 {offsets = [0, 0], sizes = [16, 32], strides = [1, 1]} : vector<16x96xf32> to vector<16x32xf32>
    %982 = vector.broadcast %944 : vector<1x32xf32> to vector<16x32xf32>
    %983 = arith.addf %981, %982 : vector<16x32xf32>
    %cst_352 = arith.constant 0.353553385 : f32
    %984 = vector.broadcast %cst_352 : f32 to vector<16x32xf32>
    %985 = arith.mulf %983, %984 : vector<16x32xf32>
    %986 = vector.extract_strided_slice %980 {offsets = [0, 32], sizes = [16, 32], strides = [1, 1]} : vector<16x96xf32> to vector<16x32xf32>
    %987 = vector.broadcast %945 : vector<1x32xf32> to vector<16x32xf32>
    %988 = arith.addf %986, %987 : vector<16x32xf32>
    %989 = vector.extract_strided_slice %980 {offsets = [0, 64], sizes = [16, 32], strides = [1, 1]} : vector<16x96xf32> to vector<16x32xf32>
    %990 = vector.broadcast %946 : vector<1x32xf32> to vector<16x32xf32>
    %991 = arith.addf %989, %990 : vector<16x32xf32>
    %992 = vector.extract_strided_slice %985 {offsets = [0, 0], sizes = [16, 8], strides = [1, 1]} : vector<16x32xf32> to vector<16x8xf32>
    %993 = vector.extract_strided_slice %988 {offsets = [0, 0], sizes = [16, 8], strides = [1, 1]} : vector<16x32xf32> to vector<16x8xf32>
    %cst_353 = arith.constant dense<0.000000e+00> : vector<16x16xf32>
    %994 = tpu.matmul %992, %993, %cst_353 {dimension_numbers = #tpu.dot_dimension_numbers<[1], [1], [0], [0], [0, 0, 1, 0], [], []>} : vector<16x8xf32>, vector<16x8xf32>, vector<16x16xf32> -> vector<16x16xf32>
    %995 = arith.addf %994, %9 : vector<16x16xf32>
    %cst_354 = arith.constant dense<0xFF800000> : vector<16xf32>
    %996 = vector.multi_reduction <maximumf>, %995, %cst_354 [1] : vector<16x16xf32> to vector<16xf32>
    %997 = vector.shape_cast %996 : vector<16xf32> to vector<16x1xf32>
    %998 = vector.broadcast %997 : vector<16x1xf32> to vector<16x16xf32>
    %999 = arith.subf %995, %998 : vector<16x16xf32>
    %1000 = math.exp %999 : vector<16x16xf32>
    %1001 = vector.extract_strided_slice %991 {offsets = [0, 0], sizes = [16, 8], strides = [1, 1]} : vector<16x32xf32> to vector<16x8xf32>
    %cst_355 = arith.constant dense<0.000000e+00> : vector<16x8xf32>
    %1002 = tpu.matmul %1000, %1001, %cst_355 {dimension_numbers = #tpu.dot_dimension_numbers<[1], [0], [0], [1], [0, 0, 1, 1], [], []>} : vector<16x16xf32>, vector<16x8xf32>, vector<16x8xf32> -> vector<16x8xf32>
    %cst_356 = arith.constant dense<0.000000e+00> : vector<16xf32>
    %1003 = vector.multi_reduction <add>, %1000, %cst_356 [1] : vector<16x16xf32> to vector<16xf32>
    %1004 = vector.shape_cast %1003 : vector<16xf32> to vector<16x1xf32>
    %1005 = tpu.reciprocal %1004 {approx = true} : vector<16x1xf32> -> vector<16x1xf32>
    %1006 = vector.broadcast %1005 : vector<16x1xf32> to vector<16x8xf32>
    %1007 = arith.mulf %1002, %1006 : vector<16x8xf32>
    %c0_357 = arith.constant 0 : index
    %c0_358 = arith.constant 0 : index
    %1008 = vector.load %arg11[%c0_357, %c0_358] : memref<16x32xf32, #tpu.memory_space<vmem>>, vector<16x8xf32>
    tpu.vector_store %arg11[%c0_357, %c0_358], %1007 {strides = array<i32>} : memref<16x32xf32, #tpu.memory_space<vmem>>, vector<16x8xf32>,
    %1009 = vector.extract_strided_slice %985 {offsets = [0, 8], sizes = [16, 8], strides = [1, 1]} : vector<16x32xf32> to vector<16x8xf32>
    %1010 = vector.extract_strided_slice %988 {offsets = [0, 8], sizes = [16, 8], strides = [1, 1]} : vector<16x32xf32> to vector<16x8xf32>
    %cst_359 = arith.constant dense<0.000000e+00> : vector<16x16xf32>
    %1011 = tpu.matmul %1009, %1010, %cst_359 {dimension_numbers = #tpu.dot_dimension_numbers<[1], [1], [0], [0], [0, 0, 1, 0], [], []>} : vector<16x8xf32>, vector<16x8xf32>, vector<16x16xf32> -> vector<16x16xf32>
    %1012 = arith.addf %1011, %9 : vector<16x16xf32>
    %cst_360 = arith.constant dense<0xFF800000> : vector<16xf32>
    %1013 = vector.multi_reduction <maximumf>, %1012, %cst_360 [1] : vector<16x16xf32> to vector<16xf32>
    %1014 = vector.shape_cast %1013 : vector<16xf32> to vector<16x1xf32>
    %1015 = vector.broadcast %1014 : vector<16x1xf32> to vector<16x16xf32>
    %1016 = arith.subf %1012, %1015 : vector<16x16xf32>
    %1017 = math.exp %1016 : vector<16x16xf32>
    %1018 = vector.extract_strided_slice %991 {offsets = [0, 8], sizes = [16, 8], strides = [1, 1]} : vector<16x32xf32> to vector<16x8xf32>
    %cst_361 = arith.constant dense<0.000000e+00> : vector<16x8xf32>
    %1019 = tpu.matmul %1017, %1018, %cst_361 {dimension_numbers = #tpu.dot_dimension_numbers<[1], [0], [0], [1], [0, 0, 1, 1], [], []>} : vector<16x16xf32>, vector<16x8xf32>, vector<16x8xf32> -> vector<16x8xf32>
    %cst_362 = arith.constant dense<0.000000e+00> : vector<16xf32>
    %1020 = vector.multi_reduction <add>, %1017, %cst_362 [1] : vector<16x16xf32> to vector<16xf32>
    %1021 = vector.shape_cast %1020 : vector<16xf32> to vector<16x1xf32>
    %1022 = tpu.reciprocal %1021 {approx = true} : vector<16x1xf32> -> vector<16x1xf32>
    %1023 = vector.broadcast %1022 : vector<16x1xf32> to vector<16x8xf32>
    %1024 = arith.mulf %1019, %1023 : vector<16x8xf32>
    %c0_363 = arith.constant 0 : index
    %c8_364 = arith.constant 8 : index
    %1025 = vector.load %arg11[%c0_363, %c8_364] : memref<16x32xf32, #tpu.memory_space<vmem>>, vector<16x8xf32>
    tpu.vector_store %arg11[%c0_363, %c8_364], %1024 {strides = array<i32>} : memref<16x32xf32, #tpu.memory_space<vmem>>, vector<16x8xf32>,
    %1026 = vector.extract_strided_slice %985 {offsets = [0, 16], sizes = [16, 8], strides = [1, 1]} : vector<16x32xf32> to vector<16x8xf32>
    %1027 = vector.extract_strided_slice %988 {offsets = [0, 16], sizes = [16, 8], strides = [1, 1]} : vector<16x32xf32> to vector<16x8xf32>
    %cst_365 = arith.constant dense<0.000000e+00> : vector<16x16xf32>
    %1028 = tpu.matmul %1026, %1027, %cst_365 {dimension_numbers = #tpu.dot_dimension_numbers<[1], [1], [0], [0], [0, 0, 1, 0], [], []>} : vector<16x8xf32>, vector<16x8xf32>, vector<16x16xf32> -> vector<16x16xf32>
    %1029 = arith.addf %1028, %9 : vector<16x16xf32>
    %cst_366 = arith.constant dense<0xFF800000> : vector<16xf32>
    %1030 = vector.multi_reduction <maximumf>, %1029, %cst_366 [1] : vector<16x16xf32> to vector<16xf32>
    %1031 = vector.shape_cast %1030 : vector<16xf32> to vector<16x1xf32>
    %1032 = vector.broadcast %1031 : vector<16x1xf32> to vector<16x16xf32>
    %1033 = arith.subf %1029, %1032 : vector<16x16xf32>
    %1034 = math.exp %1033 : vector<16x16xf32>
    %1035 = vector.extract_strided_slice %991 {offsets = [0, 16], sizes = [16, 8], strides = [1, 1]} : vector<16x32xf32> to vector<16x8xf32>
    %cst_367 = arith.constant dense<0.000000e+00> : vector<16x8xf32>
    %1036 = tpu.matmul %1034, %1035, %cst_367 {dimension_numbers = #tpu.dot_dimension_numbers<[1], [0], [0], [1], [0, 0, 1, 1], [], []>} : vector<16x16xf32>, vector<16x8xf32>, vector<16x8xf32> -> vector<16x8xf32>
    %cst_368 = arith.constant dense<0.000000e+00> : vector<16xf32>
    %1037 = vector.multi_reduction <add>, %1034, %cst_368 [1] : vector<16x16xf32> to vector<16xf32>
    %1038 = vector.shape_cast %1037 : vector<16xf32> to vector<16x1xf32>
    %1039 = tpu.reciprocal %1038 {approx = true} : vector<16x1xf32> -> vector<16x1xf32>
    %1040 = vector.broadcast %1039 : vector<16x1xf32> to vector<16x8xf32>
    %1041 = arith.mulf %1036, %1040 : vector<16x8xf32>
    %c0_369 = arith.constant 0 : index
    %c16_370 = arith.constant 16 : index
    %1042 = vector.load %arg11[%c0_369, %c16_370] : memref<16x32xf32, #tpu.memory_space<vmem>>, vector<16x8xf32>
    tpu.vector_store %arg11[%c0_369, %c16_370], %1041 {strides = array<i32>} : memref<16x32xf32, #tpu.memory_space<vmem>>, vector<16x8xf32>,
    %1043 = vector.extract_strided_slice %985 {offsets = [0, 24], sizes = [16, 8], strides = [1, 1]} : vector<16x32xf32> to vector<16x8xf32>
    %1044 = vector.extract_strided_slice %988 {offsets = [0, 24], sizes = [16, 8], strides = [1, 1]} : vector<16x32xf32> to vector<16x8xf32>
    %cst_371 = arith.constant dense<0.000000e+00> : vector<16x16xf32>
    %1045 = tpu.matmul %1043, %1044, %cst_371 {dimension_numbers = #tpu.dot_dimension_numbers<[1], [1], [0], [0], [0, 0, 1, 0], [], []>} : vector<16x8xf32>, vector<16x8xf32>, vector<16x16xf32> -> vector<16x16xf32>
    %1046 = arith.addf %1045, %9 : vector<16x16xf32>
    %cst_372 = arith.constant dense<0xFF800000> : vector<16xf32>
    %1047 = vector.multi_reduction <maximumf>, %1046, %cst_372 [1] : vector<16x16xf32> to vector<16xf32>
    %1048 = vector.shape_cast %1047 : vector<16xf32> to vector<16x1xf32>
    %1049 = vector.broadcast %1048 : vector<16x1xf32> to vector<16x16xf32>
    %1050 = arith.subf %1046, %1049 : vector<16x16xf32>
    %1051 = math.exp %1050 : vector<16x16xf32>
    %1052 = vector.extract_strided_slice %991 {offsets = [0, 24], sizes = [16, 8], strides = [1, 1]} : vector<16x32xf32> to vector<16x8xf32>
    %cst_373 = arith.constant dense<0.000000e+00> : vector<16x8xf32>
    %1053 = tpu.matmul %1051, %1052, %cst_373 {dimension_numbers = #tpu.dot_dimension_numbers<[1], [0], [0], [1], [0, 0, 1, 1], [], []>} : vector<16x16xf32>, vector<16x8xf32>, vector<16x8xf32> -> vector<16x8xf32>
    %cst_374 = arith.constant dense<0.000000e+00> : vector<16xf32>
    %1054 = vector.multi_reduction <add>, %1051, %cst_374 [1] : vector<16x16xf32> to vector<16xf32>
    %1055 = vector.shape_cast %1054 : vector<16xf32> to vector<16x1xf32>
    %1056 = tpu.reciprocal %1055 {approx = true} : vector<16x1xf32> -> vector<16x1xf32>
    %1057 = vector.broadcast %1056 : vector<16x1xf32> to vector<16x8xf32>
    %1058 = arith.mulf %1053, %1057 : vector<16x8xf32>
    %c0_375 = arith.constant 0 : index
    %c24_376 = arith.constant 24 : index
    %1059 = vector.load %arg11[%c0_375, %c24_376] : memref<16x32xf32, #tpu.memory_space<vmem>>, vector<16x8xf32>
    tpu.vector_store %arg11[%c0_375, %c24_376], %1058 {strides = array<i32>} : memref<16x32xf32, #tpu.memory_space<vmem>>, vector<16x8xf32>,
    %c0_377 = arith.constant 0 : index
    %c0_378 = arith.constant 0 : index
    %1060 = vector.load %arg11[%c0_377, %c0_378] : memref<16x32xf32, #tpu.memory_space<vmem>>, vector<16x32xf32>
    %cst_379 = arith.constant dense<0.000000e+00> : vector<16x32xf32>
    %1061 = tpu.matmul %1060, %955, %cst_379 {dimension_numbers = #tpu.dot_dimension_numbers<[1], [0], [0], [1], [0, 0, 1, 1], [], []>} : vector<16x32xf32>, vector<32x32xf32>, vector<16x32xf32> -> vector<16x32xf32>
    %1062 = arith.addf %933, %1061 : vector<16x32xf32>
    %1063 = vector.broadcast %939 : vector<1x32xf32> to vector<16x32xf32>
    %1064 = arith.addf %1062, %1063 : vector<16x32xf32>
    %c1_i32_380 = arith.constant 1 : i32
    %1065 = tpu.dynamic_rotate %1064 by %c1_i32_380 dim 0 : vector<16x32xf32>, i32 -> vector<16x32xf32>
    %1066 = vector.broadcast %1 : vector<16x1xf32> to vector<16x32xf32>
    %1067 = arith.mulf %1065, %1066 : vector<16x32xf32>
    %c15_i32_381 = arith.constant 15 : i32
    %1068 = tpu.dynamic_rotate %1064 by %c15_i32_381 dim 0 : vector<16x32xf32>, i32 -> vector<16x32xf32>
    %1069 = vector.broadcast %2 : vector<16x1xf32> to vector<16x32xf32>
    %1070 = arith.mulf %1068, %1069 : vector<16x32xf32>
    %1071 = vector.broadcast %947 : vector<1x32xf32> to vector<16x32xf32>
    %1072 = arith.mulf %1067, %1071 : vector<16x32xf32>
    %1073 = vector.broadcast %948 : vector<1x32xf32> to vector<16x32xf32>
    %1074 = arith.mulf %1064, %1073 : vector<16x32xf32>
    %1075 = arith.addf %1072, %1074 : vector<16x32xf32>
    %1076 = vector.broadcast %949 : vector<1x32xf32> to vector<16x32xf32>
    %1077 = arith.mulf %1070, %1076 : vector<16x32xf32>
    %1078 = arith.addf %1075, %1077 : vector<16x32xf32>
    %1079 = vector.broadcast %940 : vector<1x32xf32> to vector<16x32xf32>
    %1080 = arith.addf %1078, %1079 : vector<16x32xf32>
    %1081 = arith.negf %1080 : vector<16x32xf32>
    %1082 = math.exp %1081 : vector<16x32xf32>
    %cst_382 = arith.constant 1.000000e+00 : f32
    %1083 = vector.broadcast %cst_382 : f32 to vector<16x32xf32>
    %1084 = arith.addf %1083, %1082 : vector<16x32xf32>
    %1085 = arith.divf %1083, %1084 : vector<16x32xf32>
    %1086 = arith.mulf %1080, %1085 : vector<16x32xf32>
    %1087 = arith.addf %1064, %1086 : vector<16x32xf32>
    %1088 = arith.addf %1087, %959 : vector<16x32xf32>
    %cst_383 = arith.constant dense<0.000000e+00> : vector<16xf32>
    %1089 = vector.multi_reduction <add>, %1088, %cst_383 [1] : vector<16x32xf32> to vector<16xf32>
    %1090 = vector.shape_cast %1089 : vector<16xf32> to vector<16x1xf32>
    %cst_384 = arith.constant 3.200000e+01 : f32
    %1091 = vector.broadcast %cst_384 : f32 to vector<16x1xf32>
    %1092 = arith.divf %1090, %1091 : vector<16x1xf32>
    %1093 = vector.broadcast %1092 : vector<16x1xf32> to vector<16x32xf32>
    %1094 = arith.subf %1088, %1093 : vector<16x32xf32>
    %1095 = arith.mulf %1094, %1094 : vector<16x32xf32>
    %cst_385 = arith.constant dense<0.000000e+00> : vector<16xf32>
    %1096 = vector.multi_reduction <add>, %1095, %cst_385 [1] : vector<16x32xf32> to vector<16xf32>
    %1097 = vector.shape_cast %1096 : vector<16xf32> to vector<16x1xf32>
    %cst_386 = arith.constant 3.200000e+01 : f32
    %1098 = vector.broadcast %cst_386 : f32 to vector<16x1xf32>
    %1099 = arith.divf %1097, %1098 : vector<16x1xf32>
    %cst_387 = arith.constant 9.99999974E-6 : f32
    %1100 = vector.broadcast %cst_387 : f32 to vector<16x1xf32>
    %1101 = arith.addf %1099, %1100 : vector<16x1xf32>
    %1102 = math.rsqrt %1101 : vector<16x1xf32>
    %1103 = vector.broadcast %1102 : vector<16x1xf32> to vector<16x32xf32>
    %1104 = arith.mulf %1094, %1103 : vector<16x32xf32>
    %1105 = vector.broadcast %941 : vector<1x32xf32> to vector<16x32xf32>
    %1106 = arith.mulf %1104, %1105 : vector<16x32xf32>
    %1107 = vector.broadcast %942 : vector<1x32xf32> to vector<16x32xf32>
    %1108 = arith.addf %1106, %1107 : vector<16x32xf32>
    %c4_388 = arith.constant 4 : index
    %c0_389 = arith.constant 0 : index
    %c0_390 = arith.constant 0 : index
    %1109 = vector.load %arg6[%c4_388, %c0_389, %c0_390] : memref<5x33x64xf32, #tpu.memory_space<vmem>>, vector<1x32x64xf32>
    %1110 = vector.shape_cast %1109 : vector<1x32x64xf32> to vector<32x64xf32>
    %cst_391 = arith.constant dense<0.000000e+00> : vector<16x64xf32>
    %1111 = tpu.matmul %1108, %1110, %cst_391 {dimension_numbers = #tpu.dot_dimension_numbers<[1], [0], [0], [1], [0, 0, 1, 1], [], []>} : vector<16x32xf32>, vector<32x64xf32>, vector<16x64xf32> -> vector<16x64xf32>
    %c4_392 = arith.constant 4 : index
    %c32_393 = arith.constant 32 : index
    %c0_394 = arith.constant 0 : index
    %1112 = vector.load %arg6[%c4_392, %c32_393, %c0_394] : memref<5x33x64xf32, #tpu.memory_space<vmem>>, vector<1x1x64xf32>
    %1113 = vector.shape_cast %1112 : vector<1x1x64xf32> to vector<1x64xf32>
    %1114 = vector.broadcast %1113 : vector<1x64xf32> to vector<16x64xf32>
    %1115 = arith.addf %1111, %1114 : vector<16x64xf32>
    %cst_395 = arith.constant 5.000000e-01 : f32
    %1116 = vector.broadcast %cst_395 : f32 to vector<16x64xf32>
    %1117 = arith.mulf %1116, %1115 : vector<16x64xf32>
    %cst_396 = arith.constant 0.707106769 : f32
    %1118 = vector.broadcast %cst_396 : f32 to vector<16x64xf32>
    %1119 = arith.mulf %1115, %1118 : vector<16x64xf32>
    %cst_397 = arith.constant 0.000000e+00 : f32
    %1120 = vector.broadcast %cst_397 : f32 to vector<16x64xf32>
    %1121 = arith.cmpf oge, %1119, %1120 : vector<16x64xf32>
    %cst_398 = arith.constant 1.000000e+00 : f32
    %cst_399 = arith.constant -1.000000e+00 : f32
    %1122 = vector.broadcast %cst_398 : f32 to vector<16x64xf32>
    %1123 = vector.broadcast %cst_399 : f32 to vector<16x64xf32>
    %1124 = arith.select %1121, %1122, %1123 : vector<16x64xi1>, vector<16x64xf32>
    %1125 = math.absf %1119 : vector<16x64xf32>
    %cst_400 = arith.constant 0.327591091 : f32
    %1126 = vector.broadcast %cst_400 : f32 to vector<16x64xf32>
    %1127 = arith.mulf %1126, %1125 : vector<16x64xf32>
    %cst_401 = arith.constant 1.000000e+00 : f32
    %1128 = vector.broadcast %cst_401 : f32 to vector<16x64xf32>
    %1129 = arith.addf %1128, %1127 : vector<16x64xf32>
    %cst_402 = arith.constant 1.000000e+00 : f32
    %1130 = vector.broadcast %cst_402 : f32 to vector<16x64xf32>
    %1131 = arith.divf %1130, %1129 : vector<16x64xf32>
    %cst_403 = arith.constant 1.06140542 : f32
    %1132 = vector.broadcast %cst_403 : f32 to vector<16x64xf32>
    %1133 = arith.mulf %1132, %1131 : vector<16x64xf32>
    %cst_404 = arith.constant -1.45315206 : f32
    %1134 = vector.broadcast %cst_404 : f32 to vector<16x64xf32>
    %1135 = arith.addf %1133, %1134 : vector<16x64xf32>
    %1136 = arith.mulf %1135, %1131 : vector<16x64xf32>
    %cst_405 = arith.constant 1.42141378 : f32
    %1137 = vector.broadcast %cst_405 : f32 to vector<16x64xf32>
    %1138 = arith.addf %1136, %1137 : vector<16x64xf32>
    %1139 = arith.mulf %1138, %1131 : vector<16x64xf32>
    %cst_406 = arith.constant -0.284496725 : f32
    %1140 = vector.broadcast %cst_406 : f32 to vector<16x64xf32>
    %1141 = arith.addf %1139, %1140 : vector<16x64xf32>
    %1142 = arith.mulf %1141, %1131 : vector<16x64xf32>
    %cst_407 = arith.constant 0.254829586 : f32
    %1143 = vector.broadcast %cst_407 : f32 to vector<16x64xf32>
    %1144 = arith.addf %1142, %1143 : vector<16x64xf32>
    %1145 = arith.mulf %1144, %1131 : vector<16x64xf32>
    %cst_408 = arith.constant 0.000000e+00 : f32
    %1146 = vector.broadcast %cst_408 : f32 to vector<16x64xf32>
    %1147 = arith.subf %1146, %1125 : vector<16x64xf32>
    %1148 = arith.mulf %1147, %1125 : vector<16x64xf32>
    %1149 = math.exp %1148 : vector<16x64xf32>
    %1150 = arith.mulf %1145, %1149 : vector<16x64xf32>
    %cst_409 = arith.constant 1.000000e+00 : f32
    %1151 = vector.broadcast %cst_409 : f32 to vector<16x64xf32>
    %1152 = arith.subf %1151, %1150 : vector<16x64xf32>
    %1153 = arith.mulf %1124, %1152 : vector<16x64xf32>
    %cst_410 = arith.constant 1.000000e+00 : f32
    %1154 = vector.broadcast %cst_410 : f32 to vector<16x64xf32>
    %1155 = arith.addf %1154, %1153 : vector<16x64xf32>
    %1156 = arith.mulf %1117, %1155 : vector<16x64xf32>
    %c4_411 = arith.constant 4 : index
    %c0_412 = arith.constant 0 : index
    %c0_413 = arith.constant 0 : index
    %1157 = vector.load %arg7[%c4_411, %c0_412, %c0_413] : memref<5x64x32xf32, #tpu.memory_space<vmem>>, vector<1x64x32xf32>
    %1158 = vector.shape_cast %1157 : vector<1x64x32xf32> to vector<64x32xf32>
    %cst_414 = arith.constant dense<0.000000e+00> : vector<16x32xf32>
    %1159 = tpu.matmul %1156, %1158, %cst_414 {dimension_numbers = #tpu.dot_dimension_numbers<[1], [0], [0], [1], [0, 0, 1, 1], [], []>} : vector<16x64xf32>, vector<64x32xf32>, vector<16x32xf32> -> vector<16x32xf32>
    %1160 = arith.addf %1088, %1159 : vector<16x32xf32>
    %1161 = vector.broadcast %943 : vector<1x32xf32> to vector<16x32xf32>
    %1162 = arith.addf %1160, %1161 : vector<16x32xf32>
    %c0_415 = arith.constant 0 : index
    %c0_416 = arith.constant 0 : index
    %1163 = vector.load %arg4[%c0_415, %c0_416] : memref<3x16xf32, #tpu.memory_space<vmem>>, vector<2x16xf32>
    %cst_417 = arith.constant dense<0.000000e+00> : vector<2x32xf32>
    %1164 = tpu.matmul %1163, %1162, %cst_417 {dimension_numbers = #tpu.dot_dimension_numbers<[1], [0], [0], [1], [0, 0, 1, 1], [], []>} : vector<2x16xf32>, vector<16x32xf32>, vector<2x32xf32> -> vector<2x32xf32>
    %c0_418 = arith.constant 0 : index
    %c0_419 = arith.constant 0 : index
    %1165 = vector.load %arg9[%c0_418, %c0_419] : memref<33x5xf32, #tpu.memory_space<vmem>>, vector<32x5xf32>
    %cst_420 = arith.constant dense<0.000000e+00> : vector<2x5xf32>
    %1166 = tpu.matmul %1164, %1165, %cst_420 {dimension_numbers = #tpu.dot_dimension_numbers<[1], [0], [0], [1], [0, 0, 1, 1], [], []>} : vector<2x32xf32>, vector<32x5xf32>, vector<2x5xf32> -> vector<2x5xf32>
    %c32_421 = arith.constant 32 : index
    %c0_422 = arith.constant 0 : index
    %1167 = vector.load %arg9[%c32_421, %c0_422] : memref<33x5xf32, #tpu.memory_space<vmem>>, vector<1x5xf32>
    %1168 = vector.broadcast %1167 : vector<1x5xf32> to vector<2x5xf32>
    %1169 = arith.addf %1166, %1168 : vector<2x5xf32>
    %c0_423 = arith.constant 0 : index
    %c0_424 = arith.constant 0 : index
    %1170 = vector.load %arg10[%c0_423, %c0_424] : memref<2x5xf32, #tpu.memory_space<vmem>>, vector<2x5xf32>
    tpu.vector_store %arg10[%c0_423, %c0_424], %1169 {strides = array<i32>} : memref<2x5xf32, #tpu.memory_space<vmem>>, vector<2x5xf32>,
    return
  }
}

</mosaic_0001>

<llo_original>
// kernel: mamba_unet_forward.1
$region0: #{mamba_unet_forward.1}
  #allocation0 [shape = 'u32[]', space=smem, size = 0x4, offset = 0x4, fixed_abs, tag = 'smem constant byte address 0x4 - core index']
  #allocation1 [shape = 'u32[72,128]{1,0:T(1,128)}', space=vmem, size = 0x9000, scoped, tag = 'internal scratch']
  #allocation2 [shape = 'f32[16,32]{1,0:T(8,128)}', space=vmem, size = 0x2000, scoped, tag = 'scratch operand']
  %s0 = inlined_call_operand.vmem [shape: f32[16,192], index: 0, kind: input, shape index: {}]
  %s1 = inlined_call_operand.vmem [shape: f32[192,32], index: 1, kind: input, shape index: {}]
  %s2 = inlined_call_operand.vmem [shape: f32[17,32], index: 2, kind: input, shape index: {}]
  %s3 = inlined_call_operand.vmem [shape: f32[16,4], index: 3, kind: input, shape index: {}]
  %s4 = inlined_call_operand.vmem [shape: f32[3,16], index: 4, kind: input, shape index: {}]
  %s5 = inlined_call_operand.vmem [shape: f32[5,32,160], index: 5, kind: input, shape index: {}]
  %s6 = inlined_call_operand.vmem [shape: f32[5,33,64], index: 6, kind: input, shape index: {}]
  %s7 = inlined_call_operand.vmem [shape: f32[5,64,32], index: 7, kind: input, shape index: {}]
  %s8 = inlined_call_operand.vmem [shape: f32[5,14,32], index: 8, kind: input, shape index: {}]
  %s9 = inlined_call_operand.vmem [shape: f32[33,5], index: 9, kind: input, shape index: {}]
  %s10 = inlined_call_operand.hbm [shape: f32[2,5], index: 10, kind: output, shape index: {}]
  %s11 = sld [smem:[#allocation0]]
  $region50: #{mamba_unet_forward.1} parent=0
    _
  %s13 = ssub.s32 1, %s11
  %s14 = scalar_select 0, %s13, %s11
  $region1: #{mamba_unet_forward.1} parent=0
    #allocation3 [shape = 'u8[1024]{0}', space=vmem, size = 0x400, scoped, tag = 'output window, operand 0, single buffered']
    #allocation4 [shape = 's32[1]{0}', space=sflag, size = 0x4, scoped, tag = 'scoped memory for mamba_unet_forward.1']
    %15 = vsyncpa [#allocation4], 0
    // Predicated region
    $region2: #{mamba_unet_forward.1} parent=1 // pred_check
      _
    $region3: #{mamba_unet_forward.1} parent=1 // pred_check_branch
      %17 = sbr.rel (0) target = $region5
    $region4: #{mamba_unet_forward.1} parent=1 // pred_region
      _
    $region5: #{mamba_unet_forward.1} parent=1 // pred_fallthru
      _
    // Predicated region
    $region6: #{mamba_unet_forward.1} parent=1 // pred_check
      _
    $region7: #{mamba_unet_forward.1} parent=1 // pred_check_branch
      %19 = sbr.rel (0) target = $region9
    $region8: #{mamba_unet_forward.1} parent=1 // pred_region
      _
    $region9: #{mamba_unet_forward.1} parent=1 // pred_fallthru
      _
    // Predicated region
    $region10: #{mamba_unet_forward.1} parent=1 // pred_check
      _
    $region11: #{mamba_unet_forward.1} parent=1 // pred_check_branch
      %21 = sbr.rel (0) target = $region13
    $region12: #{mamba_unet_forward.1} parent=1 // pred_region
      _
    $region13: #{mamba_unet_forward.1} parent=1 // pred_fallthru
      _
    // Predicated region
    $region14: #{mamba_unet_forward.1} parent=1 // pred_check
      _
    $region15: #{mamba_unet_forward.1} parent=1 // pred_check_branch
      %23 = sbr.rel (0) target = $region17
    $region16: #{mamba_unet_forward.1} parent=1 // pred_region
      _
    $region17: #{mamba_unet_forward.1} parent=1 // pred_fallthru
      _
    // Predicated region
    $region18: #{mamba_unet_forward.1} parent=1 // pred_check
      _
    $region19: #{mamba_unet_forward.1} parent=1 // pred_check_branch
      %25 = sbr.rel (0) target = $region21
    $region20: #{mamba_unet_forward.1} parent=1 // pred_region
      _
    $region21: #{mamba_unet_forward.1} parent=1 // pred_fallthru
      _
    // Predicated region
    $region22: #{mamba_unet_forward.1} parent=1 // pred_check
      _
    $region23: #{mamba_unet_forward.1} parent=1 // pred_check_branch
      %27 = sbr.rel (0) target = $region25
    $region24: #{mamba_unet_forward.1} parent=1 // pred_region
      _
    $region25: #{mamba_unet_forward.1} parent=1 // pred_fallthru
      _
    // Predicated region
    $region26: #{mamba_unet_forward.1} parent=1 // pred_check
      _
    $region27: #{mamba_unet_forward.1} parent=1 // pred_check_branch
      %29 = sbr.rel (0) target = $region29
    $region28: #{mamba_unet_forward.1} parent=1 // pred_region
      _
    $region29: #{mamba_unet_forward.1} parent=1 // pred_fallthru
      _
    // Predicated region
    $region30: #{mamba_unet_forward.1} parent=1 // pred_check
      _
    $region31: #{mamba_unet_forward.1} parent=1 // pred_check_branch
      %31 = sbr.rel (0) target = $region33
    $region32: #{mamba_unet_forward.1} parent=1 // pred_region
      _
    $region33: #{mamba_unet_forward.1} parent=1 // pred_fallthru
      _
    // Predicated region
    $region34: #{mamba_unet_forward.1} parent=1 // pred_check
      _
    $region35: #{mamba_unet_forward.1} parent=1 // pred_check_branch
      %33 = sbr.rel (0) target = $region37
    $region36: #{mamba_unet_forward.1} parent=1 // pred_region
      _
    $region37: #{mamba_unet_forward.1} parent=1 // pred_fallthru
      _
    // Predicated region
    $region38: #{mamba_unet_forward.1} parent=1 // pred_check
      _
    $region39: #{mamba_unet_forward.1} parent=1 // pred_check_branch
      %35 = sbr.rel (0) target = $region41
    $region40: #{mamba_unet_forward.1} parent=1 // pred_region
      _
    $region41: #{mamba_unet_forward.1} parent=1 // pred_fallthru
      _
    %v36 = vld [vmem:[%s3] sm:$0xff]
    %v37 = vld [vmem:[%s3 + $0x8] sm:$0xff]
    %v38 = vld [vmem:[%s4 + $0x2] sm:$0x1]
    %40 = vset.pattern.permute.xlu0 0
    %41 = vperm.xlu0 %40, %v36
    %v42 = vpop.permute.xlu0 %41
    %45 = vset.pattern.permute.xlu0 0
    %46 = vperm.xlu0 %45, %v37
    %v47 = vpop.permute.xlu0 %46
    %v49 = vperm.slane %v38, 0
    %vm50 = vcmp.eq.f32.partialorder %v42, %v49
    %vm51 = vcmp.eq.f32.partialorder %v47, %v49
    %v52 = vsel %vm50, 0.0, -1e+30
    %v53 = vsel %vm51, 0.0, -1e+30
    %v54 = vld [vmem:[%s0] sm:$0xff]
    %v55 = vld [vmem:[%s0 + $0x8] sm:$0xff]
    %v56 = vld [vmem:[%s0 + $0x10] sm:$0xff]
    %v57 = vld [vmem:[%s0 + $0x18] sm:$0xff]
    %v58 = vld [vmem:[%s1] sm:$0xff]
    %v59 = vld [vmem:[%s1 + $0x8] sm:$0xff]
    %v60 = vld [vmem:[%s1 + $0x10] sm:$0xff]
    %v61 = vld [vmem:[%s1 + $0x18] sm:$0xff]
    %v62 = vld [vmem:[%s1 + $0x20] sm:$0xff]
    %v63 = vld [vmem:[%s1 + $0x28] sm:$0xff]
    %v64 = vld [vmem:[%s1 + $0x30] sm:$0xff]
    %v65 = vld [vmem:[%s1 + $0x38] sm:$0xff]
    %v66 = vld [vmem:[%s1 + $0x40] sm:$0xff]
    %v67 = vld [vmem:[%s1 + $0x48] sm:$0xff]
    %v68 = vld [vmem:[%s1 + $0x50] sm:$0xff]
    %v69 = vld [vmem:[%s1 + $0x58] sm:$0xff]
    %v70 = vld [vmem:[%s1 + $0x60] sm:$0xff]
    %v71 = vld [vmem:[%s1 + $0x68] sm:$0xff]
    %v72 = vld [vmem:[%s1 + $0x70] sm:$0xff]
    %v73 = vld [vmem:[%s1 + $0x78] sm:$0xff]
    %v74 = vld [vmem:[%s1 + $0x80] sm:$0xff]
    %v75 = vld [vmem:[%s1 + $0x88] sm:$0xff]
    %v76 = vld [vmem:[%s1 + $0x90] sm:$0xff]
    %v77 = vld [vmem:[%s1 + $0x98] sm:$0xff]
    %v78 = vld [vmem:[%s1 + $0xa0] sm:$0xff]
    %v79 = vld [vmem:[%s1 + $0xa8] sm:$0xff]
    %v80 = vld [vmem:[%s1 + $0xb0] sm:$0xff]
    %v81 = vld [vmem:[%s1 + $0xb8] sm:$0xff]
    %v82 = vld [vmem:[%s2] sm:$0xff]
    %v83 = vld [vmem:[%s2 + $0x8] sm:$0xff]
    %vm84 = vcmask 523264
    %v86 = vsel %vm84, %v55, 0
    %v89 = vsel %vm84, %v57, 0
    %91 = vmatpush.msra.mxu0 %v73
    %92 = vmatpush.msra.mxu0 %v72
    %93 = vmatpush.msra.mxu0 %v71
    %94 = vmatpush.msra.mxu0 %v70
    %95 = vmatpush.msra.mxu0 %v69
    %96 = vmatpush.msra.mxu0 %v68
    %97 = vmatpush.msra.mxu0 %v67
    %98 = vmatpush.msra.mxu0 %v66
    %99 = vmatpush.msra.mxu0 %v65
    %100 = vmatpush.msra.mxu0 %v64
    %101 = vmatpush.msra.mxu0 %v63
    %102 = vmatpush.msra.mxu0 %v62
    %103 = vmatpush.msra.mxu0 %v61
    %104 = vmatpush.msra.mxu0 %v60
    %105 = vmatpush.msra.mxu0 %v59
    %106 = vmatpush.msra.mxu0 %v58
    %107 = vmatmul.f32.gmra.mxu0 %v54
    %v108 = vpop.f32.mrf.mxu0
    %v109 = vadd.f32 %v82, %v108
    %110 = vmatmul.f32.gmra.mxu0 %v56
    %v111 = vpop.f32.mrf.mxu0
    %v112 = vadd.f32 %v83, %v111
    %113 = vdwg.mxu0
    %114 = vmatpush.msra.mxu0 0.0
    %115 = vmatpush.msra.mxu0 0.0
    %116 = vmatpush.msra.mxu0 0.0
    %117 = vmatpush.msra.mxu0 0.0
    %118 = vmatpush.msra.mxu0 0.0
    %119 = vmatpush.msra.mxu0 0.0
    %120 = vmatpush.msra.mxu0 0.0
    %121 = vmatpush.msra.mxu0 0.0
    %122 = vmatpush.msra.mxu0 %v81
    %123 = vmatpush.msra.mxu0 %v80
    %124 = vmatpush.msra.mxu0 %v79
    %125 = vmatpush.msra.mxu0 %v78
    %126 = vmatpush.msra.mxu0 %v77
    %127 = vmatpush.msra.mxu0 %v76
    %128 = vmatpush.msra.mxu0 %v75
    %129 = vmatpush.msra.mxu0 %v74
    %130 = vmatmul.f32.gmra.mxu0 %v86
    %v131 = vpop.f32.mrf.mxu0
    %v132 = vadd.f32 %v109, %v131
    %133 = vmatmul.f32.gmra.mxu0 %v89
    %v134 = vpop.f32.mrf.mxu0
    %v135 = vadd.f32 %v112, %v134
    %136 = vdwg.mxu0
    %v137 = vld [vmem:[%s2 + $0x10] sm:$0x1]
    %v138 = vperm.slane %v137, 0
    %v139 = vld [vmem:[%s8] sm:$0xff]
    %v140 = vld [vmem:[%s8 + $0x8] sm:$0x3f]
    %v141 = vld [vmem:[%s5] sm:$0xff]
    %v142 = vld [vmem:[%s5 + $0x10] sm:$0xff]
    %v143 = vld [vmem:[%s5 + $0x20] sm:$0xff]
    %v144 = vld [vmem:[%s5 + $0x30] sm:$0xff]
    %v145 = vld [vmem:[%s5 + $0x8] sm:$0xff]
    %v146 = vld [vmem:[%s5 + $0x18] sm:$0xff]
    %v147 = vld [vmem:[%s5 + $0x28] sm:$0xff]
    %v148 = vld [vmem:[%s5 + $0x38] sm:$0xff]
    %v149 = vperm.slane %v139, 0
    %155 = vrot.lane.b32.xlu0 %v141, 32
    %v156 = vpop.permute.xlu0 %155
    %157 = vrot.lane.b32.xlu0 %v142, 32
    %v158 = vpop.permute.xlu0 %157
    %159 = vrot.lane.b32.xlu0 %v143, 32
    %v160 = vpop.permute.xlu0 %159
    %161 = vrot.lane.b32.xlu0 %v144, 32
    %v162 = vpop.permute.xlu0 %161
    %vm167 = vcmask 261120
    %v168 = vsel %vm167, %v138, 0
    %170 = vmatpush.msra.mxu0 0.0
    %171 = vmatpush.msra.mxu0 0.0
    %172 = vmatpush.msra.mxu0 0.0
    %173 = vmatpush.msra.mxu0 0.0
    %174 = vmatpush.msra.mxu0 0.0
    %175 = vmatpush.msra.mxu0 0.0
    %176 = vmatpush.msra.mxu0 0.0
    %177 = vmatpush.msra.mxu0 0.0
    %178 = vmatpush.msra.mxu0 0.0
    %179 = vmatpush.msra.mxu0 0.0
    %180 = vmatpush.msra.mxu0 0.0
    %181 = vmatpush.msra.mxu0 0.0
    %182 = vmatpush.msra.mxu0 %v162
    %183 = vmatpush.msra.mxu0 %v160
    %184 = vmatpush.msra.mxu0 %v158
    %185 = vmatpush.msra.mxu0 %v156
    %186 = vmatmul.f32.gmra.mxu0 %v168
    %v187 = vpop.f32.mrf.mxu0
    %v188 = vadd.f32 %v149, %v187
    %189 = vmatmul.f32.gmra.mxu0 %v168
    %v190 = vpop.f32.mrf.mxu0
    %v191 = vadd.f32 %v149, %v190
    %192 = vdwg.mxu0
    %v193 = vadd.f32 %v188, %v132
    %v194 = vadd.f32 %v191, %v135
    %v195 = vsel %vm167, %v132, 0.0
    %196 = vadd.xlane.f32.xlu0 %v195
    %v197 = vpop.xlane.xlu0 %196
    %v198 = vsel %vm167, %v135, 0.0
    %199 = vadd.xlane.f32.xlu0 %v198
    %v200 = vpop.xlane.xlu0 %199
    %v201 = vrcp.pop 32.0
    %v202 = vmul.f32 32.0, %v201
    %v203 = vsub.f32 1.0, %v202
    %v204 = vmul.f32 %v201, %v203
    %v205 = vadd.f32 %v201, %v204
    %vm206 = vweird.f32 %v201
    %v207 = vsel %vm206, %v201, %v205
    %v208 = vmul.f32 %v197, %v207
    %v209 = vmul.f32 %v200, %v207
    %v210 = vsub.f32 %v132, %v208
    %v211 = vsub.f32 %v135, %v209
    %v212 = vmul.f32 %v210, %v210
    %v213 = vmul.f32 %v211, %v211
    %v214 = vsel %vm167, %v212, 0.0
    %215 = vadd.xlane.f32.xlu0 %v214
    %v216 = vpop.xlane.xlu0 %215
    %v217 = vsel %vm167, %v213, 0.0
    %218 = vadd.xlane.f32.xlu0 %v217
    %v219 = vpop.xlane.xlu0 %218
    %v220 = vmul.f32 %v216, %v207
    %v221 = vmul.f32 %v219, %v207
    %v222 = vadd.f32 %v220, 1e-05
    %v223 = vadd.f32 %v221, 1e-05
    %v224 = vrsqrt.pop %v222
    %v225 = vmul.f32 %v224, %v222
    %v226 = vmul.f32 %v225, %v224
    %v227 = vmul.f32 0.5, %v226
    %v228 = vsub.f32 1.5, %v227
    %v229 = vmul.f32 %v224, %v228
    %vm230 = vweird.f32 %v222
    %vm231 = vweird.f32 %v224
    %vm232 = vmor %vm230, %vm231
    %v233 = vsel %vm232, %v224, %v229
    %v234 = vrsqrt.pop %v223
    %v235 = vmul.f32 %v234, %v223
    %v236 = vmul.f32 %v235, %v234
    %v237 = vmul.f32 0.5, %v236
    %v238 = vsub.f32 1.5, %v237
    %v239 = vmul.f32 %v234, %v238
    %vm240 = vweird.f32 %v223
    %vm241 = vweird.f32 %v234
    %vm242 = vmor %vm240, %vm241
    %v243 = vsel %vm242, %v234, %v239
    %v244 = vmul.f32 %v210, %v233
    %v245 = vmul.f32 %v211, %v243
    %v246 = vperm.slane %v139, 1
    %v247 = vmul.f32 %v244, %v246
    %v248 = vmul.f32 %v245, %v246
    %v249 = vperm.slane %v139, 2
    %v250 = vadd.f32 %v247, %v249
    %v251 = vadd.f32 %v248, %v249
    %v253 = vsel %vm167, %v250, 0
    %v256 = vsel %vm167, %v251, 0
    %258 = vmatpush.msra.mxu0 0.0
    %259 = vmatpush.msra.mxu0 0.0
    %260 = vmatpush.msra.mxu0 0.0
    %261 = vmatpush.msra.mxu0 0.0
    %262 = vmatpush.msra.mxu0 0.0
    %263 = vmatpush.msra.mxu0 0.0
    %264 = vmatpush.msra.mxu0 0.0
    %265 = vmatpush.msra.mxu0 0.0
    %266 = vmatpush.msra.mxu0 0.0
    %267 = vmatpush.msra.mxu0 0.0
    %268 = vmatpush.msra.mxu0 0.0
    %269 = vmatpush.msra.mxu0 0.0
    %270 = vmatpush.msra.mxu0 %v144
    %271 = vmatpush.msra.mxu0 %v143
    %272 = vmatpush.msra.mxu0 %v142
    %273 = vmatpush.msra.mxu0 %v141
    %274 = vmatmul.f32.gmra.mxu0 %v253
    %v275 = vpop.f32.mrf.mxu0
    %v276 = vadd.f32 0.0, %v275
    %277 = vmatmul.f32.gmra.mxu0 %v256
    %v278 = vpop.f32.mrf.mxu0
    %v279 = vadd.f32 0.0, %v278
    %280 = vdwg.mxu0
    %v281 = vperm.slane %v140, 0
    %v282 = vadd.f32 %v276, %v281
    %v283 = vadd.f32 %v279, %v281
    %v284 = vmul.f32 %v282, 0.35355338
    %v285 = vmul.f32 %v283, 0.35355338
    %v286 = vperm.slane %v140, 1
    %288 = vrot.lane.b32.xlu0 %v286, 32
    %v289 = vpop.permute.xlu0 %288
    %v291 = vadd.f32 %v276, %v289
    %v292 = vadd.f32 %v279, %v289
    %v293 = vperm.slane %v140, 2
    %295 = vrot.lane.b32.xlu0 %v293, 64
    %v296 = vpop.permute.xlu0 %295
    %v298 = vadd.f32 %v276, %v296
    %v299 = vadd.f32 %v279, %v296
    %302 = vrot.lane.b32.xlu0 %v291, 96
    %v303 = vpop.permute.xlu0 %302
    %304 = vrot.lane.b32.xlu0 %v292, 96
    %v305 = vpop.permute.xlu0 %304
    %vm306 = vcmask 64512
    %v308 = vsel %vm306, %v284, 0
    %v311 = vsel %vm306, %v285, 0
    %v313 = vsel %vm306, %v303, 0
    %v315 = vsel %vm306, %v305, 0
    %317 = vmatpush.xpose.msra.mxu0 0.0
    %318 = vmatpush.xpose.msra.mxu0 0.0
    %319 = vmatpush.xpose.msra.mxu0 0.0
    %320 = vmatpush.xpose.msra.mxu0 0.0
    %321 = vmatpush.xpose.msra.mxu0 0.0
    %322 = vmatpush.xpose.msra.mxu0 0.0
    %323 = vmatpush.xpose.msra.mxu0 0.0
    %324 = vmatpush.xpose.msra.mxu0 0.0
    %325 = vmatpush.xpose.msra.mxu0 0.0
    %326 = vmatpush.xpose.msra.mxu0 0.0
    %327 = vmatpush.xpose.msra.mxu0 0.0
    %328 = vmatpush.xpose.msra.mxu0 0.0
    %329 = vmatpush.xpose.msra.mxu0 0.0
    %330 = vmatpush.xpose.msra.mxu0 0.0
    %331 = vmatpush.xpose.msra.mxu0 %v315
    %332 = vmatpush.xpose.msra.mxu0 %v313
    %333 = vmatmul.f32.gmra.mxu0 %v308
    %v334 = vpop.f32.mrf.mxu0
    %v335 = vadd.f32 %v52, %v334
    %336 = vmatmul.f32.gmra.mxu0 %v311
    %v337 = vpop.f32.mrf.mxu0
    %v338 = vadd.f32 %v53, %v337
    %339 = vdwg.mxu0
    %vm340 = vcmask 130048
    %v341 = vsel %vm340, %v335, -inf
    %342 = vmax.xlane.f32.xlu0 %v341
    %v343 = vpop.xlane.xlu0 %342
    %v344 = vsel %vm340, %v338, -inf
    %345 = vmax.xlane.f32.xlu0 %v344
    %v346 = vpop.xlane.xlu0 %345
    %v347 = vsub.f32 %v335, %v343
    %v348 = vsub.f32 %v338, %v346
    %v349 = vmul.f32 %v347, 1.442695
    %v350 = vpow.pop %v349
    %v351 = vmul.f32 %v348, 1.442695
    %v352 = vpow.pop %v351
    %355 = vrot.lane.b32.xlu0 %v298, 64
    %v356 = vpop.permute.xlu0 %355
    %357 = vrot.lane.b32.xlu0 %v299, 64
    %v358 = vpop.permute.xlu0 %357
    %v362 = vsel %vm340, %v350, 0
    %v365 = vsel %vm340, %v352, 0
    %367 = vmatpush.msra.mxu0 0.0
    %368 = vmatpush.msra.mxu0 0.0
    %369 = vmatpush.msra.mxu0 0.0
    %370 = vmatpush.msra.mxu0 0.0
    %371 = vmatpush.msra.mxu0 0.0
    %372 = vmatpush.msra.mxu0 0.0
    %373 = vmatpush.msra.mxu0 0.0
    %374 = vmatpush.msra.mxu0 0.0
    %375 = vmatpush.msra.mxu0 0.0
    %376 = vmatpush.msra.mxu0 0.0
    %377 = vmatpush.msra.mxu0 0.0
    %378 = vmatpush.msra.mxu0 0.0
    %379 = vmatpush.msra.mxu0 0.0
    %380 = vmatpush.msra.mxu0 0.0
    %381 = vmatpush.msra.mxu0 %v358
    %382 = vmatpush.msra.mxu0 %v356
    %383 = vmatmul.f32.gmra.mxu0 %v362
    %v384 = vpop.f32.mrf.mxu0
    %v385 = vadd.f32 0.0, %v384
    %386 = vmatmul.f32.gmra.mxu0 %v365
    %v387 = vpop.f32.mrf.mxu0
    %v388 = vadd.f32 0.0, %v387
    %389 = vdwg.mxu0
    %v390 = vsel %vm340, %v350, 0.0
    %391 = vadd.xlane.f32.xlu0 %v390
    %v392 = vpop.xlane.xlu0 %391
    %v393 = vsel %vm340, %v352, 0.0
    %394 = vadd.xlane.f32.xlu0 %v393
    %v395 = vpop.xlane.xlu0 %394
    %v396 = vrcp.pop %v392
    %v397 = vrcp.pop %v395
    %v398 = vmul.f32 %v385, %v396
    %v399 = vmul.f32 %v388, %v397
    %400 = vst.msk [vmem:[#allocation2] sm:$0xff] %vm306, %v398
    %401 = vst.msk [vmem:[#allocation2 + $0x8] sm:$0xff] %vm306, %v399
    %402 = vrot.lane.b32.xlu0 %v284, 120
    %v403 = vpop.permute.xlu0 %402
    %404 = vrot.lane.b32.xlu0 %v285, 120
    %v405 = vpop.permute.xlu0 %404
    %406 = vrot.lane.b32.xlu0 %v291, 88
    %v407 = vpop.permute.xlu0 %406
    %408 = vrot.lane.b32.xlu0 %v292, 88
    %v409 = vpop.permute.xlu0 %408
    %v410 = vsel %vm306, %v403, 0
    %v412 = vsel %vm306, %v405, 0
    %v414 = vsel %vm306, %v407, 0
    %v416 = vsel %vm306, %v409, 0
    %418 = vmatpush.xpose.msra.mxu0 0.0
    %419 = vmatpush.xpose.msra.mxu0 0.0
    %420 = vmatpush.xpose.msra.mxu0 0.0
    %421 = vmatpush.xpose.msra.mxu0 0.0
    %422 = vmatpush.xpose.msra.mxu0 0.0
    %423 = vmatpush.xpose.msra.mxu0 0.0
    %424 = vmatpush.xpose.msra.mxu0 0.0
    %425 = vmatpush.xpose.msra.mxu0 0.0
    %426 = vmatpush.xpose.msra.mxu0 0.0
    %427 = vmatpush.xpose.msra.mxu0 0.0
    %428 = vmatpush.xpose.msra.mxu0 0.0
    %429 = vmatpush.xpose.msra.mxu0 0.0
    %430 = vmatpush.xpose.msra.mxu0 0.0
    %431 = vmatpush.xpose.msra.mxu0 0.0
    %432 = vmatpush.xpose.msra.mxu0 %v416
    %433 = vmatpush.xpose.msra.mxu0 %v414
    %434 = vmatmul.f32.gmra.mxu0 %v410
    %v435 = vpop.f32.mrf.mxu0
    %v436 = vadd.f32 %v52, %v435
    %437 = vmatmul.f32.gmra.mxu0 %v412
    %v438 = vpop.f32.mrf.mxu0
    %v439 = vadd.f32 %v53, %v438
    %440 = vdwg.mxu0
    %v441 = vsel %vm340, %v436, -inf
    %442 = vmax.xlane.f32.xlu0 %v441
    %v443 = vpop.xlane.xlu0 %442
    %v444 = vsel %vm340, %v439, -inf
    %445 = vmax.xlane.f32.xlu0 %v444
    %v446 = vpop.xlane.xlu0 %445
    %v447 = vsub.f32 %v436, %v443
    %v448 = vsub.f32 %v439, %v446
    %v449 = vmul.f32 %v447, 1.442695
    %v450 = vpow.pop %v449
    %v451 = vmul.f32 %v448, 1.442695
    %v452 = vpow.pop %v451
    %453 = vrot.lane.b32.xlu0 %v298, 56
    %v454 = vpop.permute.xlu0 %453
    %455 = vrot.lane.b32.xlu0 %v299, 56
    %v456 = vpop.permute.xlu0 %455
    %v460 = vsel %vm340, %v450, 0
    %v463 = vsel %vm340, %v452, 0
    %465 = vmatpush.msra.mxu0 0.0
    %466 = vmatpush.msra.mxu0 0.0
    %467 = vmatpush.msra.mxu0 0.0
    %468 = vmatpush.msra.mxu0 0.0
    %469 = vmatpush.msra.mxu0 0.0
    %470 = vmatpush.msra.mxu0 0.0
    %471 = vmatpush.msra.mxu0 0.0
    %472 = vmatpush.msra.mxu0 0.0
    %473 = vmatpush.msra.mxu0 0.0
    %474 = vmatpush.msra.mxu0 0.0
    %475 = vmatpush.msra.mxu0 0.0
    %476 = vmatpush.msra.mxu0 0.0
    %477 = vmatpush.msra.mxu0 0.0
    %478 = vmatpush.msra.mxu0 0.0
    %479 = vmatpush.msra.mxu0 %v456
    %480 = vmatpush.msra.mxu0 %v454
    %481 = vmatmul.f32.gmra.mxu0 %v460
    %v482 = vpop.f32.mrf.mxu0
    %v483 = vadd.f32 0.0, %v482
    %484 = vmatmul.f32.gmra.mxu0 %v463
    %v485 = vpop.f32.mrf.mxu0
    %v486 = vadd.f32 0.0, %v485
    %487 = vdwg.mxu0
    %v488 = vsel %vm340, %v450, 0.0
    %489 = vadd.xlane.f32.xlu0 %v488
    %v490 = vpop.xlane.xlu0 %489
    %v491 = vsel %vm340, %v452, 0.0
    %492 = vadd.xlane.f32.xlu0 %v491
    %v493 = vpop.xlane.xlu0 %492
    %v494 = vrcp.pop %v490
    %v495 = vrcp.pop %v493
    %v496 = vmul.f32 %v483, %v494
    %v497 = vmul.f32 %v486, %v495
    %500 = vrot.lane.b32.xlu0 %v496, 8
    %v501 = vpop.permute.xlu0 %500
    %502 = vrot.lane.b32.xlu0 %v497, 8
    %v503 = vpop.permute.xlu0 %502
    %vm506 = vcmask 130112
    %507 = vst.msk [vmem:[#allocation2] sm:$0xff] %vm506, %v501
    %508 = vst.msk [vmem:[#allocation2 + $0x8] sm:$0xff] %vm506, %v503
    %509 = vrot.lane.b32.xlu0 %v284, 112
    %v510 = vpop.permute.xlu0 %509
    %511 = vrot.lane.b32.xlu0 %v285, 112
    %v512 = vpop.permute.xlu0 %511
    %513 = vrot.lane.b32.xlu0 %v291, 80
    %v514 = vpop.permute.xlu0 %513
    %515 = vrot.lane.b32.xlu0 %v292, 80
    %v516 = vpop.permute.xlu0 %515
    %v517 = vsel %vm306, %v510, 0
    %v519 = vsel %vm306, %v512, 0
    %v521 = vsel %vm306, %v514, 0
    %v523 = vsel %vm306, %v516, 0
    %525 = vmatpush.xpose.msra.mxu0 0.0
    %526 = vmatpush.xpose.msra.mxu0 0.0
    %527 = vmatpush.xpose.msra.mxu0 0.0
    %528 = vmatpush.xpose.msra.mxu0 0.0
    %529 = vmatpush.xpose.msra.mxu0 0.0
    %530 = vmatpush.xpose.msra.mxu0 0.0
    %531 = vmatpush.xpose.msra.mxu0 0.0
    %532 = vmatpush.xpose.msra.mxu0 0.0
    %533 = vmatpush.xpose.msra.mxu0 0.0
    %534 = vmatpush.xpose.msra.mxu0 0.0
    %535 = vmatpush.xpose.msra.mxu0 0.0
    %536 = vmatpush.xpose.msra.mxu0 0.0
    %537 = vmatpush.xpose.msra.mxu0 0.0
    %538 = vmatpush.xpose.msra.mxu0 0.0
    %539 = vmatpush.xpose.msra.mxu0 %v523
    %540 = vmatpush.xpose.msra.mxu0 %v521
    %541 = vmatmul.f32.gmra.mxu0 %v517
    %v542 = vpop.f32.mrf.mxu0
    %v543 = vadd.f32 %v52, %v542
    %544 = vmatmul.f32.gmra.mxu0 %v519
    %v545 = vpop.f32.mrf.mxu0
    %v546 = vadd.f32 %v53, %v545
    %547 = vdwg.mxu0
    %v548 = vsel %vm340, %v543, -inf
    %549 = vmax.xlane.f32.xlu0 %v548
    %v550 = vpop.xlane.xlu0 %549
    %v551 = vsel %vm340, %v546, -inf
    %552 = vmax.xlane.f32.xlu0 %v551
    %v553 = vpop.xlane.xlu0 %552
    %v554 = vsub.f32 %v543, %v550
    %v555 = vsub.f32 %v546, %v553
    %v556 = vmul.f32 %v554, 1.442695
    %v557 = vpow.pop %v556
    %v558 = vmul.f32 %v555, 1.442695
    %v559 = vpow.pop %v558
    %560 = vrot.lane.b32.xlu0 %v298, 48
    %v561 = vpop.permute.xlu0 %560
    %562 = vrot.lane.b32.xlu0 %v299, 48
    %v563 = vpop.permute.xlu0 %562
    %v567 = vsel %vm340, %v557, 0
    %v570 = vsel %vm340, %v559, 0
    %572 = vmatpush.msra.mxu0 0.0
    %573 = vmatpush.msra.mxu0 0.0
    %574 = vmatpush.msra.mxu0 0.0
    %575 = vmatpush.msra.mxu0 0.0
    %576 = vmatpush.msra.mxu0 0.0
    %577 = vmatpush.msra.mxu0 0.0
    %578 = vmatpush.msra.mxu0 0.0
    %579 = vmatpush.msra.mxu0 0.0
    %580 = vmatpush.msra.mxu0 0.0
    %581 = vmatpush.msra.mxu0 0.0
    %582 = vmatpush.msra.mxu0 0.0
    %583 = vmatpush.msra.mxu0 0.0
    %584 = vmatpush.msra.mxu0 0.0
    %585 = vmatpush.msra.mxu0 0.0
    %586 = vmatpush.msra.mxu0 %v563
    %587 = vmatpush.msra.mxu0 %v561
    %588 = vmatmul.f32.gmra.mxu0 %v567
    %v589 = vpop.f32.mrf.mxu0
    %v590 = vadd.f32 0.0, %v589
    %591 = vmatmul.f32.gmra.mxu0 %v570
    %v592 = vpop.f32.mrf.mxu0
    %v593 = vadd.f32 0.0, %v592
    %594 = vdwg.mxu0
    %v595 = vsel %vm340, %v557, 0.0
    %596 = vadd.xlane.f32.xlu0 %v595
    %v597 = vpop.xlane.xlu0 %596
    %v598 = vsel %vm340, %v559, 0.0
    %599 = vadd.xlane.f32.xlu0 %v598
    %v600 = vpop.xlane.xlu0 %599
    %v601 = vrcp.pop %v597
    %v602 = vrcp.pop %v600
    %v603 = vmul.f32 %v590, %v601
    %v604 = vmul.f32 %v593, %v602
    %607 = vrot.lane.b32.xlu0 %v603, 16
    %v608 = vpop.permute.xlu0 %607
    %609 = vrot.lane.b32.xlu0 %v604, 16
    %v610 = vpop.permute.xlu0 %609
    %vm613 = vcmask 195712
    %614 = vst.msk [vmem:[#allocation2] sm:$0xff] %vm613, %v608
    %615 = vst.msk [vmem:[#allocation2 + $0x8] sm:$0xff] %vm613, %v610
    %616 = vrot.lane.b32.xlu0 %v284, 104
    %v617 = vpop.permute.xlu0 %616
    %618 = vrot.lane.b32.xlu0 %v285, 104
    %v619 = vpop.permute.xlu0 %618
    %620 = vrot.lane.b32.xlu0 %v291, 72
    %v621 = vpop.permute.xlu0 %620
    %622 = vrot.lane.b32.xlu0 %v292, 72
    %v623 = vpop.permute.xlu0 %622
    %v624 = vsel %vm306, %v617, 0
    %v626 = vsel %vm306, %v619, 0
    %v628 = vsel %vm306, %v621, 0
    %v630 = vsel %vm306, %v623, 0
    %632 = vmatpush.xpose.msra.mxu0 0.0
    %633 = vmatpush.xpose.msra.mxu0 0.0
    %634 = vmatpush.xpose.msra.mxu0 0.0
    %635 = vmatpush.xpose.msra.mxu0 0.0
    %636 = vmatpush.xpose.msra.mxu0 0.0
    %637 = vmatpush.xpose.msra.mxu0 0.0
    %638 = vmatpush.xpose.msra.mxu0 0.0
    %639 = vmatpush.xpose.msra.mxu0 0.0
    %640 = vmatpush.xpose.msra.mxu0 0.0
    %641 = vmatpush.xpose.msra.mxu0 0.0
    %642 = vmatpush.xpose.msra.mxu0 0.0
    %643 = vmatpush.xpose.msra.mxu0 0.0
    %644 = vmatpush.xpose.msra.mxu0 0.0
    %645 = vmatpush.xpose.msra.mxu0 0.0
    %646 = vmatpush.xpose.msra.mxu0 %v630
    %647 = vmatpush.xpose.msra.mxu0 %v628
    %648 = vmatmul.f32.gmra.mxu0 %v624
    %v649 = vpop.f32.mrf.mxu0
    %v650 = vadd.f32 %v52, %v649
    %651 = vmatmul.f32.gmra.mxu0 %v626
    %v652 = vpop.f32.mrf.mxu0
    %v653 = vadd.f32 %v53, %v652
    %654 = vdwg.mxu0
    %v655 = vsel %vm340, %v650, -inf
    %656 = vmax.xlane.f32.xlu0 %v655
    %v657 = vpop.xlane.xlu0 %656
    %v658 = vsel %vm340, %v653, -inf
    %659 = vmax.xlane.f32.xlu0 %v658
    %v660 = vpop.xlane.xlu0 %659
    %v661 = vsub.f32 %v650, %v657
    %v662 = vsub.f32 %v653, %v660
    %v663 = vmul.f32 %v661, 1.442695
    %v664 = vpow.pop %v663
    %v665 = vmul.f32 %v662, 1.442695
    %v666 = vpow.pop %v665
    %667 = vrot.lane.b32.xlu0 %v298, 40
    %v668 = vpop.permute.xlu0 %667
    %669 = vrot.lane.b32.xlu0 %v299, 40
    %v670 = vpop.permute.xlu0 %669
    %v674 = vsel %vm340, %v664, 0
    %v677 = vsel %vm340, %v666, 0
    %679 = vmatpush.msra.mxu0 0.0
    %680 = vmatpush.msra.mxu0 0.0
    %681 = vmatpush.msra.mxu0 0.0
    %682 = vmatpush.msra.mxu0 0.0
    %683 = vmatpush.msra.mxu0 0.0
    %684 = vmatpush.msra.mxu0 0.0
    %685 = vmatpush.msra.mxu0 0.0
    %686 = vmatpush.msra.mxu0 0.0
    %687 = vmatpush.msra.mxu0 0.0
    %688 = vmatpush.msra.mxu0 0.0
    %689 = vmatpush.msra.mxu0 0.0
    %690 = vmatpush.msra.mxu0 0.0
    %691 = vmatpush.msra.mxu0 0.0
    %692 = vmatpush.msra.mxu0 0.0
    %693 = vmatpush.msra.mxu0 %v670
    %694 = vmatpush.msra.mxu0 %v668
    %695 = vmatmul.f32.gmra.mxu0 %v674
    %v696 = vpop.f32.mrf.mxu0
    %v697 = vadd.f32 0.0, %v696
    %698 = vmatmul.f32.gmra.mxu0 %v677
    %v699 = vpop.f32.mrf.mxu0
    %v700 = vadd.f32 0.0, %v699
    %701 = vdwg.mxu0
    %v702 = vsel %vm340, %v664, 0.0
    %703 = vadd.xlane.f32.xlu0 %v702
    %v704 = vpop.xlane.xlu0 %703
    %v705 = vsel %vm340, %v666, 0.0
    %706 = vadd.xlane.f32.xlu0 %v705
    %v707 = vpop.xlane.xlu0 %706
    %v708 = vrcp.pop %v704
    %v709 = vrcp.pop %v707
    %v710 = vmul.f32 %v697, %v708
    %v711 = vmul.f32 %v700, %v709
    %714 = vrot.lane.b32.xlu0 %v710, 24
    %v715 = vpop.permute.xlu0 %714
    %716 = vrot.lane.b32.xlu0 %v711, 24
    %v717 = vpop.permute.xlu0 %716
    %vm720 = vcmask 261312
    %721 = vst.msk [vmem:[#allocation2] sm:$0xff] %vm720, %v715
    %722 = vst.msk [vmem:[#allocation2 + $0x8] sm:$0xff] %vm720, %v717
    %v723 = vld [vmem:[#allocation2] sm:$0xff]
    %v724 = vld [vmem:[#allocation2 + $0x8] sm:$0xff]
    %v726 = vsel %vm167, %v723, 0
    %v729 = vsel %vm167, %v724, 0
    %731 = vmatpush.msra.mxu0 0.0
    %732 = vmatpush.msra.mxu0 0.0
    %733 = vmatpush.msra.mxu0 0.0
    %734 = vmatpush.msra.mxu0 0.0
    %735 = vmatpush.msra.mxu0 0.0
    %736 = vmatpush.msra.mxu0 0.0
    %737 = vmatpush.msra.mxu0 0.0
    %738 = vmatpush.msra.mxu0 0.0
    %739 = vmatpush.msra.mxu0 0.0
    %740 = vmatpush.msra.mxu0 0.0
    %741 = vmatpush.msra.mxu0 0.0
    %742 = vmatpush.msra.mxu0 0.0
    %743 = vmatpush.msra.mxu0 %v148
    %744 = vmatpush.msra.mxu0 %v147
    %745 = vmatpush.msra.mxu0 %v146
    %746 = vmatpush.msra.mxu0 %v145
    %747 = vmatmul.f32.gmra.mxu0 %v726
    %v748 = vpop.f32.mrf.mxu0
    %v749 = vadd.f32 0.0, %v748
    %750 = vmatmul.f32.gmra.mxu0 %v729
    %v751 = vpop.f32.mrf.mxu0
    %v752 = vadd.f32 0.0, %v751
    %753 = vdwg.mxu0
    %v754 = vadd.f32 %v132, %v749
    %v755 = vadd.f32 %v135, %v752
    %v756 = vperm.slane %v139, 3
    %v757 = vadd.f32 %v754, %v756
    %v758 = vadd.f32 %v755, %v756
    %v759 = vrot.slane %v757, 7
    %v760 = vrot.slane %v758, 7
    %v761 = vlaneseq
    %v762 = vshrl.u32 %v761, 7
    %vm763 = vcmp.lt.s32.totalorder %v762, 1
    %v764 = vsel %vm763, %v759, %v760
    %v765 = vsel %vm763, %v760, %v759
    %766 = vset.pattern.permute.xlu0 1
    %767 = vperm.xlu0 %766, %v36
    %v768 = vpop.permute.xlu0 %767
    %770 = vset.pattern.permute.xlu0 1
    %771 = vperm.xlu0 %770, %v37
    %v772 = vpop.permute.xlu0 %771
    %v774 = vmul.f32 %v765, %v768
    %v775 = vmul.f32 %v764, %v772
    %v776 = vrot.slane %v757, 1
    %v777 = vrot.slane %v758, 1
    %vm778 = vcmp.lt.s32.totalorder %v762, 7
    %v779 = vsel %vm778, %v776, %v777
    %v780 = vsel %vm778, %v777, %v776
    %781 = vset.pattern.permute.xlu0 2
    %782 = vperm.xlu0 %781, %v36
    %v783 = vpop.permute.xlu0 %782
    %785 = vset.pattern.permute.xlu0 2
    %786 = vperm.xlu0 %785, %v37
    %v787 = vpop.permute.xlu0 %786
    %v789 = vmul.f32 %v779, %v783
    %v790 = vmul.f32 %v780, %v787
    %v791 = vperm.slane %v140, 3
    %v792 = vmul.f32 %v774, %v791
    %v793 = vmul.f32 %v775, %v791
    %v794 = vperm.slane %v140, 4
    %v795 = vmul.f32 %v757, %v794
    %v796 = vmul.f32 %v758, %v794
    %v797 = vadd.f32 %v792, %v795
    %v798 = vadd.f32 %v793, %v796
    %v799 = vperm.slane %v140, 5
    %v800 = vmul.f32 %v789, %v799
    %v801 = vmul.f32 %v790, %v799
    %v802 = vadd.f32 %v797, %v800
    %v803 = vadd.f32 %v798, %v801
    %v804 = vperm.slane %v139, 4
    %v805 = vadd.f32 %v802, %v804
    %v806 = vadd.f32 %v803, %v804
    %v807 = vxor.u32 %v805, 2147483648
    %v808 = vxor.u32 %v806, 2147483648
    %v809 = vmul.f32 %v807, 1.442695
    %v810 = vpow.pop %v809
    %v811 = vmul.f32 %v808, 1.442695
    %v812 = vpow.pop %v811
    %v813 = vadd.f32 %v810, 1.0
    %v814 = vadd.f32 %v812, 1.0
    %v815 = vrcp.pop %v813
    %v816 = vmul.f32 %v813, %v815
    %v817 = vsub.f32 1.0, %v816
    %v818 = vmul.f32 %v815, %v817
    %v819 = vadd.f32 %v815, %v818
    %vm820 = vweird.f32 %v813
    %vm821 = vweird.f32 %v815
    %vm822 = vmor %vm820, %vm821
    %v823 = vsel %vm822, %v815, %v819
    %v824 = vand.u32 2147483647, %v813
    %vm825 = vcmp.eq.f32.partialorder %v824, 8.507059e+37
    %v826 = vand.u32 %v813, 2147483648
    %v827 = vor.u32 1.1754944e-38, %v826
    %v828 = vsel %vm825, %v827, %v823
    %v829 = vmul.f32 1.0, %v828
    %v830 = vrcp.pop %v814
    %v831 = vmul.f32 %v814, %v830
    %v832 = vsub.f32 1.0, %v831
    %v833 = vmul.f32 %v830, %v832
    %v834 = vadd.f32 %v830, %v833
    %vm835 = vweird.f32 %v814
    %vm836 = vweird.f32 %v830
    %vm837 = vmor %vm835, %vm836
    %v838 = vsel %vm837, %v830, %v834
    %v839 = vand.u32 2147483647, %v814
    %vm840 = vcmp.eq.f32.partialorder %v839, 8.507059e+37
    %v841 = vand.u32 %v814, 2147483648
    %v842 = vor.u32 1.1754944e-38, %v841
    %v843 = vsel %vm840, %v842, %v838
    %v844 = vmul.f32 1.0, %v843
    %v845 = vmul.f32 %v805, %v829
    %v846 = vmul.f32 %v806, %v844
    %v847 = vadd.f32 %v757, %v845
    %v848 = vadd.f32 %v758, %v846
    %v849 = vadd.f32 %v847, %v193
    %v850 = vadd.f32 %v848, %v194
    %v851 = vsel %vm167, %v849, 0.0
    %852 = vadd.xlane.f32.xlu0 %v851
    %v853 = vpop.xlane.xlu0 %852
    %v854 = vsel %vm167, %v850, 0.0
    %855 = vadd.xlane.f32.xlu0 %v854
    %v856 = vpop.xlane.xlu0 %855
    %v857 = vmul.f32 %v853, %v207
    %v858 = vmul.f32 %v856, %v207
    %v859 = vsub.f32 %v849, %v857
    %v860 = vsub.f32 %v850, %v858
    %v861 = vmul.f32 %v859, %v859
    %v862 = vmul.f32 %v860, %v860
    %v863 = vsel %vm167, %v861, 0.0
    %864 = vadd.xlane.f32.xlu0 %v863
    %v865 = vpop.xlane.xlu0 %864
    %v866 = vsel %vm167, %v862, 0.0
    %867 = vadd.xlane.f32.xlu0 %v866
    %v868 = vpop.xlane.xlu0 %867
    %v869 = vmul.f32 %v865, %v207
    %v870 = vmul.f32 %v868, %v207
    %v871 = vadd.f32 %v869, 1e-05
    %v872 = vadd.f32 %v870, 1e-05
    %v873 = vrsqrt.pop %v871
    %v874 = vmul.f32 %v873, %v871
    %v875 = vmul.f32 %v874, %v873
    %v876 = vmul.f32 0.5, %v875
    %v877 = vsub.f32 1.5, %v876
    %v878 = vmul.f32 %v873, %v877
    %vm879 = vweird.f32 %v871
    %vm880 = vweird.f32 %v873
    %vm881 = vmor %vm879, %vm880
    %v882 = vsel %vm881, %v873, %v878
    %v883 = vrsqrt.pop %v872
    %v884 = vmul.f32 %v883, %v872
    %v885 = vmul.f32 %v884, %v883
    %v886 = vmul.f32 0.5, %v885
    %v887 = vsub.f32 1.5, %v886
    %v888 = vmul.f32 %v883, %v887
    %vm889 = vweird.f32 %v872
    %vm890 = vweird.f32 %v883
    %vm891 = vmor %vm889, %vm890
    %v892 = vsel %vm891, %v883, %v888
    %v893 = vmul.f32 %v859, %v882
    %v894 = vmul.f32 %v860, %v892
    %v895 = vperm.slane %v139, 5
    %v896 = vmul.f32 %v893, %v895
    %v897 = vmul.f32 %v894, %v895
    %v898 = vperm.slane %v139, 6
    %v899 = vadd.f32 %v896, %v898
    %v900 = vadd.f32 %v897, %v898
    %v901 = vld [vmem:[%s6] sm:$0xff]
    %v902 = vld [vmem:[%s6 + $0x8] sm:$0xff]
    %v903 = vld [vmem:[%s6 + $0x10] sm:$0xff]
    %v904 = vld [vmem:[%s6 + $0x18] sm:$0xff]
    %v905 = vld [vmem:[%s6 + $0x20] sm:$0x1]
    %v906 = vperm.slane %v905, 0
    %v908 = vsel %vm167, %v899, 0
    %v911 = vsel %vm167, %v900, 0
    %913 = vmatpush.msra.mxu0 0.0
    %914 = vmatpush.msra.mxu0 0.0
    %915 = vmatpush.msra.mxu0 0.0
    %916 = vmatpush.msra.mxu0 0.0
    %917 = vmatpush.msra.mxu0 0.0
    %918 = vmatpush.msra.mxu0 0.0
    %919 = vmatpush.msra.mxu0 0.0
    %920 = vmatpush.msra.mxu0 0.0
    %921 = vmatpush.msra.mxu0 0.0
    %922 = vmatpush.msra.mxu0 0.0
    %923 = vmatpush.msra.mxu0 0.0
    %924 = vmatpush.msra.mxu0 0.0
    %925 = vmatpush.msra.mxu0 %v904
    %926 = vmatpush.msra.mxu0 %v903
    %927 = vmatpush.msra.mxu0 %v902
    %928 = vmatpush.msra.mxu0 %v901
    %929 = vmatmul.f32.gmra.mxu0 %v908
    %v930 = vpop.f32.mrf.mxu0
    %v931 = vadd.f32 %v906, %v930
    %932 = vmatmul.f32.gmra.mxu0 %v911
    %v933 = vpop.f32.mrf.mxu0
    %v934 = vadd.f32 %v906, %v933
    %935 = vdwg.mxu0
    %v936 = vmul.f32 %v931, 0.5
    %v937 = vmul.f32 %v934, 0.5
    %v938 = vmul.f32 %v931, 0.70710677
    %v939 = vmul.f32 %v934, 0.70710677
    %vm940 = vcmp.ge.f32.partialorder %v938, 0.0
    %vm941 = vcmp.ge.f32.partialorder %v939, 0.0
    %v942 = vsel %vm940, 1.0, -1.0
    %v943 = vsel %vm941, 1.0, -1.0
    %v944 = vand.u32 2147483647, %v938
    %v945 = vand.u32 2147483647, %v939
    %v946 = vmul.f32 %v944, 0.3275911
    %v947 = vmul.f32 %v945, 0.3275911
    %v948 = vadd.f32 %v946, 1.0
    %v949 = vadd.f32 %v947, 1.0
    %v950 = vrcp.pop %v948
    %v951 = vmul.f32 %v948, %v950
    %v952 = vsub.f32 1.0, %v951
    %v953 = vmul.f32 %v950, %v952
    %v954 = vadd.f32 %v950, %v953
    %vm955 = vweird.f32 %v948
    %vm956 = vweird.f32 %v950
    %vm957 = vmor %vm955, %vm956
    %v958 = vsel %vm957, %v950, %v954
    %v959 = vand.u32 2147483647, %v948
    %vm960 = vcmp.eq.f32.partialorder %v959, 8.507059e+37
    %v961 = vand.u32 %v948, 2147483648
    %v962 = vor.u32 1.1754944e-38, %v961
    %v963 = vsel %vm960, %v962, %v958
    %v964 = vmul.f32 1.0, %v963
    %v965 = vrcp.pop %v949
    %v966 = vmul.f32 %v949, %v965
    %v967 = vsub.f32 1.0, %v966
    %v968 = vmul.f32 %v965, %v967
    %v969 = vadd.f32 %v965, %v968
    %vm970 = vweird.f32 %v949
    %vm971 = vweird.f32 %v965
    %vm972 = vmor %vm970, %vm971
    %v973 = vsel %vm972, %v965, %v969
    %v974 = vand.u32 2147483647, %v949
    %vm975 = vcmp.eq.f32.partialorder %v974, 8.507059e+37
    %v976 = vand.u32 %v949, 2147483648
    %v977 = vor.u32 1.1754944e-38, %v976
    %v978 = vsel %vm975, %v977, %v973
    %v979 = vmul.f32 1.0, %v978
    %v980 = vmul.f32 %v964, 1.0614054
    %v981 = vmul.f32 %v979, 1.0614054
    %v982 = vadd.f32 %v980, -1.4531521
    %v983 = vadd.f32 %v981, -1.4531521
    %v984 = vmul.f32 %v982, %v964
    %v985 = vmul.f32 %v983, %v979
    %v986 = vadd.f32 %v984, 1.4214138
    %v987 = vadd.f32 %v985, 1.4214138
    %v988 = vmul.f32 %v986, %v964
    %v989 = vmul.f32 %v987, %v979
    %v990 = vadd.f32 %v988, -0.28449672
    %v991 = vadd.f32 %v989, -0.28449672
    %v992 = vmul.f32 %v990, %v964
    %v993 = vmul.f32 %v991, %v979
    %v994 = vadd.f32 %v992, 0.2548296
    %v995 = vadd.f32 %v993, 0.2548296
    %v996 = vmul.f32 %v994, %v964
    %v997 = vmul.f32 %v995, %v979
    %v998 = vsub.f32 0.0, %v944
    %v999 = vsub.f32 0.0, %v945
    %v1000 = vmul.f32 %v998, %v944
    %v1001 = vmul.f32 %v999, %v945
    %v1002 = vmul.f32 %v1000, 1.442695
    %v1003 = vpow.pop %v1002
    %v1004 = vmul.f32 %v1001, 1.442695
    %v1005 = vpow.pop %v1004
    %v1006 = vmul.f32 %v996, %v1003
    %v1007 = vmul.f32 %v997, %v1005
    %v1008 = vsub.f32 1.0, %v1006
    %v1009 = vsub.f32 1.0, %v1007
    %v1010 = vmul.f32 %v942, %v1008
    %v1011 = vmul.f32 %v943, %v1009
    %v1012 = vadd.f32 %v1010, 1.0
    %v1013 = vadd.f32 %v1011, 1.0
    %v1014 = vmul.f32 %v936, %v1012
    %v1015 = vmul.f32 %v937, %v1013
    %v1016 = vld [vmem:[%s7] sm:$0xff]
    %v1017 = vld [vmem:[%s7 + $0x8] sm:$0xff]
    %v1018 = vld [vmem:[%s7 + $0x10] sm:$0xff]
    %v1019 = vld [vmem:[%s7 + $0x18] sm:$0xff]
    %v1020 = vld [vmem:[%s7 + $0x20] sm:$0xff]
    %v1021 = vld [vmem:[%s7 + $0x28] sm:$0xff]
    %v1022 = vld [vmem:[%s7 + $0x30] sm:$0xff]
    %v1023 = vld [vmem:[%s7 + $0x38] sm:$0xff]
    %v1025 = vsel %vm84, %v1014, 0
    %v1028 = vsel %vm84, %v1015, 0
    %1030 = vmatpush.msra.mxu0 0.0
    %1031 = vmatpush.msra.mxu0 0.0
    %1032 = vmatpush.msra.mxu0 0.0
    %1033 = vmatpush.msra.mxu0 0.0
    %1034 = vmatpush.msra.mxu0 0.0
    %1035 = vmatpush.msra.mxu0 0.0
    %1036 = vmatpush.msra.mxu0 0.0
    %1037 = vmatpush.msra.mxu0 0.0
    %1038 = vmatpush.msra.mxu0 %v1023
    %1039 = vmatpush.msra.mxu0 %v1022
    %1040 = vmatpush.msra.mxu0 %v1021
    %1041 = vmatpush.msra.mxu0 %v1020
    %1042 = vmatpush.msra.mxu0 %v1019
    %1043 = vmatpush.msra.mxu0 %v1018
    %1044 = vmatpush.msra.mxu0 %v1017
    %1045 = vmatpush.msra.mxu0 %v1016
    %1046 = vmatmul.f32.gmra.mxu0 %v1025
    %v1047 = vpop.f32.mrf.mxu0
    %v1048 = vadd.f32 0.0, %v1047
    %1049 = vmatmul.f32.gmra.mxu0 %v1028
    %v1050 = vpop.f32.mrf.mxu0
    %v1051 = vadd.f32 0.0, %v1050
    %1052 = vdwg.mxu0
    %v1053 = vadd.f32 %v849, %v1048
    %v1054 = vadd.f32 %v850, %v1051
    %v1055 = vperm.slane %v139, 7
    %v1056 = vadd.f32 %v1053, %v1055
    %v1057 = vadd.f32 %v1054, %v1055
    %s1058 = scalar_lea.vmem %s8, 16
    %v1059 = vld [vmem:[%s1058] sm:$0xff]
    %v1060 = vld [vmem:[%s1058 + $0x8] sm:$0x3f]
    %s1061 = scalar_lea.vmem %s5, 64
    %v1062 = vld [vmem:[%s1061] sm:$0xff]
    %v1063 = vld [vmem:[%s1061 + $0x10] sm:$0xff]
    %v1064 = vld [vmem:[%s1061 + $0x20] sm:$0xff]
    %v1065 = vld [vmem:[%s1061 + $0x30] sm:$0xff]
    %v1066 = vld [vmem:[%s1061 + $0x8] sm:$0xff]
    %v1067 = vld [vmem:[%s1061 + $0x18] sm:$0xff]
    %v1068 = vld [vmem:[%s1061 + $0x28] sm:$0xff]
    %v1069 = vld [vmem:[%s1061 + $0x38] sm:$0xff]
    %v1070 = vperm.slane %v1059, 0
    %1075 = vrot.lane.b32.xlu0 %v1062, 32
    %v1076 = vpop.permute.xlu0 %1075
    %1077 = vrot.lane.b32.xlu0 %v1063, 32
    %v1078 = vpop.permute.xlu0 %1077
    %1079 = vrot.lane.b32.xlu0 %v1064, 32
    %v1080 = vpop.permute.xlu0 %1079
    %1081 = vrot.lane.b32.xlu0 %v1065, 32
    %v1082 = vpop.permute.xlu0 %1081
    %v1088 = vsel %vm167, %v193, 0
    %v1091 = vsel %vm167, %v194, 0
    %1093 = vmatpush.msra.mxu0 0.0
    %1094 = vmatpush.msra.mxu0 0.0
    %1095 = vmatpush.msra.mxu0 0.0
    %1096 = vmatpush.msra.mxu0 0.0
    %1097 = vmatpush.msra.mxu0 0.0
    %1098 = vmatpush.msra.mxu0 0.0
    %1099 = vmatpush.msra.mxu0 0.0
    %1100 = vmatpush.msra.mxu0 0.0
    %1101 = vmatpush.msra.mxu0 0.0
    %1102 = vmatpush.msra.mxu0 0.0
    %1103 = vmatpush.msra.mxu0 0.0
    %1104 = vmatpush.msra.mxu0 0.0
    %1105 = vmatpush.msra.mxu0 %v1082
    %1106 = vmatpush.msra.mxu0 %v1080
    %1107 = vmatpush.msra.mxu0 %v1078
    %1108 = vmatpush.msra.mxu0 %v1076
    %1109 = vmatmul.f32.gmra.mxu0 %v1088
    %v1110 = vpop.f32.mrf.mxu0
    %v1111 = vadd.f32 %v1070, %v1110
    %1112 = vmatmul.f32.gmra.mxu0 %v1091
    %v1113 = vpop.f32.mrf.mxu0
    %v1114 = vadd.f32 %v1070, %v1113
    %1115 = vdwg.mxu0
    %v1116 = vadd.f32 %v1111, %v1056
    %v1117 = vadd.f32 %v1114, %v1057
    %v1118 = vsel %vm167, %v1056, 0.0
    %1119 = vadd.xlane.f32.xlu0 %v1118
    %v1120 = vpop.xlane.xlu0 %1119
    %v1121 = vsel %vm167, %v1057, 0.0
    %1122 = vadd.xlane.f32.xlu0 %v1121
    %v1123 = vpop.xlane.xlu0 %1122
    %v1124 = vmul.f32 %v1120, %v207
    %v1125 = vmul.f32 %v1123, %v207
    %v1126 = vsub.f32 %v1056, %v1124
    %v1127 = vsub.f32 %v1057, %v1125
    %v1128 = vmul.f32 %v1126, %v1126
    %v1129 = vmul.f32 %v1127, %v1127
    %v1130 = vsel %vm167, %v1128, 0.0
    %1131 = vadd.xlane.f32.xlu0 %v1130
    %v1132 = vpop.xlane.xlu0 %1131
    %v1133 = vsel %vm167, %v1129, 0.0
    %1134 = vadd.xlane.f32.xlu0 %v1133
    %v1135 = vpop.xlane.xlu0 %1134
    %v1136 = vmul.f32 %v1132, %v207
    %v1137 = vmul.f32 %v1135, %v207
    %v1138 = vadd.f32 %v1136, 1e-05
    %v1139 = vadd.f32 %v1137, 1e-05
    %v1140 = vrsqrt.pop %v1138
    %v1141 = vmul.f32 %v1140, %v1138
    %v1142 = vmul.f32 %v1141, %v1140
    %v1143 = vmul.f32 0.5, %v1142
    %v1144 = vsub.f32 1.5, %v1143
    %v1145 = vmul.f32 %v1140, %v1144
    %vm1146 = vweird.f32 %v1138
    %vm1147 = vweird.f32 %v1140
    %vm1148 = vmor %vm1146, %vm1147
    %v1149 = vsel %vm1148, %v1140, %v1145
    %v1150 = vrsqrt.pop %v1139
    %v1151 = vmul.f32 %v1150, %v1139
    %v1152 = vmul.f32 %v1151, %v1150
    %v1153 = vmul.f32 0.5, %v1152
    %v1154 = vsub.f32 1.5, %v1153
    %v1155 = vmul.f32 %v1150, %v1154
    %vm1156 = vweird.f32 %v1139
    %vm1157 = vweird.f32 %v1150
    %vm1158 = vmor %vm1156, %vm1157
    %v1159 = vsel %vm1158, %v1150, %v1155
    %v1160 = vmul.f32 %v1126, %v1149
    %v1161 = vmul.f32 %v1127, %v1159
    %v1162 = vperm.slane %v1059, 1
    %v1163 = vmul.f32 %v1160, %v1162
    %v1164 = vmul.f32 %v1161, %v1162
    %v1165 = vperm.slane %v1059, 2
    %v1166 = vadd.f32 %v1163, %v1165
    %v1167 = vadd.f32 %v1164, %v1165
    %v1169 = vsel %vm167, %v1166, 0
    %v1172 = vsel %vm167, %v1167, 0
    %1174 = vmatpush.msra.mxu0 0.0
    %1175 = vmatpush.msra.mxu0 0.0
    %1176 = vmatpush.msra.mxu0 0.0
    %1177 = vmatpush.msra.mxu0 0.0
    %1178 = vmatpush.msra.mxu0 0.0
    %1179 = vmatpush.msra.mxu0 0.0
    %1180 = vmatpush.msra.mxu0 0.0
    %1181 = vmatpush.msra.mxu0 0.0
    %1182 = vmatpush.msra.mxu0 0.0
    %1183 = vmatpush.msra.mxu0 0.0
    %1184 = vmatpush.msra.mxu0 0.0
    %1185 = vmatpush.msra.mxu0 0.0
    %1186 = vmatpush.msra.mxu0 %v1065
    %1187 = vmatpush.msra.mxu0 %v1064
    %1188 = vmatpush.msra.mxu0 %v1063
    %1189 = vmatpush.msra.mxu0 %v1062
    %1190 = vmatmul.f32.gmra.mxu0 %v1169
    %v1191 = vpop.f32.mrf.mxu0
    %v1192 = vadd.f32 0.0, %v1191
    %1193 = vmatmul.f32.gmra.mxu0 %v1172
    %v1194 = vpop.f32.mrf.mxu0
    %v1195 = vadd.f32 0.0, %v1194
    %1196 = vdwg.mxu0
    %v1197 = vperm.slane %v1060, 0
    %v1198 = vadd.f32 %v1192, %v1197
    %v1199 = vadd.f32 %v1195, %v1197
    %v1200 = vmul.f32 %v1198, 0.35355338
    %v1201 = vmul.f32 %v1199, 0.35355338
    %v1202 = vperm.slane %v1060, 1
    %1204 = vrot.lane.b32.xlu0 %v1202, 32
    %v1205 = vpop.permute.xlu0 %1204
    %v1207 = vadd.f32 %v1192, %v1205
    %v1208 = vadd.f32 %v1195, %v1205
    %v1209 = vperm.slane %v1060, 2
    %1211 = vrot.lane.b32.xlu0 %v1209, 64
    %v1212 = vpop.permute.xlu0 %1211
    %v1214 = vadd.f32 %v1192, %v1212
    %v1215 = vadd.f32 %v1195, %v1212
    %1218 = vrot.lane.b32.xlu0 %v1207, 96
    %v1219 = vpop.permute.xlu0 %1218
    %1220 = vrot.lane.b32.xlu0 %v1208, 96
    %v1221 = vpop.permute.xlu0 %1220
    %v1223 = vsel %vm306, %v1200, 0
    %v1226 = vsel %vm306, %v1201, 0
    %v1228 = vsel %vm306, %v1219, 0
    %v1230 = vsel %vm306, %v1221, 0
    %1232 = vmatpush.xpose.msra.mxu0 0.0
    %1233 = vmatpush.xpose.msra.mxu0 0.0
    %1234 = vmatpush.xpose.msra.mxu0 0.0
    %1235 = vmatpush.xpose.msra.mxu0 0.0
    %1236 = vmatpush.xpose.msra.mxu0 0.0
    %1237 = vmatpush.xpose.msra.mxu0 0.0
    %1238 = vmatpush.xpose.msra.mxu0 0.0
    %1239 = vmatpush.xpose.msra.mxu0 0.0
    %1240 = vmatpush.xpose.msra.mxu0 0.0
    %1241 = vmatpush.xpose.msra.mxu0 0.0
    %1242 = vmatpush.xpose.msra.mxu0 0.0
    %1243 = vmatpush.xpose.msra.mxu0 0.0
    %1244 = vmatpush.xpose.msra.mxu0 0.0
    %1245 = vmatpush.xpose.msra.mxu0 0.0
    %1246 = vmatpush.xpose.msra.mxu0 %v1230
    %1247 = vmatpush.xpose.msra.mxu0 %v1228
    %1248 = vmatmul.f32.gmra.mxu0 %v1223
    %v1249 = vpop.f32.mrf.mxu0
    %v1250 = vadd.f32 %v52, %v1249
    %1251 = vmatmul.f32.gmra.mxu0 %v1226
    %v1252 = vpop.f32.mrf.mxu0
    %v1253 = vadd.f32 %v53, %v1252
    %1254 = vdwg.mxu0
    %v1255 = vsel %vm340, %v1250, -inf
    %1256 = vmax.xlane.f32.xlu0 %v1255
    %v1257 = vpop.xlane.xlu0 %1256
    %v1258 = vsel %vm340, %v1253, -inf
    %1259 = vmax.xlane.f32.xlu0 %v1258
    %v1260 = vpop.xlane.xlu0 %1259
    %v1261 = vsub.f32 %v1250, %v1257
    %v1262 = vsub.f32 %v1253, %v1260
    %v1263 = vmul.f32 %v1261, 1.442695
    %v1264 = vpow.pop %v1263
    %v1265 = vmul.f32 %v1262, 1.442695
    %v1266 = vpow.pop %v1265
    %1269 = vrot.lane.b32.xlu0 %v1214, 64
    %v1270 = vpop.permute.xlu0 %1269
    %1271 = vrot.lane.b32.xlu0 %v1215, 64
    %v1272 = vpop.permute.xlu0 %1271
    %v1276 = vsel %vm340, %v1264, 0
    %v1279 = vsel %vm340, %v1266, 0
    %1281 = vmatpush.msra.mxu0 0.0
    %1282 = vmatpush.msra.mxu0 0.0
    %1283 = vmatpush.msra.mxu0 0.0
    %1284 = vmatpush.msra.mxu0 0.0
    %1285 = vmatpush.msra.mxu0 0.0
    %1286 = vmatpush.msra.mxu0 0.0
    %1287 = vmatpush.msra.mxu0 0.0
    %1288 = vmatpush.msra.mxu0 0.0
    %1289 = vmatpush.msra.mxu0 0.0
    %1290 = vmatpush.msra.mxu0 0.0
    %1291 = vmatpush.msra.mxu0 0.0
    %1292 = vmatpush.msra.mxu0 0.0
    %1293 = vmatpush.msra.mxu0 0.0
    %1294 = vmatpush.msra.mxu0 0.0
    %1295 = vmatpush.msra.mxu0 %v1272
    %1296 = vmatpush.msra.mxu0 %v1270
    %1297 = vmatmul.f32.gmra.mxu0 %v1276
    %v1298 = vpop.f32.mrf.mxu0
    %v1299 = vadd.f32 0.0, %v1298
    %1300 = vmatmul.f32.gmra.mxu0 %v1279
    %v1301 = vpop.f32.mrf.mxu0
    %v1302 = vadd.f32 0.0, %v1301
    %1303 = vdwg.mxu0
    %v1304 = vsel %vm340, %v1264, 0.0
    %1305 = vadd.xlane.f32.xlu0 %v1304
    %v1306 = vpop.xlane.xlu0 %1305
    %v1307 = vsel %vm340, %v1266, 0.0
    %1308 = vadd.xlane.f32.xlu0 %v1307
    %v1309 = vpop.xlane.xlu0 %1308
    %v1310 = vrcp.pop %v1306
    %v1311 = vrcp.pop %v1309
    %v1312 = vmul.f32 %v1299, %v1310
    %v1313 = vmul.f32 %v1302, %v1311
    %1314 = vst.msk [vmem:[#allocation2] sm:$0xff] %vm306, %v1312
    %1315 = vst.msk [vmem:[#allocation2 + $0x8] sm:$0xff] %vm306, %v1313
    %1316 = vrot.lane.b32.xlu0 %v1200, 120
    %v1317 = vpop.permute.xlu0 %1316
    %1318 = vrot.lane.b32.xlu0 %v1201, 120
    %v1319 = vpop.permute.xlu0 %1318
    %1320 = vrot.lane.b32.xlu0 %v1207, 88
    %v1321 = vpop.permute.xlu0 %1320
    %1322 = vrot.lane.b32.xlu0 %v1208, 88
    %v1323 = vpop.permute.xlu0 %1322
    %v1324 = vsel %vm306, %v1317, 0
    %v1326 = vsel %vm306, %v1319, 0
    %v1328 = vsel %vm306, %v1321, 0
    %v1330 = vsel %vm306, %v1323, 0
    %1332 = vmatpush.xpose.msra.mxu0 0.0
    %1333 = vmatpush.xpose.msra.mxu0 0.0
    %1334 = vmatpush.xpose.msra.mxu0 0.0
    %1335 = vmatpush.xpose.msra.mxu0 0.0
    %1336 = vmatpush.xpose.msra.mxu0 0.0
    %1337 = vmatpush.xpose.msra.mxu0 0.0
    %1338 = vmatpush.xpose.msra.mxu0 0.0
    %1339 = vmatpush.xpose.msra.mxu0 0.0
    %1340 = vmatpush.xpose.msra.mxu0 0.0
    %1341 = vmatpush.xpose.msra.mxu0 0.0
    %1342 = vmatpush.xpose.msra.mxu0 0.0
    %1343 = vmatpush.xpose.msra.mxu0 0.0
    %1344 = vmatpush.xpose.msra.mxu0 0.0
    %1345 = vmatpush.xpose.msra.mxu0 0.0
    %1346 = vmatpush.xpose.msra.mxu0 %v1330
    %1347 = vmatpush.xpose.msra.mxu0 %v1328
    %1348 = vmatmul.f32.gmra.mxu0 %v1324
    %v1349 = vpop.f32.mrf.mxu0
    %v1350 = vadd.f32 %v52, %v1349
    %1351 = vmatmul.f32.gmra.mxu0 %v1326
    %v1352 = vpop.f32.mrf.mxu0
    %v1353 = vadd.f32 %v53, %v1352
    %1354 = vdwg.mxu0
    %v1355 = vsel %vm340, %v1350, -inf
    %1356 = vmax.xlane.f32.xlu0 %v1355
    %v1357 = vpop.xlane.xlu0 %1356
    %v1358 = vsel %vm340, %v1353, -inf
    %1359 = vmax.xlane.f32.xlu0 %v1358
    %v1360 = vpop.xlane.xlu0 %1359
    %v1361 = vsub.f32 %v1350, %v1357
    %v1362 = vsub.f32 %v1353, %v1360
    %v1363 = vmul.f32 %v1361, 1.442695
    %v1364 = vpow.pop %v1363
    %v1365 = vmul.f32 %v1362, 1.442695
    %v1366 = vpow.pop %v1365
    %1367 = vrot.lane.b32.xlu0 %v1214, 56
    %v1368 = vpop.permute.xlu0 %1367
    %1369 = vrot.lane.b32.xlu0 %v1215, 56
    %v1370 = vpop.permute.xlu0 %1369
    %v1374 = vsel %vm340, %v1364, 0
    %v1377 = vsel %vm340, %v1366, 0
    %1379 = vmatpush.msra.mxu0 0.0
    %1380 = vmatpush.msra.mxu0 0.0
    %1381 = vmatpush.msra.mxu0 0.0
    %1382 = vmatpush.msra.mxu0 0.0
    %1383 = vmatpush.msra.mxu0 0.0
    %1384 = vmatpush.msra.mxu0 0.0
    %1385 = vmatpush.msra.mxu0 0.0
    %1386 = vmatpush.msra.mxu0 0.0
    %1387 = vmatpush.msra.mxu0 0.0
    %1388 = vmatpush.msra.mxu0 0.0
    %1389 = vmatpush.msra.mxu0 0.0
    %1390 = vmatpush.msra.mxu0 0.0
    %1391 = vmatpush.msra.mxu0 0.0
    %1392 = vmatpush.msra.mxu0 0.0
    %1393 = vmatpush.msra.mxu0 %v1370
    %1394 = vmatpush.msra.mxu0 %v1368
    %1395 = vmatmul.f32.gmra.mxu0 %v1374
    %v1396 = vpop.f32.mrf.mxu0
    %v1397 = vadd.f32 0.0, %v1396
    %1398 = vmatmul.f32.gmra.mxu0 %v1377
    %v1399 = vpop.f32.mrf.mxu0
    %v1400 = vadd.f32 0.0, %v1399
    %1401 = vdwg.mxu0
    %v1402 = vsel %vm340, %v1364, 0.0
    %1403 = vadd.xlane.f32.xlu0 %v1402
    %v1404 = vpop.xlane.xlu0 %1403
    %v1405 = vsel %vm340, %v1366, 0.0
    %1406 = vadd.xlane.f32.xlu0 %v1405
    %v1407 = vpop.xlane.xlu0 %1406
    %v1408 = vrcp.pop %v1404
    %v1409 = vrcp.pop %v1407
    %v1410 = vmul.f32 %v1397, %v1408
    %v1411 = vmul.f32 %v1400, %v1409
    %1414 = vrot.lane.b32.xlu0 %v1410, 8
    %v1415 = vpop.permute.xlu0 %1414
    %1416 = vrot.lane.b32.xlu0 %v1411, 8
    %v1417 = vpop.permute.xlu0 %1416
    %1420 = vst.msk [vmem:[#allocation2] sm:$0xff] %vm506, %v1415
    %1421 = vst.msk [vmem:[#allocation2 + $0x8] sm:$0xff] %vm506, %v1417
    %1422 = vrot.lane.b32.xlu0 %v1200, 112
    %v1423 = vpop.permute.xlu0 %1422
    %1424 = vrot.lane.b32.xlu0 %v1201, 112
    %v1425 = vpop.permute.xlu0 %1424
    %1426 = vrot.lane.b32.xlu0 %v1207, 80
    %v1427 = vpop.permute.xlu0 %1426
    %1428 = vrot.lane.b32.xlu0 %v1208, 80
    %v1429 = vpop.permute.xlu0 %1428
    %v1430 = vsel %vm306, %v1423, 0
    %v1432 = vsel %vm306, %v1425, 0
    %v1434 = vsel %vm306, %v1427, 0
    %v1436 = vsel %vm306, %v1429, 0
    %1438 = vmatpush.xpose.msra.mxu0 0.0
    %1439 = vmatpush.xpose.msra.mxu0 0.0
    %1440 = vmatpush.xpose.msra.mxu0 0.0
    %1441 = vmatpush.xpose.msra.mxu0 0.0
    %1442 = vmatpush.xpose.msra.mxu0 0.0
    %1443 = vmatpush.xpose.msra.mxu0 0.0
    %1444 = vmatpush.xpose.msra.mxu0 0.0
    %1445 = vmatpush.xpose.msra.mxu0 0.0
    %1446 = vmatpush.xpose.msra.mxu0 0.0
    %1447 = vmatpush.xpose.msra.mxu0 0.0
    %1448 = vmatpush.xpose.msra.mxu0 0.0
    %1449 = vmatpush.xpose.msra.mxu0 0.0
    %1450 = vmatpush.xpose.msra.mxu0 0.0
    %1451 = vmatpush.xpose.msra.mxu0 0.0
    %1452 = vmatpush.xpose.msra.mxu0 %v1436
    %1453 = vmatpush.xpose.msra.mxu0 %v1434
    %1454 = vmatmul.f32.gmra.mxu0 %v1430
    %v1455 = vpop.f32.mrf.mxu0
    %v1456 = vadd.f32 %v52, %v1455
    %1457 = vmatmul.f32.gmra.mxu0 %v1432
    %v1458 = vpop.f32.mrf.mxu0
    %v1459 = vadd.f32 %v53, %v1458
    %1460 = vdwg.mxu0
    %v1461 = vsel %vm340, %v1456, -inf
    %1462 = vmax.xlane.f32.xlu0 %v1461
    %v1463 = vpop.xlane.xlu0 %1462
    %v1464 = vsel %vm340, %v1459, -inf
    %1465 = vmax.xlane.f32.xlu0 %v1464
    %v1466 = vpop.xlane.xlu0 %1465
    %v1467 = vsub.f32 %v1456, %v1463
    %v1468 = vsub.f32 %v1459, %v1466
    %v1469 = vmul.f32 %v1467, 1.442695
    %v1470 = vpow.pop %v1469
    %v1471 = vmul.f32 %v1468, 1.442695
    %v1472 = vpow.pop %v1471
    %1473 = vrot.lane.b32.xlu0 %v1214, 48
    %v1474 = vpop.permute.xlu0 %1473
    %1475 = vrot.lane.b32.xlu0 %v1215, 48
    %v1476 = vpop.permute.xlu0 %1475
    %v1480 = vsel %vm340, %v1470, 0
    %v1483 = vsel %vm340, %v1472, 0
    %1485 = vmatpush.msra.mxu0 0.0
    %1486 = vmatpush.msra.mxu0 0.0
    %1487 = vmatpush.msra.mxu0 0.0
    %1488 = vmatpush.msra.mxu0 0.0
    %1489 = vmatpush.msra.mxu0 0.0
    %1490 = vmatpush.msra.mxu0 0.0
    %1491 = vmatpush.msra.mxu0 0.0
    %1492 = vmatpush.msra.mxu0 0.0
    %1493 = vmatpush.msra.mxu0 0.0
    %1494 = vmatpush.msra.mxu0 0.0
    %1495 = vmatpush.msra.mxu0 0.0
    %1496 = vmatpush.msra.mxu0 0.0
    %1497 = vmatpush.msra.mxu0 0.0
    %1498 = vmatpush.msra.mxu0 0.0
    %1499 = vmatpush.msra.mxu0 %v1476
    %1500 = vmatpush.msra.mxu0 %v1474
    %1501 = vmatmul.f32.gmra.mxu0 %v1480
    %v1502 = vpop.f32.mrf.mxu0
    %v1503 = vadd.f32 0.0, %v1502
    %1504 = vmatmul.f32.gmra.mxu0 %v1483
    %v1505 = vpop.f32.mrf.mxu0
    %v1506 = vadd.f32 0.0, %v1505
    %1507 = vdwg.mxu0
    %v1508 = vsel %vm340, %v1470, 0.0
    %1509 = vadd.xlane.f32.xlu0 %v1508
    %v1510 = vpop.xlane.xlu0 %1509
    %v1511 = vsel %vm340, %v1472, 0.0
    %1512 = vadd.xlane.f32.xlu0 %v1511
    %v1513 = vpop.xlane.xlu0 %1512
    %v1514 = vrcp.pop %v1510
    %v1515 = vrcp.pop %v1513
    %v1516 = vmul.f32 %v1503, %v1514
    %v1517 = vmul.f32 %v1506, %v1515
    %1520 = vrot.lane.b32.xlu0 %v1516, 16
    %v1521 = vpop.permute.xlu0 %1520
    %1522 = vrot.lane.b32.xlu0 %v1517, 16
    %v1523 = vpop.permute.xlu0 %1522
    %1526 = vst.msk [vmem:[#allocation2] sm:$0xff] %vm613, %v1521
    %1527 = vst.msk [vmem:[#allocation2 + $0x8] sm:$0xff] %vm613, %v1523
    %1528 = vrot.lane.b32.xlu0 %v1200, 104
    %v1529 = vpop.permute.xlu0 %1528
    %1530 = vrot.lane.b32.xlu0 %v1201, 104
    %v1531 = vpop.permute.xlu0 %1530
    %1532 = vrot.lane.b32.xlu0 %v1207, 72
    %v1533 = vpop.permute.xlu0 %1532
    %1534 = vrot.lane.b32.xlu0 %v1208, 72
    %v1535 = vpop.permute.xlu0 %1534
    %v1536 = vsel %vm306, %v1529, 0
    %v1538 = vsel %vm306, %v1531, 0
    %v1540 = vsel %vm306, %v1533, 0
    %v1542 = vsel %vm306, %v1535, 0
    %1544 = vmatpush.xpose.msra.mxu0 0.0
    %1545 = vmatpush.xpose.msra.mxu0 0.0
    %1546 = vmatpush.xpose.msra.mxu0 0.0
    %1547 = vmatpush.xpose.msra.mxu0 0.0
    %1548 = vmatpush.xpose.msra.mxu0 0.0
    %1549 = vmatpush.xpose.msra.mxu0 0.0
    %1550 = vmatpush.xpose.msra.mxu0 0.0
    %1551 = vmatpush.xpose.msra.mxu0 0.0
    %1552 = vmatpush.xpose.msra.mxu0 0.0
    %1553 = vmatpush.xpose.msra.mxu0 0.0
    %1554 = vmatpush.xpose.msra.mxu0 0.0
    %1555 = vmatpush.xpose.msra.mxu0 0.0
    %1556 = vmatpush.xpose.msra.mxu0 0.0
    %1557 = vmatpush.xpose.msra.mxu0 0.0
    %1558 = vmatpush.xpose.msra.mxu0 %v1542
    %1559 = vmatpush.xpose.msra.mxu0 %v1540
    %1560 = vmatmul.f32.gmra.mxu0 %v1536
    %v1561 = vpop.f32.mrf.mxu0
    %v1562 = vadd.f32 %v52, %v1561
    %1563 = vmatmul.f32.gmra.mxu0 %v1538
    %v1564 = vpop.f32.mrf.mxu0
    %v1565 = vadd.f32 %v53, %v1564
    %1566 = vdwg.mxu0
    %v1567 = vsel %vm340, %v1562, -inf
    %1568 = vmax.xlane.f32.xlu0 %v1567
    %v1569 = vpop.xlane.xlu0 %1568
    %v1570 = vsel %vm340, %v1565, -inf
    %1571 = vmax.xlane.f32.xlu0 %v1570
    %v1572 = vpop.xlane.xlu0 %1571
    %v1573 = vsub.f32 %v1562, %v1569
    %v1574 = vsub.f32 %v1565, %v1572
    %v1575 = vmul.f32 %v1573, 1.442695
    %v1576 = vpow.pop %v1575
    %v1577 = vmul.f32 %v1574, 1.442695
    %v1578 = vpow.pop %v1577
    %1579 = vrot.lane.b32.xlu0 %v1214, 40
    %v1580 = vpop.permute.xlu0 %1579
    %1581 = vrot.lane.b32.xlu0 %v1215, 40
    %v1582 = vpop.permute.xlu0 %1581
    %v1586 = vsel %vm340, %v1576, 0
    %v1589 = vsel %vm340, %v1578, 0
    %1591 = vmatpush.msra.mxu0 0.0
    %1592 = vmatpush.msra.mxu0 0.0
    %1593 = vmatpush.msra.mxu0 0.0
    %1594 = vmatpush.msra.mxu0 0.0
    %1595 = vmatpush.msra.mxu0 0.0
    %1596 = vmatpush.msra.mxu0 0.0
    %1597 = vmatpush.msra.mxu0 0.0
    %1598 = vmatpush.msra.mxu0 0.0
    %1599 = vmatpush.msra.mxu0 0.0
    %1600 = vmatpush.msra.mxu0 0.0
    %1601 = vmatpush.msra.mxu0 0.0
    %1602 = vmatpush.msra.mxu0 0.0
    %1603 = vmatpush.msra.mxu0 0.0
    %1604 = vmatpush.msra.mxu0 0.0
    %1605 = vmatpush.msra.mxu0 %v1582
    %1606 = vmatpush.msra.mxu0 %v1580
    %1607 = vmatmul.f32.gmra.mxu0 %v1586
    %v1608 = vpop.f32.mrf.mxu0
    %v1609 = vadd.f32 0.0, %v1608
    %1610 = vmatmul.f32.gmra.mxu0 %v1589
    %v1611 = vpop.f32.mrf.mxu0
    %v1612 = vadd.f32 0.0, %v1611
    %1613 = vdwg.mxu0
    %v1614 = vsel %vm340, %v1576, 0.0
    %1615 = vadd.xlane.f32.xlu0 %v1614
    %v1616 = vpop.xlane.xlu0 %1615
    %v1617 = vsel %vm340, %v1578, 0.0
    %1618 = vadd.xlane.f32.xlu0 %v1617
    %v1619 = vpop.xlane.xlu0 %1618
    %v1620 = vrcp.pop %v1616
    %v1621 = vrcp.pop %v1619
    %v1622 = vmul.f32 %v1609, %v1620
    %v1623 = vmul.f32 %v1612, %v1621
    %1626 = vrot.lane.b32.xlu0 %v1622, 24
    %v1627 = vpop.permute.xlu0 %1626
    %1628 = vrot.lane.b32.xlu0 %v1623, 24
    %v1629 = vpop.permute.xlu0 %1628
    %1632 = vst.msk [vmem:[#allocation2] sm:$0xff] %vm720, %v1627
    %1633 = vst.msk [vmem:[#allocation2 + $0x8] sm:$0xff] %vm720, %v1629
    %v1634 = vld [vmem:[#allocation2] sm:$0xff]
    %v1635 = vld [vmem:[#allocation2 + $0x8] sm:$0xff]
    %v1637 = vsel %vm167, %v1634, 0
    %v1640 = vsel %vm167, %v1635, 0
    %1642 = vmatpush.msra.mxu0 0.0
    %1643 = vmatpush.msra.mxu0 0.0
    %1644 = vmatpush.msra.mxu0 0.0
    %1645 = vmatpush.msra.mxu0 0.0
    %1646 = vmatpush.msra.mxu0 0.0
    %1647 = vmatpush.msra.mxu0 0.0
    %1648 = vmatpush.msra.mxu0 0.0
    %1649 = vmatpush.msra.mxu0 0.0
    %1650 = vmatpush.msra.mxu0 0.0
    %1651 = vmatpush.msra.mxu0 0.0
    %1652 = vmatpush.msra.mxu0 0.0
    %1653 = vmatpush.msra.mxu0 0.0
    %1654 = vmatpush.msra.mxu0 %v1069
    %1655 = vmatpush.msra.mxu0 %v1068
    %1656 = vmatpush.msra.mxu0 %v1067
    %1657 = vmatpush.msra.mxu0 %v1066
    %1658 = vmatmul.f32.gmra.mxu0 %v1637
    %v1659 = vpop.f32.mrf.mxu0
    %v1660 = vadd.f32 0.0, %v1659
    %1661 = vmatmul.f32.gmra.mxu0 %v1640
    %v1662 = vpop.f32.mrf.mxu0
    %v1663 = vadd.f32 0.0, %v1662
    %1664 = vdwg.mxu0
    %v1665 = vadd.f32 %v1056, %v1660
    %v1666 = vadd.f32 %v1057, %v1663
    %v1667 = vperm.slane %v1059, 3
    %v1668 = vadd.f32 %v1665, %v1667
    %v1669 = vadd.f32 %v1666, %v1667
    %v1670 = vrot.slane %v1668, 7
    %v1671 = vrot.slane %v1669, 7
    %v1672 = vsel %vm763, %v1670, %v1671
    %v1673 = vsel %vm763, %v1671, %v1670
    %v1674 = vmul.f32 %v1673, %v768
    %v1675 = vmul.f32 %v1672, %v772
    %v1676 = vrot.slane %v1668, 1
    %v1677 = vrot.slane %v1669, 1
    %v1678 = vsel %vm778, %v1676, %v1677
    %v1679 = vsel %vm778, %v1677, %v1676
    %v1680 = vmul.f32 %v1678, %v783
    %v1681 = vmul.f32 %v1679, %v787
    %v1682 = vperm.slane %v1060, 3
    %v1683 = vmul.f32 %v1674, %v1682
    %v1684 = vmul.f32 %v1675, %v1682
    %v1685 = vperm.slane %v1060, 4
    %v1686 = vmul.f32 %v1668, %v1685
    %v1687 = vmul.f32 %v1669, %v1685
    %v1688 = vadd.f32 %v1683, %v1686
    %v1689 = vadd.f32 %v1684, %v1687
    %v1690 = vperm.slane %v1060, 5
    %v1691 = vmul.f32 %v1680, %v1690
    %v1692 = vmul.f32 %v1681, %v1690
    %v1693 = vadd.f32 %v1688, %v1691
    %v1694 = vadd.f32 %v1689, %v1692
    %v1695 = vperm.slane %v1059, 4
    %v1696 = vadd.f32 %v1693, %v1695
    %v1697 = vadd.f32 %v1694, %v1695
    %v1698 = vxor.u32 %v1696, 2147483648
    %v1699 = vxor.u32 %v1697, 2147483648
    %v1700 = vmul.f32 %v1698, 1.442695
    %v1701 = vpow.pop %v1700
    %v1702 = vmul.f32 %v1699, 1.442695
    %v1703 = vpow.pop %v1702
    %v1704 = vadd.f32 %v1701, 1.0
    %v1705 = vadd.f32 %v1703, 1.0
    %v1706 = vrcp.pop %v1704
    %v1707 = vmul.f32 %v1704, %v1706
    %v1708 = vsub.f32 1.0, %v1707
    %v1709 = vmul.f32 %v1706, %v1708
    %v1710 = vadd.f32 %v1706, %v1709
    %vm1711 = vweird.f32 %v1704
    %vm1712 = vweird.f32 %v1706
    %vm1713 = vmor %vm1711, %vm1712
    %v1714 = vsel %vm1713, %v1706, %v1710
    %v1715 = vand.u32 2147483647, %v1704
    %vm1716 = vcmp.eq.f32.partialorder %v1715, 8.507059e+37
    %v1717 = vand.u32 %v1704, 2147483648
    %v1718 = vor.u32 1.1754944e-38, %v1717
    %v1719 = vsel %vm1716, %v1718, %v1714
    %v1720 = vmul.f32 1.0, %v1719
    %v1721 = vrcp.pop %v1705
    %v1722 = vmul.f32 %v1705, %v1721
    %v1723 = vsub.f32 1.0, %v1722
    %v1724 = vmul.f32 %v1721, %v1723
    %v1725 = vadd.f32 %v1721, %v1724
    %vm1726 = vweird.f32 %v1705
    %vm1727 = vweird.f32 %v1721
    %vm1728 = vmor %vm1726, %vm1727
    %v1729 = vsel %vm1728, %v1721, %v1725
    %v1730 = vand.u32 2147483647, %v1705
    %vm1731 = vcmp.eq.f32.partialorder %v1730, 8.507059e+37
    %v1732 = vand.u32 %v1705, 2147483648
    %v1733 = vor.u32 1.1754944e-38, %v1732
    %v1734 = vsel %vm1731, %v1733, %v1729
    %v1735 = vmul.f32 1.0, %v1734
    %v1736 = vmul.f32 %v1696, %v1720
    %v1737 = vmul.f32 %v1697, %v1735
    %v1738 = vadd.f32 %v1668, %v1736
    %v1739 = vadd.f32 %v1669, %v1737
    %v1740 = vadd.f32 %v1738, %v1116
    %v1741 = vadd.f32 %v1739, %v1117
    %v1742 = vsel %vm167, %v1740, 0.0
    %1743 = vadd.xlane.f32.xlu0 %v1742
    %v1744 = vpop.xlane.xlu0 %1743
    %v1745 = vsel %vm167, %v1741, 0.0
    %1746 = vadd.xlane.f32.xlu0 %v1745
    %v1747 = vpop.xlane.xlu0 %1746
    %v1748 = vmul.f32 %v1744, %v207
    %v1749 = vmul.f32 %v1747, %v207
    %v1750 = vsub.f32 %v1740, %v1748
    %v1751 = vsub.f32 %v1741, %v1749
    %v1752 = vmul.f32 %v1750, %v1750
    %v1753 = vmul.f32 %v1751, %v1751
    %v1754 = vsel %vm167, %v1752, 0.0
    %1755 = vadd.xlane.f32.xlu0 %v1754
    %v1756 = vpop.xlane.xlu0 %1755
    %v1757 = vsel %vm167, %v1753, 0.0
    %1758 = vadd.xlane.f32.xlu0 %v1757
    %v1759 = vpop.xlane.xlu0 %1758
    %v1760 = vmul.f32 %v1756, %v207
    %v1761 = vmul.f32 %v1759, %v207
    %v1762 = vadd.f32 %v1760, 1e-05
    %v1763 = vadd.f32 %v1761, 1e-05
    %v1764 = vrsqrt.pop %v1762
    %v1765 = vmul.f32 %v1764, %v1762
    %v1766 = vmul.f32 %v1765, %v1764
    %v1767 = vmul.f32 0.5, %v1766
    %v1768 = vsub.f32 1.5, %v1767
    %v1769 = vmul.f32 %v1764, %v1768
    %vm1770 = vweird.f32 %v1762
    %vm1771 = vweird.f32 %v1764
    %vm1772 = vmor %vm1770, %vm1771
    %v1773 = vsel %vm1772, %v1764, %v1769
    %v1774 = vrsqrt.pop %v1763
    %v1775 = vmul.f32 %v1774, %v1763
    %v1776 = vmul.f32 %v1775, %v1774
    %v1777 = vmul.f32 0.5, %v1776
    %v1778 = vsub.f32 1.5, %v1777
    %v1779 = vmul.f32 %v1774, %v1778
    %vm1780 = vweird.f32 %v1763
    %vm1781 = vweird.f32 %v1774
    %vm1782 = vmor %vm1780, %vm1781
    %v1783 = vsel %vm1782, %v1774, %v1779
    %v1784 = vmul.f32 %v1750, %v1773
    %v1785 = vmul.f32 %v1751, %v1783
    %v1786 = vperm.slane %v1059, 5
    %v1787 = vmul.f32 %v1784, %v1786
    %v1788 = vmul.f32 %v1785, %v1786
    %v1789 = vperm.slane %v1059, 6
    %v1790 = vadd.f32 %v1787, %v1789
    %v1791 = vadd.f32 %v1788, %v1789
    %s1792 = scalar_lea.vmem %s6, 40
    %v1793 = vld [vmem:[%s1792] sm:$0xff]
    %v1794 = vld [vmem:[%s1792 + $0x8] sm:$0xff]
    %v1795 = vld [vmem:[%s1792 + $0x10] sm:$0xff]
    %v1796 = vld [vmem:[%s1792 + $0x18] sm:$0xff]
    %v1797 = vld [vmem:[%s1792 + $0x20] sm:$0x1]
    %v1798 = vperm.slane %v1797, 0
    %v1800 = vsel %vm167, %v1790, 0
    %v1803 = vsel %vm167, %v1791, 0
    %1805 = vmatpush.msra.mxu0 0.0
    %1806 = vmatpush.msra.mxu0 0.0
    %1807 = vmatpush.msra.mxu0 0.0
    %1808 = vmatpush.msra.mxu0 0.0
    %1809 = vmatpush.msra.mxu0 0.0
    %1810 = vmatpush.msra.mxu0 0.0
    %1811 = vmatpush.msra.mxu0 0.0
    %1812 = vmatpush.msra.mxu0 0.0
    %1813 = vmatpush.msra.mxu0 0.0
    %1814 = vmatpush.msra.mxu0 0.0
    %1815 = vmatpush.msra.mxu0 0.0
    %1816 = vmatpush.msra.mxu0 0.0
    %1817 = vmatpush.msra.mxu0 %v1796
    %1818 = vmatpush.msra.mxu0 %v1795
    %1819 = vmatpush.msra.mxu0 %v1794
    %1820 = vmatpush.msra.mxu0 %v1793
    %1821 = vmatmul.f32.gmra.mxu0 %v1800
    %v1822 = vpop.f32.mrf.mxu0
    %v1823 = vadd.f32 %v1798, %v1822
    %1824 = vmatmul.f32.gmra.mxu0 %v1803
    %v1825 = vpop.f32.mrf.mxu0
    %v1826 = vadd.f32 %v1798, %v1825
    %1827 = vdwg.mxu0
    %v1828 = vmul.f32 %v1823, 0.5
    %v1829 = vmul.f32 %v1826, 0.5
    %v1830 = vmul.f32 %v1823, 0.70710677
    %v1831 = vmul.f32 %v1826, 0.70710677
    %vm1832 = vcmp.ge.f32.partialorder %v1830, 0.0
    %vm1833 = vcmp.ge.f32.partialorder %v1831, 0.0
    %v1834 = vsel %vm1832, 1.0, -1.0
    %v1835 = vsel %vm1833, 1.0, -1.0
    %v1836 = vand.u32 2147483647, %v1830
    %v1837 = vand.u32 2147483647, %v1831
    %v1838 = vmul.f32 %v1836, 0.3275911
    %v1839 = vmul.f32 %v1837, 0.3275911
    %v1840 = vadd.f32 %v1838, 1.0
    %v1841 = vadd.f32 %v1839, 1.0
    %v1842 = vrcp.pop %v1840
    %v1843 = vmul.f32 %v1840, %v1842
    %v1844 = vsub.f32 1.0, %v1843
    %v1845 = vmul.f32 %v1842, %v1844
    %v1846 = vadd.f32 %v1842, %v1845
    %vm1847 = vweird.f32 %v1840
    %vm1848 = vweird.f32 %v1842
    %vm1849 = vmor %vm1847, %vm1848
    %v1850 = vsel %vm1849, %v1842, %v1846
    %v1851 = vand.u32 2147483647, %v1840
    %vm1852 = vcmp.eq.f32.partialorder %v1851, 8.507059e+37
    %v1853 = vand.u32 %v1840, 2147483648
    %v1854 = vor.u32 1.1754944e-38, %v1853
    %v1855 = vsel %vm1852, %v1854, %v1850
    %v1856 = vmul.f32 1.0, %v1855
    %v1857 = vrcp.pop %v1841
    %v1858 = vmul.f32 %v1841, %v1857
    %v1859 = vsub.f32 1.0, %v1858
    %v1860 = vmul.f32 %v1857, %v1859
    %v1861 = vadd.f32 %v1857, %v1860
    %vm1862 = vweird.f32 %v1841
    %vm1863 = vweird.f32 %v1857
    %vm1864 = vmor %vm1862, %vm1863
    %v1865 = vsel %vm1864, %v1857, %v1861
    %v1866 = vand.u32 2147483647, %v1841
    %vm1867 = vcmp.eq.f32.partialorder %v1866, 8.507059e+37
    %v1868 = vand.u32 %v1841, 2147483648
    %v1869 = vor.u32 1.1754944e-38, %v1868
    %v1870 = vsel %vm1867, %v1869, %v1865
    %v1871 = vmul.f32 1.0, %v1870
    %v1872 = vmul.f32 %v1856, 1.0614054
    %v1873 = vmul.f32 %v1871, 1.0614054
    %v1874 = vadd.f32 %v1872, -1.4531521
    %v1875 = vadd.f32 %v1873, -1.4531521
    %v1876 = vmul.f32 %v1874, %v1856
    %v1877 = vmul.f32 %v1875, %v1871
    %v1878 = vadd.f32 %v1876, 1.4214138
    %v1879 = vadd.f32 %v1877, 1.4214138
    %v1880 = vmul.f32 %v1878, %v1856
    %v1881 = vmul.f32 %v1879, %v1871
    %v1882 = vadd.f32 %v1880, -0.28449672
    %v1883 = vadd.f32 %v1881, -0.28449672
    %v1884 = vmul.f32 %v1882, %v1856
    %v1885 = vmul.f32 %v1883, %v1871
    %v1886 = vadd.f32 %v1884, 0.2548296
    %v1887 = vadd.f32 %v1885, 0.2548296
    %v1888 = vmul.f32 %v1886, %v1856
    %v1889 = vmul.f32 %v1887, %v1871
    %v1890 = vsub.f32 0.0, %v1836
    %v1891 = vsub.f32 0.0, %v1837
    %v1892 = vmul.f32 %v1890, %v1836
    %v1893 = vmul.f32 %v1891, %v1837
    %v1894 = vmul.f32 %v1892, 1.442695
    %v1895 = vpow.pop %v1894
    %v1896 = vmul.f32 %v1893, 1.442695
    %v1897 = vpow.pop %v1896
    %v1898 = vmul.f32 %v1888, %v1895
    %v1899 = vmul.f32 %v1889, %v1897
    %v1900 = vsub.f32 1.0, %v1898
    %v1901 = vsub.f32 1.0, %v1899
    %v1902 = vmul.f32 %v1834, %v1900
    %v1903 = vmul.f32 %v1835, %v1901
    %v1904 = vadd.f32 %v1902, 1.0
    %v1905 = vadd.f32 %v1903, 1.0
    %v1906 = vmul.f32 %v1828, %v1904
    %v1907 = vmul.f32 %v1829, %v1905
    %s1908 = scalar_lea.vmem %s7, 64
    %v1909 = vld [vmem:[%s1908] sm:$0xff]
    %v1910 = vld [vmem:[%s1908 + $0x8] sm:$0xff]
    %v1911 = vld [vmem:[%s1908 + $0x10] sm:$0xff]
    %v1912 = vld [vmem:[%s1908 + $0x18] sm:$0xff]
    %v1913 = vld [vmem:[%s1908 + $0x20] sm:$0xff]
    %v1914 = vld [vmem:[%s1908 + $0x28] sm:$0xff]
    %v1915 = vld [vmem:[%s1908 + $0x30] sm:$0xff]
    %v1916 = vld [vmem:[%s1908 + $0x38] sm:$0xff]
    %v1918 = vsel %vm84, %v1906, 0
    %v1921 = vsel %vm84, %v1907, 0
    %1923 = vmatpush.msra.mxu0 0.0
    %1924 = vmatpush.msra.mxu0 0.0
    %1925 = vmatpush.msra.mxu0 0.0
    %1926 = vmatpush.msra.mxu0 0.0
    %1927 = vmatpush.msra.mxu0 0.0
    %1928 = vmatpush.msra.mxu0 0.0
    %1929 = vmatpush.msra.mxu0 0.0
    %1930 = vmatpush.msra.mxu0 0.0
    %1931 = vmatpush.msra.mxu0 %v1916
    %1932 = vmatpush.msra.mxu0 %v1915
    %1933 = vmatpush.msra.mxu0 %v1914
    %1934 = vmatpush.msra.mxu0 %v1913
    %1935 = vmatpush.msra.mxu0 %v1912
    %1936 = vmatpush.msra.mxu0 %v1911
    %1937 = vmatpush.msra.mxu0 %v1910
    %1938 = vmatpush.msra.mxu0 %v1909
    %1939 = vmatmul.f32.gmra.mxu0 %v1918
    %v1940 = vpop.f32.mrf.mxu0
    %v1941 = vadd.f32 0.0, %v1940
    %1942 = vmatmul.f32.gmra.mxu0 %v1921
    %v1943 = vpop.f32.mrf.mxu0
    %v1944 = vadd.f32 0.0, %v1943
    %1945 = vdwg.mxu0
    %v1946 = vadd.f32 %v1740, %v1941
    %v1947 = vadd.f32 %v1741, %v1944
    %v1948 = vperm.slane %v1059, 7
    %v1949 = vadd.f32 %v1946, %v1948
    %v1950 = vadd.f32 %v1947, %v1948
    %s1951 = scalar_lea.vmem %s8, 32
    %v1952 = vld [vmem:[%s1951] sm:$0xff]
    %v1953 = vld [vmem:[%s1951 + $0x8] sm:$0x3f]
    %s1954 = scalar_lea.vmem %s5, 128
    %v1955 = vld [vmem:[%s1954] sm:$0xff]
    %v1956 = vld [vmem:[%s1954 + $0x10] sm:$0xff]
    %v1957 = vld [vmem:[%s1954 + $0x20] sm:$0xff]
    %v1958 = vld [vmem:[%s1954 + $0x30] sm:$0xff]
    %v1959 = vld [vmem:[%s1954 + $0x8] sm:$0xff]
    %v1960 = vld [vmem:[%s1954 + $0x18] sm:$0xff]
    %v1961 = vld [vmem:[%s1954 + $0x28] sm:$0xff]
    %v1962 = vld [vmem:[%s1954 + $0x38] sm:$0xff]
    %v1963 = vperm.slane %v1952, 0
    %1968 = vrot.lane.b32.xlu0 %v1955, 32
    %v1969 = vpop.permute.xlu0 %1968
    %1970 = vrot.lane.b32.xlu0 %v1956, 32
    %v1971 = vpop.permute.xlu0 %1970
    %1972 = vrot.lane.b32.xlu0 %v1957, 32
    %v1973 = vpop.permute.xlu0 %1972
    %1974 = vrot.lane.b32.xlu0 %v1958, 32
    %v1975 = vpop.permute.xlu0 %1974
    %v1981 = vsel %vm167, %v1116, 0
    %v1984 = vsel %vm167, %v1117, 0
    %1986 = vmatpush.msra.mxu0 0.0
    %1987 = vmatpush.msra.mxu0 0.0
    %1988 = vmatpush.msra.mxu0 0.0
    %1989 = vmatpush.msra.mxu0 0.0
    %1990 = vmatpush.msra.mxu0 0.0
    %1991 = vmatpush.msra.mxu0 0.0
    %1992 = vmatpush.msra.mxu0 0.0
    %1993 = vmatpush.msra.mxu0 0.0
    %1994 = vmatpush.msra.mxu0 0.0
    %1995 = vmatpush.msra.mxu0 0.0
    %1996 = vmatpush.msra.mxu0 0.0
    %1997 = vmatpush.msra.mxu0 0.0
    %1998 = vmatpush.msra.mxu0 %v1975
    %1999 = vmatpush.msra.mxu0 %v1973
    %2000 = vmatpush.msra.mxu0 %v1971
    %2001 = vmatpush.msra.mxu0 %v1969
    %2002 = vmatmul.f32.gmra.mxu0 %v1981
    %v2003 = vpop.f32.mrf.mxu0
    %v2004 = vadd.f32 %v1963, %v2003
    %2005 = vmatmul.f32.gmra.mxu0 %v1984
    %v2006 = vpop.f32.mrf.mxu0
    %v2007 = vadd.f32 %v1963, %v2006
    %2008 = vdwg.mxu0
    %v2009 = vadd.f32 %v2004, %v1949
    %v2010 = vadd.f32 %v2007, %v1950
    %v2011 = vsel %vm167, %v1949, 0.0
    %2012 = vadd.xlane.f32.xlu0 %v2011
    %v2013 = vpop.xlane.xlu0 %2012
    %v2014 = vsel %vm167, %v1950, 0.0
    %2015 = vadd.xlane.f32.xlu0 %v2014
    %v2016 = vpop.xlane.xlu0 %2015
    %v2017 = vmul.f32 %v2013, %v207
    %v2018 = vmul.f32 %v2016, %v207
    %v2019 = vsub.f32 %v1949, %v2017
    %v2020 = vsub.f32 %v1950, %v2018
    %v2021 = vmul.f32 %v2019, %v2019
    %v2022 = vmul.f32 %v2020, %v2020
    %v2023 = vsel %vm167, %v2021, 0.0
    %2024 = vadd.xlane.f32.xlu0 %v2023
    %v2025 = vpop.xlane.xlu0 %2024
    %v2026 = vsel %vm167, %v2022, 0.0
    %2027 = vadd.xlane.f32.xlu0 %v2026
    %v2028 = vpop.xlane.xlu0 %2027
    %v2029 = vmul.f32 %v2025, %v207
    %v2030 = vmul.f32 %v2028, %v207
    %v2031 = vadd.f32 %v2029, 1e-05
    %v2032 = vadd.f32 %v2030, 1e-05
    %v2033 = vrsqrt.pop %v2031
    %v2034 = vmul.f32 %v2033, %v2031
    %v2035 = vmul.f32 %v2034, %v2033
    %v2036 = vmul.f32 0.5, %v2035
    %v2037 = vsub.f32 1.5, %v2036
    %v2038 = vmul.f32 %v2033, %v2037
    %vm2039 = vweird.f32 %v2031
    %vm2040 = vweird.f32 %v2033
    %vm2041 = vmor %vm2039, %vm2040
    %v2042 = vsel %vm2041, %v2033, %v2038
    %v2043 = vrsqrt.pop %v2032
    %v2044 = vmul.f32 %v2043, %v2032
    %v2045 = vmul.f32 %v2044, %v2043
    %v2046 = vmul.f32 0.5, %v2045
    %v2047 = vsub.f32 1.5, %v2046
    %v2048 = vmul.f32 %v2043, %v2047
    %vm2049 = vweird.f32 %v2032
    %vm2050 = vweird.f32 %v2043
    %vm2051 = vmor %vm2049, %vm2050
    %v2052 = vsel %vm2051, %v2043, %v2048
    %v2053 = vmul.f32 %v2019, %v2042
    %v2054 = vmul.f32 %v2020, %v2052
    %v2055 = vperm.slane %v1952, 1
    %v2056 = vmul.f32 %v2053, %v2055
    %v2057 = vmul.f32 %v2054, %v2055
    %v2058 = vperm.slane %v1952, 2
    %v2059 = vadd.f32 %v2056, %v2058
    %v2060 = vadd.f32 %v2057, %v2058
    %v2062 = vsel %vm167, %v2059, 0
    %v2065 = vsel %vm167, %v2060, 0
    %2067 = vmatpush.msra.mxu0 0.0
    %2068 = vmatpush.msra.mxu0 0.0
    %2069 = vmatpush.msra.mxu0 0.0
    %2070 = vmatpush.msra.mxu0 0.0
    %2071 = vmatpush.msra.mxu0 0.0
    %2072 = vmatpush.msra.mxu0 0.0
    %2073 = vmatpush.msra.mxu0 0.0
    %2074 = vmatpush.msra.mxu0 0.0
    %2075 = vmatpush.msra.mxu0 0.0
    %2076 = vmatpush.msra.mxu0 0.0
    %2077 = vmatpush.msra.mxu0 0.0
    %2078 = vmatpush.msra.mxu0 0.0
    %2079 = vmatpush.msra.mxu0 %v1958
    %2080 = vmatpush.msra.mxu0 %v1957
    %2081 = vmatpush.msra.mxu0 %v1956
    %2082 = vmatpush.msra.mxu0 %v1955
    %2083 = vmatmul.f32.gmra.mxu0 %v2062
    %v2084 = vpop.f32.mrf.mxu0
    %v2085 = vadd.f32 0.0, %v2084
    %2086 = vmatmul.f32.gmra.mxu0 %v2065
    %v2087 = vpop.f32.mrf.mxu0
    %v2088 = vadd.f32 0.0, %v2087
    %2089 = vdwg.mxu0
    %v2090 = vperm.slane %v1953, 0
    %v2091 = vadd.f32 %v2085, %v2090
    %v2092 = vadd.f32 %v2088, %v2090
    %v2093 = vmul.f32 %v2091, 0.35355338
    %v2094 = vmul.f32 %v2092, 0.35355338
    %v2095 = vperm.slane %v1953, 1
    %2097 = vrot.lane.b32.xlu0 %v2095, 32
    %v2098 = vpop.permute.xlu0 %2097
    %v2100 = vadd.f32 %v2085, %v2098
    %v2101 = vadd.f32 %v2088, %v2098
    %v2102 = vperm.slane %v1953, 2
    %2104 = vrot.lane.b32.xlu0 %v2102, 64
    %v2105 = vpop.permute.xlu0 %2104
    %v2107 = vadd.f32 %v2085, %v2105
    %v2108 = vadd.f32 %v2088, %v2105
    %2111 = vrot.lane.b32.xlu0 %v2100, 96
    %v2112 = vpop.permute.xlu0 %2111
    %2113 = vrot.lane.b32.xlu0 %v2101, 96
    %v2114 = vpop.permute.xlu0 %2113
    %v2116 = vsel %vm306, %v2093, 0
    %v2119 = vsel %vm306, %v2094, 0
    %v2121 = vsel %vm306, %v2112, 0
    %v2123 = vsel %vm306, %v2114, 0
    %2125 = vmatpush.xpose.msra.mxu0 0.0
    %2126 = vmatpush.xpose.msra.mxu0 0.0
    %2127 = vmatpush.xpose.msra.mxu0 0.0
    %2128 = vmatpush.xpose.msra.mxu0 0.0
    %2129 = vmatpush.xpose.msra.mxu0 0.0
    %2130 = vmatpush.xpose.msra.mxu0 0.0
    %2131 = vmatpush.xpose.msra.mxu0 0.0
    %2132 = vmatpush.xpose.msra.mxu0 0.0
    %2133 = vmatpush.xpose.msra.mxu0 0.0
    %2134 = vmatpush.xpose.msra.mxu0 0.0
    %2135 = vmatpush.xpose.msra.mxu0 0.0
    %2136 = vmatpush.xpose.msra.mxu0 0.0
    %2137 = vmatpush.xpose.msra.mxu0 0.0
    %2138 = vmatpush.xpose.msra.mxu0 0.0
    %2139 = vmatpush.xpose.msra.mxu0 %v2123
    %2140 = vmatpush.xpose.msra.mxu0 %v2121
    %2141 = vmatmul.f32.gmra.mxu0 %v2116
    %v2142 = vpop.f32.mrf.mxu0
    %v2143 = vadd.f32 %v52, %v2142
    %2144 = vmatmul.f32.gmra.mxu0 %v2119
    %v2145 = vpop.f32.mrf.mxu0
    %v2146 = vadd.f32 %v53, %v2145
    %2147 = vdwg.mxu0
    %v2148 = vsel %vm340, %v2143, -inf
    %2149 = vmax.xlane.f32.xlu0 %v2148
    %v2150 = vpop.xlane.xlu0 %2149
    %v2151 = vsel %vm340, %v2146, -inf
    %2152 = vmax.xlane.f32.xlu0 %v2151
    %v2153 = vpop.xlane.xlu0 %2152
    %v2154 = vsub.f32 %v2143, %v2150
    %v2155 = vsub.f32 %v2146, %v2153
    %v2156 = vmul.f32 %v2154, 1.442695
    %v2157 = vpow.pop %v2156
    %v2158 = vmul.f32 %v2155, 1.442695
    %v2159 = vpow.pop %v2158
    %2162 = vrot.lane.b32.xlu0 %v2107, 64
    %v2163 = vpop.permute.xlu0 %2162
    %2164 = vrot.lane.b32.xlu0 %v2108, 64
    %v2165 = vpop.permute.xlu0 %2164
    %v2169 = vsel %vm340, %v2157, 0
    %v2172 = vsel %vm340, %v2159, 0
    %2174 = vmatpush.msra.mxu0 0.0
    %2175 = vmatpush.msra.mxu0 0.0
    %2176 = vmatpush.msra.mxu0 0.0
    %2177 = vmatpush.msra.mxu0 0.0
    %2178 = vmatpush.msra.mxu0 0.0
    %2179 = vmatpush.msra.mxu0 0.0
    %2180 = vmatpush.msra.mxu0 0.0
    %2181 = vmatpush.msra.mxu0 0.0
    %2182 = vmatpush.msra.mxu0 0.0
    %2183 = vmatpush.msra.mxu0 0.0
    %2184 = vmatpush.msra.mxu0 0.0
    %2185 = vmatpush.msra.mxu0 0.0
    %2186 = vmatpush.msra.mxu0 0.0
    %2187 = vmatpush.msra.mxu0 0.0
    %2188 = vmatpush.msra.mxu0 %v2165
    %2189 = vmatpush.msra.mxu0 %v2163
    %2190 = vmatmul.f32.gmra.mxu0 %v2169
    %v2191 = vpop.f32.mrf.mxu0
    %v2192 = vadd.f32 0.0, %v2191
    %2193 = vmatmul.f32.gmra.mxu0 %v2172
    %v2194 = vpop.f32.mrf.mxu0
    %v2195 = vadd.f32 0.0, %v2194
    %2196 = vdwg.mxu0
    %v2197 = vsel %vm340, %v2157, 0.0
    %2198 = vadd.xlane.f32.xlu0 %v2197
    %v2199 = vpop.xlane.xlu0 %2198
    %v2200 = vsel %vm340, %v2159, 0.0
    %2201 = vadd.xlane.f32.xlu0 %v2200
    %v2202 = vpop.xlane.xlu0 %2201
    %v2203 = vrcp.pop %v2199
    %v2204 = vrcp.pop %v2202
    %v2205 = vmul.f32 %v2192, %v2203
    %v2206 = vmul.f32 %v2195, %v2204
    %2207 = vst.msk [vmem:[#allocation2] sm:$0xff] %vm306, %v2205
    %2208 = vst.msk [vmem:[#allocation2 + $0x8] sm:$0xff] %vm306, %v2206
    %2209 = vrot.lane.b32.xlu0 %v2093, 120
    %v2210 = vpop.permute.xlu0 %2209
    %2211 = vrot.lane.b32.xlu0 %v2094, 120
    %v2212 = vpop.permute.xlu0 %2211
    %2213 = vrot.lane.b32.xlu0 %v2100, 88
    %v2214 = vpop.permute.xlu0 %2213
    %2215 = vrot.lane.b32.xlu0 %v2101, 88
    %v2216 = vpop.permute.xlu0 %2215
    %v2217 = vsel %vm306, %v2210, 0
    %v2219 = vsel %vm306, %v2212, 0
    %v2221 = vsel %vm306, %v2214, 0
    %v2223 = vsel %vm306, %v2216, 0
    %2225 = vmatpush.xpose.msra.mxu0 0.0
    %2226 = vmatpush.xpose.msra.mxu0 0.0
    %2227 = vmatpush.xpose.msra.mxu0 0.0
    %2228 = vmatpush.xpose.msra.mxu0 0.0
    %2229 = vmatpush.xpose.msra.mxu0 0.0
    %2230 = vmatpush.xpose.msra.mxu0 0.0
    %2231 = vmatpush.xpose.msra.mxu0 0.0
    %2232 = vmatpush.xpose.msra.mxu0 0.0
    %2233 = vmatpush.xpose.msra.mxu0 0.0
    %2234 = vmatpush.xpose.msra.mxu0 0.0
    %2235 = vmatpush.xpose.msra.mxu0 0.0
    %2236 = vmatpush.xpose.msra.mxu0 0.0
    %2237 = vmatpush.xpose.msra.mxu0 0.0
    %2238 = vmatpush.xpose.msra.mxu0 0.0
    %2239 = vmatpush.xpose.msra.mxu0 %v2223
    %2240 = vmatpush.xpose.msra.mxu0 %v2221
    %2241 = vmatmul.f32.gmra.mxu0 %v2217
    %v2242 = vpop.f32.mrf.mxu0
    %v2243 = vadd.f32 %v52, %v2242
    %2244 = vmatmul.f32.gmra.mxu0 %v2219
    %v2245 = vpop.f32.mrf.mxu0
    %v2246 = vadd.f32 %v53, %v2245
    %2247 = vdwg.mxu0
    %v2248 = vsel %vm340, %v2243, -inf
    %2249 = vmax.xlane.f32.xlu0 %v2248
    %v2250 = vpop.xlane.xlu0 %2249
    %v2251 = vsel %vm340, %v2246, -inf
    %2252 = vmax.xlane.f32.xlu0 %v2251
    %v2253 = vpop.xlane.xlu0 %2252
    %v2254 = vsub.f32 %v2243, %v2250
    %v2255 = vsub.f32 %v2246, %v2253
    %v2256 = vmul.f32 %v2254, 1.442695
    %v2257 = vpow.pop %v2256
    %v2258 = vmul.f32 %v2255, 1.442695
    %v2259 = vpow.pop %v2258
    %2260 = vrot.lane.b32.xlu0 %v2107, 56
    %v2261 = vpop.permute.xlu0 %2260
    %2262 = vrot.lane.b32.xlu0 %v2108, 56
    %v2263 = vpop.permute.xlu0 %2262
    %v2267 = vsel %vm340, %v2257, 0
    %v2270 = vsel %vm340, %v2259, 0
    %2272 = vmatpush.msra.mxu0 0.0
    %2273 = vmatpush.msra.mxu0 0.0
    %2274 = vmatpush.msra.mxu0 0.0
    %2275 = vmatpush.msra.mxu0 0.0
    %2276 = vmatpush.msra.mxu0 0.0
    %2277 = vmatpush.msra.mxu0 0.0
    %2278 = vmatpush.msra.mxu0 0.0
    %2279 = vmatpush.msra.mxu0 0.0
    %2280 = vmatpush.msra.mxu0 0.0
    %2281 = vmatpush.msra.mxu0 0.0
    %2282 = vmatpush.msra.mxu0 0.0
    %2283 = vmatpush.msra.mxu0 0.0
    %2284 = vmatpush.msra.mxu0 0.0
    %2285 = vmatpush.msra.mxu0 0.0
    %2286 = vmatpush.msra.mxu0 %v2263
    %2287 = vmatpush.msra.mxu0 %v2261
    %2288 = vmatmul.f32.gmra.mxu0 %v2267
    %v2289 = vpop.f32.mrf.mxu0
    %v2290 = vadd.f32 0.0, %v2289
    %2291 = vmatmul.f32.gmra.mxu0 %v2270
    %v2292 = vpop.f32.mrf.mxu0
    %v2293 = vadd.f32 0.0, %v2292
    %2294 = vdwg.mxu0
    %v2295 = vsel %vm340, %v2257, 0.0
    %2296 = vadd.xlane.f32.xlu0 %v2295
    %v2297 = vpop.xlane.xlu0 %2296
    %v2298 = vsel %vm340, %v2259, 0.0
    %2299 = vadd.xlane.f32.xlu0 %v2298
    %v2300 = vpop.xlane.xlu0 %2299
    %v2301 = vrcp.pop %v2297
    %v2302 = vrcp.pop %v2300
    %v2303 = vmul.f32 %v2290, %v2301
    %v2304 = vmul.f32 %v2293, %v2302
    %2307 = vrot.lane.b32.xlu0 %v2303, 8
    %v2308 = vpop.permute.xlu0 %2307
    %2309 = vrot.lane.b32.xlu0 %v2304, 8
    %v2310 = vpop.permute.xlu0 %2309
    %2313 = vst.msk [vmem:[#allocation2] sm:$0xff] %vm506, %v2308
    %2314 = vst.msk [vmem:[#allocation2 + $0x8] sm:$0xff] %vm506, %v2310
    %2315 = vrot.lane.b32.xlu0 %v2093, 112
    %v2316 = vpop.permute.xlu0 %2315
    %2317 = vrot.lane.b32.xlu0 %v2094, 112
    %v2318 = vpop.permute.xlu0 %2317
    %2319 = vrot.lane.b32.xlu0 %v2100, 80
    %v2320 = vpop.permute.xlu0 %2319
    %2321 = vrot.lane.b32.xlu0 %v2101, 80
    %v2322 = vpop.permute.xlu0 %2321
    %v2323 = vsel %vm306, %v2316, 0
    %v2325 = vsel %vm306, %v2318, 0
    %v2327 = vsel %vm306, %v2320, 0
    %v2329 = vsel %vm306, %v2322, 0
    %2331 = vmatpush.xpose.msra.mxu0 0.0
    %2332 = vmatpush.xpose.msra.mxu0 0.0
    %2333 = vmatpush.xpose.msra.mxu0 0.0
    %2334 = vmatpush.xpose.msra.mxu0 0.0
    %2335 = vmatpush.xpose.msra.mxu0 0.0
    %2336 = vmatpush.xpose.msra.mxu0 0.0
    %2337 = vmatpush.xpose.msra.mxu0 0.0
    %2338 = vmatpush.xpose.msra.mxu0 0.0
    %2339 = vmatpush.xpose.msra.mxu0 0.0
    %2340 = vmatpush.xpose.msra.mxu0 0.0
    %2341 = vmatpush.xpose.msra.mxu0 0.0
    %2342 = vmatpush.xpose.msra.mxu0 0.0
    %2343 = vmatpush.xpose.msra.mxu0 0.0
    %2344 = vmatpush.xpose.msra.mxu0 0.0
    %2345 = vmatpush.xpose.msra.mxu0 %v2329
    %2346 = vmatpush.xpose.msra.mxu0 %v2327
    %2347 = vmatmul.f32.gmra.mxu0 %v2323
    %v2348 = vpop.f32.mrf.mxu0
    %v2349 = vadd.f32 %v52, %v2348
    %2350 = vmatmul.f32.gmra.mxu0 %v2325
    %v2351 = vpop.f32.mrf.mxu0
    %v2352 = vadd.f32 %v53, %v2351
    %2353 = vdwg.mxu0
    %v2354 = vsel %vm340, %v2349, -inf
    %2355 = vmax.xlane.f32.xlu0 %v2354
    %v2356 = vpop.xlane.xlu0 %2355
    %v2357 = vsel %vm340, %v2352, -inf
    %2358 = vmax.xlane.f32.xlu0 %v2357
    %v2359 = vpop.xlane.xlu0 %2358
    %v2360 = vsub.f32 %v2349, %v2356
    %v2361 = vsub.f32 %v2352, %v2359
    %v2362 = vmul.f32 %v2360, 1.442695
    %v2363 = vpow.pop %v2362
    %v2364 = vmul.f32 %v2361, 1.442695
    %v2365 = vpow.pop %v2364
    %2366 = vrot.lane.b32.xlu0 %v2107, 48
    %v2367 = vpop.permute.xlu0 %2366
    %2368 = vrot.lane.b32.xlu0 %v2108, 48
    %v2369 = vpop.permute.xlu0 %2368
    %v2373 = vsel %vm340, %v2363, 0
    %v2376 = vsel %vm340, %v2365, 0
    %2378 = vmatpush.msra.mxu0 0.0
    %2379 = vmatpush.msra.mxu0 0.0
    %2380 = vmatpush.msra.mxu0 0.0
    %2381 = vmatpush.msra.mxu0 0.0
    %2382 = vmatpush.msra.mxu0 0.0
    %2383 = vmatpush.msra.mxu0 0.0
    %2384 = vmatpush.msra.mxu0 0.0
    %2385 = vmatpush.msra.mxu0 0.0
    %2386 = vmatpush.msra.mxu0 0.0
    %2387 = vmatpush.msra.mxu0 0.0
    %2388 = vmatpush.msra.mxu0 0.0
    %2389 = vmatpush.msra.mxu0 0.0
    %2390 = vmatpush.msra.mxu0 0.0
    %2391 = vmatpush.msra.mxu0 0.0
    %2392 = vmatpush.msra.mxu0 %v2369
    %2393 = vmatpush.msra.mxu0 %v2367
    %2394 = vmatmul.f32.gmra.mxu0 %v2373
    %v2395 = vpop.f32.mrf.mxu0
    %v2396 = vadd.f32 0.0, %v2395
    %2397 = vmatmul.f32.gmra.mxu0 %v2376
    %v2398 = vpop.f32.mrf.mxu0
    %v2399 = vadd.f32 0.0, %v2398
    %2400 = vdwg.mxu0
    %v2401 = vsel %vm340, %v2363, 0.0
    %2402 = vadd.xlane.f32.xlu0 %v2401
    %v2403 = vpop.xlane.xlu0 %2402
    %v2404 = vsel %vm340, %v2365, 0.0
    %2405 = vadd.xlane.f32.xlu0 %v2404
    %v2406 = vpop.xlane.xlu0 %2405
    %v2407 = vrcp.pop %v2403
    %v2408 = vrcp.pop %v2406
    %v2409 = vmul.f32 %v2396, %v2407
    %v2410 = vmul.f32 %v2399, %v2408
    %2413 = vrot.lane.b32.xlu0 %v2409, 16
    %v2414 = vpop.permute.xlu0 %2413
    %2415 = vrot.lane.b32.xlu0 %v2410, 16
    %v2416 = vpop.permute.xlu0 %2415
    %2419 = vst.msk [vmem:[#allocation2] sm:$0xff] %vm613, %v2414
    %2420 = vst.msk [vmem:[#allocation2 + $0x8] sm:$0xff] %vm613, %v2416
    %2421 = vrot.lane.b32.xlu0 %v2093, 104
    %v2422 = vpop.permute.xlu0 %2421
    %2423 = vrot.lane.b32.xlu0 %v2094, 104
    %v2424 = vpop.permute.xlu0 %2423
    %2425 = vrot.lane.b32.xlu0 %v2100, 72
    %v2426 = vpop.permute.xlu0 %2425
    %2427 = vrot.lane.b32.xlu0 %v2101, 72
    %v2428 = vpop.permute.xlu0 %2427
    %v2429 = vsel %vm306, %v2422, 0
    %v2431 = vsel %vm306, %v2424, 0
    %v2433 = vsel %vm306, %v2426, 0
    %v2435 = vsel %vm306, %v2428, 0
    %2437 = vmatpush.xpose.msra.mxu0 0.0
    %2438 = vmatpush.xpose.msra.mxu0 0.0
    %2439 = vmatpush.xpose.msra.mxu0 0.0
    %2440 = vmatpush.xpose.msra.mxu0 0.0
    %2441 = vmatpush.xpose.msra.mxu0 0.0
    %2442 = vmatpush.xpose.msra.mxu0 0.0
    %2443 = vmatpush.xpose.msra.mxu0 0.0
    %2444 = vmatpush.xpose.msra.mxu0 0.0
    %2445 = vmatpush.xpose.msra.mxu0 0.0
    %2446 = vmatpush.xpose.msra.mxu0 0.0
    %2447 = vmatpush.xpose.msra.mxu0 0.0
    %2448 = vmatpush.xpose.msra.mxu0 0.0
    %2449 = vmatpush.xpose.msra.mxu0 0.0
    %2450 = vmatpush.xpose.msra.mxu0 0.0
    %2451 = vmatpush.xpose.msra.mxu0 %v2435
    %2452 = vmatpush.xpose.msra.mxu0 %v2433
    %2453 = vmatmul.f32.gmra.mxu0 %v2429
    %v2454 = vpop.f32.mrf.mxu0
    %v2455 = vadd.f32 %v52, %v2454
    %2456 = vmatmul.f32.gmra.mxu0 %v2431
    %v2457 = vpop.f32.mrf.mxu0
    %v2458 = vadd.f32 %v53, %v2457
    %2459 = vdwg.mxu0
    %v2460 = vsel %vm340, %v2455, -inf
    %2461 = vmax.xlane.f32.xlu0 %v2460
    %v2462 = vpop.xlane.xlu0 %2461
    %v2463 = vsel %vm340, %v2458, -inf
    %2464 = vmax.xlane.f32.xlu0 %v2463
    %v2465 = vpop.xlane.xlu0 %2464
    %v2466 = vsub.f32 %v2455, %v2462
    %v2467 = vsub.f32 %v2458, %v2465
    %v2468 = vmul.f32 %v2466, 1.442695
    %v2469 = vpow.pop %v2468
    %v2470 = vmul.f32 %v2467, 1.442695
    %v2471 = vpow.pop %v2470
    %2472 = vrot.lane.b32.xlu0 %v2107, 40
    %v2473 = vpop.permute.xlu0 %2472
    %2474 = vrot.lane.b32.xlu0 %v2108, 40
    %v2475 = vpop.permute.xlu0 %2474
    %v2479 = vsel %vm340, %v2469, 0
    %v2482 = vsel %vm340, %v2471, 0
    %2484 = vmatpush.msra.mxu0 0.0
    %2485 = vmatpush.msra.mxu0 0.0
    %2486 = vmatpush.msra.mxu0 0.0
    %2487 = vmatpush.msra.mxu0 0.0
    %2488 = vmatpush.msra.mxu0 0.0
    %2489 = vmatpush.msra.mxu0 0.0
    %2490 = vmatpush.msra.mxu0 0.0
    %2491 = vmatpush.msra.mxu0 0.0
    %2492 = vmatpush.msra.mxu0 0.0
    %2493 = vmatpush.msra.mxu0 0.0
    %2494 = vmatpush.msra.mxu0 0.0
    %2495 = vmatpush.msra.mxu0 0.0
    %2496 = vmatpush.msra.mxu0 0.0
    %2497 = vmatpush.msra.mxu0 0.0
    %2498 = vmatpush.msra.mxu0 %v2475
    %2499 = vmatpush.msra.mxu0 %v2473
    %2500 = vmatmul.f32.gmra.mxu0 %v2479
    %v2501 = vpop.f32.mrf.mxu0
    %v2502 = vadd.f32 0.0, %v2501
    %2503 = vmatmul.f32.gmra.mxu0 %v2482
    %v2504 = vpop.f32.mrf.mxu0
    %v2505 = vadd.f32 0.0, %v2504
    %2506 = vdwg.mxu0
    %v2507 = vsel %vm340, %v2469, 0.0
    %2508 = vadd.xlane.f32.xlu0 %v2507
    %v2509 = vpop.xlane.xlu0 %2508
    %v2510 = vsel %vm340, %v2471, 0.0
    %2511 = vadd.xlane.f32.xlu0 %v2510
    %v2512 = vpop.xlane.xlu0 %2511
    %v2513 = vrcp.pop %v2509
    %v2514 = vrcp.pop %v2512
    %v2515 = vmul.f32 %v2502, %v2513
    %v2516 = vmul.f32 %v2505, %v2514
    %2519 = vrot.lane.b32.xlu0 %v2515, 24
    %v2520 = vpop.permute.xlu0 %2519
    %2521 = vrot.lane.b32.xlu0 %v2516, 24
    %v2522 = vpop.permute.xlu0 %2521
    %2525 = vst.msk [vmem:[#allocation2] sm:$0xff] %vm720, %v2520
    %2526 = vst.msk [vmem:[#allocation2 + $0x8] sm:$0xff] %vm720, %v2522
    %v2527 = vld [vmem:[#allocation2] sm:$0xff]
    %v2528 = vld [vmem:[#allocation2 + $0x8] sm:$0xff]
    %v2530 = vsel %vm167, %v2527, 0
    %v2533 = vsel %vm167, %v2528, 0
    %2535 = vmatpush.msra.mxu0 0.0
    %2536 = vmatpush.msra.mxu0 0.0
    %2537 = vmatpush.msra.mxu0 0.0
    %2538 = vmatpush.msra.mxu0 0.0
    %2539 = vmatpush.msra.mxu0 0.0
    %2540 = vmatpush.msra.mxu0 0.0
    %2541 = vmatpush.msra.mxu0 0.0
    %2542 = vmatpush.msra.mxu0 0.0
    %2543 = vmatpush.msra.mxu0 0.0
    %2544 = vmatpush.msra.mxu0 0.0
    %2545 = vmatpush.msra.mxu0 0.0
    %2546 = vmatpush.msra.mxu0 0.0
    %2547 = vmatpush.msra.mxu0 %v1962
    %2548 = vmatpush.msra.mxu0 %v1961
    %2549 = vmatpush.msra.mxu0 %v1960
    %2550 = vmatpush.msra.mxu0 %v1959
    %2551 = vmatmul.f32.gmra.mxu0 %v2530
    %v2552 = vpop.f32.mrf.mxu0
    %v2553 = vadd.f32 0.0, %v2552
    %2554 = vmatmul.f32.gmra.mxu0 %v2533
    %v2555 = vpop.f32.mrf.mxu0
    %v2556 = vadd.f32 0.0, %v2555
    %2557 = vdwg.mxu0
    %v2558 = vadd.f32 %v1949, %v2553
    %v2559 = vadd.f32 %v1950, %v2556
    %v2560 = vperm.slane %v1952, 3
    %v2561 = vadd.f32 %v2558, %v2560
    %v2562 = vadd.f32 %v2559, %v2560
    %v2563 = vrot.slane %v2561, 7
    %v2564 = vrot.slane %v2562, 7
    %v2565 = vsel %vm763, %v2563, %v2564
    %v2566 = vsel %vm763, %v2564, %v2563
    %v2567 = vmul.f32 %v2566, %v768
    %v2568 = vmul.f32 %v2565, %v772
    %v2569 = vrot.slane %v2561, 1
    %v2570 = vrot.slane %v2562, 1
    %v2571 = vsel %vm778, %v2569, %v2570
    %v2572 = vsel %vm778, %v2570, %v2569
    %v2573 = vmul.f32 %v2571, %v783
    %v2574 = vmul.f32 %v2572, %v787
    %v2575 = vperm.slane %v1953, 3
    %v2576 = vmul.f32 %v2567, %v2575
    %v2577 = vmul.f32 %v2568, %v2575
    %v2578 = vperm.slane %v1953, 4
    %v2579 = vmul.f32 %v2561, %v2578
    %v2580 = vmul.f32 %v2562, %v2578
    %v2581 = vadd.f32 %v2576, %v2579
    %v2582 = vadd.f32 %v2577, %v2580
    %v2583 = vperm.slane %v1953, 5
    %v2584 = vmul.f32 %v2573, %v2583
    %v2585 = vmul.f32 %v2574, %v2583
    %v2586 = vadd.f32 %v2581, %v2584
    %v2587 = vadd.f32 %v2582, %v2585
    %v2588 = vperm.slane %v1952, 4
    %v2589 = vadd.f32 %v2586, %v2588
    %v2590 = vadd.f32 %v2587, %v2588
    %v2591 = vxor.u32 %v2589, 2147483648
    %v2592 = vxor.u32 %v2590, 2147483648
    %v2593 = vmul.f32 %v2591, 1.442695
    %v2594 = vpow.pop %v2593
    %v2595 = vmul.f32 %v2592, 1.442695
    %v2596 = vpow.pop %v2595
    %v2597 = vadd.f32 %v2594, 1.0
    %v2598 = vadd.f32 %v2596, 1.0
    %v2599 = vrcp.pop %v2597
    %v2600 = vmul.f32 %v2597, %v2599
    %v2601 = vsub.f32 1.0, %v2600
    %v2602 = vmul.f32 %v2599, %v2601
    %v2603 = vadd.f32 %v2599, %v2602
    %vm2604 = vweird.f32 %v2597
    %vm2605 = vweird.f32 %v2599
    %vm2606 = vmor %vm2604, %vm2605
    %v2607 = vsel %vm2606, %v2599, %v2603
    %v2608 = vand.u32 2147483647, %v2597
    %vm2609 = vcmp.eq.f32.partialorder %v2608, 8.507059e+37
    %v2610 = vand.u32 %v2597, 2147483648
    %v2611 = vor.u32 1.1754944e-38, %v2610
    %v2612 = vsel %vm2609, %v2611, %v2607
    %v2613 = vmul.f32 1.0, %v2612
    %v2614 = vrcp.pop %v2598
    %v2615 = vmul.f32 %v2598, %v2614
    %v2616 = vsub.f32 1.0, %v2615
    %v2617 = vmul.f32 %v2614, %v2616
    %v2618 = vadd.f32 %v2614, %v2617
    %vm2619 = vweird.f32 %v2598
    %vm2620 = vweird.f32 %v2614
    %vm2621 = vmor %vm2619, %vm2620
    %v2622 = vsel %vm2621, %v2614, %v2618
    %v2623 = vand.u32 2147483647, %v2598
    %vm2624 = vcmp.eq.f32.partialorder %v2623, 8.507059e+37
    %v2625 = vand.u32 %v2598, 2147483648
    %v2626 = vor.u32 1.1754944e-38, %v2625
    %v2627 = vsel %vm2624, %v2626, %v2622
    %v2628 = vmul.f32 1.0, %v2627
    %v2629 = vmul.f32 %v2589, %v2613
    %v2630 = vmul.f32 %v2590, %v2628
    %v2631 = vadd.f32 %v2561, %v2629
    %v2632 = vadd.f32 %v2562, %v2630
    %v2633 = vadd.f32 %v2631, %v2009
    %v2634 = vadd.f32 %v2632, %v2010
    %v2635 = vsel %vm167, %v2633, 0.0
    %2636 = vadd.xlane.f32.xlu0 %v2635
    %v2637 = vpop.xlane.xlu0 %2636
    %v2638 = vsel %vm167, %v2634, 0.0
    %2639 = vadd.xlane.f32.xlu0 %v2638
    %v2640 = vpop.xlane.xlu0 %2639
    %v2641 = vmul.f32 %v2637, %v207
    %v2642 = vmul.f32 %v2640, %v207
    %v2643 = vsub.f32 %v2633, %v2641
    %v2644 = vsub.f32 %v2634, %v2642
    %v2645 = vmul.f32 %v2643, %v2643
    %v2646 = vmul.f32 %v2644, %v2644
    %v2647 = vsel %vm167, %v2645, 0.0
    %2648 = vadd.xlane.f32.xlu0 %v2647
    %v2649 = vpop.xlane.xlu0 %2648
    %v2650 = vsel %vm167, %v2646, 0.0
    %2651 = vadd.xlane.f32.xlu0 %v2650
    %v2652 = vpop.xlane.xlu0 %2651
    %v2653 = vmul.f32 %v2649, %v207
    %v2654 = vmul.f32 %v2652, %v207
    %v2655 = vadd.f32 %v2653, 1e-05
    %v2656 = vadd.f32 %v2654, 1e-05
    %v2657 = vrsqrt.pop %v2655
    %v2658 = vmul.f32 %v2657, %v2655
    %v2659 = vmul.f32 %v2658, %v2657
    %v2660 = vmul.f32 0.5, %v2659
    %v2661 = vsub.f32 1.5, %v2660
    %v2662 = vmul.f32 %v2657, %v2661
    %vm2663 = vweird.f32 %v2655
    %vm2664 = vweird.f32 %v2657
    %vm2665 = vmor %vm2663, %vm2664
    %v2666 = vsel %vm2665, %v2657, %v2662
    %v2667 = vrsqrt.pop %v2656
    %v2668 = vmul.f32 %v2667, %v2656
    %v2669 = vmul.f32 %v2668, %v2667
    %v2670 = vmul.f32 0.5, %v2669
    %v2671 = vsub.f32 1.5, %v2670
    %v2672 = vmul.f32 %v2667, %v2671
    %vm2673 = vweird.f32 %v2656
    %vm2674 = vweird.f32 %v2667
    %vm2675 = vmor %vm2673, %vm2674
    %v2676 = vsel %vm2675, %v2667, %v2672
    %v2677 = vmul.f32 %v2643, %v2666
    %v2678 = vmul.f32 %v2644, %v2676
    %v2679 = vperm.slane %v1952, 5
    %v2680 = vmul.f32 %v2677, %v2679
    %v2681 = vmul.f32 %v2678, %v2679
    %v2682 = vperm.slane %v1952, 6
    %v2683 = vadd.f32 %v2680, %v2682
    %v2684 = vadd.f32 %v2681, %v2682
    %s2685 = scalar_lea.vmem %s6, 80
    %v2686 = vld [vmem:[%s2685] sm:$0xff]
    %v2687 = vld [vmem:[%s2685 + $0x8] sm:$0xff]
    %v2688 = vld [vmem:[%s2685 + $0x10] sm:$0xff]
    %v2689 = vld [vmem:[%s2685 + $0x18] sm:$0xff]
    %v2690 = vld [vmem:[%s2685 + $0x20] sm:$0x1]
    %v2691 = vperm.slane %v2690, 0
    %v2693 = vsel %vm167, %v2683, 0
    %v2696 = vsel %vm167, %v2684, 0
    %2698 = vmatpush.msra.mxu0 0.0
    %2699 = vmatpush.msra.mxu0 0.0
    %2700 = vmatpush.msra.mxu0 0.0
    %2701 = vmatpush.msra.mxu0 0.0
    %2702 = vmatpush.msra.mxu0 0.0
    %2703 = vmatpush.msra.mxu0 0.0
    %2704 = vmatpush.msra.mxu0 0.0
    %2705 = vmatpush.msra.mxu0 0.0
    %2706 = vmatpush.msra.mxu0 0.0
    %2707 = vmatpush.msra.mxu0 0.0
    %2708 = vmatpush.msra.mxu0 0.0
    %2709 = vmatpush.msra.mxu0 0.0
    %2710 = vmatpush.msra.mxu0 %v2689
    %2711 = vmatpush.msra.mxu0 %v2688
    %2712 = vmatpush.msra.mxu0 %v2687
    %2713 = vmatpush.msra.mxu0 %v2686
    %2714 = vmatmul.f32.gmra.mxu0 %v2693
    %v2715 = vpop.f32.mrf.mxu0
    %v2716 = vadd.f32 %v2691, %v2715
    %2717 = vmatmul.f32.gmra.mxu0 %v2696
    %v2718 = vpop.f32.mrf.mxu0
    %v2719 = vadd.f32 %v2691, %v2718
    %2720 = vdwg.mxu0
    %v2721 = vmul.f32 %v2716, 0.5
    %v2722 = vmul.f32 %v2719, 0.5
    %v2723 = vmul.f32 %v2716, 0.70710677
    %v2724 = vmul.f32 %v2719, 0.70710677
    %vm2725 = vcmp.ge.f32.partialorder %v2723, 0.0
    %vm2726 = vcmp.ge.f32.partialorder %v2724, 0.0
    %v2727 = vsel %vm2725, 1.0, -1.0
    %v2728 = vsel %vm2726, 1.0, -1.0
    %v2729 = vand.u32 2147483647, %v2723
    %v2730 = vand.u32 2147483647, %v2724
    %v2731 = vmul.f32 %v2729, 0.3275911
    %v2732 = vmul.f32 %v2730, 0.3275911
    %v2733 = vadd.f32 %v2731, 1.0
    %v2734 = vadd.f32 %v2732, 1.0
    %v2735 = vrcp.pop %v2733
    %v2736 = vmul.f32 %v2733, %v2735
    %v2737 = vsub.f32 1.0, %v2736
    %v2738 = vmul.f32 %v2735, %v2737
    %v2739 = vadd.f32 %v2735, %v2738
    %vm2740 = vweird.f32 %v2733
    %vm2741 = vweird.f32 %v2735
    %vm2742 = vmor %vm2740, %vm2741
    %v2743 = vsel %vm2742, %v2735, %v2739
    %v2744 = vand.u32 2147483647, %v2733
    %vm2745 = vcmp.eq.f32.partialorder %v2744, 8.507059e+37
    %v2746 = vand.u32 %v2733, 2147483648
    %v2747 = vor.u32 1.1754944e-38, %v2746
    %v2748 = vsel %vm2745, %v2747, %v2743
    %v2749 = vmul.f32 1.0, %v2748
    %v2750 = vrcp.pop %v2734
    %v2751 = vmul.f32 %v2734, %v2750
    %v2752 = vsub.f32 1.0, %v2751
    %v2753 = vmul.f32 %v2750, %v2752
    %v2754 = vadd.f32 %v2750, %v2753
    %vm2755 = vweird.f32 %v2734
    %vm2756 = vweird.f32 %v2750
    %vm2757 = vmor %vm2755, %vm2756
    %v2758 = vsel %vm2757, %v2750, %v2754
    %v2759 = vand.u32 2147483647, %v2734
    %vm2760 = vcmp.eq.f32.partialorder %v2759, 8.507059e+37
    %v2761 = vand.u32 %v2734, 2147483648
    %v2762 = vor.u32 1.1754944e-38, %v2761
    %v2763 = vsel %vm2760, %v2762, %v2758
    %v2764 = vmul.f32 1.0, %v2763
    %v2765 = vmul.f32 %v2749, 1.0614054
    %v2766 = vmul.f32 %v2764, 1.0614054
    %v2767 = vadd.f32 %v2765, -1.4531521
    %v2768 = vadd.f32 %v2766, -1.4531521
    %v2769 = vmul.f32 %v2767, %v2749
    %v2770 = vmul.f32 %v2768, %v2764
    %v2771 = vadd.f32 %v2769, 1.4214138
    %v2772 = vadd.f32 %v2770, 1.4214138
    %v2773 = vmul.f32 %v2771, %v2749
    %v2774 = vmul.f32 %v2772, %v2764
    %v2775 = vadd.f32 %v2773, -0.28449672
    %v2776 = vadd.f32 %v2774, -0.28449672
    %v2777 = vmul.f32 %v2775, %v2749
    %v2778 = vmul.f32 %v2776, %v2764
    %v2779 = vadd.f32 %v2777, 0.2548296
    %v2780 = vadd.f32 %v2778, 0.2548296
    %v2781 = vmul.f32 %v2779, %v2749
    %v2782 = vmul.f32 %v2780, %v2764
    %v2783 = vsub.f32 0.0, %v2729
    %v2784 = vsub.f32 0.0, %v2730
    %v2785 = vmul.f32 %v2783, %v2729
    %v2786 = vmul.f32 %v2784, %v2730
    %v2787 = vmul.f32 %v2785, 1.442695
    %v2788 = vpow.pop %v2787
    %v2789 = vmul.f32 %v2786, 1.442695
    %v2790 = vpow.pop %v2789
    %v2791 = vmul.f32 %v2781, %v2788
    %v2792 = vmul.f32 %v2782, %v2790
    %v2793 = vsub.f32 1.0, %v2791
    %v2794 = vsub.f32 1.0, %v2792
    %v2795 = vmul.f32 %v2727, %v2793
    %v2796 = vmul.f32 %v2728, %v2794
    %v2797 = vadd.f32 %v2795, 1.0
    %v2798 = vadd.f32 %v2796, 1.0
    %v2799 = vmul.f32 %v2721, %v2797
    %v2800 = vmul.f32 %v2722, %v2798
    %s2801 = scalar_lea.vmem %s7, 128
    %v2802 = vld [vmem:[%s2801] sm:$0xff]
    %v2803 = vld [vmem:[%s2801 + $0x8] sm:$0xff]
    %v2804 = vld [vmem:[%s2801 + $0x10] sm:$0xff]
    %v2805 = vld [vmem:[%s2801 + $0x18] sm:$0xff]
    %v2806 = vld [vmem:[%s2801 + $0x20] sm:$0xff]
    %v2807 = vld [vmem:[%s2801 + $0x28] sm:$0xff]
    %v2808 = vld [vmem:[%s2801 + $0x30] sm:$0xff]
    %v2809 = vld [vmem:[%s2801 + $0x38] sm:$0xff]
    %v2811 = vsel %vm84, %v2799, 0
    %v2814 = vsel %vm84, %v2800, 0
    %2816 = vmatpush.msra.mxu0 0.0
    %2817 = vmatpush.msra.mxu0 0.0
    %2818 = vmatpush.msra.mxu0 0.0
    %2819 = vmatpush.msra.mxu0 0.0
    %2820 = vmatpush.msra.mxu0 0.0
    %2821 = vmatpush.msra.mxu0 0.0
    %2822 = vmatpush.msra.mxu0 0.0
    %2823 = vmatpush.msra.mxu0 0.0
    %2824 = vmatpush.msra.mxu0 %v2809
    %2825 = vmatpush.msra.mxu0 %v2808
    %2826 = vmatpush.msra.mxu0 %v2807
    %2827 = vmatpush.msra.mxu0 %v2806
    %2828 = vmatpush.msra.mxu0 %v2805
    %2829 = vmatpush.msra.mxu0 %v2804
    %2830 = vmatpush.msra.mxu0 %v2803
    %2831 = vmatpush.msra.mxu0 %v2802
    %2832 = vmatmul.f32.gmra.mxu0 %v2811
    %v2833 = vpop.f32.mrf.mxu0
    %v2834 = vadd.f32 0.0, %v2833
    %2835 = vmatmul.f32.gmra.mxu0 %v2814
    %v2836 = vpop.f32.mrf.mxu0
    %v2837 = vadd.f32 0.0, %v2836
    %2838 = vdwg.mxu0
    %v2839 = vadd.f32 %v2633, %v2834
    %v2840 = vadd.f32 %v2634, %v2837
    %v2841 = vperm.slane %v1952, 7
    %v2842 = vadd.f32 %v2839, %v2841
    %v2843 = vadd.f32 %v2840, %v2841
    %s2844 = scalar_lea.vmem %s8, 48
    %v2845 = vld [vmem:[%s2844] sm:$0xff]
    %v2846 = vld [vmem:[%s2844 + $0x8] sm:$0x3f]
    %s2847 = scalar_lea.vmem %s5, 192
    %v2848 = vld [vmem:[%s2847] sm:$0xff]
    %v2849 = vld [vmem:[%s2847 + $0x10] sm:$0xff]
    %v2850 = vld [vmem:[%s2847 + $0x20] sm:$0xff]
    %v2851 = vld [vmem:[%s2847 + $0x30] sm:$0xff]
    %v2852 = vld [vmem:[%s2847 + $0x8] sm:$0xff]
    %v2853 = vld [vmem:[%s2847 + $0x18] sm:$0xff]
    %v2854 = vld [vmem:[%s2847 + $0x28] sm:$0xff]
    %v2855 = vld [vmem:[%s2847 + $0x38] sm:$0xff]
    %v2856 = vperm.slane %v2845, 0
    %2861 = vrot.lane.b32.xlu0 %v2848, 32
    %v2862 = vpop.permute.xlu0 %2861
    %2863 = vrot.lane.b32.xlu0 %v2849, 32
    %v2864 = vpop.permute.xlu0 %2863
    %2865 = vrot.lane.b32.xlu0 %v2850, 32
    %v2866 = vpop.permute.xlu0 %2865
    %2867 = vrot.lane.b32.xlu0 %v2851, 32
    %v2868 = vpop.permute.xlu0 %2867
    %v2874 = vsel %vm167, %v2009, 0
    %v2877 = vsel %vm167, %v2010, 0
    %2879 = vmatpush.msra.mxu0 0.0
    %2880 = vmatpush.msra.mxu0 0.0
    %2881 = vmatpush.msra.mxu0 0.0
    %2882 = vmatpush.msra.mxu0 0.0
    %2883 = vmatpush.msra.mxu0 0.0
    %2884 = vmatpush.msra.mxu0 0.0
    %2885 = vmatpush.msra.mxu0 0.0
    %2886 = vmatpush.msra.mxu0 0.0
    %2887 = vmatpush.msra.mxu0 0.0
    %2888 = vmatpush.msra.mxu0 0.0
    %2889 = vmatpush.msra.mxu0 0.0
    %2890 = vmatpush.msra.mxu0 0.0
    %2891 = vmatpush.msra.mxu0 %v2868
    %2892 = vmatpush.msra.mxu0 %v2866
    %2893 = vmatpush.msra.mxu0 %v2864
    %2894 = vmatpush.msra.mxu0 %v2862
    %2895 = vmatmul.f32.gmra.mxu0 %v2874
    %v2896 = vpop.f32.mrf.mxu0
    %v2897 = vadd.f32 %v2856, %v2896
    %2898 = vmatmul.f32.gmra.mxu0 %v2877
    %v2899 = vpop.f32.mrf.mxu0
    %v2900 = vadd.f32 %v2856, %v2899
    %2901 = vdwg.mxu0
    %v2902 = vadd.f32 %v2897, %v2842
    %v2903 = vadd.f32 %v2900, %v2843
    %v2904 = vsel %vm167, %v2842, 0.0
    %2905 = vadd.xlane.f32.xlu0 %v2904
    %v2906 = vpop.xlane.xlu0 %2905
    %v2907 = vsel %vm167, %v2843, 0.0
    %2908 = vadd.xlane.f32.xlu0 %v2907
    %v2909 = vpop.xlane.xlu0 %2908
    %v2910 = vmul.f32 %v2906, %v207
    %v2911 = vmul.f32 %v2909, %v207
    %v2912 = vsub.f32 %v2842, %v2910
    %v2913 = vsub.f32 %v2843, %v2911
    %v2914 = vmul.f32 %v2912, %v2912
    %v2915 = vmul.f32 %v2913, %v2913
    %v2916 = vsel %vm167, %v2914, 0.0
    %2917 = vadd.xlane.f32.xlu0 %v2916
    %v2918 = vpop.xlane.xlu0 %2917
    %v2919 = vsel %vm167, %v2915, 0.0
    %2920 = vadd.xlane.f32.xlu0 %v2919
    %v2921 = vpop.xlane.xlu0 %2920
    %v2922 = vmul.f32 %v2918, %v207
    %v2923 = vmul.f32 %v2921, %v207
    %v2924 = vadd.f32 %v2922, 1e-05
    %v2925 = vadd.f32 %v2923, 1e-05
    %v2926 = vrsqrt.pop %v2924
    %v2927 = vmul.f32 %v2926, %v2924
    %v2928 = vmul.f32 %v2927, %v2926
    %v2929 = vmul.f32 0.5, %v2928
    %v2930 = vsub.f32 1.5, %v2929
    %v2931 = vmul.f32 %v2926, %v2930
    %vm2932 = vweird.f32 %v2924
    %vm2933 = vweird.f32 %v2926
    %vm2934 = vmor %vm2932, %vm2933
    %v2935 = vsel %vm2934, %v2926, %v2931
    %v2936 = vrsqrt.pop %v2925
    %v2937 = vmul.f32 %v2936, %v2925
    %v2938 = vmul.f32 %v2937, %v2936
    %v2939 = vmul.f32 0.5, %v2938
    %v2940 = vsub.f32 1.5, %v2939
    %v2941 = vmul.f32 %v2936, %v2940
    %vm2942 = vweird.f32 %v2925
    %vm2943 = vweird.f32 %v2936
    %vm2944 = vmor %vm2942, %vm2943
    %v2945 = vsel %vm2944, %v2936, %v2941
    %v2946 = vmul.f32 %v2912, %v2935
    %v2947 = vmul.f32 %v2913, %v2945
    %v2948 = vperm.slane %v2845, 1
    %v2949 = vmul.f32 %v2946, %v2948
    %v2950 = vmul.f32 %v2947, %v2948
    %v2951 = vperm.slane %v2845, 2
    %v2952 = vadd.f32 %v2949, %v2951
    %v2953 = vadd.f32 %v2950, %v2951
    %v2955 = vsel %vm167, %v2952, 0
    %v2958 = vsel %vm167, %v2953, 0
    %2960 = vmatpush.msra.mxu0 0.0
    %2961 = vmatpush.msra.mxu0 0.0
    %2962 = vmatpush.msra.mxu0 0.0
    %2963 = vmatpush.msra.mxu0 0.0
    %2964 = vmatpush.msra.mxu0 0.0
    %2965 = vmatpush.msra.mxu0 0.0
    %2966 = vmatpush.msra.mxu0 0.0
    %2967 = vmatpush.msra.mxu0 0.0
    %2968 = vmatpush.msra.mxu0 0.0
    %2969 = vmatpush.msra.mxu0 0.0
    %2970 = vmatpush.msra.mxu0 0.0
    %2971 = vmatpush.msra.mxu0 0.0
    %2972 = vmatpush.msra.mxu0 %v2851
    %2973 = vmatpush.msra.mxu0 %v2850
    %2974 = vmatpush.msra.mxu0 %v2849
    %2975 = vmatpush.msra.mxu0 %v2848
    %2976 = vmatmul.f32.gmra.mxu0 %v2955
    %v2977 = vpop.f32.mrf.mxu0
    %v2978 = vadd.f32 0.0, %v2977
    %2979 = vmatmul.f32.gmra.mxu0 %v2958
    %v2980 = vpop.f32.mrf.mxu0
    %v2981 = vadd.f32 0.0, %v2980
    %2982 = vdwg.mxu0
    %v2983 = vperm.slane %v2846, 0
    %v2984 = vadd.f32 %v2978, %v2983
    %v2985 = vadd.f32 %v2981, %v2983
    %v2986 = vmul.f32 %v2984, 0.35355338
    %v2987 = vmul.f32 %v2985, 0.35355338
    %v2988 = vperm.slane %v2846, 1
    %2990 = vrot.lane.b32.xlu0 %v2988, 32
    %v2991 = vpop.permute.xlu0 %2990
    %v2993 = vadd.f32 %v2978, %v2991
    %v2994 = vadd.f32 %v2981, %v2991
    %v2995 = vperm.slane %v2846, 2
    %2997 = vrot.lane.b32.xlu0 %v2995, 64
    %v2998 = vpop.permute.xlu0 %2997
    %v3000 = vadd.f32 %v2978, %v2998
    %v3001 = vadd.f32 %v2981, %v2998
    %3004 = vrot.lane.b32.xlu0 %v2993, 96
    %v3005 = vpop.permute.xlu0 %3004
    %3006 = vrot.lane.b32.xlu0 %v2994, 96
    %v3007 = vpop.permute.xlu0 %3006
    %v3009 = vsel %vm306, %v2986, 0
    %v3012 = vsel %vm306, %v2987, 0
    %v3014 = vsel %vm306, %v3005, 0
    %v3016 = vsel %vm306, %v3007, 0
    %3018 = vmatpush.xpose.msra.mxu0 0.0
    %3019 = vmatpush.xpose.msra.mxu0 0.0
    %3020 = vmatpush.xpose.msra.mxu0 0.0
    %3021 = vmatpush.xpose.msra.mxu0 0.0
    %3022 = vmatpush.xpose.msra.mxu0 0.0
    %3023 = vmatpush.xpose.msra.mxu0 0.0
    %3024 = vmatpush.xpose.msra.mxu0 0.0
    %3025 = vmatpush.xpose.msra.mxu0 0.0
    %3026 = vmatpush.xpose.msra.mxu0 0.0
    %3027 = vmatpush.xpose.msra.mxu0 0.0
    %3028 = vmatpush.xpose.msra.mxu0 0.0
    %3029 = vmatpush.xpose.msra.mxu0 0.0
    %3030 = vmatpush.xpose.msra.mxu0 0.0
    %3031 = vmatpush.xpose.msra.mxu0 0.0
    %3032 = vmatpush.xpose.msra.mxu0 %v3016
    %3033 = vmatpush.xpose.msra.mxu0 %v3014
    %3034 = vmatmul.f32.gmra.mxu0 %v3009
    %v3035 = vpop.f32.mrf.mxu0
    %v3036 = vadd.f32 %v52, %v3035
    %3037 = vmatmul.f32.gmra.mxu0 %v3012
    %v3038 = vpop.f32.mrf.mxu0
    %v3039 = vadd.f32 %v53, %v3038
    %3040 = vdwg.mxu0
    %v3041 = vsel %vm340, %v3036, -inf
    %3042 = vmax.xlane.f32.xlu0 %v3041
    %v3043 = vpop.xlane.xlu0 %3042
    %v3044 = vsel %vm340, %v3039, -inf
    %3045 = vmax.xlane.f32.xlu0 %v3044
    %v3046 = vpop.xlane.xlu0 %3045
    %v3047 = vsub.f32 %v3036, %v3043
    %v3048 = vsub.f32 %v3039, %v3046
    %v3049 = vmul.f32 %v3047, 1.442695
    %v3050 = vpow.pop %v3049
    %v3051 = vmul.f32 %v3048, 1.442695
    %v3052 = vpow.pop %v3051
    %3055 = vrot.lane.b32.xlu0 %v3000, 64
    %v3056 = vpop.permute.xlu0 %3055
    %3057 = vrot.lane.b32.xlu0 %v3001, 64
    %v3058 = vpop.permute.xlu0 %3057
    %v3062 = vsel %vm340, %v3050, 0
    %v3065 = vsel %vm340, %v3052, 0
    %3067 = vmatpush.msra.mxu0 0.0
    %3068 = vmatpush.msra.mxu0 0.0
    %3069 = vmatpush.msra.mxu0 0.0
    %3070 = vmatpush.msra.mxu0 0.0
    %3071 = vmatpush.msra.mxu0 0.0
    %3072 = vmatpush.msra.mxu0 0.0
    %3073 = vmatpush.msra.mxu0 0.0
    %3074 = vmatpush.msra.mxu0 0.0
    %3075 = vmatpush.msra.mxu0 0.0
    %3076 = vmatpush.msra.mxu0 0.0
    %3077 = vmatpush.msra.mxu0 0.0
    %3078 = vmatpush.msra.mxu0 0.0
    %3079 = vmatpush.msra.mxu0 0.0
    %3080 = vmatpush.msra.mxu0 0.0
    %3081 = vmatpush.msra.mxu0 %v3058
    %3082 = vmatpush.msra.mxu0 %v3056
    %3083 = vmatmul.f32.gmra.mxu0 %v3062
    %v3084 = vpop.f32.mrf.mxu0
    %v3085 = vadd.f32 0.0, %v3084
    %3086 = vmatmul.f32.gmra.mxu0 %v3065
    %v3087 = vpop.f32.mrf.mxu0
    %v3088 = vadd.f32 0.0, %v3087
    %3089 = vdwg.mxu0
    %v3090 = vsel %vm340, %v3050, 0.0
    %3091 = vadd.xlane.f32.xlu0 %v3090
    %v3092 = vpop.xlane.xlu0 %3091
    %v3093 = vsel %vm340, %v3052, 0.0
    %3094 = vadd.xlane.f32.xlu0 %v3093
    %v3095 = vpop.xlane.xlu0 %3094
    %v3096 = vrcp.pop %v3092
    %v3097 = vrcp.pop %v3095
    %v3098 = vmul.f32 %v3085, %v3096
    %v3099 = vmul.f32 %v3088, %v3097
    %3100 = vst.msk [vmem:[#allocation2] sm:$0xff] %vm306, %v3098
    %3101 = vst.msk [vmem:[#allocation2 + $0x8] sm:$0xff] %vm306, %v3099
    %3102 = vrot.lane.b32.xlu0 %v2986, 120
    %v3103 = vpop.permute.xlu0 %3102
    %3104 = vrot.lane.b32.xlu0 %v2987, 120
    %v3105 = vpop.permute.xlu0 %3104
    %3106 = vrot.lane.b32.xlu0 %v2993, 88
    %v3107 = vpop.permute.xlu0 %3106
    %3108 = vrot.lane.b32.xlu0 %v2994, 88
    %v3109 = vpop.permute.xlu0 %3108
    %v3110 = vsel %vm306, %v3103, 0
    %v3112 = vsel %vm306, %v3105, 0
    %v3114 = vsel %vm306, %v3107, 0
    %v3116 = vsel %vm306, %v3109, 0
    %3118 = vmatpush.xpose.msra.mxu0 0.0
    %3119 = vmatpush.xpose.msra.mxu0 0.0
    %3120 = vmatpush.xpose.msra.mxu0 0.0
    %3121 = vmatpush.xpose.msra.mxu0 0.0
    %3122 = vmatpush.xpose.msra.mxu0 0.0
    %3123 = vmatpush.xpose.msra.mxu0 0.0
    %3124 = vmatpush.xpose.msra.mxu0 0.0
    %3125 = vmatpush.xpose.msra.mxu0 0.0
    %3126 = vmatpush.xpose.msra.mxu0 0.0
    %3127 = vmatpush.xpose.msra.mxu0 0.0
    %3128 = vmatpush.xpose.msra.mxu0 0.0
    %3129 = vmatpush.xpose.msra.mxu0 0.0
    %3130 = vmatpush.xpose.msra.mxu0 0.0
    %3131 = vmatpush.xpose.msra.mxu0 0.0
    %3132 = vmatpush.xpose.msra.mxu0 %v3116
    %3133 = vmatpush.xpose.msra.mxu0 %v3114
    %3134 = vmatmul.f32.gmra.mxu0 %v3110
    %v3135 = vpop.f32.mrf.mxu0
    %v3136 = vadd.f32 %v52, %v3135
    %3137 = vmatmul.f32.gmra.mxu0 %v3112
    %v3138 = vpop.f32.mrf.mxu0
    %v3139 = vadd.f32 %v53, %v3138
    %3140 = vdwg.mxu0
    %v3141 = vsel %vm340, %v3136, -inf
    %3142 = vmax.xlane.f32.xlu0 %v3141
    %v3143 = vpop.xlane.xlu0 %3142
    %v3144 = vsel %vm340, %v3139, -inf
    %3145 = vmax.xlane.f32.xlu0 %v3144
    %v3146 = vpop.xlane.xlu0 %3145
    %v3147 = vsub.f32 %v3136, %v3143
    %v3148 = vsub.f32 %v3139, %v3146
    %v3149 = vmul.f32 %v3147, 1.442695
    %v3150 = vpow.pop %v3149
    %v3151 = vmul.f32 %v3148, 1.442695
    %v3152 = vpow.pop %v3151
    %3153 = vrot.lane.b32.xlu0 %v3000, 56
    %v3154 = vpop.permute.xlu0 %3153
    %3155 = vrot.lane.b32.xlu0 %v3001, 56
    %v3156 = vpop.permute.xlu0 %3155
    %v3160 = vsel %vm340, %v3150, 0
    %v3163 = vsel %vm340, %v3152, 0
    %3165 = vmatpush.msra.mxu0 0.0
    %3166 = vmatpush.msra.mxu0 0.0
    %3167 = vmatpush.msra.mxu0 0.0
    %3168 = vmatpush.msra.mxu0 0.0
    %3169 = vmatpush.msra.mxu0 0.0
    %3170 = vmatpush.msra.mxu0 0.0
    %3171 = vmatpush.msra.mxu0 0.0
    %3172 = vmatpush.msra.mxu0 0.0
    %3173 = vmatpush.msra.mxu0 0.0
    %3174 = vmatpush.msra.mxu0 0.0
    %3175 = vmatpush.msra.mxu0 0.0
    %3176 = vmatpush.msra.mxu0 0.0
    %3177 = vmatpush.msra.mxu0 0.0
    %3178 = vmatpush.msra.mxu0 0.0
    %3179 = vmatpush.msra.mxu0 %v3156
    %3180 = vmatpush.msra.mxu0 %v3154
    %3181 = vmatmul.f32.gmra.mxu0 %v3160
    %v3182 = vpop.f32.mrf.mxu0
    %v3183 = vadd.f32 0.0, %v3182
    %3184 = vmatmul.f32.gmra.mxu0 %v3163
    %v3185 = vpop.f32.mrf.mxu0
    %v3186 = vadd.f32 0.0, %v3185
    %3187 = vdwg.mxu0
    %v3188 = vsel %vm340, %v3150, 0.0
    %3189 = vadd.xlane.f32.xlu0 %v3188
    %v3190 = vpop.xlane.xlu0 %3189
    %v3191 = vsel %vm340, %v3152, 0.0
    %3192 = vadd.xlane.f32.xlu0 %v3191
    %v3193 = vpop.xlane.xlu0 %3192
    %v3194 = vrcp.pop %v3190
    %v3195 = vrcp.pop %v3193
    %v3196 = vmul.f32 %v3183, %v3194
    %v3197 = vmul.f32 %v3186, %v3195
    %3200 = vrot.lane.b32.xlu0 %v3196, 8
    %v3201 = vpop.permute.xlu0 %3200
    %3202 = vrot.lane.b32.xlu0 %v3197, 8
    %v3203 = vpop.permute.xlu0 %3202
    %3206 = vst.msk [vmem:[#allocation2] sm:$0xff] %vm506, %v3201
    %3207 = vst.msk [vmem:[#allocation2 + $0x8] sm:$0xff] %vm506, %v3203
    %3208 = vrot.lane.b32.xlu0 %v2986, 112
    %v3209 = vpop.permute.xlu0 %3208
    %3210 = vrot.lane.b32.xlu0 %v2987, 112
    %v3211 = vpop.permute.xlu0 %3210
    %3212 = vrot.lane.b32.xlu0 %v2993, 80
    %v3213 = vpop.permute.xlu0 %3212
    %3214 = vrot.lane.b32.xlu0 %v2994, 80
    %v3215 = vpop.permute.xlu0 %3214
    %v3216 = vsel %vm306, %v3209, 0
    %v3218 = vsel %vm306, %v3211, 0
    %v3220 = vsel %vm306, %v3213, 0
    %v3222 = vsel %vm306, %v3215, 0
    %3224 = vmatpush.xpose.msra.mxu0 0.0
    %3225 = vmatpush.xpose.msra.mxu0 0.0
    %3226 = vmatpush.xpose.msra.mxu0 0.0
    %3227 = vmatpush.xpose.msra.mxu0 0.0
    %3228 = vmatpush.xpose.msra.mxu0 0.0
    %3229 = vmatpush.xpose.msra.mxu0 0.0
    %3230 = vmatpush.xpose.msra.mxu0 0.0
    %3231 = vmatpush.xpose.msra.mxu0 0.0
    %3232 = vmatpush.xpose.msra.mxu0 0.0
    %3233 = vmatpush.xpose.msra.mxu0 0.0
    %3234 = vmatpush.xpose.msra.mxu0 0.0
    %3235 = vmatpush.xpose.msra.mxu0 0.0
    %3236 = vmatpush.xpose.msra.mxu0 0.0
    %3237 = vmatpush.xpose.msra.mxu0 0.0
    %3238 = vmatpush.xpose.msra.mxu0 %v3222
    %3239 = vmatpush.xpose.msra.mxu0 %v3220
    %3240 = vmatmul.f32.gmra.mxu0 %v3216
    %v3241 = vpop.f32.mrf.mxu0
    %v3242 = vadd.f32 %v52, %v3241
    %3243 = vmatmul.f32.gmra.mxu0 %v3218
    %v3244 = vpop.f32.mrf.mxu0
    %v3245 = vadd.f32 %v53, %v3244
    %3246 = vdwg.mxu0
    %v3247 = vsel %vm340, %v3242, -inf
    %3248 = vmax.xlane.f32.xlu0 %v3247
    %v3249 = vpop.xlane.xlu0 %3248
    %v3250 = vsel %vm340, %v3245, -inf
    %3251 = vmax.xlane.f32.xlu0 %v3250
    %v3252 = vpop.xlane.xlu0 %3251
    %v3253 = vsub.f32 %v3242, %v3249
    %v3254 = vsub.f32 %v3245, %v3252
    %v3255 = vmul.f32 %v3253, 1.442695
    %v3256 = vpow.pop %v3255
    %v3257 = vmul.f32 %v3254, 1.442695
    %v3258 = vpow.pop %v3257
    %3259 = vrot.lane.b32.xlu0 %v3000, 48
    %v3260 = vpop.permute.xlu0 %3259
    %3261 = vrot.lane.b32.xlu0 %v3001, 48
    %v3262 = vpop.permute.xlu0 %3261
    %v3266 = vsel %vm340, %v3256, 0
    %v3269 = vsel %vm340, %v3258, 0
    %3271 = vmatpush.msra.mxu0 0.0
    %3272 = vmatpush.msra.mxu0 0.0
    %3273 = vmatpush.msra.mxu0 0.0
    %3274 = vmatpush.msra.mxu0 0.0
    %3275 = vmatpush.msra.mxu0 0.0
    %3276 = vmatpush.msra.mxu0 0.0
    %3277 = vmatpush.msra.mxu0 0.0
    %3278 = vmatpush.msra.mxu0 0.0
    %3279 = vmatpush.msra.mxu0 0.0
    %3280 = vmatpush.msra.mxu0 0.0
    %3281 = vmatpush.msra.mxu0 0.0
    %3282 = vmatpush.msra.mxu0 0.0
    %3283 = vmatpush.msra.mxu0 0.0
    %3284 = vmatpush.msra.mxu0 0.0
    %3285 = vmatpush.msra.mxu0 %v3262
    %3286 = vmatpush.msra.mxu0 %v3260
    %3287 = vmatmul.f32.gmra.mxu0 %v3266
    %v3288 = vpop.f32.mrf.mxu0
    %v3289 = vadd.f32 0.0, %v3288
    %3290 = vmatmul.f32.gmra.mxu0 %v3269
    %v3291 = vpop.f32.mrf.mxu0
    %v3292 = vadd.f32 0.0, %v3291
    %3293 = vdwg.mxu0
    %v3294 = vsel %vm340, %v3256, 0.0
    %3295 = vadd.xlane.f32.xlu0 %v3294
    %v3296 = vpop.xlane.xlu0 %3295
    %v3297 = vsel %vm340, %v3258, 0.0
    %3298 = vadd.xlane.f32.xlu0 %v3297
    %v3299 = vpop.xlane.xlu0 %3298
    %v3300 = vrcp.pop %v3296
    %v3301 = vrcp.pop %v3299
    %v3302 = vmul.f32 %v3289, %v3300
    %v3303 = vmul.f32 %v3292, %v3301
    %3306 = vrot.lane.b32.xlu0 %v3302, 16
    %v3307 = vpop.permute.xlu0 %3306
    %3308 = vrot.lane.b32.xlu0 %v3303, 16
    %v3309 = vpop.permute.xlu0 %3308
    %3312 = vst.msk [vmem:[#allocation2] sm:$0xff] %vm613, %v3307
    %3313 = vst.msk [vmem:[#allocation2 + $0x8] sm:$0xff] %vm613, %v3309
    %3314 = vrot.lane.b32.xlu0 %v2986, 104
    %v3315 = vpop.permute.xlu0 %3314
    %3316 = vrot.lane.b32.xlu0 %v2987, 104
    %v3317 = vpop.permute.xlu0 %3316
    %3318 = vrot.lane.b32.xlu0 %v2993, 72
    %v3319 = vpop.permute.xlu0 %3318
    %3320 = vrot.lane.b32.xlu0 %v2994, 72
    %v3321 = vpop.permute.xlu0 %3320
    %v3322 = vsel %vm306, %v3315, 0
    %v3324 = vsel %vm306, %v3317, 0
    %v3326 = vsel %vm306, %v3319, 0
    %v3328 = vsel %vm306, %v3321, 0
    %3330 = vmatpush.xpose.msra.mxu0 0.0
    %3331 = vmatpush.xpose.msra.mxu0 0.0
    %3332 = vmatpush.xpose.msra.mxu0 0.0
    %3333 = vmatpush.xpose.msra.mxu0 0.0
    %3334 = vmatpush.xpose.msra.mxu0 0.0
    %3335 = vmatpush.xpose.msra.mxu0 0.0
    %3336 = vmatpush.xpose.msra.mxu0 0.0
    %3337 = vmatpush.xpose.msra.mxu0 0.0
    %3338 = vmatpush.xpose.msra.mxu0 0.0
    %3339 = vmatpush.xpose.msra.mxu0 0.0
    %3340 = vmatpush.xpose.msra.mxu0 0.0
    %3341 = vmatpush.xpose.msra.mxu0 0.0
    %3342 = vmatpush.xpose.msra.mxu0 0.0
    %3343 = vmatpush.xpose.msra.mxu0 0.0
    %3344 = vmatpush.xpose.msra.mxu0 %v3328
    %3345 = vmatpush.xpose.msra.mxu0 %v3326
    %3346 = vmatmul.f32.gmra.mxu0 %v3322
    %v3347 = vpop.f32.mrf.mxu0
    %v3348 = vadd.f32 %v52, %v3347
    %3349 = vmatmul.f32.gmra.mxu0 %v3324
    %v3350 = vpop.f32.mrf.mxu0
    %v3351 = vadd.f32 %v53, %v3350
    %3352 = vdwg.mxu0
    %v3353 = vsel %vm340, %v3348, -inf
    %3354 = vmax.xlane.f32.xlu0 %v3353
    %v3355 = vpop.xlane.xlu0 %3354
    %v3356 = vsel %vm340, %v3351, -inf
    %3357 = vmax.xlane.f32.xlu0 %v3356
    %v3358 = vpop.xlane.xlu0 %3357
    %v3359 = vsub.f32 %v3348, %v3355
    %v3360 = vsub.f32 %v3351, %v3358
    %v3361 = vmul.f32 %v3359, 1.442695
    %v3362 = vpow.pop %v3361
    %v3363 = vmul.f32 %v3360, 1.442695
    %v3364 = vpow.pop %v3363
    %3365 = vrot.lane.b32.xlu0 %v3000, 40
    %v3366 = vpop.permute.xlu0 %3365
    %3367 = vrot.lane.b32.xlu0 %v3001, 40
    %v3368 = vpop.permute.xlu0 %3367
    %v3372 = vsel %vm340, %v3362, 0
    %v3375 = vsel %vm340, %v3364, 0
    %3377 = vmatpush.msra.mxu0 0.0
    %3378 = vmatpush.msra.mxu0 0.0
    %3379 = vmatpush.msra.mxu0 0.0
    %3380 = vmatpush.msra.mxu0 0.0
    %3381 = vmatpush.msra.mxu0 0.0
    %3382 = vmatpush.msra.mxu0 0.0
    %3383 = vmatpush.msra.mxu0 0.0
    %3384 = vmatpush.msra.mxu0 0.0
    %3385 = vmatpush.msra.mxu0 0.0
    %3386 = vmatpush.msra.mxu0 0.0
    %3387 = vmatpush.msra.mxu0 0.0
    %3388 = vmatpush.msra.mxu0 0.0
    %3389 = vmatpush.msra.mxu0 0.0
    %3390 = vmatpush.msra.mxu0 0.0
    %3391 = vmatpush.msra.mxu0 %v3368
    %3392 = vmatpush.msra.mxu0 %v3366
    %3393 = vmatmul.f32.gmra.mxu0 %v3372
    %v3394 = vpop.f32.mrf.mxu0
    %v3395 = vadd.f32 0.0, %v3394
    %3396 = vmatmul.f32.gmra.mxu0 %v3375
    %v3397 = vpop.f32.mrf.mxu0
    %v3398 = vadd.f32 0.0, %v3397
    %3399 = vdwg.mxu0
    %v3400 = vsel %vm340, %v3362, 0.0
    %3401 = vadd.xlane.f32.xlu0 %v3400
    %v3402 = vpop.xlane.xlu0 %3401
    %v3403 = vsel %vm340, %v3364, 0.0
    %3404 = vadd.xlane.f32.xlu0 %v3403
    %v3405 = vpop.xlane.xlu0 %3404
    %v3406 = vrcp.pop %v3402
    %v3407 = vrcp.pop %v3405
    %v3408 = vmul.f32 %v3395, %v3406
    %v3409 = vmul.f32 %v3398, %v3407
    %3412 = vrot.lane.b32.xlu0 %v3408, 24
    %v3413 = vpop.permute.xlu0 %3412
    %3414 = vrot.lane.b32.xlu0 %v3409, 24
    %v3415 = vpop.permute.xlu0 %3414
    %3418 = vst.msk [vmem:[#allocation2] sm:$0xff] %vm720, %v3413
    %3419 = vst.msk [vmem:[#allocation2 + $0x8] sm:$0xff] %vm720, %v3415
    %v3420 = vld [vmem:[#allocation2] sm:$0xff]
    %v3421 = vld [vmem:[#allocation2 + $0x8] sm:$0xff]
    %v3423 = vsel %vm167, %v3420, 0
    %v3426 = vsel %vm167, %v3421, 0
    %3428 = vmatpush.msra.mxu0 0.0
    %3429 = vmatpush.msra.mxu0 0.0
    %3430 = vmatpush.msra.mxu0 0.0
    %3431 = vmatpush.msra.mxu0 0.0
    %3432 = vmatpush.msra.mxu0 0.0
    %3433 = vmatpush.msra.mxu0 0.0
    %3434 = vmatpush.msra.mxu0 0.0
    %3435 = vmatpush.msra.mxu0 0.0
    %3436 = vmatpush.msra.mxu0 0.0
    %3437 = vmatpush.msra.mxu0 0.0
    %3438 = vmatpush.msra.mxu0 0.0
    %3439 = vmatpush.msra.mxu0 0.0
    %3440 = vmatpush.msra.mxu0 %v2855
    %3441 = vmatpush.msra.mxu0 %v2854
    %3442 = vmatpush.msra.mxu0 %v2853
    %3443 = vmatpush.msra.mxu0 %v2852
    %3444 = vmatmul.f32.gmra.mxu0 %v3423
    %v3445 = vpop.f32.mrf.mxu0
    %v3446 = vadd.f32 0.0, %v3445
    %3447 = vmatmul.f32.gmra.mxu0 %v3426
    %v3448 = vpop.f32.mrf.mxu0
    %v3449 = vadd.f32 0.0, %v3448
    %3450 = vdwg.mxu0
    %v3451 = vadd.f32 %v2842, %v3446
    %v3452 = vadd.f32 %v2843, %v3449
    %v3453 = vperm.slane %v2845, 3
    %v3454 = vadd.f32 %v3451, %v3453
    %v3455 = vadd.f32 %v3452, %v3453
    %v3456 = vrot.slane %v3454, 7
    %v3457 = vrot.slane %v3455, 7
    %v3458 = vsel %vm763, %v3456, %v3457
    %v3459 = vsel %vm763, %v3457, %v3456
    %v3460 = vmul.f32 %v3459, %v768
    %v3461 = vmul.f32 %v3458, %v772
    %v3462 = vrot.slane %v3454, 1
    %v3463 = vrot.slane %v3455, 1
    %v3464 = vsel %vm778, %v3462, %v3463
    %v3465 = vsel %vm778, %v3463, %v3462
    %v3466 = vmul.f32 %v3464, %v783
    %v3467 = vmul.f32 %v3465, %v787
    %v3468 = vperm.slane %v2846, 3
    %v3469 = vmul.f32 %v3460, %v3468
    %v3470 = vmul.f32 %v3461, %v3468
    %v3471 = vperm.slane %v2846, 4
    %v3472 = vmul.f32 %v3454, %v3471
    %v3473 = vmul.f32 %v3455, %v3471
    %v3474 = vadd.f32 %v3469, %v3472
    %v3475 = vadd.f32 %v3470, %v3473
    %v3476 = vperm.slane %v2846, 5
    %v3477 = vmul.f32 %v3466, %v3476
    %v3478 = vmul.f32 %v3467, %v3476
    %v3479 = vadd.f32 %v3474, %v3477
    %v3480 = vadd.f32 %v3475, %v3478
    %v3481 = vperm.slane %v2845, 4
    %v3482 = vadd.f32 %v3479, %v3481
    %v3483 = vadd.f32 %v3480, %v3481
    %v3484 = vxor.u32 %v3482, 2147483648
    %v3485 = vxor.u32 %v3483, 2147483648
    %v3486 = vmul.f32 %v3484, 1.442695
    %v3487 = vpow.pop %v3486
    %v3488 = vmul.f32 %v3485, 1.442695
    %v3489 = vpow.pop %v3488
    %v3490 = vadd.f32 %v3487, 1.0
    %v3491 = vadd.f32 %v3489, 1.0
    %v3492 = vrcp.pop %v3490
    %v3493 = vmul.f32 %v3490, %v3492
    %v3494 = vsub.f32 1.0, %v3493
    %v3495 = vmul.f32 %v3492, %v3494
    %v3496 = vadd.f32 %v3492, %v3495
    %vm3497 = vweird.f32 %v3490
    %vm3498 = vweird.f32 %v3492
    %vm3499 = vmor %vm3497, %vm3498
    %v3500 = vsel %vm3499, %v3492, %v3496
    %v3501 = vand.u32 2147483647, %v3490
    %vm3502 = vcmp.eq.f32.partialorder %v3501, 8.507059e+37
    %v3503 = vand.u32 %v3490, 2147483648
    %v3504 = vor.u32 1.1754944e-38, %v3503
    %v3505 = vsel %vm3502, %v3504, %v3500
    %v3506 = vmul.f32 1.0, %v3505
    %v3507 = vrcp.pop %v3491
    %v3508 = vmul.f32 %v3491, %v3507
    %v3509 = vsub.f32 1.0, %v3508
    %v3510 = vmul.f32 %v3507, %v3509
    %v3511 = vadd.f32 %v3507, %v3510
    %vm3512 = vweird.f32 %v3491
    %vm3513 = vweird.f32 %v3507
    %vm3514 = vmor %vm3512, %vm3513
    %v3515 = vsel %vm3514, %v3507, %v3511
    %v3516 = vand.u32 2147483647, %v3491
    %vm3517 = vcmp.eq.f32.partialorder %v3516, 8.507059e+37
    %v3518 = vand.u32 %v3491, 2147483648
    %v3519 = vor.u32 1.1754944e-38, %v3518
    %v3520 = vsel %vm3517, %v3519, %v3515
    %v3521 = vmul.f32 1.0, %v3520
    %v3522 = vmul.f32 %v3482, %v3506
    %v3523 = vmul.f32 %v3483, %v3521
    %v3524 = vadd.f32 %v3454, %v3522
    %v3525 = vadd.f32 %v3455, %v3523
    %v3526 = vadd.f32 %v3524, %v2902
    %v3527 = vadd.f32 %v3525, %v2903
    %v3528 = vsel %vm167, %v3526, 0.0
    %3529 = vadd.xlane.f32.xlu0 %v3528
    %v3530 = vpop.xlane.xlu0 %3529
    %v3531 = vsel %vm167, %v3527, 0.0
    %3532 = vadd.xlane.f32.xlu0 %v3531
    %v3533 = vpop.xlane.xlu0 %3532
    %v3534 = vmul.f32 %v3530, %v207
    %v3535 = vmul.f32 %v3533, %v207
    %v3536 = vsub.f32 %v3526, %v3534
    %v3537 = vsub.f32 %v3527, %v3535
    %v3538 = vmul.f32 %v3536, %v3536
    %v3539 = vmul.f32 %v3537, %v3537
    %v3540 = vsel %vm167, %v3538, 0.0
    %3541 = vadd.xlane.f32.xlu0 %v3540
    %v3542 = vpop.xlane.xlu0 %3541
    %v3543 = vsel %vm167, %v3539, 0.0
    %3544 = vadd.xlane.f32.xlu0 %v3543
    %v3545 = vpop.xlane.xlu0 %3544
    %v3546 = vmul.f32 %v3542, %v207
    %v3547 = vmul.f32 %v3545, %v207
    %v3548 = vadd.f32 %v3546, 1e-05
    %v3549 = vadd.f32 %v3547, 1e-05
    %v3550 = vrsqrt.pop %v3548
    %v3551 = vmul.f32 %v3550, %v3548
    %v3552 = vmul.f32 %v3551, %v3550
    %v3553 = vmul.f32 0.5, %v3552
    %v3554 = vsub.f32 1.5, %v3553
    %v3555 = vmul.f32 %v3550, %v3554
    %vm3556 = vweird.f32 %v3548
    %vm3557 = vweird.f32 %v3550
    %vm3558 = vmor %vm3556, %vm3557
    %v3559 = vsel %vm3558, %v3550, %v3555
    %v3560 = vrsqrt.pop %v3549
    %v3561 = vmul.f32 %v3560, %v3549
    %v3562 = vmul.f32 %v3561, %v3560
    %v3563 = vmul.f32 0.5, %v3562
    %v3564 = vsub.f32 1.5, %v3563
    %v3565 = vmul.f32 %v3560, %v3564
    %vm3566 = vweird.f32 %v3549
    %vm3567 = vweird.f32 %v3560
    %vm3568 = vmor %vm3566, %vm3567
    %v3569 = vsel %vm3568, %v3560, %v3565
    %v3570 = vmul.f32 %v3536, %v3559
    %v3571 = vmul.f32 %v3537, %v3569
    %v3572 = vperm.slane %v2845, 5
    %v3573 = vmul.f32 %v3570, %v3572
    %v3574 = vmul.f32 %v3571, %v3572
    %v3575 = vperm.slane %v2845, 6
    %v3576 = vadd.f32 %v3573, %v3575
    %v3577 = vadd.f32 %v3574, %v3575
    %s3578 = scalar_lea.vmem %s6, 120
    %v3579 = vld [vmem:[%s3578] sm:$0xff]
    %v3580 = vld [vmem:[%s3578 + $0x8] sm:$0xff]
    %v3581 = vld [vmem:[%s3578 + $0x10] sm:$0xff]
    %v3582 = vld [vmem:[%s3578 + $0x18] sm:$0xff]
    %v3583 = vld [vmem:[%s3578 + $0x20] sm:$0x1]
    %v3584 = vperm.slane %v3583, 0
    %v3586 = vsel %vm167, %v3576, 0
    %v3589 = vsel %vm167, %v3577, 0
    %3591 = vmatpush.msra.mxu0 0.0
    %3592 = vmatpush.msra.mxu0 0.0
    %3593 = vmatpush.msra.mxu0 0.0
    %3594 = vmatpush.msra.mxu0 0.0
    %3595 = vmatpush.msra.mxu0 0.0
    %3596 = vmatpush.msra.mxu0 0.0
    %3597 = vmatpush.msra.mxu0 0.0
    %3598 = vmatpush.msra.mxu0 0.0
    %3599 = vmatpush.msra.mxu0 0.0
    %3600 = vmatpush.msra.mxu0 0.0
    %3601 = vmatpush.msra.mxu0 0.0
    %3602 = vmatpush.msra.mxu0 0.0
    %3603 = vmatpush.msra.mxu0 %v3582
    %3604 = vmatpush.msra.mxu0 %v3581
    %3605 = vmatpush.msra.mxu0 %v3580
    %3606 = vmatpush.msra.mxu0 %v3579
    %3607 = vmatmul.f32.gmra.mxu0 %v3586
    %v3608 = vpop.f32.mrf.mxu0
    %v3609 = vadd.f32 %v3584, %v3608
    %3610 = vmatmul.f32.gmra.mxu0 %v3589
    %v3611 = vpop.f32.mrf.mxu0
    %v3612 = vadd.f32 %v3584, %v3611
    %3613 = vdwg.mxu0
    %v3614 = vmul.f32 %v3609, 0.5
    %v3615 = vmul.f32 %v3612, 0.5
    %v3616 = vmul.f32 %v3609, 0.70710677
    %v3617 = vmul.f32 %v3612, 0.70710677
    %vm3618 = vcmp.ge.f32.partialorder %v3616, 0.0
    %vm3619 = vcmp.ge.f32.partialorder %v3617, 0.0
    %v3620 = vsel %vm3618, 1.0, -1.0
    %v3621 = vsel %vm3619, 1.0, -1.0
    %v3622 = vand.u32 2147483647, %v3616
    %v3623 = vand.u32 2147483647, %v3617
    %v3624 = vmul.f32 %v3622, 0.3275911
    %v3625 = vmul.f32 %v3623, 0.3275911
    %v3626 = vadd.f32 %v3624, 1.0
    %v3627 = vadd.f32 %v3625, 1.0
    %v3628 = vrcp.pop %v3626
    %v3629 = vmul.f32 %v3626, %v3628
    %v3630 = vsub.f32 1.0, %v3629
    %v3631 = vmul.f32 %v3628, %v3630
    %v3632 = vadd.f32 %v3628, %v3631
    %vm3633 = vweird.f32 %v3626
    %vm3634 = vweird.f32 %v3628
    %vm3635 = vmor %vm3633, %vm3634
    %v3636 = vsel %vm3635, %v3628, %v3632
    %v3637 = vand.u32 2147483647, %v3626
    %vm3638 = vcmp.eq.f32.partialorder %v3637, 8.507059e+37
    %v3639 = vand.u32 %v3626, 2147483648
    %v3640 = vor.u32 1.1754944e-38, %v3639
    %v3641 = vsel %vm3638, %v3640, %v3636
    %v3642 = vmul.f32 1.0, %v3641
    %v3643 = vrcp.pop %v3627
    %v3644 = vmul.f32 %v3627, %v3643
    %v3645 = vsub.f32 1.0, %v3644
    %v3646 = vmul.f32 %v3643, %v3645
    %v3647 = vadd.f32 %v3643, %v3646
    %vm3648 = vweird.f32 %v3627
    %vm3649 = vweird.f32 %v3643
    %vm3650 = vmor %vm3648, %vm3649
    %v3651 = vsel %vm3650, %v3643, %v3647
    %v3652 = vand.u32 2147483647, %v3627
    %vm3653 = vcmp.eq.f32.partialorder %v3652, 8.507059e+37
    %v3654 = vand.u32 %v3627, 2147483648
    %v3655 = vor.u32 1.1754944e-38, %v3654
    %v3656 = vsel %vm3653, %v3655, %v3651
    %v3657 = vmul.f32 1.0, %v3656
    %v3658 = vmul.f32 %v3642, 1.0614054
    %v3659 = vmul.f32 %v3657, 1.0614054
    %v3660 = vadd.f32 %v3658, -1.4531521
    %v3661 = vadd.f32 %v3659, -1.4531521
    %v3662 = vmul.f32 %v3660, %v3642
    %v3663 = vmul.f32 %v3661, %v3657
    %v3664 = vadd.f32 %v3662, 1.4214138
    %v3665 = vadd.f32 %v3663, 1.4214138
    %v3666 = vmul.f32 %v3664, %v3642
    %v3667 = vmul.f32 %v3665, %v3657
    %v3668 = vadd.f32 %v3666, -0.28449672
    %v3669 = vadd.f32 %v3667, -0.28449672
    %v3670 = vmul.f32 %v3668, %v3642
    %v3671 = vmul.f32 %v3669, %v3657
    %v3672 = vadd.f32 %v3670, 0.2548296
    %v3673 = vadd.f32 %v3671, 0.2548296
    %v3674 = vmul.f32 %v3672, %v3642
    %v3675 = vmul.f32 %v3673, %v3657
    %v3676 = vsub.f32 0.0, %v3622
    %v3677 = vsub.f32 0.0, %v3623
    %v3678 = vmul.f32 %v3676, %v3622
    %v3679 = vmul.f32 %v3677, %v3623
    %v3680 = vmul.f32 %v3678, 1.442695
    %v3681 = vpow.pop %v3680
    %v3682 = vmul.f32 %v3679, 1.442695
    %v3683 = vpow.pop %v3682
    %v3684 = vmul.f32 %v3674, %v3681
    %v3685 = vmul.f32 %v3675, %v3683
    %v3686 = vsub.f32 1.0, %v3684
    %v3687 = vsub.f32 1.0, %v3685
    %v3688 = vmul.f32 %v3620, %v3686
    %v3689 = vmul.f32 %v3621, %v3687
    %v3690 = vadd.f32 %v3688, 1.0
    %v3691 = vadd.f32 %v3689, 1.0
    %v3692 = vmul.f32 %v3614, %v3690
    %v3693 = vmul.f32 %v3615, %v3691
    %s3694 = scalar_lea.vmem %s7, 192
    %v3695 = vld [vmem:[%s3694] sm:$0xff]
    %v3696 = vld [vmem:[%s3694 + $0x8] sm:$0xff]
    %v3697 = vld [vmem:[%s3694 + $0x10] sm:$0xff]
    %v3698 = vld [vmem:[%s3694 + $0x18] sm:$0xff]
    %v3699 = vld [vmem:[%s3694 + $0x20] sm:$0xff]
    %v3700 = vld [vmem:[%s3694 + $0x28] sm:$0xff]
    %v3701 = vld [vmem:[%s3694 + $0x30] sm:$0xff]
    %v3702 = vld [vmem:[%s3694 + $0x38] sm:$0xff]
    %v3704 = vsel %vm84, %v3692, 0
    %v3707 = vsel %vm84, %v3693, 0
    %3709 = vmatpush.msra.mxu0 0.0
    %3710 = vmatpush.msra.mxu0 0.0
    %3711 = vmatpush.msra.mxu0 0.0
    %3712 = vmatpush.msra.mxu0 0.0
    %3713 = vmatpush.msra.mxu0 0.0
    %3714 = vmatpush.msra.mxu0 0.0
    %3715 = vmatpush.msra.mxu0 0.0
    %3716 = vmatpush.msra.mxu0 0.0
    %3717 = vmatpush.msra.mxu0 %v3702
    %3718 = vmatpush.msra.mxu0 %v3701
    %3719 = vmatpush.msra.mxu0 %v3700
    %3720 = vmatpush.msra.mxu0 %v3699
    %3721 = vmatpush.msra.mxu0 %v3698
    %3722 = vmatpush.msra.mxu0 %v3697
    %3723 = vmatpush.msra.mxu0 %v3696
    %3724 = vmatpush.msra.mxu0 %v3695
    %3725 = vmatmul.f32.gmra.mxu0 %v3704
    %v3726 = vpop.f32.mrf.mxu0
    %v3727 = vadd.f32 0.0, %v3726
    %3728 = vmatmul.f32.gmra.mxu0 %v3707
    %v3729 = vpop.f32.mrf.mxu0
    %v3730 = vadd.f32 0.0, %v3729
    %3731 = vdwg.mxu0
    %v3732 = vadd.f32 %v3526, %v3727
    %v3733 = vadd.f32 %v3527, %v3730
    %v3734 = vperm.slane %v2845, 7
    %v3735 = vadd.f32 %v3732, %v3734
    %v3736 = vadd.f32 %v3733, %v3734
    %s3737 = scalar_lea.vmem %s8, 64
    %v3738 = vld [vmem:[%s3737] sm:$0xff]
    %v3739 = vld [vmem:[%s3737 + $0x8] sm:$0x3f]
    %s3740 = scalar_lea.vmem %s5, 256
    %v3741 = vld [vmem:[%s3740] sm:$0xff]
    %v3742 = vld [vmem:[%s3740 + $0x10] sm:$0xff]
    %v3743 = vld [vmem:[%s3740 + $0x20] sm:$0xff]
    %v3744 = vld [vmem:[%s3740 + $0x30] sm:$0xff]
    %v3745 = vld [vmem:[%s3740 + $0x8] sm:$0xff]
    %v3746 = vld [vmem:[%s3740 + $0x18] sm:$0xff]
    %v3747 = vld [vmem:[%s3740 + $0x28] sm:$0xff]
    %v3748 = vld [vmem:[%s3740 + $0x38] sm:$0xff]
    %v3749 = vperm.slane %v3738, 0
    %3754 = vrot.lane.b32.xlu0 %v3741, 32
    %v3755 = vpop.permute.xlu0 %3754
    %3756 = vrot.lane.b32.xlu0 %v3742, 32
    %v3757 = vpop.permute.xlu0 %3756
    %3758 = vrot.lane.b32.xlu0 %v3743, 32
    %v3759 = vpop.permute.xlu0 %3758
    %3760 = vrot.lane.b32.xlu0 %v3744, 32
    %v3761 = vpop.permute.xlu0 %3760
    %v3767 = vsel %vm167, %v2902, 0
    %v3770 = vsel %vm167, %v2903, 0
    %3772 = vmatpush.msra.mxu0 0.0
    %3773 = vmatpush.msra.mxu0 0.0
    %3774 = vmatpush.msra.mxu0 0.0
    %3775 = vmatpush.msra.mxu0 0.0
    %3776 = vmatpush.msra.mxu0 0.0
    %3777 = vmatpush.msra.mxu0 0.0
    %3778 = vmatpush.msra.mxu0 0.0
    %3779 = vmatpush.msra.mxu0 0.0
    %3780 = vmatpush.msra.mxu0 0.0
    %3781 = vmatpush.msra.mxu0 0.0
    %3782 = vmatpush.msra.mxu0 0.0
    %3783 = vmatpush.msra.mxu0 0.0
    %3784 = vmatpush.msra.mxu0 %v3761
    %3785 = vmatpush.msra.mxu0 %v3759
    %3786 = vmatpush.msra.mxu0 %v3757
    %3787 = vmatpush.msra.mxu0 %v3755
    %3788 = vmatmul.f32.gmra.mxu0 %v3767
    %v3789 = vpop.f32.mrf.mxu0
    %v3790 = vadd.f32 %v3749, %v3789
    %3791 = vmatmul.f32.gmra.mxu0 %v3770
    %v3792 = vpop.f32.mrf.mxu0
    %v3793 = vadd.f32 %v3749, %v3792
    %3794 = vdwg.mxu0
    %v3795 = vadd.f32 %v3790, %v3735
    %v3796 = vadd.f32 %v3793, %v3736
    %v3797 = vsel %vm167, %v3735, 0.0
    %3798 = vadd.xlane.f32.xlu0 %v3797
    %v3799 = vpop.xlane.xlu0 %3798
    %v3800 = vsel %vm167, %v3736, 0.0
    %3801 = vadd.xlane.f32.xlu0 %v3800
    %v3802 = vpop.xlane.xlu0 %3801
    %v3803 = vmul.f32 %v3799, %v207
    %v3804 = vmul.f32 %v3802, %v207
    %v3805 = vsub.f32 %v3735, %v3803
    %v3806 = vsub.f32 %v3736, %v3804
    %v3807 = vmul.f32 %v3805, %v3805
    %v3808 = vmul.f32 %v3806, %v3806
    %v3809 = vsel %vm167, %v3807, 0.0
    %3810 = vadd.xlane.f32.xlu0 %v3809
    %v3811 = vpop.xlane.xlu0 %3810
    %v3812 = vsel %vm167, %v3808, 0.0
    %3813 = vadd.xlane.f32.xlu0 %v3812
    %v3814 = vpop.xlane.xlu0 %3813
    %v3815 = vmul.f32 %v3811, %v207
    %v3816 = vmul.f32 %v3814, %v207
    %v3817 = vadd.f32 %v3815, 1e-05
    %v3818 = vadd.f32 %v3816, 1e-05
    %v3819 = vrsqrt.pop %v3817
    %v3820 = vmul.f32 %v3819, %v3817
    %v3821 = vmul.f32 %v3820, %v3819
    %v3822 = vmul.f32 0.5, %v3821
    %v3823 = vsub.f32 1.5, %v3822
    %v3824 = vmul.f32 %v3819, %v3823
    %vm3825 = vweird.f32 %v3817
    %vm3826 = vweird.f32 %v3819
    %vm3827 = vmor %vm3825, %vm3826
    %v3828 = vsel %vm3827, %v3819, %v3824
    %v3829 = vrsqrt.pop %v3818
    %v3830 = vmul.f32 %v3829, %v3818
    %v3831 = vmul.f32 %v3830, %v3829
    %v3832 = vmul.f32 0.5, %v3831
    %v3833 = vsub.f32 1.5, %v3832
    %v3834 = vmul.f32 %v3829, %v3833
    %vm3835 = vweird.f32 %v3818
    %vm3836 = vweird.f32 %v3829
    %vm3837 = vmor %vm3835, %vm3836
    %v3838 = vsel %vm3837, %v3829, %v3834
    %v3839 = vmul.f32 %v3805, %v3828
    %v3840 = vmul.f32 %v3806, %v3838
    %v3841 = vperm.slane %v3738, 1
    %v3842 = vmul.f32 %v3839, %v3841
    %v3843 = vmul.f32 %v3840, %v3841
    %v3844 = vperm.slane %v3738, 2
    %v3845 = vadd.f32 %v3842, %v3844
    %v3846 = vadd.f32 %v3843, %v3844
    %v3848 = vsel %vm167, %v3845, 0
    %v3851 = vsel %vm167, %v3846, 0
    %3853 = vmatpush.msra.mxu0 0.0
    %3854 = vmatpush.msra.mxu0 0.0
    %3855 = vmatpush.msra.mxu0 0.0
    %3856 = vmatpush.msra.mxu0 0.0
    %3857 = vmatpush.msra.mxu0 0.0
    %3858 = vmatpush.msra.mxu0 0.0
    %3859 = vmatpush.msra.mxu0 0.0
    %3860 = vmatpush.msra.mxu0 0.0
    %3861 = vmatpush.msra.mxu0 0.0
    %3862 = vmatpush.msra.mxu0 0.0
    %3863 = vmatpush.msra.mxu0 0.0
    %3864 = vmatpush.msra.mxu0 0.0
    %3865 = vmatpush.msra.mxu0 %v3744
    %3866 = vmatpush.msra.mxu0 %v3743
    %3867 = vmatpush.msra.mxu0 %v3742
    %3868 = vmatpush.msra.mxu0 %v3741
    %3869 = vmatmul.f32.gmra.mxu0 %v3848
    %v3870 = vpop.f32.mrf.mxu0
    %v3871 = vadd.f32 0.0, %v3870
    %3872 = vmatmul.f32.gmra.mxu0 %v3851
    %v3873 = vpop.f32.mrf.mxu0
    %v3874 = vadd.f32 0.0, %v3873
    %3875 = vdwg.mxu0
    %v3876 = vperm.slane %v3739, 0
    %v3877 = vadd.f32 %v3871, %v3876
    %v3878 = vadd.f32 %v3874, %v3876
    %v3879 = vmul.f32 %v3877, 0.35355338
    %v3880 = vmul.f32 %v3878, 0.35355338
    %v3881 = vperm.slane %v3739, 1
    %3883 = vrot.lane.b32.xlu0 %v3881, 32
    %v3884 = vpop.permute.xlu0 %3883
    %v3886 = vadd.f32 %v3871, %v3884
    %v3887 = vadd.f32 %v3874, %v3884
    %v3888 = vperm.slane %v3739, 2
    %3890 = vrot.lane.b32.xlu0 %v3888, 64
    %v3891 = vpop.permute.xlu0 %3890
    %v3893 = vadd.f32 %v3871, %v3891
    %v3894 = vadd.f32 %v3874, %v3891
    %3897 = vrot.lane.b32.xlu0 %v3886, 96
    %v3898 = vpop.permute.xlu0 %3897
    %3899 = vrot.lane.b32.xlu0 %v3887, 96
    %v3900 = vpop.permute.xlu0 %3899
    %v3902 = vsel %vm306, %v3879, 0
    %v3905 = vsel %vm306, %v3880, 0
    %v3907 = vsel %vm306, %v3898, 0
    %v3909 = vsel %vm306, %v3900, 0
    %3911 = vmatpush.xpose.msra.mxu0 0.0
    %3912 = vmatpush.xpose.msra.mxu0 0.0
    %3913 = vmatpush.xpose.msra.mxu0 0.0
    %3914 = vmatpush.xpose.msra.mxu0 0.0
    %3915 = vmatpush.xpose.msra.mxu0 0.0
    %3916 = vmatpush.xpose.msra.mxu0 0.0
    %3917 = vmatpush.xpose.msra.mxu0 0.0
    %3918 = vmatpush.xpose.msra.mxu0 0.0
    %3919 = vmatpush.xpose.msra.mxu0 0.0
    %3920 = vmatpush.xpose.msra.mxu0 0.0
    %3921 = vmatpush.xpose.msra.mxu0 0.0
    %3922 = vmatpush.xpose.msra.mxu0 0.0
    %3923 = vmatpush.xpose.msra.mxu0 0.0
    %3924 = vmatpush.xpose.msra.mxu0 0.0
    %3925 = vmatpush.xpose.msra.mxu0 %v3909
    %3926 = vmatpush.xpose.msra.mxu0 %v3907
    %3927 = vmatmul.f32.gmra.mxu0 %v3902
    %v3928 = vpop.f32.mrf.mxu0
    %v3929 = vadd.f32 %v52, %v3928
    %3930 = vmatmul.f32.gmra.mxu0 %v3905
    %v3931 = vpop.f32.mrf.mxu0
    %v3932 = vadd.f32 %v53, %v3931
    %3933 = vdwg.mxu0
    %v3934 = vsel %vm340, %v3929, -inf
    %3935 = vmax.xlane.f32.xlu0 %v3934
    %v3936 = vpop.xlane.xlu0 %3935
    %v3937 = vsel %vm340, %v3932, -inf
    %3938 = vmax.xlane.f32.xlu0 %v3937
    %v3939 = vpop.xlane.xlu0 %3938
    %v3940 = vsub.f32 %v3929, %v3936
    %v3941 = vsub.f32 %v3932, %v3939
    %v3942 = vmul.f32 %v3940, 1.442695
    %v3943 = vpow.pop %v3942
    %v3944 = vmul.f32 %v3941, 1.442695
    %v3945 = vpow.pop %v3944
    %3948 = vrot.lane.b32.xlu0 %v3893, 64
    %v3949 = vpop.permute.xlu0 %3948
    %3950 = vrot.lane.b32.xlu0 %v3894, 64
    %v3951 = vpop.permute.xlu0 %3950
    %v3955 = vsel %vm340, %v3943, 0
    %v3958 = vsel %vm340, %v3945, 0
    %3960 = vmatpush.msra.mxu0 0.0
    %3961 = vmatpush.msra.mxu0 0.0
    %3962 = vmatpush.msra.mxu0 0.0
    %3963 = vmatpush.msra.mxu0 0.0
    %3964 = vmatpush.msra.mxu0 0.0
    %3965 = vmatpush.msra.mxu0 0.0
    %3966 = vmatpush.msra.mxu0 0.0
    %3967 = vmatpush.msra.mxu0 0.0
    %3968 = vmatpush.msra.mxu0 0.0
    %3969 = vmatpush.msra.mxu0 0.0
    %3970 = vmatpush.msra.mxu0 0.0
    %3971 = vmatpush.msra.mxu0 0.0
    %3972 = vmatpush.msra.mxu0 0.0
    %3973 = vmatpush.msra.mxu0 0.0
    %3974 = vmatpush.msra.mxu0 %v3951
    %3975 = vmatpush.msra.mxu0 %v3949
    %3976 = vmatmul.f32.gmra.mxu0 %v3955
    %v3977 = vpop.f32.mrf.mxu0
    %v3978 = vadd.f32 0.0, %v3977
    %3979 = vmatmul.f32.gmra.mxu0 %v3958
    %v3980 = vpop.f32.mrf.mxu0
    %v3981 = vadd.f32 0.0, %v3980
    %3982 = vdwg.mxu0
    %v3983 = vsel %vm340, %v3943, 0.0
    %3984 = vadd.xlane.f32.xlu0 %v3983
    %v3985 = vpop.xlane.xlu0 %3984
    %v3986 = vsel %vm340, %v3945, 0.0
    %3987 = vadd.xlane.f32.xlu0 %v3986
    %v3988 = vpop.xlane.xlu0 %3987
    %v3989 = vrcp.pop %v3985
    %v3990 = vrcp.pop %v3988
    %v3991 = vmul.f32 %v3978, %v3989
    %v3992 = vmul.f32 %v3981, %v3990
    %3993 = vst.msk [vmem:[#allocation2] sm:$0xff] %vm306, %v3991
    %3994 = vst.msk [vmem:[#allocation2 + $0x8] sm:$0xff] %vm306, %v3992
    %3995 = vrot.lane.b32.xlu0 %v3879, 120
    %v3996 = vpop.permute.xlu0 %3995
    %3997 = vrot.lane.b32.xlu0 %v3880, 120
    %v3998 = vpop.permute.xlu0 %3997
    %3999 = vrot.lane.b32.xlu0 %v3886, 88
    %v4000 = vpop.permute.xlu0 %3999
    %4001 = vrot.lane.b32.xlu0 %v3887, 88
    %v4002 = vpop.permute.xlu0 %4001
    %v4003 = vsel %vm306, %v3996, 0
    %v4005 = vsel %vm306, %v3998, 0
    %v4007 = vsel %vm306, %v4000, 0
    %v4009 = vsel %vm306, %v4002, 0
    %4011 = vmatpush.xpose.msra.mxu0 0.0
    %4012 = vmatpush.xpose.msra.mxu0 0.0
    %4013 = vmatpush.xpose.msra.mxu0 0.0
    %4014 = vmatpush.xpose.msra.mxu0 0.0
    %4015 = vmatpush.xpose.msra.mxu0 0.0
    %4016 = vmatpush.xpose.msra.mxu0 0.0
    %4017 = vmatpush.xpose.msra.mxu0 0.0
    %4018 = vmatpush.xpose.msra.mxu0 0.0
    %4019 = vmatpush.xpose.msra.mxu0 0.0
    %4020 = vmatpush.xpose.msra.mxu0 0.0
    %4021 = vmatpush.xpose.msra.mxu0 0.0
    %4022 = vmatpush.xpose.msra.mxu0 0.0
    %4023 = vmatpush.xpose.msra.mxu0 0.0
    %4024 = vmatpush.xpose.msra.mxu0 0.0
    %4025 = vmatpush.xpose.msra.mxu0 %v4009
    %4026 = vmatpush.xpose.msra.mxu0 %v4007
    %4027 = vmatmul.f32.gmra.mxu0 %v4003
    %v4028 = vpop.f32.mrf.mxu0
    %v4029 = vadd.f32 %v52, %v4028
    %4030 = vmatmul.f32.gmra.mxu0 %v4005
    %v4031 = vpop.f32.mrf.mxu0
    %v4032 = vadd.f32 %v53, %v4031
    %4033 = vdwg.mxu0
    %v4034 = vsel %vm340, %v4029, -inf
    %4035 = vmax.xlane.f32.xlu0 %v4034
    %v4036 = vpop.xlane.xlu0 %4035
    %v4037 = vsel %vm340, %v4032, -inf
    %4038 = vmax.xlane.f32.xlu0 %v4037
    %v4039 = vpop.xlane.xlu0 %4038
    %v4040 = vsub.f32 %v4029, %v4036
    %v4041 = vsub.f32 %v4032, %v4039
    %v4042 = vmul.f32 %v4040, 1.442695
    %v4043 = vpow.pop %v4042
    %v4044 = vmul.f32 %v4041, 1.442695
    %v4045 = vpow.pop %v4044
    %4046 = vrot.lane.b32.xlu0 %v3893, 56
    %v4047 = vpop.permute.xlu0 %4046
    %4048 = vrot.lane.b32.xlu0 %v3894, 56
    %v4049 = vpop.permute.xlu0 %4048
    %v4053 = vsel %vm340, %v4043, 0
    %v4056 = vsel %vm340, %v4045, 0
    %4058 = vmatpush.msra.mxu0 0.0
    %4059 = vmatpush.msra.mxu0 0.0
    %4060 = vmatpush.msra.mxu0 0.0
    %4061 = vmatpush.msra.mxu0 0.0
    %4062 = vmatpush.msra.mxu0 0.0
    %4063 = vmatpush.msra.mxu0 0.0
    %4064 = vmatpush.msra.mxu0 0.0
    %4065 = vmatpush.msra.mxu0 0.0
    %4066 = vmatpush.msra.mxu0 0.0
    %4067 = vmatpush.msra.mxu0 0.0
    %4068 = vmatpush.msra.mxu0 0.0
    %4069 = vmatpush.msra.mxu0 0.0
    %4070 = vmatpush.msra.mxu0 0.0
    %4071 = vmatpush.msra.mxu0 0.0
    %4072 = vmatpush.msra.mxu0 %v4049
    %4073 = vmatpush.msra.mxu0 %v4047
    %4074 = vmatmul.f32.gmra.mxu0 %v4053
    %v4075 = vpop.f32.mrf.mxu0
    %v4076 = vadd.f32 0.0, %v4075
    %4077 = vmatmul.f32.gmra.mxu0 %v4056
    %v4078 = vpop.f32.mrf.mxu0
    %v4079 = vadd.f32 0.0, %v4078
    %4080 = vdwg.mxu0
    %v4081 = vsel %vm340, %v4043, 0.0
    %4082 = vadd.xlane.f32.xlu0 %v4081
    %v4083 = vpop.xlane.xlu0 %4082
    %v4084 = vsel %vm340, %v4045, 0.0
    %4085 = vadd.xlane.f32.xlu0 %v4084
    %v4086 = vpop.xlane.xlu0 %4085
    %v4087 = vrcp.pop %v4083
    %v4088 = vrcp.pop %v4086
    %v4089 = vmul.f32 %v4076, %v4087
    %v4090 = vmul.f32 %v4079, %v4088
    %4093 = vrot.lane.b32.xlu0 %v4089, 8
    %v4094 = vpop.permute.xlu0 %4093
    %4095 = vrot.lane.b32.xlu0 %v4090, 8
    %v4096 = vpop.permute.xlu0 %4095
    %4099 = vst.msk [vmem:[#allocation2] sm:$0xff] %vm506, %v4094
    %4100 = vst.msk [vmem:[#allocation2 + $0x8] sm:$0xff] %vm506, %v4096
    %4101 = vrot.lane.b32.xlu0 %v3879, 112
    %v4102 = vpop.permute.xlu0 %4101
    %4103 = vrot.lane.b32.xlu0 %v3880, 112
    %v4104 = vpop.permute.xlu0 %4103
    %4105 = vrot.lane.b32.xlu0 %v3886, 80
    %v4106 = vpop.permute.xlu0 %4105
    %4107 = vrot.lane.b32.xlu0 %v3887, 80
    %v4108 = vpop.permute.xlu0 %4107
    %v4109 = vsel %vm306, %v4102, 0
    %v4111 = vsel %vm306, %v4104, 0
    %v4113 = vsel %vm306, %v4106, 0
    %v4115 = vsel %vm306, %v4108, 0
    %4117 = vmatpush.xpose.msra.mxu0 0.0
    %4118 = vmatpush.xpose.msra.mxu0 0.0
    %4119 = vmatpush.xpose.msra.mxu0 0.0
    %4120 = vmatpush.xpose.msra.mxu0 0.0
    %4121 = vmatpush.xpose.msra.mxu0 0.0
    %4122 = vmatpush.xpose.msra.mxu0 0.0
    %4123 = vmatpush.xpose.msra.mxu0 0.0
    %4124 = vmatpush.xpose.msra.mxu0 0.0
    %4125 = vmatpush.xpose.msra.mxu0 0.0
    %4126 = vmatpush.xpose.msra.mxu0 0.0
    %4127 = vmatpush.xpose.msra.mxu0 0.0
    %4128 = vmatpush.xpose.msra.mxu0 0.0
    %4129 = vmatpush.xpose.msra.mxu0 0.0
    %4130 = vmatpush.xpose.msra.mxu0 0.0
    %4131 = vmatpush.xpose.msra.mxu0 %v4115
    %4132 = vmatpush.xpose.msra.mxu0 %v4113
    %4133 = vmatmul.f32.gmra.mxu0 %v4109
    %v4134 = vpop.f32.mrf.mxu0
    %v4135 = vadd.f32 %v52, %v4134
    %4136 = vmatmul.f32.gmra.mxu0 %v4111
    %v4137 = vpop.f32.mrf.mxu0
    %v4138 = vadd.f32 %v53, %v4137
    %4139 = vdwg.mxu0
    %v4140 = vsel %vm340, %v4135, -inf
    %4141 = vmax.xlane.f32.xlu0 %v4140
    %v4142 = vpop.xlane.xlu0 %4141
    %v4143 = vsel %vm340, %v4138, -inf
    %4144 = vmax.xlane.f32.xlu0 %v4143
    %v4145 = vpop.xlane.xlu0 %4144
    %v4146 = vsub.f32 %v4135, %v4142
    %v4147 = vsub.f32 %v4138, %v4145
    %v4148 = vmul.f32 %v4146, 1.442695
    %v4149 = vpow.pop %v4148
    %v4150 = vmul.f32 %v4147, 1.442695
    %v4151 = vpow.pop %v4150
    %4152 = vrot.lane.b32.xlu0 %v3893, 48
    %v4153 = vpop.permute.xlu0 %4152
    %4154 = vrot.lane.b32.xlu0 %v3894, 48
    %v4155 = vpop.permute.xlu0 %4154
    %v4159 = vsel %vm340, %v4149, 0
    %v4162 = vsel %vm340, %v4151, 0
    %4164 = vmatpush.msra.mxu0 0.0
    %4165 = vmatpush.msra.mxu0 0.0
    %4166 = vmatpush.msra.mxu0 0.0
    %4167 = vmatpush.msra.mxu0 0.0
    %4168 = vmatpush.msra.mxu0 0.0
    %4169 = vmatpush.msra.mxu0 0.0
    %4170 = vmatpush.msra.mxu0 0.0
    %4171 = vmatpush.msra.mxu0 0.0
    %4172 = vmatpush.msra.mxu0 0.0
    %4173 = vmatpush.msra.mxu0 0.0
    %4174 = vmatpush.msra.mxu0 0.0
    %4175 = vmatpush.msra.mxu0 0.0
    %4176 = vmatpush.msra.mxu0 0.0
    %4177 = vmatpush.msra.mxu0 0.0
    %4178 = vmatpush.msra.mxu0 %v4155
    %4179 = vmatpush.msra.mxu0 %v4153
    %4180 = vmatmul.f32.gmra.mxu0 %v4159
    %v4181 = vpop.f32.mrf.mxu0
    %v4182 = vadd.f32 0.0, %v4181
    %4183 = vmatmul.f32.gmra.mxu0 %v4162
    %v4184 = vpop.f32.mrf.mxu0
    %v4185 = vadd.f32 0.0, %v4184
    %4186 = vdwg.mxu0
    %v4187 = vsel %vm340, %v4149, 0.0
    %4188 = vadd.xlane.f32.xlu0 %v4187
    %v4189 = vpop.xlane.xlu0 %4188
    %v4190 = vsel %vm340, %v4151, 0.0
    %4191 = vadd.xlane.f32.xlu0 %v4190
    %v4192 = vpop.xlane.xlu0 %4191
    %v4193 = vrcp.pop %v4189
    %v4194 = vrcp.pop %v4192
    %v4195 = vmul.f32 %v4182, %v4193
    %v4196 = vmul.f32 %v4185, %v4194
    %4199 = vrot.lane.b32.xlu0 %v4195, 16
    %v4200 = vpop.permute.xlu0 %4199
    %4201 = vrot.lane.b32.xlu0 %v4196, 16
    %v4202 = vpop.permute.xlu0 %4201
    %4205 = vst.msk [vmem:[#allocation2] sm:$0xff] %vm613, %v4200
    %4206 = vst.msk [vmem:[#allocation2 + $0x8] sm:$0xff] %vm613, %v4202
    %4207 = vrot.lane.b32.xlu0 %v3879, 104
    %v4208 = vpop.permute.xlu0 %4207
    %4209 = vrot.lane.b32.xlu0 %v3880, 104
    %v4210 = vpop.permute.xlu0 %4209
    %4211 = vrot.lane.b32.xlu0 %v3886, 72
    %v4212 = vpop.permute.xlu0 %4211
    %4213 = vrot.lane.b32.xlu0 %v3887, 72
    %v4214 = vpop.permute.xlu0 %4213
    %v4215 = vsel %vm306, %v4208, 0
    %v4217 = vsel %vm306, %v4210, 0
    %v4219 = vsel %vm306, %v4212, 0
    %v4221 = vsel %vm306, %v4214, 0
    %4223 = vmatpush.xpose.msra.mxu0 0.0
    %4224 = vmatpush.xpose.msra.mxu0 0.0
    %4225 = vmatpush.xpose.msra.mxu0 0.0
    %4226 = vmatpush.xpose.msra.mxu0 0.0
    %4227 = vmatpush.xpose.msra.mxu0 0.0
    %4228 = vmatpush.xpose.msra.mxu0 0.0
    %4229 = vmatpush.xpose.msra.mxu0 0.0
    %4230 = vmatpush.xpose.msra.mxu0 0.0
    %4231 = vmatpush.xpose.msra.mxu0 0.0
    %4232 = vmatpush.xpose.msra.mxu0 0.0
    %4233 = vmatpush.xpose.msra.mxu0 0.0
    %4234 = vmatpush.xpose.msra.mxu0 0.0
    %4235 = vmatpush.xpose.msra.mxu0 0.0
    %4236 = vmatpush.xpose.msra.mxu0 0.0
    %4237 = vmatpush.xpose.msra.mxu0 %v4221
    %4238 = vmatpush.xpose.msra.mxu0 %v4219
    %4239 = vmatmul.f32.gmra.mxu0 %v4215
    %v4240 = vpop.f32.mrf.mxu0
    %v4241 = vadd.f32 %v52, %v4240
    %4242 = vmatmul.f32.gmra.mxu0 %v4217
    %v4243 = vpop.f32.mrf.mxu0
    %v4244 = vadd.f32 %v53, %v4243
    %4245 = vdwg.mxu0
    %v4246 = vsel %vm340, %v4241, -inf
    %4247 = vmax.xlane.f32.xlu0 %v4246
    %v4248 = vpop.xlane.xlu0 %4247
    %v4249 = vsel %vm340, %v4244, -inf
    %4250 = vmax.xlane.f32.xlu0 %v4249
    %v4251 = vpop.xlane.xlu0 %4250
    %v4252 = vsub.f32 %v4241, %v4248
    %v4253 = vsub.f32 %v4244, %v4251
    %v4254 = vmul.f32 %v4252, 1.442695
    %v4255 = vpow.pop %v4254
    %v4256 = vmul.f32 %v4253, 1.442695
    %v4257 = vpow.pop %v4256
    %4258 = vrot.lane.b32.xlu0 %v3893, 40
    %v4259 = vpop.permute.xlu0 %4258
    %4260 = vrot.lane.b32.xlu0 %v3894, 40
    %v4261 = vpop.permute.xlu0 %4260
    %v4265 = vsel %vm340, %v4255, 0
    %v4268 = vsel %vm340, %v4257, 0
    %4270 = vmatpush.msra.mxu0 0.0
    %4271 = vmatpush.msra.mxu0 0.0
    %4272 = vmatpush.msra.mxu0 0.0
    %4273 = vmatpush.msra.mxu0 0.0
    %4274 = vmatpush.msra.mxu0 0.0
    %4275 = vmatpush.msra.mxu0 0.0
    %4276 = vmatpush.msra.mxu0 0.0
    %4277 = vmatpush.msra.mxu0 0.0
    %4278 = vmatpush.msra.mxu0 0.0
    %4279 = vmatpush.msra.mxu0 0.0
    %4280 = vmatpush.msra.mxu0 0.0
    %4281 = vmatpush.msra.mxu0 0.0
    %4282 = vmatpush.msra.mxu0 0.0
    %4283 = vmatpush.msra.mxu0 0.0
    %4284 = vmatpush.msra.mxu0 %v4261
    %4285 = vmatpush.msra.mxu0 %v4259
    %4286 = vmatmul.f32.gmra.mxu0 %v4265
    %v4287 = vpop.f32.mrf.mxu0
    %v4288 = vadd.f32 0.0, %v4287
    %4289 = vmatmul.f32.gmra.mxu0 %v4268
    %v4290 = vpop.f32.mrf.mxu0
    %v4291 = vadd.f32 0.0, %v4290
    %4292 = vdwg.mxu0
    %v4293 = vsel %vm340, %v4255, 0.0
    %4294 = vadd.xlane.f32.xlu0 %v4293
    %v4295 = vpop.xlane.xlu0 %4294
    %v4296 = vsel %vm340, %v4257, 0.0
    %4297 = vadd.xlane.f32.xlu0 %v4296
    %v4298 = vpop.xlane.xlu0 %4297
    %v4299 = vrcp.pop %v4295
    %v4300 = vrcp.pop %v4298
    %v4301 = vmul.f32 %v4288, %v4299
    %v4302 = vmul.f32 %v4291, %v4300
    %4305 = vrot.lane.b32.xlu0 %v4301, 24
    %v4306 = vpop.permute.xlu0 %4305
    %4307 = vrot.lane.b32.xlu0 %v4302, 24
    %v4308 = vpop.permute.xlu0 %4307
    %4311 = vst.msk [vmem:[#allocation2] sm:$0xff] %vm720, %v4306
    %4312 = vst.msk [vmem:[#allocation2 + $0x8] sm:$0xff] %vm720, %v4308
    %v4313 = vld [vmem:[#allocation2] sm:$0xff]
    %v4314 = vld [vmem:[#allocation2 + $0x8] sm:$0xff]
    %v4316 = vsel %vm167, %v4313, 0
    %v4319 = vsel %vm167, %v4314, 0
    %4321 = vmatpush.msra.mxu0 0.0
    %4322 = vmatpush.msra.mxu0 0.0
    %4323 = vmatpush.msra.mxu0 0.0
    %4324 = vmatpush.msra.mxu0 0.0
    %4325 = vmatpush.msra.mxu0 0.0
    %4326 = vmatpush.msra.mxu0 0.0
    %4327 = vmatpush.msra.mxu0 0.0
    %4328 = vmatpush.msra.mxu0 0.0
    %4329 = vmatpush.msra.mxu0 0.0
    %4330 = vmatpush.msra.mxu0 0.0
    %4331 = vmatpush.msra.mxu0 0.0
    %4332 = vmatpush.msra.mxu0 0.0
    %4333 = vmatpush.msra.mxu0 %v3748
    %4334 = vmatpush.msra.mxu0 %v3747
    %4335 = vmatpush.msra.mxu0 %v3746
    %4336 = vmatpush.msra.mxu0 %v3745
    %4337 = vmatmul.f32.gmra.mxu0 %v4316
    %v4338 = vpop.f32.mrf.mxu0
    %v4339 = vadd.f32 0.0, %v4338
    %4340 = vmatmul.f32.gmra.mxu0 %v4319
    %v4341 = vpop.f32.mrf.mxu0
    %v4342 = vadd.f32 0.0, %v4341
    %4343 = vdwg.mxu0
    %v4344 = vadd.f32 %v3735, %v4339
    %v4345 = vadd.f32 %v3736, %v4342
    %v4346 = vperm.slane %v3738, 3
    %v4347 = vadd.f32 %v4344, %v4346
    %v4348 = vadd.f32 %v4345, %v4346
    %v4349 = vrot.slane %v4347, 7
    %v4350 = vrot.slane %v4348, 7
    %v4351 = vsel %vm763, %v4349, %v4350
    %v4352 = vsel %vm763, %v4350, %v4349
    %v4353 = vmul.f32 %v4352, %v768
    %v4354 = vmul.f32 %v4351, %v772
    %v4355 = vrot.slane %v4347, 1
    %v4356 = vrot.slane %v4348, 1
    %v4357 = vsel %vm778, %v4355, %v4356
    %v4358 = vsel %vm778, %v4356, %v4355
    %v4359 = vmul.f32 %v4357, %v783
    %v4360 = vmul.f32 %v4358, %v787
    %v4361 = vperm.slane %v3739, 3
    %v4362 = vmul.f32 %v4353, %v4361
    %v4363 = vmul.f32 %v4354, %v4361
    %v4364 = vperm.slane %v3739, 4
    %v4365 = vmul.f32 %v4347, %v4364
    %v4366 = vmul.f32 %v4348, %v4364
    %v4367 = vadd.f32 %v4362, %v4365
    %v4368 = vadd.f32 %v4363, %v4366
    %v4369 = vperm.slane %v3739, 5
    %v4370 = vmul.f32 %v4359, %v4369
    %v4371 = vmul.f32 %v4360, %v4369
    %v4372 = vadd.f32 %v4367, %v4370
    %v4373 = vadd.f32 %v4368, %v4371
    %v4374 = vperm.slane %v3738, 4
    %v4375 = vadd.f32 %v4372, %v4374
    %v4376 = vadd.f32 %v4373, %v4374
    %v4377 = vxor.u32 %v4375, 2147483648
    %v4378 = vxor.u32 %v4376, 2147483648
    %v4379 = vmul.f32 %v4377, 1.442695
    %v4380 = vpow.pop %v4379
    %v4381 = vmul.f32 %v4378, 1.442695
    %v4382 = vpow.pop %v4381
    %v4383 = vadd.f32 %v4380, 1.0
    %v4384 = vadd.f32 %v4382, 1.0
    %v4385 = vrcp.pop %v4383
    %v4386 = vmul.f32 %v4383, %v4385
    %v4387 = vsub.f32 1.0, %v4386
    %v4388 = vmul.f32 %v4385, %v4387
    %v4389 = vadd.f32 %v4385, %v4388
    %vm4390 = vweird.f32 %v4383
    %vm4391 = vweird.f32 %v4385
    %vm4392 = vmor %vm4390, %vm4391
    %v4393 = vsel %vm4392, %v4385, %v4389
    %v4394 = vand.u32 2147483647, %v4383
    %vm4395 = vcmp.eq.f32.partialorder %v4394, 8.507059e+37
    %v4396 = vand.u32 %v4383, 2147483648
    %v4397 = vor.u32 1.1754944e-38, %v4396
    %v4398 = vsel %vm4395, %v4397, %v4393
    %v4399 = vmul.f32 1.0, %v4398
    %v4400 = vrcp.pop %v4384
    %v4401 = vmul.f32 %v4384, %v4400
    %v4402 = vsub.f32 1.0, %v4401
    %v4403 = vmul.f32 %v4400, %v4402
    %v4404 = vadd.f32 %v4400, %v4403
    %vm4405 = vweird.f32 %v4384
    %vm4406 = vweird.f32 %v4400
    %vm4407 = vmor %vm4405, %vm4406
    %v4408 = vsel %vm4407, %v4400, %v4404
    %v4409 = vand.u32 2147483647, %v4384
    %vm4410 = vcmp.eq.f32.partialorder %v4409, 8.507059e+37
    %v4411 = vand.u32 %v4384, 2147483648
    %v4412 = vor.u32 1.1754944e-38, %v4411
    %v4413 = vsel %vm4410, %v4412, %v4408
    %v4414 = vmul.f32 1.0, %v4413
    %v4415 = vmul.f32 %v4375, %v4399
    %v4416 = vmul.f32 %v4376, %v4414
    %v4417 = vadd.f32 %v4347, %v4415
    %v4418 = vadd.f32 %v4348, %v4416
    %v4419 = vadd.f32 %v4417, %v3795
    %v4420 = vadd.f32 %v4418, %v3796
    %v4421 = vsel %vm167, %v4419, 0.0
    %4422 = vadd.xlane.f32.xlu0 %v4421
    %v4423 = vpop.xlane.xlu0 %4422
    %v4424 = vsel %vm167, %v4420, 0.0
    %4425 = vadd.xlane.f32.xlu0 %v4424
    %v4426 = vpop.xlane.xlu0 %4425
    %v4427 = vmul.f32 %v4423, %v207
    %v4428 = vmul.f32 %v4426, %v207
    %v4429 = vsub.f32 %v4419, %v4427
    %v4430 = vsub.f32 %v4420, %v4428
    %v4431 = vmul.f32 %v4429, %v4429
    %v4432 = vmul.f32 %v4430, %v4430
    %v4433 = vsel %vm167, %v4431, 0.0
    %4434 = vadd.xlane.f32.xlu0 %v4433
    %v4435 = vpop.xlane.xlu0 %4434
    %v4436 = vsel %vm167, %v4432, 0.0
    %4437 = vadd.xlane.f32.xlu0 %v4436
    %v4438 = vpop.xlane.xlu0 %4437
    %v4439 = vmul.f32 %v4435, %v207
    %v4440 = vmul.f32 %v4438, %v207
    %v4441 = vadd.f32 %v4439, 1e-05
    %v4442 = vadd.f32 %v4440, 1e-05
    %v4443 = vrsqrt.pop %v4441
    %v4444 = vmul.f32 %v4443, %v4441
    %v4445 = vmul.f32 %v4444, %v4443
    %v4446 = vmul.f32 0.5, %v4445
    %v4447 = vsub.f32 1.5, %v4446
    %v4448 = vmul.f32 %v4443, %v4447
    %vm4449 = vweird.f32 %v4441
    %vm4450 = vweird.f32 %v4443
    %vm4451 = vmor %vm4449, %vm4450
    %v4452 = vsel %vm4451, %v4443, %v4448
    %v4453 = vrsqrt.pop %v4442
    %v4454 = vmul.f32 %v4453, %v4442
    %v4455 = vmul.f32 %v4454, %v4453
    %v4456 = vmul.f32 0.5, %v4455
    %v4457 = vsub.f32 1.5, %v4456
    %v4458 = vmul.f32 %v4453, %v4457
    %vm4459 = vweird.f32 %v4442
    %vm4460 = vweird.f32 %v4453
    %vm4461 = vmor %vm4459, %vm4460
    %v4462 = vsel %vm4461, %v4453, %v4458
    %v4463 = vmul.f32 %v4429, %v4452
    %v4464 = vmul.f32 %v4430, %v4462
    %v4465 = vperm.slane %v3738, 5
    %v4466 = vmul.f32 %v4463, %v4465
    %v4467 = vmul.f32 %v4464, %v4465
    %v4468 = vperm.slane %v3738, 6
    %v4469 = vadd.f32 %v4466, %v4468
    %v4470 = vadd.f32 %v4467, %v4468
    %s4471 = scalar_lea.vmem %s6, 160
    %v4472 = vld [vmem:[%s4471] sm:$0xff]
    %v4473 = vld [vmem:[%s4471 + $0x8] sm:$0xff]
    %v4474 = vld [vmem:[%s4471 + $0x10] sm:$0xff]
    %v4475 = vld [vmem:[%s4471 + $0x18] sm:$0xff]
    %v4476 = vld [vmem:[%s4471 + $0x20] sm:$0x1]
    %v4477 = vperm.slane %v4476, 0
    %v4479 = vsel %vm167, %v4469, 0
    %v4482 = vsel %vm167, %v4470, 0
    %4484 = vmatpush.msra.mxu0 0.0
    %4485 = vmatpush.msra.mxu0 0.0
    %4486 = vmatpush.msra.mxu0 0.0
    %4487 = vmatpush.msra.mxu0 0.0
    %4488 = vmatpush.msra.mxu0 0.0
    %4489 = vmatpush.msra.mxu0 0.0
    %4490 = vmatpush.msra.mxu0 0.0
    %4491 = vmatpush.msra.mxu0 0.0
    %4492 = vmatpush.msra.mxu0 0.0
    %4493 = vmatpush.msra.mxu0 0.0
    %4494 = vmatpush.msra.mxu0 0.0
    %4495 = vmatpush.msra.mxu0 0.0
    %4496 = vmatpush.msra.mxu0 %v4475
    %4497 = vmatpush.msra.mxu0 %v4474
    %4498 = vmatpush.msra.mxu0 %v4473
    %4499 = vmatpush.msra.mxu0 %v4472
    %4500 = vmatmul.f32.gmra.mxu0 %v4479
    %v4501 = vpop.f32.mrf.mxu0
    %v4502 = vadd.f32 %v4477, %v4501
    %4503 = vmatmul.f32.gmra.mxu0 %v4482
    %v4504 = vpop.f32.mrf.mxu0
    %v4505 = vadd.f32 %v4477, %v4504
    %4506 = vdwg.mxu0
    %v4507 = vmul.f32 %v4502, 0.5
    %v4508 = vmul.f32 %v4505, 0.5
    %v4509 = vmul.f32 %v4502, 0.70710677
    %v4510 = vmul.f32 %v4505, 0.70710677
    %vm4511 = vcmp.ge.f32.partialorder %v4509, 0.0
    %vm4512 = vcmp.ge.f32.partialorder %v4510, 0.0
    %v4513 = vsel %vm4511, 1.0, -1.0
    %v4514 = vsel %vm4512, 1.0, -1.0
    %v4515 = vand.u32 2147483647, %v4509
    %v4516 = vand.u32 2147483647, %v4510
    %v4517 = vmul.f32 %v4515, 0.3275911
    %v4518 = vmul.f32 %v4516, 0.3275911
    %v4519 = vadd.f32 %v4517, 1.0
    %v4520 = vadd.f32 %v4518, 1.0
    %v4521 = vrcp.pop %v4519
    %v4522 = vmul.f32 %v4519, %v4521
    %v4523 = vsub.f32 1.0, %v4522
    %v4524 = vmul.f32 %v4521, %v4523
    %v4525 = vadd.f32 %v4521, %v4524
    %vm4526 = vweird.f32 %v4519
    %vm4527 = vweird.f32 %v4521
    %vm4528 = vmor %vm4526, %vm4527
    %v4529 = vsel %vm4528, %v4521, %v4525
    %v4530 = vand.u32 2147483647, %v4519
    %vm4531 = vcmp.eq.f32.partialorder %v4530, 8.507059e+37
    %v4532 = vand.u32 %v4519, 2147483648
    %v4533 = vor.u32 1.1754944e-38, %v4532
    %v4534 = vsel %vm4531, %v4533, %v4529
    %v4535 = vmul.f32 1.0, %v4534
    %v4536 = vrcp.pop %v4520
    %v4537 = vmul.f32 %v4520, %v4536
    %v4538 = vsub.f32 1.0, %v4537
    %v4539 = vmul.f32 %v4536, %v4538
    %v4540 = vadd.f32 %v4536, %v4539
    %vm4541 = vweird.f32 %v4520
    %vm4542 = vweird.f32 %v4536
    %vm4543 = vmor %vm4541, %vm4542
    %v4544 = vsel %vm4543, %v4536, %v4540
    %v4545 = vand.u32 2147483647, %v4520
    %vm4546 = vcmp.eq.f32.partialorder %v4545, 8.507059e+37
    %v4547 = vand.u32 %v4520, 2147483648
    %v4548 = vor.u32 1.1754944e-38, %v4547
    %v4549 = vsel %vm4546, %v4548, %v4544
    %v4550 = vmul.f32 1.0, %v4549
    %v4551 = vmul.f32 %v4535, 1.0614054
    %v4552 = vmul.f32 %v4550, 1.0614054
    %v4553 = vadd.f32 %v4551, -1.4531521
    %v4554 = vadd.f32 %v4552, -1.4531521
    %v4555 = vmul.f32 %v4553, %v4535
    %v4556 = vmul.f32 %v4554, %v4550
    %v4557 = vadd.f32 %v4555, 1.4214138
    %v4558 = vadd.f32 %v4556, 1.4214138
    %v4559 = vmul.f32 %v4557, %v4535
    %v4560 = vmul.f32 %v4558, %v4550
    %v4561 = vadd.f32 %v4559, -0.28449672
    %v4562 = vadd.f32 %v4560, -0.28449672
    %v4563 = vmul.f32 %v4561, %v4535
    %v4564 = vmul.f32 %v4562, %v4550
    %v4565 = vadd.f32 %v4563, 0.2548296
    %v4566 = vadd.f32 %v4564, 0.2548296
    %v4567 = vmul.f32 %v4565, %v4535
    %v4568 = vmul.f32 %v4566, %v4550
    %v4569 = vsub.f32 0.0, %v4515
    %v4570 = vsub.f32 0.0, %v4516
    %v4571 = vmul.f32 %v4569, %v4515
    %v4572 = vmul.f32 %v4570, %v4516
    %v4573 = vmul.f32 %v4571, 1.442695
    %v4574 = vpow.pop %v4573
    %v4575 = vmul.f32 %v4572, 1.442695
    %v4576 = vpow.pop %v4575
    %v4577 = vmul.f32 %v4567, %v4574
    %v4578 = vmul.f32 %v4568, %v4576
    %v4579 = vsub.f32 1.0, %v4577
    %v4580 = vsub.f32 1.0, %v4578
    %v4581 = vmul.f32 %v4513, %v4579
    %v4582 = vmul.f32 %v4514, %v4580
    %v4583 = vadd.f32 %v4581, 1.0
    %v4584 = vadd.f32 %v4582, 1.0
    %v4585 = vmul.f32 %v4507, %v4583
    %v4586 = vmul.f32 %v4508, %v4584
    %s4587 = scalar_lea.vmem %s7, 256
    %v4588 = vld [vmem:[%s4587] sm:$0xff]
    %v4589 = vld [vmem:[%s4587 + $0x8] sm:$0xff]
    %v4590 = vld [vmem:[%s4587 + $0x10] sm:$0xff]
    %v4591 = vld [vmem:[%s4587 + $0x18] sm:$0xff]
    %v4592 = vld [vmem:[%s4587 + $0x20] sm:$0xff]
    %v4593 = vld [vmem:[%s4587 + $0x28] sm:$0xff]
    %v4594 = vld [vmem:[%s4587 + $0x30] sm:$0xff]
    %v4595 = vld [vmem:[%s4587 + $0x38] sm:$0xff]
    %v4597 = vsel %vm84, %v4585, 0
    %v4600 = vsel %vm84, %v4586, 0
    %4602 = vmatpush.msra.mxu0 0.0
    %4603 = vmatpush.msra.mxu0 0.0
    %4604 = vmatpush.msra.mxu0 0.0
    %4605 = vmatpush.msra.mxu0 0.0
    %4606 = vmatpush.msra.mxu0 0.0
    %4607 = vmatpush.msra.mxu0 0.0
    %4608 = vmatpush.msra.mxu0 0.0
    %4609 = vmatpush.msra.mxu0 0.0
    %4610 = vmatpush.msra.mxu0 %v4595
    %4611 = vmatpush.msra.mxu0 %v4594
    %4612 = vmatpush.msra.mxu0 %v4593
    %4613 = vmatpush.msra.mxu0 %v4592
    %4614 = vmatpush.msra.mxu0 %v4591
    %4615 = vmatpush.msra.mxu0 %v4590
    %4616 = vmatpush.msra.mxu0 %v4589
    %4617 = vmatpush.msra.mxu0 %v4588
    %4618 = vmatmul.f32.gmra.mxu0 %v4597
    %v4619 = vpop.f32.mrf.mxu0
    %v4620 = vadd.f32 0.0, %v4619
    %4621 = vmatmul.f32.gmra.mxu0 %v4600
    %v4622 = vpop.f32.mrf.mxu0
    %v4623 = vadd.f32 0.0, %v4622
    %4624 = vdwg.mxu0
    %v4625 = vadd.f32 %v4419, %v4620
    %v4626 = vadd.f32 %v4420, %v4623
    %v4627 = vperm.slane %v3738, 7
    %v4628 = vadd.f32 %v4625, %v4627
    %v4629 = vadd.f32 %v4626, %v4627
    %v4630 = vld [vmem:[%s4] sm:$0x3]
    %v4632 = vsel %vm340, %v4630, 0
    %4634 = vmatpush.msra.mxu0 0.0
    %4635 = vmatpush.msra.mxu0 0.0
    %4636 = vmatpush.msra.mxu0 0.0
    %4637 = vmatpush.msra.mxu0 0.0
    %4638 = vmatpush.msra.mxu0 0.0
    %4639 = vmatpush.msra.mxu0 0.0
    %4640 = vmatpush.msra.mxu0 0.0
    %4641 = vmatpush.msra.mxu0 0.0
    %4642 = vmatpush.msra.mxu0 0.0
    %4643 = vmatpush.msra.mxu0 0.0
    %4644 = vmatpush.msra.mxu0 0.0
    %4645 = vmatpush.msra.mxu0 0.0
    %4646 = vmatpush.msra.mxu0 0.0
    %4647 = vmatpush.msra.mxu0 0.0
    %4648 = vmatpush.msra.mxu0 %v4629
    %4649 = vmatpush.msra.mxu0 %v4628
    %4650 = vmatmul.f32.gmra.mxu0 %v4632
    %v4651 = vpop.f32.mrf.mxu0
    %v4652 = vadd.f32 0.0, %v4651
    %4653 = vdwg.mxu0
    %v4654 = vld [vmem:[%s9] sm:$0xff]
    %v4655 = vld [vmem:[%s9 + $0x8] sm:$0xff]
    %v4656 = vld [vmem:[%s9 + $0x10] sm:$0xff]
    %v4657 = vld [vmem:[%s9 + $0x18] sm:$0xff]
    %v4658 = vld [vmem:[%s9 + $0x20] sm:$0x1]
    %v4659 = vperm.slane %v4658, 0
    %v4661 = vsel %vm167, %v4652, 0
    %4663 = vmatpush.msra.mxu0 0.0
    %4664 = vmatpush.msra.mxu0 0.0
    %4665 = vmatpush.msra.mxu0 0.0
    %4666 = vmatpush.msra.mxu0 0.0
    %4667 = vmatpush.msra.mxu0 0.0
    %4668 = vmatpush.msra.mxu0 0.0
    %4669 = vmatpush.msra.mxu0 0.0
    %4670 = vmatpush.msra.mxu0 0.0
    %4671 = vmatpush.msra.mxu0 0.0
    %4672 = vmatpush.msra.mxu0 0.0
    %4673 = vmatpush.msra.mxu0 0.0
    %4674 = vmatpush.msra.mxu0 0.0
    %4675 = vmatpush.msra.mxu0 %v4657
    %4676 = vmatpush.msra.mxu0 %v4656
    %4677 = vmatpush.msra.mxu0 %v4655
    %4678 = vmatpush.msra.mxu0 %v4654
    %4679 = vmatmul.f32.gmra.mxu0 %v4661
    %v4680 = vpop.f32.mrf.mxu0
    %v4681 = vadd.f32 %v4659, %v4680
    %4682 = vdwg.mxu0
    %vm4683 = vcmask 33792
    %4684 = vst.msk [vmem:[#allocation3] sm:$0x3] %vm4683, %v4681
    // Predicated region
    $region42: #{mamba_unet_forward.1} parent=1 // pred_check
      _
    $region43: #{mamba_unet_forward.1} parent=1 // pred_check_branch
      %4686 = sbr.rel (0) target = $region45
    $region44: #{mamba_unet_forward.1} parent=1 // pred_region
      %4688 = vsyncadd [#allocation4], 0
      %s4690 = sshll.u32 [#allocation3], 4
      %s4691 = int_to_ptr.vmem [resolvable:$true] %s4690
      %s4692 = sshll.u32 %s10, 4
      %s4693 = int_to_ptr.hbm [resolvable:$true] %s4692
      %4695 = dma.vmem_to_hbm [thread:$0]  %s4691, 32, %s4693, [#allocation4]
    $region45: #{mamba_unet_forward.1} parent=1 // pred_fallthru
      _
    // Predicated region
    $region46: #{mamba_unet_forward.1} parent=1 // pred_check
      _
    $region47: #{mamba_unet_forward.1} parent=1 // pred_check_branch
      %4697 = sbr.rel (0) target = $region49
    $region48: #{mamba_unet_forward.1} parent=1 // pred_region
      %4699 = dma.done [#allocation4], 32
    $region49: #{mamba_unet_forward.1} parent=1 // pred_fallthru
      _
    %4700 = vsyncpa [#allocation4], 1

</llo_original>
